<compile_context>
chip_gen: v5e
topology: v5e:2x2
jax: 0.10.0
libtpu: 0.0.40
codegen_flags: <defaults>
</compile_context>

<pallas_src>
import numpy as np
import jax
import jax.numpy as jnp
from jax.experimental import pallas as pl
from jax.experimental.pallas import tpu as pltpu

NEG_SLOPE = 0.01   # F.leaky_relu / nn.LeakyReLU default
LN_EPS = 1e-5      # nn.LayerNorm default
LAYERS = 3         # DQN_GNN(layers=3) default

IN_DIM = 8         # node feature dim
IN_PAD = 16        # padded so every bf16 slab section is 16-row aligned
GNN_DIM = 256
TREE_DIM = 64      # true tree_out / mutation-out width
TREE_PAD = 128     # lane-padded width (keeps operands on the (8,128) grid)


def _round_up(x, m):
    return (x + m - 1) // m * m


# ---------------------------------------------------------------------------
# In-kernel helpers
# ---------------------------------------------------------------------------
def _layernorm(x, g, b):
    mu = jnp.mean(x, axis=-1, keepdims=True)
    xc = x - mu
    var = jnp.mean(xc * xc, axis=-1, keepdims=True)
    return xc * jax.lax.rsqrt(var + LN_EPS) * g + b


def _layernorm_padded(x, g, b, true_dim):
    # x has exact zeros in lanes >= true_dim; g/b are zero there too, so the
    # padded lanes come out exactly zero while stats use only true_dim values.
    inv_n = 1.0 / float(true_dim)
    s1 = jnp.sum(x, axis=-1, keepdims=True)
    s2 = jnp.sum(x * x, axis=-1, keepdims=True)
    mu = s1 * inv_n
    var = s2 * inv_n - mu * mu
    return (x - mu) * jax.lax.rsqrt(var + LN_EPS) * g + b


def _leaky(x):
    return jnp.where(x > 0, x, NEG_SLOPE * x)


def _mmb(a, b):
    # bf16 MXU operands, f32 accumulation
    return jnp.dot(a.astype(jnp.bfloat16), b.astype(jnp.bfloat16),
                   preferred_element_type=jnp.float32)


# ---------------------------------------------------------------------------
# Fused forward kernel (one graph-batch chunk per grid step)
#   x_ref     (NC, IN_PAD)              bf16  node features (lane padded 8->16)
#   ahat_ref  (NC, NC)                  bf16  per-chunk normalized adjacency
#   mut_ref   (GC, M_pad)               bf16  mutation features (lane padded)
#   wgnn_ref  (IN_PAD+2*256, 256)       bf16  packed GNN-path weights   (resident)
#   wmut_ref  (M_pad+(L+1)*H, H)        bf16  packed mutation weights   (resident)
#   wcomb_ref (3*128+(L+1)*H, H)        bf16  packed combined weights   (resident)
#   vec_ref   (R, max(256,H))           f32   biases / LN gamma / LN beta rows
#   out_ref   (GC, 1)                   f32
# ---------------------------------------------------------------------------
def dqn_gnn_kernel(x_ref, ahat_ref, mut_ref,
                   wgnn_ref, wmut_ref, wcomb_ref, vec_ref, out_ref):
    H = wmut_ref.shape[1]
    m_pad = wmut_ref.shape[0] - (LAYERS + 1) * H
    nc = x_ref.shape[0]          # nodes per chunk
    gc = out_ref.shape[0]        # graphs per chunk
    npg = nc // gc               # nodes per graph (contiguous, fixed)

    # Sequentially consumed bias / LN rows (same order as the packer).
    ctr = [0]

    def vec(dim):
        i = ctr[0]
        ctr[0] += 1
        return vec_ref[i:i + 1, 0:dim]            # (1, dim) f32

    x = x_ref[...]                                # (nc, IN_PAD) bf16
    ahat = ahat_ref[...]                          # (nc, nc) bf16

    # ---- GCNConv(8, 256): reassociated (A_hat @ X) @ W1 since IN_PAD << 256 ----
    ax = _mmb(ahat, x)                            # (nc, IN_PAD) f32
    h = _mmb(ax, wgnn_ref[0:IN_PAD, :]) + vec(GNN_DIM)
    h = _leaky(_layernorm(h, vec(GNN_DIM), vec(GNN_DIM)))

    # ---- GCNConv(256, 256) + LayerNorm + LeakyReLU ----
    h = _mmb(ahat, _mmb(h, wgnn_ref[IN_PAD:IN_PAD + GNN_DIM, :])) + vec(GNN_DIM)
    h = _leaky(_layernorm(h, vec(GNN_DIM), vec(GNN_DIM)))

    # ---- global_max_pool: contiguous fixed-size graphs -> sublane-group max ----
    # (no (GC, NC, 256) broadcast temp; this is a cheap per-group reduction)
    pooled = jnp.max(h.reshape(gc, npg, GNN_DIM), axis=1)          # (gc, 256)

    # ---- tree_out (lane-padded to 128) + LayerNorm(64) + LeakyReLU ----
    w_to = wgnn_ref[IN_PAD + GNN_DIM:IN_PAD + 2 * GNN_DIM, 0:TREE_PAD]
    t = _mmb(pooled, w_to) + vec(TREE_PAD)
    t = _leaky(_layernorm_padded(t, vec(TREE_PAD), vec(TREE_PAD), TREE_DIM))

    # ---- mutation_features MLP (Linear -> [Linear, LN, LN] x L -> Linear);
    #      no nonlinearity between layers, matching the PyTorch module ----
    m = mut_ref[...]                              # (gc, m_pad) bf16
    off = 0
    m = _mmb(m, wmut_ref[off:off + m_pad, :]) + vec(H)
    off += m_pad
    for _ in range(LAYERS):
        m = _mmb(m, wmut_ref[off:off + H, :]) + vec(H)
        off += H
        m = _layernorm(m, vec(H), vec(H))
        m = _layernorm(m, vec(H), vec(H))
    m = _mmb(m, wmut_ref[off:off + H, 0:TREE_PAD]) + vec(TREE_PAD)  # (gc, 128)

    # ---- combined head: cat(t, m, t*m) @ W0 as three lane-padded split matmuls ----
    c = (_mmb(t, wcomb_ref[0:TREE_PAD, :]) +
         _mmb(m, wcomb_ref[TREE_PAD:2 * TREE_PAD, :]) +
         _mmb(t * m, wcomb_ref[2 * TREE_PAD:3 * TREE_PAD, :]) + vec(H))
    off = 3 * TREE_PAD
    for _ in range(LAYERS):
        c = _mmb(c, wcomb_ref[off:off + H, :]) + vec(H)
        off += H
        c = _leaky(_layernorm(c, vec(H), vec(H)))
    c = _mmb(c, wcomb_ref[off:off + H, :]) + vec(H)                 # combined[-1]

    # ---- out: Linear(H, 1) as a VPU multiply + lane reduction (no 1-col MXU) ----
    w_out = vec(H)                                # (1, H) f32
    b_out = vec(1)                                # (1, 1) f32
    out_ref[...] = jnp.sum(c * w_out, axis=-1, keepdims=True) + b_out


# ---------------------------------------------------------------------------
# Plain-JAX glue: GCN normalization built per-chunk (block-diagonal A_hat).
# Build this ONCE when edge_index / batch are static across steps and cache it.
# TODO(synk): the sparse scatter-based gcn_norm has no clean Pallas equivalent
# at this scale; it is materialized as dense per-chunk adjacency blocks here.
# ---------------------------------------------------------------------------
def gcn_norm_chunked(edge_index, num_nodes, nodes_per_chunk):
    n_chunks = num_nodes // nodes_per_chunk
    row, col = edge_index[0], edge_index[1]            # source -> target
    self_idx = jnp.arange(num_nodes, dtype=edge_index.dtype)
    row = jnp.concatenate([row, self_idx])
    col = jnp.concatenate([col, self_idx])
    ew = jnp.ones(row.shape[0], jnp.float32)
    deg = jnp.zeros((num_nodes,), jnp.float32).at[col].add(ew)
    dis = jnp.where(deg > 0, jax.lax.rsqrt(deg), 0.0)
    norm = dis[row] * dis[col]
    # Graphs are contiguous and never span chunks, so row/col share a chunk id.
    chunk = col // nodes_per_chunk
    a = jnp.zeros((n_chunks, nodes_per_chunk, nodes_per_chunk), jnp.float32)
    a = a.at[chunk, col % nodes_per_chunk, row % nodes_per_chunk].add(norm)
    return a.astype(jnp.bfloat16)                      # (G, NC, NC)


# ---------------------------------------------------------------------------
# Parameter construction + packing into slabs.
# ---------------------------------------------------------------------------
def make_params(key, mutation_size, hidden_size, layers=LAYERS):
    H = hidden_size
    assert H >= TREE_PAD and H % 128 == 0, "hidden_size must be a multiple of 128 (>=128)"
    m_pad = _round_up(mutation_size, 16)
    keys = iter(jax.random.split(key, 128))

    def w_init(fan_in, fan_out):
        s = 1.0 / np.sqrt(np.float32(fan_in))
        return jax.random.uniform(next(keys), (fan_in, fan_out), jnp.float32, -s, s)

    vec_rows = []

    def add_lin_b(fan_in, fan_out):
        s = 1.0 / np.sqrt(np.float32(fan_in))
        vec_rows.append(jax.random.uniform(next(keys), (fan_out,), jnp.float32, -s, s))

    def add_ln(dim):  # PyTorch default: gamma=1, beta=0
        vec_rows.append(jnp.ones((dim,), jnp.float32))
        vec_rows.append(jnp.zeros((dim,), jnp.float32))

    def pad2(w, rows, lanes):
        return jnp.pad(w, ((0, rows - w.shape[0]), (0, lanes - w.shape[1])))

    # GNN path (order of vec_rows == consumption order in the kernel)
    g1_w = w_init(IN_DIM, GNN_DIM);   add_lin_b(IN_DIM, GNN_DIM);   add_ln(GNN_DIM)
    g2_w = w_init(GNN_DIM, GNN_DIM);  add_lin_b(GNN_DIM, GNN_DIM);  add_ln(GNN_DIM)
    to_w = w_init(GNN_DIM, TREE_DIM); add_lin_b(GNN_DIM, TREE_DIM); add_ln(TREE_DIM)

    # mutation path
    mi_w = w_init(mutation_size, H);  add_lin_b(mutation_size, H)
    mut_hh = []
    for _ in range(layers):
        mut_hh.append(w_init(H, H));  add_lin_b(H, H); add_ln(H); add_ln(H)
    mo_w = w_init(H, TREE_DIM);       add_lin_b(H, TREE_DIM)

    # combined path (cat(t, m, t*m): three TREE_PAD-row zero-padded sections)
    c0_w = w_init(3 * TREE_DIM, H);   add_lin_b(3 * TREE_DIM, H)
    comb_hh = []
    for _ in range(layers):
        comb_hh.append(w_init(H, H)); add_lin_b(H, H); add_ln(H)
    cl_w = w_init(H, H);              add_lin_b(H, H)

    # final Linear(H, 1): weight as a vec row (VPU dot in the kernel) + bias row
    out_w = w_init(H, 1)
    vec_rows.append(out_w[:, 0])
    add_lin_b(H, 1)

    w_gnn = jnp.concatenate(
        [pad2(g1_w, IN_PAD, GNN_DIM), g2_w, pad2(to_w, GNN_DIM, GNN_DIM)],
        axis=0).astype(jnp.bfloat16)                      # (IN_PAD + 2*256, 256)
    w_mut = jnp.concatenate(
        [pad2(mi_w, m_pad, H)] + mut_hh + [pad2(mo_w, H, H)],
        axis=0).astype(jnp.bfloat16)                      # (m_pad + (L+1)*H, H)
    c0_sections = [pad2(c0_w[i * TREE_DIM:(i + 1) * TREE_DIM, :], TREE_PAD, H)
                   for i in range(3)]
    w_comb = jnp.concatenate(c0_sections + comb_hh + [cl_w],
                             axis=0).astype(jnp.bfloat16)  # (3*128 + (L+1)*H, H)

    vl = max(GNN_DIM, H)
    r = _round_up(len(vec_rows), 8)
    vecs_np = np.zeros((r, vl), np.float32)
    for i, v in enumerate(vec_rows):
        vecs_np[i, :v.shape[0]] = np.asarray(v)
    vecs = jnp.asarray(vecs_np)

    return {"w_gnn": w_gnn, "w_mut": w_mut, "w_comb": w_comb, "vecs": vecs}


# ---------------------------------------------------------------------------
# Forward wrapper (jit it; pass the cached per-chunk A_hat built once).
# ---------------------------------------------------------------------------
def dqn_gnn_forward(tree_x, mutation_x, a_hat_chunks, params):
    n_chunks, nc, _ = a_hat_chunks.shape
    n_graphs = mutation_x.shape[0]
    assert n_graphs % n_chunks == 0
    gc = n_graphs // n_chunks
    assert nc % gc == 0                           # fixed nodes per graph
    assert tree_x.shape[0] == n_chunks * nc

    H = params["w_mut"].shape[1]
    m_pad = params["w_mut"].shape[0] - (LAYERS + 1) * H

    x = jnp.pad(tree_x.astype(jnp.bfloat16),
                ((0, 0), (0, IN_PAD - tree_x.shape[1])))            # (N, IN_PAD)
    mut = jnp.pad(mutation_x.astype(jnp.bfloat16),
                  ((0, 0), (0, m_pad - mutation_x.shape[1])))       # (B, m_pad)

    wgnn = params["w_gnn"]; wmut = params["w_mut"]
    wcomb = params["w_comb"]; vecs = params["vecs"]

    weight_bytes = sum(int(w.size) * w.dtype.itemsize for w in (wgnn, wmut, wcomb, vecs))
    chunk_bytes = 2 * (nc * IN_PAD * 2 + nc * nc * 2 + gc * m_pad * 2 + gc * 4)
    vmem_limit = int(min(max(weight_bytes + 2 * chunk_bytes + (8 << 20), 16 << 20),
                         48 << 20))

    return pl.pallas_call(
        dqn_gnn_kernel,
        out_shape=jax.ShapeDtypeStruct((n_graphs, 1), jnp.float32),
        grid=(n_chunks,),
        in_specs=[
            pl.BlockSpec((nc, IN_PAD), lambda i: (i, 0)),            # node features
            pl.BlockSpec((None, nc, nc), lambda i: (i, 0, 0)),       # per-chunk A_hat
            pl.BlockSpec((gc, m_pad), lambda i: (i, 0)),             # mutation features
            pl.BlockSpec(wgnn.shape, lambda i: (0, 0)),              # resident weights
            pl.BlockSpec(wmut.shape, lambda i: (0, 0)),
            pl.BlockSpec(wcomb.shape, lambda i: (0, 0)),
            pl.BlockSpec(vecs.shape, lambda i: (0, 0)),
        ],
        out_specs=pl.BlockSpec((gc, 1), lambda i: (i, 0)),
        compiler_params=pltpu.CompilerParams(
            dimension_semantics=("parallel",),                       # v7x: 2 TCs
            vmem_limit_bytes=vmem_limit),
    )(x, a_hat_chunks, mut, wgnn, wmut, wcomb, vecs)


if __name__ == "__main__":
    key = jax.random.PRNGKey(0)
    k_tree, k_mut, k_params = jax.random.split(key, 3)

    NODES_PER_GRAPH = 8
    GRAPHS_PER_CHUNK = 32        # 256 node rows / 32 graph rows per grid step
    N_CHUNKS = 2                 # grid steps; sharded across TCs on v7x
    N_GRAPHS = GRAPHS_PER_CHUNK * N_CHUNKS
    N_NODES = NODES_PER_GRAPH * N_GRAPHS
    MUTATION_SIZE = 16
    HIDDEN = 128

    tree_x = jax.random.normal(k_tree, (N_NODES, IN_DIM), jnp.float32)
    mutation_x = jax.random.normal(k_mut, (N_GRAPHS, MUTATION_SIZE), jnp.float32)
    batch = jnp.repeat(jnp.arange(N_GRAPHS, dtype=jnp.int32), NODES_PER_GRAPH)
    # contiguous PyG-style batching is required by the pooling reshape
    assert bool(jnp.all(batch == jnp.sort(batch)))

    # small undirected chain graph per batch element
    src, dst = [], []
    for g in range(N_GRAPHS):
        base = g * NODES_PER_GRAPH
        for i in range(NODES_PER_GRAPH - 1):
            src += [base + i, base + i + 1]
            dst += [base + i + 1, base + i]
    edge_index = jnp.array([src, dst], jnp.int32)

    params = make_params(k_params, MUTATION_SIZE, HIDDEN)

    # A_hat built once (edge_index / batch are static across replay steps).
    a_hat_chunks = gcn_norm_chunked(edge_index, N_NODES,
                                    GRAPHS_PER_CHUNK * NODES_PER_GRAPH)

    fwd = jax.jit(dqn_gnn_forward)
    out = jax.block_until_ready(fwd(tree_x, mutation_x, a_hat_chunks, params))
    assert out.shape == (N_GRAPHS, 1)
    assert bool(jnp.all(jnp.isfinite(out)))
    print("KERNEL_OK")
</pallas_src>

<mosaic_0001>
module attributes {stable_mosaic.version = 11 : i64} {
  func.func @dqn_gnn_kernel(%arg0: i32, %arg1: memref<256x16xbf16, #tpu.memory_space<vmem>>, %arg2: memref<1x256x256xbf16, #tpu.memory_space<vmem>>, %arg3: memref<32x16xbf16, #tpu.memory_space<vmem>>, %arg4: memref<528x256xbf16, #tpu.memory_space<vmem>>, %arg5: memref<528x128xbf16, #tpu.memory_space<vmem>>, %arg6: memref<896x128xbf16, #tpu.memory_space<vmem>>, %arg7: memref<40x256xf32, #tpu.memory_space<vmem>>, %arg8: memref<32x1xf32, #tpu.memory_space<vmem>>) attributes {dimension_semantics = [#tpu.dimension_semantics<parallel>], iteration_bounds = array<i64: 2>, scalar_prefetch = 0 : i64, scratch_operands = 0 : i64, tpu.core_type = #tpu.core_type<tc>, window_params = [{transform_indices = @transform_0, window_bounds = array<i64: 256, 16>}, {transform_indices = @transform_1, window_bounds = array<i64: 1, 256, 256>}, {transform_indices = @transform_2, window_bounds = array<i64: 32, 16>}, {pipeline_mode = #tpu.pipeline_mode<synchronous>, transform_indices = @transform_3, window_bounds = array<i64: 528, 256>}, {pipeline_mode = #tpu.pipeline_mode<synchronous>, transform_indices = @transform_4, window_bounds = array<i64: 528, 128>}, {pipeline_mode = #tpu.pipeline_mode<synchronous>, transform_indices = @transform_5, window_bounds = array<i64: 896, 128>}, {pipeline_mode = #tpu.pipeline_mode<synchronous>, transform_indices = @transform_6, window_bounds = array<i64: 40, 256>}, {transform_indices = @transform_7, window_bounds = array<i64: 32, 1>}]} {
    %c0 = arith.constant 0 : index
    %c0_0 = arith.constant 0 : index
    %0 = vector.load %arg1[%c0, %c0_0] : memref<256x16xbf16, #tpu.memory_space<vmem>>, vector<256x16xbf16>
    %c0_1 = arith.constant 0 : index
    %c0_2 = arith.constant 0 : index
    %c0_3 = arith.constant 0 : index
    %1 = vector.load %arg2[%c0_1, %c0_2, %c0_3] : memref<1x256x256xbf16, #tpu.memory_space<vmem>>, vector<1x256x256xbf16>
    %2 = vector.shape_cast %1 : vector<1x256x256xbf16> to vector<256x256xbf16>
    %cst = arith.constant dense<0.000000e+00> : vector<256x16xf32>
    %3 = tpu.matmul %2, %0, %cst {dimension_numbers = #tpu.dot_dimension_numbers<[1], [0], [0], [1], [0, 0, 1, 1], [], []>} : vector<256x256xbf16>, vector<256x16xbf16>, vector<256x16xf32> -> vector<256x16xf32>
    %c0_4 = arith.constant 0 : index
    %c0_5 = arith.constant 0 : index
    %4 = vector.load %arg4[%c0_4, %c0_5] : memref<528x256xbf16, #tpu.memory_space<vmem>>, vector<16x256xbf16>
    %5 = arith.truncf %3 : vector<256x16xf32> to vector<256x16xbf16>
    %cst_6 = arith.constant dense<0.000000e+00> : vector<256x256xf32>
    %6 = tpu.matmul %5, %4, %cst_6 {dimension_numbers = #tpu.dot_dimension_numbers<[1], [0], [0], [1], [0, 0, 1, 1], [], []>} : vector<256x16xbf16>, vector<16x256xbf16>, vector<256x256xf32> -> vector<256x256xf32>
    %c0_7 = arith.constant 0 : index
    %c0_8 = arith.constant 0 : index
    %7 = vector.load %arg7[%c0_7, %c0_8] : memref<40x256xf32, #tpu.memory_space<vmem>>, vector<1x256xf32>
    %8 = vector.broadcast %7 : vector<1x256xf32> to vector<256x256xf32>
    %9 = arith.addf %6, %8 : vector<256x256xf32>
    %c1 = arith.constant 1 : index
    %c0_9 = arith.constant 0 : index
    %10 = vector.load %arg7[%c1, %c0_9] : memref<40x256xf32, #tpu.memory_space<vmem>>, vector<1x256xf32>
    %c2 = arith.constant 2 : index
    %c0_10 = arith.constant 0 : index
    %11 = vector.load %arg7[%c2, %c0_10] : memref<40x256xf32, #tpu.memory_space<vmem>>, vector<1x256xf32>
    %cst_11 = arith.constant dense<0.000000e+00> : vector<256xf32>
    %12 = vector.multi_reduction <add>, %9, %cst_11 [1] : vector<256x256xf32> to vector<256xf32>
    %13 = vector.shape_cast %12 : vector<256xf32> to vector<256x1xf32>
    %cst_12 = arith.constant 2.560000e+02 : f32
    %14 = vector.broadcast %cst_12 : f32 to vector<256x1xf32>
    %15 = arith.divf %13, %14 : vector<256x1xf32>
    %16 = vector.broadcast %15 : vector<256x1xf32> to vector<256x256xf32>
    %17 = arith.subf %9, %16 : vector<256x256xf32>
    %18 = arith.mulf %17, %17 : vector<256x256xf32>
    %cst_13 = arith.constant dense<0.000000e+00> : vector<256xf32>
    %19 = vector.multi_reduction <add>, %18, %cst_13 [1] : vector<256x256xf32> to vector<256xf32>
    %20 = vector.shape_cast %19 : vector<256xf32> to vector<256x1xf32>
    %cst_14 = arith.constant 2.560000e+02 : f32
    %21 = vector.broadcast %cst_14 : f32 to vector<256x1xf32>
    %22 = arith.divf %20, %21 : vector<256x1xf32>
    %cst_15 = arith.constant 9.99999974E-6 : f32
    %23 = vector.broadcast %cst_15 : f32 to vector<256x1xf32>
    %24 = arith.addf %22, %23 : vector<256x1xf32>
    %25 = math.rsqrt %24 : vector<256x1xf32>
    %26 = vector.broadcast %25 : vector<256x1xf32> to vector<256x256xf32>
    %27 = arith.mulf %17, %26 : vector<256x256xf32>
    %28 = vector.broadcast %10 : vector<1x256xf32> to vector<256x256xf32>
    %29 = arith.mulf %27, %28 : vector<256x256xf32>
    %30 = vector.broadcast %11 : vector<1x256xf32> to vector<256x256xf32>
    %31 = arith.addf %29, %30 : vector<256x256xf32>
    %cst_16 = arith.constant 0.000000e+00 : f32
    %32 = vector.broadcast %cst_16 : f32 to vector<256x256xf32>
    %33 = arith.cmpf ogt, %31, %32 : vector<256x256xf32>
    %cst_17 = arith.constant 0.00999999977 : f32
    %34 = vector.broadcast %cst_17 : f32 to vector<256x256xf32>
    %35 = arith.mulf %34, %31 : vector<256x256xf32>
    %36 = arith.select %33, %31, %35 : vector<256x256xi1>, vector<256x256xf32>
    %c16 = arith.constant 16 : index
    %c0_18 = arith.constant 0 : index
    %37 = vector.load %arg4[%c16, %c0_18] : memref<528x256xbf16, #tpu.memory_space<vmem>>, vector<256x256xbf16>
    %38 = arith.truncf %36 : vector<256x256xf32> to vector<256x256xbf16>
    %cst_19 = arith.constant dense<0.000000e+00> : vector<256x256xf32>
    %39 = tpu.matmul %38, %37, %cst_19 {dimension_numbers = #tpu.dot_dimension_numbers<[1], [0], [0], [1], [0, 0, 1, 1], [], []>} : vector<256x256xbf16>, vector<256x256xbf16>, vector<256x256xf32> -> vector<256x256xf32>
    %40 = arith.truncf %39 : vector<256x256xf32> to vector<256x256xbf16>
    %cst_20 = arith.constant dense<0.000000e+00> : vector<256x256xf32>
    %41 = tpu.matmul %2, %40, %cst_20 {dimension_numbers = #tpu.dot_dimension_numbers<[1], [0], [0], [1], [0, 0, 1, 1], [], []>} : vector<256x256xbf16>, vector<256x256xbf16>, vector<256x256xf32> -> vector<256x256xf32>
    %c3 = arith.constant 3 : index
    %c0_21 = arith.constant 0 : index
    %42 = vector.load %arg7[%c3, %c0_21] : memref<40x256xf32, #tpu.memory_space<vmem>>, vector<1x256xf32>
    %43 = vector.broadcast %42 : vector<1x256xf32> to vector<256x256xf32>
    %44 = arith.addf %41, %43 : vector<256x256xf32>
    %c4 = arith.constant 4 : index
    %c0_22 = arith.constant 0 : index
    %45 = vector.load %arg7[%c4, %c0_22] : memref<40x256xf32, #tpu.memory_space<vmem>>, vector<1x256xf32>
    %c5 = arith.constant 5 : index
    %c0_23 = arith.constant 0 : index
    %46 = vector.load %arg7[%c5, %c0_23] : memref<40x256xf32, #tpu.memory_space<vmem>>, vector<1x256xf32>
    %cst_24 = arith.constant dense<0.000000e+00> : vector<256xf32>
    %47 = vector.multi_reduction <add>, %44, %cst_24 [1] : vector<256x256xf32> to vector<256xf32>
    %48 = vector.shape_cast %47 : vector<256xf32> to vector<256x1xf32>
    %cst_25 = arith.constant 2.560000e+02 : f32
    %49 = vector.broadcast %cst_25 : f32 to vector<256x1xf32>
    %50 = arith.divf %48, %49 : vector<256x1xf32>
    %51 = vector.broadcast %50 : vector<256x1xf32> to vector<256x256xf32>
    %52 = arith.subf %44, %51 : vector<256x256xf32>
    %53 = arith.mulf %52, %52 : vector<256x256xf32>
    %cst_26 = arith.constant dense<0.000000e+00> : vector<256xf32>
    %54 = vector.multi_reduction <add>, %53, %cst_26 [1] : vector<256x256xf32> to vector<256xf32>
    %55 = vector.shape_cast %54 : vector<256xf32> to vector<256x1xf32>
    %cst_27 = arith.constant 2.560000e+02 : f32
    %56 = vector.broadcast %cst_27 : f32 to vector<256x1xf32>
    %57 = arith.divf %55, %56 : vector<256x1xf32>
    %cst_28 = arith.constant 9.99999974E-6 : f32
    %58 = vector.broadcast %cst_28 : f32 to vector<256x1xf32>
    %59 = arith.addf %57, %58 : vector<256x1xf32>
    %60 = math.rsqrt %59 : vector<256x1xf32>
    %61 = vector.broadcast %60 : vector<256x1xf32> to vector<256x256xf32>
    %62 = arith.mulf %52, %61 : vector<256x256xf32>
    %63 = vector.broadcast %45 : vector<1x256xf32> to vector<256x256xf32>
    %64 = arith.mulf %62, %63 : vector<256x256xf32>
    %65 = vector.broadcast %46 : vector<1x256xf32> to vector<256x256xf32>
    %66 = arith.addf %64, %65 : vector<256x256xf32>
    %cst_29 = arith.constant 0.000000e+00 : f32
    %67 = vector.broadcast %cst_29 : f32 to vector<256x256xf32>
    %68 = arith.cmpf ogt, %66, %67 : vector<256x256xf32>
    %cst_30 = arith.constant 0.00999999977 : f32
    %69 = vector.broadcast %cst_30 : f32 to vector<256x256xf32>
    %70 = arith.mulf %69, %66 : vector<256x256xf32>
    %71 = arith.select %68, %66, %70 : vector<256x256xi1>, vector<256x256xf32>
    %72 = vector.shape_cast %71 : vector<256x256xf32> to vector<32x8x256xf32>
    %cst_31 = arith.constant dense<0xFF800000> : vector<32x256xf32>
    %73 = vector.multi_reduction <maximumf>, %72, %cst_31 [1] : vector<32x8x256xf32> to vector<32x256xf32>
    %c272 = arith.constant 272 : index
    %c0_32 = arith.constant 0 : index
    %74 = vector.load %arg4[%c272, %c0_32] : memref<528x256xbf16, #tpu.memory_space<vmem>>, vector<256x128xbf16>
    %75 = arith.truncf %73 : vector<32x256xf32> to vector<32x256xbf16>
    %cst_33 = arith.constant dense<0.000000e+00> : vector<32x128xf32>
    %76 = tpu.matmul %75, %74, %cst_33 {dimension_numbers = #tpu.dot_dimension_numbers<[1], [0], [0], [1], [0, 0, 1, 1], [], []>} : vector<32x256xbf16>, vector<256x128xbf16>, vector<32x128xf32> -> vector<32x128xf32>
    %c6 = arith.constant 6 : index
    %c0_34 = arith.constant 0 : index
    %77 = vector.load %arg7[%c6, %c0_34] : memref<40x256xf32, #tpu.memory_space<vmem>>, vector<1x128xf32>
    %78 = vector.broadcast %77 : vector<1x128xf32> to vector<32x128xf32>
    %79 = arith.addf %76, %78 : vector<32x128xf32>
    %c7 = arith.constant 7 : index
    %c0_35 = arith.constant 0 : index
    %80 = vector.load %arg7[%c7, %c0_35] : memref<40x256xf32, #tpu.memory_space<vmem>>, vector<1x128xf32>
    %c8 = arith.constant 8 : index
    %c0_36 = arith.constant 0 : index
    %81 = vector.load %arg7[%c8, %c0_36] : memref<40x256xf32, #tpu.memory_space<vmem>>, vector<1x128xf32>
    %cst_37 = arith.constant dense<0.000000e+00> : vector<32xf32>
    %82 = vector.multi_reduction <add>, %79, %cst_37 [1] : vector<32x128xf32> to vector<32xf32>
    %83 = vector.shape_cast %82 : vector<32xf32> to vector<32x1xf32>
    %84 = arith.mulf %79, %79 : vector<32x128xf32>
    %cst_38 = arith.constant dense<0.000000e+00> : vector<32xf32>
    %85 = vector.multi_reduction <add>, %84, %cst_38 [1] : vector<32x128xf32> to vector<32xf32>
    %86 = vector.shape_cast %85 : vector<32xf32> to vector<32x1xf32>
    %cst_39 = arith.constant 1.562500e-02 : f32
    %87 = vector.broadcast %cst_39 : f32 to vector<32x1xf32>
    %88 = arith.mulf %83, %87 : vector<32x1xf32>
    %cst_40 = arith.constant 1.562500e-02 : f32
    %89 = vector.broadcast %cst_40 : f32 to vector<32x1xf32>
    %90 = arith.mulf %86, %89 : vector<32x1xf32>
    %91 = arith.mulf %88, %88 : vector<32x1xf32>
    %92 = arith.subf %90, %91 : vector<32x1xf32>
    %93 = vector.broadcast %88 : vector<32x1xf32> to vector<32x128xf32>
    %94 = arith.subf %79, %93 : vector<32x128xf32>
    %cst_41 = arith.constant 9.99999974E-6 : f32
    %95 = vector.broadcast %cst_41 : f32 to vector<32x1xf32>
    %96 = arith.addf %92, %95 : vector<32x1xf32>
    %97 = math.rsqrt %96 : vector<32x1xf32>
    %98 = vector.broadcast %97 : vector<32x1xf32> to vector<32x128xf32>
    %99 = arith.mulf %94, %98 : vector<32x128xf32>
    %100 = vector.broadcast %80 : vector<1x128xf32> to vector<32x128xf32>
    %101 = arith.mulf %99, %100 : vector<32x128xf32>
    %102 = vector.broadcast %81 : vector<1x128xf32> to vector<32x128xf32>
    %103 = arith.addf %101, %102 : vector<32x128xf32>
    %cst_42 = arith.constant 0.000000e+00 : f32
    %104 = vector.broadcast %cst_42 : f32 to vector<32x128xf32>
    %105 = arith.cmpf ogt, %103, %104 : vector<32x128xf32>
    %cst_43 = arith.constant 0.00999999977 : f32
    %106 = vector.broadcast %cst_43 : f32 to vector<32x128xf32>
    %107 = arith.mulf %106, %103 : vector<32x128xf32>
    %108 = arith.select %105, %103, %107 : vector<32x128xi1>, vector<32x128xf32>
    %c0_44 = arith.constant 0 : index
    %c0_45 = arith.constant 0 : index
    %109 = vector.load %arg3[%c0_44, %c0_45] : memref<32x16xbf16, #tpu.memory_space<vmem>>, vector<32x16xbf16>
    %c0_46 = arith.constant 0 : index
    %c0_47 = arith.constant 0 : index
    %110 = vector.load %arg5[%c0_46, %c0_47] : memref<528x128xbf16, #tpu.memory_space<vmem>>, vector<16x128xbf16>
    %cst_48 = arith.constant dense<0.000000e+00> : vector<32x128xf32>
    %111 = tpu.matmul %109, %110, %cst_48 {dimension_numbers = #tpu.dot_dimension_numbers<[1], [0], [0], [1], [0, 0, 1, 1], [], []>} : vector<32x16xbf16>, vector<16x128xbf16>, vector<32x128xf32> -> vector<32x128xf32>
    %c9 = arith.constant 9 : index
    %c0_49 = arith.constant 0 : index
    %112 = vector.load %arg7[%c9, %c0_49] : memref<40x256xf32, #tpu.memory_space<vmem>>, vector<1x128xf32>
    %113 = vector.broadcast %112 : vector<1x128xf32> to vector<32x128xf32>
    %114 = arith.addf %111, %113 : vector<32x128xf32>
    %c16_50 = arith.constant 16 : index
    %c0_51 = arith.constant 0 : index
    %115 = vector.load %arg5[%c16_50, %c0_51] : memref<528x128xbf16, #tpu.memory_space<vmem>>, vector<128x128xbf16>
    %116 = arith.truncf %114 : vector<32x128xf32> to vector<32x128xbf16>
    %cst_52 = arith.constant dense<0.000000e+00> : vector<32x128xf32>
    %117 = tpu.matmul %116, %115, %cst_52 {dimension_numbers = #tpu.dot_dimension_numbers<[1], [0], [0], [1], [0, 0, 1, 1], [], []>} : vector<32x128xbf16>, vector<128x128xbf16>, vector<32x128xf32> -> vector<32x128xf32>
    %c10 = arith.constant 10 : index
    %c0_53 = arith.constant 0 : index
    %118 = vector.load %arg7[%c10, %c0_53] : memref<40x256xf32, #tpu.memory_space<vmem>>, vector<1x128xf32>
    %119 = vector.broadcast %118 : vector<1x128xf32> to vector<32x128xf32>
    %120 = arith.addf %117, %119 : vector<32x128xf32>
    %c11 = arith.constant 11 : index
    %c0_54 = arith.constant 0 : index
    %121 = vector.load %arg7[%c11, %c0_54] : memref<40x256xf32, #tpu.memory_space<vmem>>, vector<1x128xf32>
    %c12 = arith.constant 12 : index
    %c0_55 = arith.constant 0 : index
    %122 = vector.load %arg7[%c12, %c0_55] : memref<40x256xf32, #tpu.memory_space<vmem>>, vector<1x128xf32>
    %cst_56 = arith.constant dense<0.000000e+00> : vector<32xf32>
    %123 = vector.multi_reduction <add>, %120, %cst_56 [1] : vector<32x128xf32> to vector<32xf32>
    %124 = vector.shape_cast %123 : vector<32xf32> to vector<32x1xf32>
    %cst_57 = arith.constant 1.280000e+02 : f32
    %125 = vector.broadcast %cst_57 : f32 to vector<32x1xf32>
    %126 = arith.divf %124, %125 : vector<32x1xf32>
    %127 = vector.broadcast %126 : vector<32x1xf32> to vector<32x128xf32>
    %128 = arith.subf %120, %127 : vector<32x128xf32>
    %129 = arith.mulf %128, %128 : vector<32x128xf32>
    %cst_58 = arith.constant dense<0.000000e+00> : vector<32xf32>
    %130 = vector.multi_reduction <add>, %129, %cst_58 [1] : vector<32x128xf32> to vector<32xf32>
    %131 = vector.shape_cast %130 : vector<32xf32> to vector<32x1xf32>
    %cst_59 = arith.constant 1.280000e+02 : f32
    %132 = vector.broadcast %cst_59 : f32 to vector<32x1xf32>
    %133 = arith.divf %131, %132 : vector<32x1xf32>
    %cst_60 = arith.constant 9.99999974E-6 : f32
    %134 = vector.broadcast %cst_60 : f32 to vector<32x1xf32>
    %135 = arith.addf %133, %134 : vector<32x1xf32>
    %136 = math.rsqrt %135 : vector<32x1xf32>
    %137 = vector.broadcast %136 : vector<32x1xf32> to vector<32x128xf32>
    %138 = arith.mulf %128, %137 : vector<32x128xf32>
    %139 = vector.broadcast %121 : vector<1x128xf32> to vector<32x128xf32>
    %140 = arith.mulf %138, %139 : vector<32x128xf32>
    %141 = vector.broadcast %122 : vector<1x128xf32> to vector<32x128xf32>
    %142 = arith.addf %140, %141 : vector<32x128xf32>
    %c13 = arith.constant 13 : index
    %c0_61 = arith.constant 0 : index
    %143 = vector.load %arg7[%c13, %c0_61] : memref<40x256xf32, #tpu.memory_space<vmem>>, vector<1x128xf32>
    %c14 = arith.constant 14 : index
    %c0_62 = arith.constant 0 : index
    %144 = vector.load %arg7[%c14, %c0_62] : memref<40x256xf32, #tpu.memory_space<vmem>>, vector<1x128xf32>
    %cst_63 = arith.constant dense<0.000000e+00> : vector<32xf32>
    %145 = vector.multi_reduction <add>, %142, %cst_63 [1] : vector<32x128xf32> to vector<32xf32>
    %146 = vector.shape_cast %145 : vector<32xf32> to vector<32x1xf32>
    %cst_64 = arith.constant 1.280000e+02 : f32
    %147 = vector.broadcast %cst_64 : f32 to vector<32x1xf32>
    %148 = arith.divf %146, %147 : vector<32x1xf32>
    %149 = vector.broadcast %148 : vector<32x1xf32> to vector<32x128xf32>
    %150 = arith.subf %142, %149 : vector<32x128xf32>
    %151 = arith.mulf %150, %150 : vector<32x128xf32>
    %cst_65 = arith.constant dense<0.000000e+00> : vector<32xf32>
    %152 = vector.multi_reduction <add>, %151, %cst_65 [1] : vector<32x128xf32> to vector<32xf32>
    %153 = vector.shape_cast %152 : vector<32xf32> to vector<32x1xf32>
    %cst_66 = arith.constant 1.280000e+02 : f32
    %154 = vector.broadcast %cst_66 : f32 to vector<32x1xf32>
    %155 = arith.divf %153, %154 : vector<32x1xf32>
    %cst_67 = arith.constant 9.99999974E-6 : f32
    %156 = vector.broadcast %cst_67 : f32 to vector<32x1xf32>
    %157 = arith.addf %155, %156 : vector<32x1xf32>
    %158 = math.rsqrt %157 : vector<32x1xf32>
    %159 = vector.broadcast %158 : vector<32x1xf32> to vector<32x128xf32>
    %160 = arith.mulf %150, %159 : vector<32x128xf32>
    %161 = vector.broadcast %143 : vector<1x128xf32> to vector<32x128xf32>
    %162 = arith.mulf %160, %161 : vector<32x128xf32>
    %163 = vector.broadcast %144 : vector<1x128xf32> to vector<32x128xf32>
    %164 = arith.addf %162, %163 : vector<32x128xf32>
    %c144 = arith.constant 144 : index
    %c0_68 = arith.constant 0 : index
    %165 = vector.load %arg5[%c144, %c0_68] : memref<528x128xbf16, #tpu.memory_space<vmem>>, vector<128x128xbf16>
    %166 = arith.truncf %164 : vector<32x128xf32> to vector<32x128xbf16>
    %cst_69 = arith.constant dense<0.000000e+00> : vector<32x128xf32>
    %167 = tpu.matmul %166, %165, %cst_69 {dimension_numbers = #tpu.dot_dimension_numbers<[1], [0], [0], [1], [0, 0, 1, 1], [], []>} : vector<32x128xbf16>, vector<128x128xbf16>, vector<32x128xf32> -> vector<32x128xf32>
    %c15 = arith.constant 15 : index
    %c0_70 = arith.constant 0 : index
    %168 = vector.load %arg7[%c15, %c0_70] : memref<40x256xf32, #tpu.memory_space<vmem>>, vector<1x128xf32>
    %169 = vector.broadcast %168 : vector<1x128xf32> to vector<32x128xf32>
    %170 = arith.addf %167, %169 : vector<32x128xf32>
    %c16_71 = arith.constant 16 : index
    %c0_72 = arith.constant 0 : index
    %171 = vector.load %arg7[%c16_71, %c0_72] : memref<40x256xf32, #tpu.memory_space<vmem>>, vector<1x128xf32>
    %c17 = arith.constant 17 : index
    %c0_73 = arith.constant 0 : index
    %172 = vector.load %arg7[%c17, %c0_73] : memref<40x256xf32, #tpu.memory_space<vmem>>, vector<1x128xf32>
    %cst_74 = arith.constant dense<0.000000e+00> : vector<32xf32>
    %173 = vector.multi_reduction <add>, %170, %cst_74 [1] : vector<32x128xf32> to vector<32xf32>
    %174 = vector.shape_cast %173 : vector<32xf32> to vector<32x1xf32>
    %cst_75 = arith.constant 1.280000e+02 : f32
    %175 = vector.broadcast %cst_75 : f32 to vector<32x1xf32>
    %176 = arith.divf %174, %175 : vector<32x1xf32>
    %177 = vector.broadcast %176 : vector<32x1xf32> to vector<32x128xf32>
    %178 = arith.subf %170, %177 : vector<32x128xf32>
    %179 = arith.mulf %178, %178 : vector<32x128xf32>
    %cst_76 = arith.constant dense<0.000000e+00> : vector<32xf32>
    %180 = vector.multi_reduction <add>, %179, %cst_76 [1] : vector<32x128xf32> to vector<32xf32>
    %181 = vector.shape_cast %180 : vector<32xf32> to vector<32x1xf32>
    %cst_77 = arith.constant 1.280000e+02 : f32
    %182 = vector.broadcast %cst_77 : f32 to vector<32x1xf32>
    %183 = arith.divf %181, %182 : vector<32x1xf32>
    %cst_78 = arith.constant 9.99999974E-6 : f32
    %184 = vector.broadcast %cst_78 : f32 to vector<32x1xf32>
    %185 = arith.addf %183, %184 : vector<32x1xf32>
    %186 = math.rsqrt %185 : vector<32x1xf32>
    %187 = vector.broadcast %186 : vector<32x1xf32> to vector<32x128xf32>
    %188 = arith.mulf %178, %187 : vector<32x128xf32>
    %189 = vector.broadcast %171 : vector<1x128xf32> to vector<32x128xf32>
    %190 = arith.mulf %188, %189 : vector<32x128xf32>
    %191 = vector.broadcast %172 : vector<1x128xf32> to vector<32x128xf32>
    %192 = arith.addf %190, %191 : vector<32x128xf32>
    %c18 = arith.constant 18 : index
    %c0_79 = arith.constant 0 : index
    %193 = vector.load %arg7[%c18, %c0_79] : memref<40x256xf32, #tpu.memory_space<vmem>>, vector<1x128xf32>
    %c19 = arith.constant 19 : index
    %c0_80 = arith.constant 0 : index
    %194 = vector.load %arg7[%c19, %c0_80] : memref<40x256xf32, #tpu.memory_space<vmem>>, vector<1x128xf32>
    %cst_81 = arith.constant dense<0.000000e+00> : vector<32xf32>
    %195 = vector.multi_reduction <add>, %192, %cst_81 [1] : vector<32x128xf32> to vector<32xf32>
    %196 = vector.shape_cast %195 : vector<32xf32> to vector<32x1xf32>
    %cst_82 = arith.constant 1.280000e+02 : f32
    %197 = vector.broadcast %cst_82 : f32 to vector<32x1xf32>
    %198 = arith.divf %196, %197 : vector<32x1xf32>
    %199 = vector.broadcast %198 : vector<32x1xf32> to vector<32x128xf32>
    %200 = arith.subf %192, %199 : vector<32x128xf32>
    %201 = arith.mulf %200, %200 : vector<32x128xf32>
    %cst_83 = arith.constant dense<0.000000e+00> : vector<32xf32>
    %202 = vector.multi_reduction <add>, %201, %cst_83 [1] : vector<32x128xf32> to vector<32xf32>
    %203 = vector.shape_cast %202 : vector<32xf32> to vector<32x1xf32>
    %cst_84 = arith.constant 1.280000e+02 : f32
    %204 = vector.broadcast %cst_84 : f32 to vector<32x1xf32>
    %205 = arith.divf %203, %204 : vector<32x1xf32>
    %cst_85 = arith.constant 9.99999974E-6 : f32
    %206 = vector.broadcast %cst_85 : f32 to vector<32x1xf32>
    %207 = arith.addf %205, %206 : vector<32x1xf32>
    %208 = math.rsqrt %207 : vector<32x1xf32>
    %209 = vector.broadcast %208 : vector<32x1xf32> to vector<32x128xf32>
    %210 = arith.mulf %200, %209 : vector<32x128xf32>
    %211 = vector.broadcast %193 : vector<1x128xf32> to vector<32x128xf32>
    %212 = arith.mulf %210, %211 : vector<32x128xf32>
    %213 = vector.broadcast %194 : vector<1x128xf32> to vector<32x128xf32>
    %214 = arith.addf %212, %213 : vector<32x128xf32>
    %c272_86 = arith.constant 272 : index
    %c0_87 = arith.constant 0 : index
    %215 = vector.load %arg5[%c272_86, %c0_87] : memref<528x128xbf16, #tpu.memory_space<vmem>>, vector<128x128xbf16>
    %216 = arith.truncf %214 : vector<32x128xf32> to vector<32x128xbf16>
    %cst_88 = arith.constant dense<0.000000e+00> : vector<32x128xf32>
    %217 = tpu.matmul %216, %215, %cst_88 {dimension_numbers = #tpu.dot_dimension_numbers<[1], [0], [0], [1], [0, 0, 1, 1], [], []>} : vector<32x128xbf16>, vector<128x128xbf16>, vector<32x128xf32> -> vector<32x128xf32>
    %c20 = arith.constant 20 : index
    %c0_89 = arith.constant 0 : index
    %218 = vector.load %arg7[%c20, %c0_89] : memref<40x256xf32, #tpu.memory_space<vmem>>, vector<1x128xf32>
    %219 = vector.broadcast %218 : vector<1x128xf32> to vector<32x128xf32>
    %220 = arith.addf %217, %219 : vector<32x128xf32>
    %c21 = arith.constant 21 : index
    %c0_90 = arith.constant 0 : index
    %221 = vector.load %arg7[%c21, %c0_90] : memref<40x256xf32, #tpu.memory_space<vmem>>, vector<1x128xf32>
    %c22 = arith.constant 22 : index
    %c0_91 = arith.constant 0 : index
    %222 = vector.load %arg7[%c22, %c0_91] : memref<40x256xf32, #tpu.memory_space<vmem>>, vector<1x128xf32>
    %cst_92 = arith.constant dense<0.000000e+00> : vector<32xf32>
    %223 = vector.multi_reduction <add>, %220, %cst_92 [1] : vector<32x128xf32> to vector<32xf32>
    %224 = vector.shape_cast %223 : vector<32xf32> to vector<32x1xf32>
    %cst_93 = arith.constant 1.280000e+02 : f32
    %225 = vector.broadcast %cst_93 : f32 to vector<32x1xf32>
    %226 = arith.divf %224, %225 : vector<32x1xf32>
    %227 = vector.broadcast %226 : vector<32x1xf32> to vector<32x128xf32>
    %228 = arith.subf %220, %227 : vector<32x128xf32>
    %229 = arith.mulf %228, %228 : vector<32x128xf32>
    %cst_94 = arith.constant dense<0.000000e+00> : vector<32xf32>
    %230 = vector.multi_reduction <add>, %229, %cst_94 [1] : vector<32x128xf32> to vector<32xf32>
    %231 = vector.shape_cast %230 : vector<32xf32> to vector<32x1xf32>
    %cst_95 = arith.constant 1.280000e+02 : f32
    %232 = vector.broadcast %cst_95 : f32 to vector<32x1xf32>
    %233 = arith.divf %231, %232 : vector<32x1xf32>
    %cst_96 = arith.constant 9.99999974E-6 : f32
    %234 = vector.broadcast %cst_96 : f32 to vector<32x1xf32>
    %235 = arith.addf %233, %234 : vector<32x1xf32>
    %236 = math.rsqrt %235 : vector<32x1xf32>
    %237 = vector.broadcast %236 : vector<32x1xf32> to vector<32x128xf32>
    %238 = arith.mulf %228, %237 : vector<32x128xf32>
    %239 = vector.broadcast %221 : vector<1x128xf32> to vector<32x128xf32>
    %240 = arith.mulf %238, %239 : vector<32x128xf32>
    %241 = vector.broadcast %222 : vector<1x128xf32> to vector<32x128xf32>
    %242 = arith.addf %240, %241 : vector<32x128xf32>
    %c23 = arith.constant 23 : index
    %c0_97 = arith.constant 0 : index
    %243 = vector.load %arg7[%c23, %c0_97] : memref<40x256xf32, #tpu.memory_space<vmem>>, vector<1x128xf32>
    %c24 = arith.constant 24 : index
    %c0_98 = arith.constant 0 : index
    %244 = vector.load %arg7[%c24, %c0_98] : memref<40x256xf32, #tpu.memory_space<vmem>>, vector<1x128xf32>
    %cst_99 = arith.constant dense<0.000000e+00> : vector<32xf32>
    %245 = vector.multi_reduction <add>, %242, %cst_99 [1] : vector<32x128xf32> to vector<32xf32>
    %246 = vector.shape_cast %245 : vector<32xf32> to vector<32x1xf32>
    %cst_100 = arith.constant 1.280000e+02 : f32
    %247 = vector.broadcast %cst_100 : f32 to vector<32x1xf32>
    %248 = arith.divf %246, %247 : vector<32x1xf32>
    %249 = vector.broadcast %248 : vector<32x1xf32> to vector<32x128xf32>
    %250 = arith.subf %242, %249 : vector<32x128xf32>
    %251 = arith.mulf %250, %250 : vector<32x128xf32>
    %cst_101 = arith.constant dense<0.000000e+00> : vector<32xf32>
    %252 = vector.multi_reduction <add>, %251, %cst_101 [1] : vector<32x128xf32> to vector<32xf32>
    %253 = vector.shape_cast %252 : vector<32xf32> to vector<32x1xf32>
    %cst_102 = arith.constant 1.280000e+02 : f32
    %254 = vector.broadcast %cst_102 : f32 to vector<32x1xf32>
    %255 = arith.divf %253, %254 : vector<32x1xf32>
    %cst_103 = arith.constant 9.99999974E-6 : f32
    %256 = vector.broadcast %cst_103 : f32 to vector<32x1xf32>
    %257 = arith.addf %255, %256 : vector<32x1xf32>
    %258 = math.rsqrt %257 : vector<32x1xf32>
    %259 = vector.broadcast %258 : vector<32x1xf32> to vector<32x128xf32>
    %260 = arith.mulf %250, %259 : vector<32x128xf32>
    %261 = vector.broadcast %243 : vector<1x128xf32> to vector<32x128xf32>
    %262 = arith.mulf %260, %261 : vector<32x128xf32>
    %263 = vector.broadcast %244 : vector<1x128xf32> to vector<32x128xf32>
    %264 = arith.addf %262, %263 : vector<32x128xf32>
    %c400 = arith.constant 400 : index
    %c0_104 = arith.constant 0 : index
    %265 = vector.load %arg5[%c400, %c0_104] : memref<528x128xbf16, #tpu.memory_space<vmem>>, vector<128x128xbf16>
    %266 = arith.truncf %264 : vector<32x128xf32> to vector<32x128xbf16>
    %cst_105 = arith.constant dense<0.000000e+00> : vector<32x128xf32>
    %267 = tpu.matmul %266, %265, %cst_105 {dimension_numbers = #tpu.dot_dimension_numbers<[1], [0], [0], [1], [0, 0, 1, 1], [], []>} : vector<32x128xbf16>, vector<128x128xbf16>, vector<32x128xf32> -> vector<32x128xf32>
    %c25 = arith.constant 25 : index
    %c0_106 = arith.constant 0 : index
    %268 = vector.load %arg7[%c25, %c0_106] : memref<40x256xf32, #tpu.memory_space<vmem>>, vector<1x128xf32>
    %269 = vector.broadcast %268 : vector<1x128xf32> to vector<32x128xf32>
    %270 = arith.addf %267, %269 : vector<32x128xf32>
    %c0_107 = arith.constant 0 : index
    %c0_108 = arith.constant 0 : index
    %271 = vector.load %arg6[%c0_107, %c0_108] : memref<896x128xbf16, #tpu.memory_space<vmem>>, vector<128x128xbf16>
    %272 = arith.truncf %108 : vector<32x128xf32> to vector<32x128xbf16>
    %cst_109 = arith.constant dense<0.000000e+00> : vector<32x128xf32>
    %273 = tpu.matmul %272, %271, %cst_109 {dimension_numbers = #tpu.dot_dimension_numbers<[1], [0], [0], [1], [0, 0, 1, 1], [], []>} : vector<32x128xbf16>, vector<128x128xbf16>, vector<32x128xf32> -> vector<32x128xf32>
    %c128 = arith.constant 128 : index
    %c0_110 = arith.constant 0 : index
    %274 = vector.load %arg6[%c128, %c0_110] : memref<896x128xbf16, #tpu.memory_space<vmem>>, vector<128x128xbf16>
    %275 = arith.truncf %270 : vector<32x128xf32> to vector<32x128xbf16>
    %cst_111 = arith.constant dense<0.000000e+00> : vector<32x128xf32>
    %276 = tpu.matmul %275, %274, %cst_111 {dimension_numbers = #tpu.dot_dimension_numbers<[1], [0], [0], [1], [0, 0, 1, 1], [], []>} : vector<32x128xbf16>, vector<128x128xbf16>, vector<32x128xf32> -> vector<32x128xf32>
    %277 = arith.addf %273, %276 : vector<32x128xf32>
    %278 = arith.mulf %108, %270 : vector<32x128xf32>
    %c256 = arith.constant 256 : index
    %c0_112 = arith.constant 0 : index
    %279 = vector.load %arg6[%c256, %c0_112] : memref<896x128xbf16, #tpu.memory_space<vmem>>, vector<128x128xbf16>
    %280 = arith.truncf %278 : vector<32x128xf32> to vector<32x128xbf16>
    %cst_113 = arith.constant dense<0.000000e+00> : vector<32x128xf32>
    %281 = tpu.matmul %280, %279, %cst_113 {dimension_numbers = #tpu.dot_dimension_numbers<[1], [0], [0], [1], [0, 0, 1, 1], [], []>} : vector<32x128xbf16>, vector<128x128xbf16>, vector<32x128xf32> -> vector<32x128xf32>
    %282 = arith.addf %277, %281 : vector<32x128xf32>
    %c26 = arith.constant 26 : index
    %c0_114 = arith.constant 0 : index
    %283 = vector.load %arg7[%c26, %c0_114] : memref<40x256xf32, #tpu.memory_space<vmem>>, vector<1x128xf32>
    %284 = vector.broadcast %283 : vector<1x128xf32> to vector<32x128xf32>
    %285 = arith.addf %282, %284 : vector<32x128xf32>
    %c384 = arith.constant 384 : index
    %c0_115 = arith.constant 0 : index
    %286 = vector.load %arg6[%c384, %c0_115] : memref<896x128xbf16, #tpu.memory_space<vmem>>, vector<128x128xbf16>
    %287 = arith.truncf %285 : vector<32x128xf32> to vector<32x128xbf16>
    %cst_116 = arith.constant dense<0.000000e+00> : vector<32x128xf32>
    %288 = tpu.matmul %287, %286, %cst_116 {dimension_numbers = #tpu.dot_dimension_numbers<[1], [0], [0], [1], [0, 0, 1, 1], [], []>} : vector<32x128xbf16>, vector<128x128xbf16>, vector<32x128xf32> -> vector<32x128xf32>
    %c27 = arith.constant 27 : index
    %c0_117 = arith.constant 0 : index
    %289 = vector.load %arg7[%c27, %c0_117] : memref<40x256xf32, #tpu.memory_space<vmem>>, vector<1x128xf32>
    %290 = vector.broadcast %289 : vector<1x128xf32> to vector<32x128xf32>
    %291 = arith.addf %288, %290 : vector<32x128xf32>
    %c28 = arith.constant 28 : index
    %c0_118 = arith.constant 0 : index
    %292 = vector.load %arg7[%c28, %c0_118] : memref<40x256xf32, #tpu.memory_space<vmem>>, vector<1x128xf32>
    %c29 = arith.constant 29 : index
    %c0_119 = arith.constant 0 : index
    %293 = vector.load %arg7[%c29, %c0_119] : memref<40x256xf32, #tpu.memory_space<vmem>>, vector<1x128xf32>
    %cst_120 = arith.constant dense<0.000000e+00> : vector<32xf32>
    %294 = vector.multi_reduction <add>, %291, %cst_120 [1] : vector<32x128xf32> to vector<32xf32>
    %295 = vector.shape_cast %294 : vector<32xf32> to vector<32x1xf32>
    %cst_121 = arith.constant 1.280000e+02 : f32
    %296 = vector.broadcast %cst_121 : f32 to vector<32x1xf32>
    %297 = arith.divf %295, %296 : vector<32x1xf32>
    %298 = vector.broadcast %297 : vector<32x1xf32> to vector<32x128xf32>
    %299 = arith.subf %291, %298 : vector<32x128xf32>
    %300 = arith.mulf %299, %299 : vector<32x128xf32>
    %cst_122 = arith.constant dense<0.000000e+00> : vector<32xf32>
    %301 = vector.multi_reduction <add>, %300, %cst_122 [1] : vector<32x128xf32> to vector<32xf32>
    %302 = vector.shape_cast %301 : vector<32xf32> to vector<32x1xf32>
    %cst_123 = arith.constant 1.280000e+02 : f32
    %303 = vector.broadcast %cst_123 : f32 to vector<32x1xf32>
    %304 = arith.divf %302, %303 : vector<32x1xf32>
    %cst_124 = arith.constant 9.99999974E-6 : f32
    %305 = vector.broadcast %cst_124 : f32 to vector<32x1xf32>
    %306 = arith.addf %304, %305 : vector<32x1xf32>
    %307 = math.rsqrt %306 : vector<32x1xf32>
    %308 = vector.broadcast %307 : vector<32x1xf32> to vector<32x128xf32>
    %309 = arith.mulf %299, %308 : vector<32x128xf32>
    %310 = vector.broadcast %292 : vector<1x128xf32> to vector<32x128xf32>
    %311 = arith.mulf %309, %310 : vector<32x128xf32>
    %312 = vector.broadcast %293 : vector<1x128xf32> to vector<32x128xf32>
    %313 = arith.addf %311, %312 : vector<32x128xf32>
    %cst_125 = arith.constant 0.000000e+00 : f32
    %314 = vector.broadcast %cst_125 : f32 to vector<32x128xf32>
    %315 = arith.cmpf ogt, %313, %314 : vector<32x128xf32>
    %cst_126 = arith.constant 0.00999999977 : f32
    %316 = vector.broadcast %cst_126 : f32 to vector<32x128xf32>
    %317 = arith.mulf %316, %313 : vector<32x128xf32>
    %318 = arith.select %315, %313, %317 : vector<32x128xi1>, vector<32x128xf32>
    %c512 = arith.constant 512 : index
    %c0_127 = arith.constant 0 : index
    %319 = vector.load %arg6[%c512, %c0_127] : memref<896x128xbf16, #tpu.memory_space<vmem>>, vector<128x128xbf16>
    %320 = arith.truncf %318 : vector<32x128xf32> to vector<32x128xbf16>
    %cst_128 = arith.constant dense<0.000000e+00> : vector<32x128xf32>
    %321 = tpu.matmul %320, %319, %cst_128 {dimension_numbers = #tpu.dot_dimension_numbers<[1], [0], [0], [1], [0, 0, 1, 1], [], []>} : vector<32x128xbf16>, vector<128x128xbf16>, vector<32x128xf32> -> vector<32x128xf32>
    %c30 = arith.constant 30 : index
    %c0_129 = arith.constant 0 : index
    %322 = vector.load %arg7[%c30, %c0_129] : memref<40x256xf32, #tpu.memory_space<vmem>>, vector<1x128xf32>
    %323 = vector.broadcast %322 : vector<1x128xf32> to vector<32x128xf32>
    %324 = arith.addf %321, %323 : vector<32x128xf32>
    %c31 = arith.constant 31 : index
    %c0_130 = arith.constant 0 : index
    %325 = vector.load %arg7[%c31, %c0_130] : memref<40x256xf32, #tpu.memory_space<vmem>>, vector<1x128xf32>
    %c32 = arith.constant 32 : index
    %c0_131 = arith.constant 0 : index
    %326 = vector.load %arg7[%c32, %c0_131] : memref<40x256xf32, #tpu.memory_space<vmem>>, vector<1x128xf32>
    %cst_132 = arith.constant dense<0.000000e+00> : vector<32xf32>
    %327 = vector.multi_reduction <add>, %324, %cst_132 [1] : vector<32x128xf32> to vector<32xf32>
    %328 = vector.shape_cast %327 : vector<32xf32> to vector<32x1xf32>
    %cst_133 = arith.constant 1.280000e+02 : f32
    %329 = vector.broadcast %cst_133 : f32 to vector<32x1xf32>
    %330 = arith.divf %328, %329 : vector<32x1xf32>
    %331 = vector.broadcast %330 : vector<32x1xf32> to vector<32x128xf32>
    %332 = arith.subf %324, %331 : vector<32x128xf32>
    %333 = arith.mulf %332, %332 : vector<32x128xf32>
    %cst_134 = arith.constant dense<0.000000e+00> : vector<32xf32>
    %334 = vector.multi_reduction <add>, %333, %cst_134 [1] : vector<32x128xf32> to vector<32xf32>
    %335 = vector.shape_cast %334 : vector<32xf32> to vector<32x1xf32>
    %cst_135 = arith.constant 1.280000e+02 : f32
    %336 = vector.broadcast %cst_135 : f32 to vector<32x1xf32>
    %337 = arith.divf %335, %336 : vector<32x1xf32>
    %cst_136 = arith.constant 9.99999974E-6 : f32
    %338 = vector.broadcast %cst_136 : f32 to vector<32x1xf32>
    %339 = arith.addf %337, %338 : vector<32x1xf32>
    %340 = math.rsqrt %339 : vector<32x1xf32>
    %341 = vector.broadcast %340 : vector<32x1xf32> to vector<32x128xf32>
    %342 = arith.mulf %332, %341 : vector<32x128xf32>
    %343 = vector.broadcast %325 : vector<1x128xf32> to vector<32x128xf32>
    %344 = arith.mulf %342, %343 : vector<32x128xf32>
    %345 = vector.broadcast %326 : vector<1x128xf32> to vector<32x128xf32>
    %346 = arith.addf %344, %345 : vector<32x128xf32>
    %cst_137 = arith.constant 0.000000e+00 : f32
    %347 = vector.broadcast %cst_137 : f32 to vector<32x128xf32>
    %348 = arith.cmpf ogt, %346, %347 : vector<32x128xf32>
    %cst_138 = arith.constant 0.00999999977 : f32
    %349 = vector.broadcast %cst_138 : f32 to vector<32x128xf32>
    %350 = arith.mulf %349, %346 : vector<32x128xf32>
    %351 = arith.select %348, %346, %350 : vector<32x128xi1>, vector<32x128xf32>
    %c640 = arith.constant 640 : index
    %c0_139 = arith.constant 0 : index
    %352 = vector.load %arg6[%c640, %c0_139] : memref<896x128xbf16, #tpu.memory_space<vmem>>, vector<128x128xbf16>
    %353 = arith.truncf %351 : vector<32x128xf32> to vector<32x128xbf16>
    %cst_140 = arith.constant dense<0.000000e+00> : vector<32x128xf32>
    %354 = tpu.matmul %353, %352, %cst_140 {dimension_numbers = #tpu.dot_dimension_numbers<[1], [0], [0], [1], [0, 0, 1, 1], [], []>} : vector<32x128xbf16>, vector<128x128xbf16>, vector<32x128xf32> -> vector<32x128xf32>
    %c33 = arith.constant 33 : index
    %c0_141 = arith.constant 0 : index
    %355 = vector.load %arg7[%c33, %c0_141] : memref<40x256xf32, #tpu.memory_space<vmem>>, vector<1x128xf32>
    %356 = vector.broadcast %355 : vector<1x128xf32> to vector<32x128xf32>
    %357 = arith.addf %354, %356 : vector<32x128xf32>
    %c34 = arith.constant 34 : index
    %c0_142 = arith.constant 0 : index
    %358 = vector.load %arg7[%c34, %c0_142] : memref<40x256xf32, #tpu.memory_space<vmem>>, vector<1x128xf32>
    %c35 = arith.constant 35 : index
    %c0_143 = arith.constant 0 : index
    %359 = vector.load %arg7[%c35, %c0_143] : memref<40x256xf32, #tpu.memory_space<vmem>>, vector<1x128xf32>
    %cst_144 = arith.constant dense<0.000000e+00> : vector<32xf32>
    %360 = vector.multi_reduction <add>, %357, %cst_144 [1] : vector<32x128xf32> to vector<32xf32>
    %361 = vector.shape_cast %360 : vector<32xf32> to vector<32x1xf32>
    %cst_145 = arith.constant 1.280000e+02 : f32
    %362 = vector.broadcast %cst_145 : f32 to vector<32x1xf32>
    %363 = arith.divf %361, %362 : vector<32x1xf32>
    %364 = vector.broadcast %363 : vector<32x1xf32> to vector<32x128xf32>
    %365 = arith.subf %357, %364 : vector<32x128xf32>
    %366 = arith.mulf %365, %365 : vector<32x128xf32>
    %cst_146 = arith.constant dense<0.000000e+00> : vector<32xf32>
    %367 = vector.multi_reduction <add>, %366, %cst_146 [1] : vector<32x128xf32> to vector<32xf32>
    %368 = vector.shape_cast %367 : vector<32xf32> to vector<32x1xf32>
    %cst_147 = arith.constant 1.280000e+02 : f32
    %369 = vector.broadcast %cst_147 : f32 to vector<32x1xf32>
    %370 = arith.divf %368, %369 : vector<32x1xf32>
    %cst_148 = arith.constant 9.99999974E-6 : f32
    %371 = vector.broadcast %cst_148 : f32 to vector<32x1xf32>
    %372 = arith.addf %370, %371 : vector<32x1xf32>
    %373 = math.rsqrt %372 : vector<32x1xf32>
    %374 = vector.broadcast %373 : vector<32x1xf32> to vector<32x128xf32>
    %375 = arith.mulf %365, %374 : vector<32x128xf32>
    %376 = vector.broadcast %358 : vector<1x128xf32> to vector<32x128xf32>
    %377 = arith.mulf %375, %376 : vector<32x128xf32>
    %378 = vector.broadcast %359 : vector<1x128xf32> to vector<32x128xf32>
    %379 = arith.addf %377, %378 : vector<32x128xf32>
    %cst_149 = arith.constant 0.000000e+00 : f32
    %380 = vector.broadcast %cst_149 : f32 to vector<32x128xf32>
    %381 = arith.cmpf ogt, %379, %380 : vector<32x128xf32>
    %cst_150 = arith.constant 0.00999999977 : f32
    %382 = vector.broadcast %cst_150 : f32 to vector<32x128xf32>
    %383 = arith.mulf %382, %379 : vector<32x128xf32>
    %384 = arith.select %381, %379, %383 : vector<32x128xi1>, vector<32x128xf32>
    %c768 = arith.constant 768 : index
    %c0_151 = arith.constant 0 : index
    %385 = vector.load %arg6[%c768, %c0_151] : memref<896x128xbf16, #tpu.memory_space<vmem>>, vector<128x128xbf16>
    %386 = arith.truncf %384 : vector<32x128xf32> to vector<32x128xbf16>
    %cst_152 = arith.constant dense<0.000000e+00> : vector<32x128xf32>
    %387 = tpu.matmul %386, %385, %cst_152 {dimension_numbers = #tpu.dot_dimension_numbers<[1], [0], [0], [1], [0, 0, 1, 1], [], []>} : vector<32x128xbf16>, vector<128x128xbf16>, vector<32x128xf32> -> vector<32x128xf32>
    %c36 = arith.constant 36 : index
    %c0_153 = arith.constant 0 : index
    %388 = vector.load %arg7[%c36, %c0_153] : memref<40x256xf32, #tpu.memory_space<vmem>>, vector<1x128xf32>
    %389 = vector.broadcast %388 : vector<1x128xf32> to vector<32x128xf32>
    %390 = arith.addf %387, %389 : vector<32x128xf32>
    %c37 = arith.constant 37 : index
    %c0_154 = arith.constant 0 : index
    %391 = vector.load %arg7[%c37, %c0_154] : memref<40x256xf32, #tpu.memory_space<vmem>>, vector<1x128xf32>
    %c38 = arith.constant 38 : index
    %c0_155 = arith.constant 0 : index
    %392 = vector.load %arg7[%c38, %c0_155] : memref<40x256xf32, #tpu.memory_space<vmem>>, vector<1x1xf32>
    %393 = vector.broadcast %391 : vector<1x128xf32> to vector<32x128xf32>
    %394 = arith.mulf %390, %393 : vector<32x128xf32>
    %cst_156 = arith.constant dense<0.000000e+00> : vector<32xf32>
    %395 = vector.multi_reduction <add>, %394, %cst_156 [1] : vector<32x128xf32> to vector<32xf32>
    %396 = vector.shape_cast %395 : vector<32xf32> to vector<32x1xf32>
    %397 = vector.broadcast %392 : vector<1x1xf32> to vector<32x1xf32>
    %398 = arith.addf %396, %397 : vector<32x1xf32>
    %c0_157 = arith.constant 0 : index
    %c0_158 = arith.constant 0 : index
    %399 = vector.load %arg8[%c0_157, %c0_158] : memref<32x1xf32, #tpu.memory_space<vmem>>, vector<32x1xf32>
    tpu.vector_store %arg8[%c0_157, %c0_158], %398 {strides = array<i32>} : memref<32x1xf32, #tpu.memory_space<vmem>>, vector<32x1xf32>,
    return
  }
  func.func @transform_0(%arg0: i32) -> (i32, i32) {
    %c0_i32 = arith.constant 0 : i32
    %c0_i32_0 = arith.constant 0 : i32
    return %arg0, %c0_i32 : i32, i32
  }
  func.func @transform_1(%arg0: i32) -> (i32, i32, i32) {
    %c0_i32 = arith.constant 0 : i32
    %c0_i32_0 = arith.constant 0 : i32
    %c0_i32_1 = arith.constant 0 : i32
    return %arg0, %c0_i32, %c0_i32_0 : i32, i32, i32
  }
  func.func @transform_2(%arg0: i32) -> (i32, i32) {
    %c0_i32 = arith.constant 0 : i32
    %c0_i32_0 = arith.constant 0 : i32
    return %arg0, %c0_i32 : i32, i32
  }
  func.func @transform_3(%arg0: i32) -> (i32, i32) {
    %c0_i32 = arith.constant 0 : i32
    %c0_i32_0 = arith.constant 0 : i32
    %c0_i32_1 = arith.constant 0 : i32
    return %c0_i32, %c0_i32_0 : i32, i32
  }
  func.func @transform_4(%arg0: i32) -> (i32, i32) {
    %c0_i32 = arith.constant 0 : i32
    %c0_i32_0 = arith.constant 0 : i32
    %c0_i32_1 = arith.constant 0 : i32
    return %c0_i32, %c0_i32_0 : i32, i32
  }
  func.func @transform_5(%arg0: i32) -> (i32, i32) {
    %c0_i32 = arith.constant 0 : i32
    %c0_i32_0 = arith.constant 0 : i32
    %c0_i32_1 = arith.constant 0 : i32
    return %c0_i32, %c0_i32_0 : i32, i32
  }
  func.func @transform_6(%arg0: i32) -> (i32, i32) {
    %c0_i32 = arith.constant 0 : i32
    %c0_i32_0 = arith.constant 0 : i32
    %c0_i32_1 = arith.constant 0 : i32
    return %c0_i32, %c0_i32_0 : i32, i32
  }
  func.func @transform_7(%arg0: i32) -> (i32, i32) {
    %c0_i32 = arith.constant 0 : i32
    %c0_i32_0 = arith.constant 0 : i32
    return %arg0, %c0_i32 : i32, i32
  }
}

</mosaic_0001>

<llo_original>
// kernel: dqn_gnn_forward.1
$region0: #{dqn_gnn_forward.1}
  #allocation0 [shape = 'u32[]', space=smem, size = 0x4, offset = 0x4, fixed_abs, tag = 'smem constant byte address 0x4 - core index']
  #allocation1 [shape = 'u32[72,128]{1,0:T(1,128)}', space=vmem, size = 0x9000, scoped, tag = 'internal scratch']
  %s0 = inlined_call_operand.vmem [shape: bf16[512,16], index: 0, kind: input, shape index: {}]
  %s1 = inlined_call_operand.hbm [shape: bf16[2,256,256], index: 1, kind: input, shape index: {}]
  %s2 = inlined_call_operand.vmem [shape: bf16[64,16], index: 2, kind: input, shape index: {}]
  %s3 = inlined_call_operand.vmem [shape: bf16[528,256], index: 3, kind: input, shape index: {}]
  %s4 = inlined_call_operand.vmem [shape: bf16[528,128], index: 4, kind: input, shape index: {}]
  %s5 = inlined_call_operand.hbm [shape: bf16[896,128], index: 5, kind: input, shape index: {}]
  %s6 = inlined_call_operand.vmem [shape: f32[40,256], index: 6, kind: input, shape index: {}]
  %s7 = inlined_call_operand.vmem [shape: f32[64,1], index: 7, kind: output, shape index: {}]
  %s8 = sld [smem:[#allocation0]]
  $region69: #{dqn_gnn_forward.1} parent=0
    _
  %s10 = ssub.s32 1, %s8
  %s11 = scalar_select 0, %s10, %s8
  $region1: #{dqn_gnn_forward.1} parent=0
    #allocation2 [shape = 'u8[262144]{0}', space=vmem, size = 0x40000, scoped, tag = 'input window, operand 1']
    #allocation3 [shape = 's32[2]{0}', space=sflag, size = 0x8, scoped, tag = 'scoped memory for dqn_gnn_forward.1']
    #allocation4 [shape = 'u8[229376]{0}', space=vmem, size = 0x38000, scoped, tag = 'input window, operand 5, single buffered']
    #allocation5 [shape = 's32[1]{0}', space=sflag, size = 0x4, scoped, tag = 'scoped memory for dqn_gnn_forward.1']
    %12 = vsyncpa [#allocation3], 0
    %s13 = scalar_lea.sflag [#allocation3], 1
    %14 = vsyncpa %s13, 0
    %15 = vsyncpa [#allocation5], 0
    loop: start=0, step=1, limit=4
    $region2: #{dqn_gnn_forward.1} parent=1 // loop_pre_header
      _
    $region3: #{dqn_gnn_forward.1} parent=1 // loop_header
      %s17 = sphi 0, %s21
      %p18 = scmp.ge.s32.totalorder %s17, 4
      %s27 = sphi 0, %s29
      %s30 = sphi 0, %s27
      %s31 = sphi 0, %s30
      %s47 = sphi 0, %s31
      %s53 = sphi 0, %s55
      %s56 = sphi 0, %s53
      %s57 = sphi 0, %s56
      %s73 = sphi 0, %s57
      %s79 = sphi 0, %s81
      %s82 = sphi 0, %s79
      %s83 = sphi 0, %s82
      %s99 = sphi 0, %s83
      %s103 = sphi 0, %s103
      %s105 = sphi 0, %s103
      %s106 = sphi 0, %s105
      %s120 = sphi 0, %s106
      %s124 = sphi 0, %s124
      %s126 = sphi 0, %s124
      %s127 = sphi 0, %s126
      %s141 = sphi 0, %s127
      %s145 = sphi 0, %s145
      %s147 = sphi 0, %s145
      %s148 = sphi 0, %s147
      %s162 = sphi 0, %s148
      %s166 = sphi 0, %s166
      %s168 = sphi 0, %s166
      %s169 = sphi 0, %s168
      %s183 = sphi 0, %s169
      %s189 = sphi 0, %s191
      %s192 = sphi 0, %s189
      %s193 = sphi 0, %s192
      %s209 = sphi 0, %s193
    $region4: #{dqn_gnn_forward.1} parent=1 // loop_header_branch
      %20 = sbr.rel (%p18) target = $region8
    $region5: #{dqn_gnn_forward.1} parent=1 // loop_body
      %s22 = ssub.s32 %s17, 1
      %s23 = ssub.s32 %s17, 2
      %s24 = sadd.s32 %s17, 1
      %s25 = ssub.s32 %s17, %s24
      %p26 = scmp.eq.s32.totalorder %s25, 0
      %s28 = sadd.s32 %s27, 1
      %s29 = scalar_select %p26, %s27, %s28
      %p32 = pneg %p26
      %p33 = scmp.eq.s32.totalorder %s17, 1
      %p34 = por %p32, %p33
      %p35 = scmp.ne.s32.totalorder %s27, %s30
      %p36 = scmp.eq.s32.totalorder %s17, 0
      %p37 = por %p35, %p36
      %p38 = scmp.ne.s32.totalorder %s27, %s30
      %p39 = scmp.eq.s32.totalorder %s22, 1
      %p40 = por %p38, %p39
      %p41 = scmp.ne.s32.totalorder %s30, %s31
      %p42 = scmp.eq.s32.totalorder %s22, 0
      %p43 = por %p41, %p42
      %p44 = scmp.ne.s32.totalorder %s30, %s31
      %p45 = scmp.eq.s32.totalorder %s23, 1
      %p46 = por %p44, %p45
      %p48 = scmp.ne.s32.totalorder %s31, %s47
      %p49 = scmp.eq.s32.totalorder %s23, 0
      %p50 = por %p48, %p49
      %s51 = ssub.s32 %s17, %s24
      %p52 = scmp.eq.s32.totalorder %s51, 0
      %s54 = sadd.s32 %s53, 1
      %s55 = scalar_select %p52, %s53, %s54
      %p58 = pneg %p52
      %p59 = scmp.eq.s32.totalorder %s17, 1
      %p60 = por %p58, %p59
      %p61 = scmp.ne.s32.totalorder %s53, %s56
      %p62 = scmp.eq.s32.totalorder %s17, 0
      %p63 = por %p61, %p62
      %p64 = scmp.ne.s32.totalorder %s53, %s56
      %p65 = scmp.eq.s32.totalorder %s22, 1
      %p66 = por %p64, %p65
      %p67 = scmp.ne.s32.totalorder %s56, %s57
      %p68 = scmp.eq.s32.totalorder %s22, 0
      %p69 = por %p67, %p68
      %p70 = scmp.ne.s32.totalorder %s56, %s57
      %p71 = scmp.eq.s32.totalorder %s23, 1
      %p72 = por %p70, %p71
      %p74 = scmp.ne.s32.totalorder %s57, %s73
      %p75 = scmp.eq.s32.totalorder %s23, 0
      %p76 = por %p74, %p75
      %s77 = ssub.s32 %s17, %s24
      %p78 = scmp.eq.s32.totalorder %s77, 0
      %s80 = sadd.s32 %s79, 1
      %s81 = scalar_select %p78, %s79, %s80
      %p84 = pneg %p78
      %p85 = scmp.eq.s32.totalorder %s17, 1
      %p86 = por %p84, %p85
      %p87 = scmp.ne.s32.totalorder %s79, %s82
      %p88 = scmp.eq.s32.totalorder %s17, 0
      %p89 = por %p87, %p88
      %p90 = scmp.ne.s32.totalorder %s79, %s82
      %p91 = scmp.eq.s32.totalorder %s22, 1
      %p92 = por %p90, %p91
      %p93 = scmp.ne.s32.totalorder %s82, %s83
      %p94 = scmp.eq.s32.totalorder %s22, 0
      %p95 = por %p93, %p94
      %p96 = scmp.ne.s32.totalorder %s82, %s83
      %p97 = scmp.eq.s32.totalorder %s23, 1
      %p98 = por %p96, %p97
      %p100 = scmp.ne.s32.totalorder %s83, %s99
      %p101 = scmp.eq.s32.totalorder %s23, 0
      %p102 = por %p100, %p101
      %s104 = sadd.s32 %s103, 1
      %p107 = scmp.eq.s32.totalorder %s17, 1
      %p108 = scmp.ne.s32.totalorder %s103, %s105
      %p109 = scmp.eq.s32.totalorder %s17, 0
      %p110 = por %p108, %p109
      %p111 = scmp.ne.s32.totalorder %s103, %s105
      %p112 = scmp.eq.s32.totalorder %s22, 1
      %p113 = por %p111, %p112
      %p114 = scmp.ne.s32.totalorder %s105, %s106
      %p115 = scmp.eq.s32.totalorder %s22, 0
      %p116 = por %p114, %p115
      %p117 = scmp.ne.s32.totalorder %s105, %s106
      %p118 = scmp.eq.s32.totalorder %s23, 1
      %p119 = por %p117, %p118
      %p121 = scmp.ne.s32.totalorder %s106, %s120
      %p122 = scmp.eq.s32.totalorder %s23, 0
      %p123 = por %p121, %p122
      %s125 = sadd.s32 %s124, 1
      %p128 = scmp.eq.s32.totalorder %s17, 1
      %p129 = scmp.ne.s32.totalorder %s124, %s126
      %p130 = scmp.eq.s32.totalorder %s17, 0
      %p131 = por %p129, %p130
      %p132 = scmp.ne.s32.totalorder %s124, %s126
      %p133 = scmp.eq.s32.totalorder %s22, 1
      %p134 = por %p132, %p133
      %p135 = scmp.ne.s32.totalorder %s126, %s127
      %p136 = scmp.eq.s32.totalorder %s22, 0
      %p137 = por %p135, %p136
      %p138 = scmp.ne.s32.totalorder %s126, %s127
      %p139 = scmp.eq.s32.totalorder %s23, 1
      %p140 = por %p138, %p139
      %p142 = scmp.ne.s32.totalorder %s127, %s141
      %p143 = scmp.eq.s32.totalorder %s23, 0
      %p144 = por %p142, %p143
      %s146 = sadd.s32 %s145, 1
      %p149 = scmp.eq.s32.totalorder %s17, 1
      %p150 = scmp.ne.s32.totalorder %s145, %s147
      %p151 = scmp.eq.s32.totalorder %s17, 0
      %p152 = por %p150, %p151
      %p153 = scmp.ne.s32.totalorder %s145, %s147
      %p154 = scmp.eq.s32.totalorder %s22, 1
      %p155 = por %p153, %p154
      %p156 = scmp.ne.s32.totalorder %s147, %s148
      %p157 = scmp.eq.s32.totalorder %s22, 0
      %p158 = por %p156, %p157
      %p159 = scmp.ne.s32.totalorder %s147, %s148
      %p160 = scmp.eq.s32.totalorder %s23, 1
      %p161 = por %p159, %p160
      %p163 = scmp.ne.s32.totalorder %s148, %s162
      %p164 = scmp.eq.s32.totalorder %s23, 0
      %p165 = por %p163, %p164
      %s167 = sadd.s32 %s166, 1
      %p170 = scmp.eq.s32.totalorder %s17, 1
      %p171 = scmp.ne.s32.totalorder %s166, %s168
      %p172 = scmp.eq.s32.totalorder %s17, 0
      %p173 = por %p171, %p172
      %p174 = scmp.ne.s32.totalorder %s166, %s168
      %p175 = scmp.eq.s32.totalorder %s22, 1
      %p176 = por %p174, %p175
      %p177 = scmp.ne.s32.totalorder %s168, %s169
      %p178 = scmp.eq.s32.totalorder %s22, 0
      %p179 = por %p177, %p178
      %p180 = scmp.ne.s32.totalorder %s168, %s169
      %p181 = scmp.eq.s32.totalorder %s23, 1
      %p182 = por %p180, %p181
      %p184 = scmp.ne.s32.totalorder %s169, %s183
      %p185 = scmp.eq.s32.totalorder %s23, 0
      %p186 = por %p184, %p185
      %s187 = ssub.s32 %s17, %s24
      %p188 = scmp.eq.s32.totalorder %s187, 0
      %s190 = sadd.s32 %s189, 1
      %s191 = scalar_select %p188, %s189, %s190
      %p194 = pneg %p188
      %p195 = scmp.eq.s32.totalorder %s17, 1
      %p196 = por %p194, %p195
      %p197 = scmp.ne.s32.totalorder %s189, %s192
      %p198 = scmp.eq.s32.totalorder %s17, 0
      %p199 = por %p197, %p198
      %p200 = scmp.ne.s32.totalorder %s189, %s192
      %p201 = scmp.eq.s32.totalorder %s22, 1
      %p202 = por %p200, %p201
      %p203 = scmp.ne.s32.totalorder %s192, %s193
      %p204 = scmp.eq.s32.totalorder %s22, 0
      %p205 = por %p203, %p204
      %p206 = scmp.ne.s32.totalorder %s192, %s193
      %p207 = scmp.eq.s32.totalorder %s23, 1
      %p208 = por %p206, %p207
      %p210 = scmp.ne.s32.totalorder %s193, %s209
      %p211 = scmp.eq.s32.totalorder %s23, 0
      %p212 = por %p210, %p211
      %p213 = scmp.le.s32.totalorder 1, %s17
      %p214 = scmp.lt.s32.totalorder %s17, 3
      %p215 = pnand %p213, %p214
      %p216 = pneg %p215
      // Predicated region
      $region9: #{dqn_gnn_forward.1} parent=5 // pred_check
        _
      $region10: #{dqn_gnn_forward.1} parent=5 // pred_check_branch
        %218 = sbr.rel (%p215) target = $region12
      $region11: #{dqn_gnn_forward.1} parent=5 // pred_region
        %s219 = ssub.s32 %s17, 1
        // Predicated region
        $region13: #{dqn_gnn_forward.1} parent=11 // pred_check
          %p220 = pneg %p116
        $region14: #{dqn_gnn_forward.1} parent=11 // pred_check_branch
          %222 = sbr.rel (%p220) target = $region16
        $region15: #{dqn_gnn_forward.1} parent=11 // pred_region
          _
        $region16: #{dqn_gnn_forward.1} parent=11 // pred_fallthru
          _
        // Predicated region
        $region17: #{dqn_gnn_forward.1} parent=11 // pred_check
          %p223 = pneg %p137
        $region18: #{dqn_gnn_forward.1} parent=11 // pred_check_branch
          %225 = sbr.rel (%p223) target = $region20
        $region19: #{dqn_gnn_forward.1} parent=11 // pred_region
          _
        $region20: #{dqn_gnn_forward.1} parent=11 // pred_fallthru
          _
        // Predicated region
        $region21: #{dqn_gnn_forward.1} parent=11 // pred_check
          %p226 = pneg %p158
        $region22: #{dqn_gnn_forward.1} parent=11 // pred_check_branch
          %228 = sbr.rel (%p226) target = $region24
        $region23: #{dqn_gnn_forward.1} parent=11 // pred_region
          %230 = vsyncadd [#allocation5], 0
          %s231 = sshll.u32 %s5, 4
          %s232 = int_to_ptr.hbm [resolvable:$true] %s231
          %s233 = sshll.u32 [#allocation4], 4
          %s234 = int_to_ptr.vmem [resolvable:$true] %s233
          %239 = dma.hbm_to_vmem [thread:$0]  %s232, 7168, %s234, [#allocation5], 64, 64, 4
        $region24: #{dqn_gnn_forward.1} parent=11 // pred_fallthru
          _
        // Predicated region
        $region25: #{dqn_gnn_forward.1} parent=11 // pred_check
          %p240 = pneg %p179
        $region26: #{dqn_gnn_forward.1} parent=11 // pred_check_branch
          %242 = sbr.rel (%p240) target = $region28
        $region27: #{dqn_gnn_forward.1} parent=11 // pred_region
          _
        $region28: #{dqn_gnn_forward.1} parent=11 // pred_fallthru
          _
      $region12: #{dqn_gnn_forward.1} parent=5 // pred_fallthru
        _
      %p243 = scmp.lt.s32.totalorder %s17, 2
      // Predicated region
      $region29: #{dqn_gnn_forward.1} parent=5 // pred_check
        %p244 = pneg %p243
      $region30: #{dqn_gnn_forward.1} parent=5 // pred_check_branch
        %246 = sbr.rel (%p244) target = $region32
      $region31: #{dqn_gnn_forward.1} parent=5 // pred_region
        // Predicated region
        $region33: #{dqn_gnn_forward.1} parent=31 // pred_check
          %p247 = pneg %p37
        $region34: #{dqn_gnn_forward.1} parent=31 // pred_check_branch
          %249 = sbr.rel (%p247) target = $region36
        $region35: #{dqn_gnn_forward.1} parent=31 // pred_region
          %s250 = smul.u32 32, %s17
          %p251 = scmp.lt.s32.totalorder %s250, 63
          %s252 = scalar_select %p251, %s250, 63
          %s253 = smul.addr %s252, 4
          %s254 = scalar_lea.vmem %s0, %s253
          %s255 = smul.u32 32, %s17
        $region36: #{dqn_gnn_forward.1} parent=31 // pred_fallthru
          _
        // Predicated region
        $region37: #{dqn_gnn_forward.1} parent=31 // pred_check
          %p256 = pneg %p63
        $region38: #{dqn_gnn_forward.1} parent=31 // pred_check_branch
          %258 = sbr.rel (%p256) target = $region40
        $region39: #{dqn_gnn_forward.1} parent=31 // pred_region
          %s259 = sand.u32 %s53, 1
          %s260 = scalar_lea.sflag [#allocation3], %s259
          %s261 = sand.u32 %s53, 1
          %s262 = smul.addr %s261, 256
          %s263 = scalar_lea.vmem [#allocation2], %s262
          %265 = vsyncadd %s260, 0
          %s266 = smul.addr %s17, 64
          %s267 = smul.addr %s266, 4
          %s268 = scalar_lea.hbm %s1, %s267
          %s269 = sshll.u32 %s268, 4
          %s270 = int_to_ptr.hbm [resolvable:$true] %s269
          %s271 = sshll.u32 %s263, 4
          %s272 = int_to_ptr.vmem [resolvable:$true] %s271
          %277 = dma.hbm_to_vmem [thread:$0]  %s270, 4096, %s272, %s260, 128, 128, 8
        $region40: #{dqn_gnn_forward.1} parent=31 // pred_fallthru
          _
        // Predicated region
        $region41: #{dqn_gnn_forward.1} parent=31 // pred_check
          %p278 = pneg %p89
        $region42: #{dqn_gnn_forward.1} parent=31 // pred_check_branch
          %280 = sbr.rel (%p278) target = $region44
        $region43: #{dqn_gnn_forward.1} parent=31 // pred_region
          %s281 = smul.u32 4, %s17
          %p282 = scmp.lt.s32.totalorder %s281, 7
          %s283 = scalar_select %p282, %s281, 7
          %s284 = smul.addr %s283, 4
          %s285 = scalar_lea.vmem %s2, %s284
          %s286 = smul.u32 4, %s17
        $region44: #{dqn_gnn_forward.1} parent=31 // pred_fallthru
          _
      $region32: #{dqn_gnn_forward.1} parent=5 // pred_fallthru
        _
      %p287 = scmp.le.s32.totalorder 1, %s17
      %p288 = scmp.lt.s32.totalorder %s17, 3
      %p289 = pnand %p287, %p288
      %p290 = pneg %p289
      // Predicated region
      $region45: #{dqn_gnn_forward.1} parent=5 // pred_check
        _
      $region46: #{dqn_gnn_forward.1} parent=5 // pred_check_branch
        %292 = sbr.rel (%p289) target = $region48
      $region47: #{dqn_gnn_forward.1} parent=5 // pred_region
        %s293 = ssub.s32 %s17, 1
        %s294 = sand.u32 %s56, 1
        %s295 = scalar_lea.sflag [#allocation3], %s294
        %s296 = sand.u32 %s56, 1
        %s297 = smul.addr %s296, 256
        %s298 = scalar_lea.vmem [#allocation2], %s297
        // Predicated region
        $region49: #{dqn_gnn_forward.1} parent=47 // pred_check
          %p299 = pneg %p69
        $region50: #{dqn_gnn_forward.1} parent=47 // pred_check_branch
          %301 = sbr.rel (%p299) target = $region52
        $region51: #{dqn_gnn_forward.1} parent=47 // pred_region
          %303 = dma.done %s295, 4096
        $region52: #{dqn_gnn_forward.1} parent=47 // pred_fallthru
          _
        // Predicated region
        $region53: #{dqn_gnn_forward.1} parent=47 // pred_check
          %p304 = pneg %p158
        $region54: #{dqn_gnn_forward.1} parent=47 // pred_check_branch
          %306 = sbr.rel (%p304) target = $region56
        $region55: #{dqn_gnn_forward.1} parent=47 // pred_region
          %308 = dma.done [#allocation5], 7168
        $region56: #{dqn_gnn_forward.1} parent=47 // pred_fallthru
          _
        %s309 = smul.u32 32, %s22
        %p310 = scmp.lt.s32.totalorder %s309, 63
        %s311 = scalar_select %p310, %s309, 63
        %s312 = smul.addr %s311, 4
        %s313 = scalar_lea.vmem %s0, %s312
        %p314 = pneg %p43
        %p315 = pneg %p40
        %s316 = sand.u32 %s56, 1
        %s317 = scalar_lea.sflag [#allocation3], %s316
        %s318 = sand.u32 %s56, 1
        %s319 = smul.addr %s318, 256
        %s320 = scalar_lea.vmem [#allocation2], %s319
        %p321 = pneg %p69
        %p322 = pneg %p66
        %s323 = smul.u32 4, %s22
        %p324 = scmp.lt.s32.totalorder %s323, 7
        %s325 = scalar_select %p324, %s323, 7
        %s326 = smul.addr %s325, 4
        %s327 = scalar_lea.vmem %s2, %s326
        %p328 = pneg %p95
        %p329 = pneg %p92
        %p330 = pneg %p116
        %p331 = pneg %p113
        %p332 = pneg %p137
        %p333 = pneg %p134
        %p334 = pneg %p158
        %p335 = pneg %p155
        %p336 = pneg %p179
        %p337 = pneg %p176
        %p338 = pneg %p205
        %p339 = pneg %p202
        %s340 = smul.u32 4, %s22
        %p341 = scmp.lt.s32.totalorder %s340, 7
        %s342 = scalar_select %p341, %s340, 7
        %s343 = smul.addr %s342, 8
        %s344 = scalar_lea.vmem %s7, %s343
        %s345 = smul.u32 32, %s22
        %p346 = scmp.lt.s32.totalorder %s345, 63
        %s347 = scalar_select %p346, %s345, 63
        %s348 = smul.addr %s347, 4
        %s349 = scalar_lea.vmem %s0, %s348
        %s350 = smul.u32 32, %s22
        %s351 = smul.u32 4, %s22
        %p352 = scmp.lt.s32.totalorder %s351, 7
        %s353 = scalar_select %p352, %s351, 7
        %s354 = smul.addr %s353, 4
        %s355 = scalar_lea.vmem %s2, %s354
        %s356 = smul.u32 4, %s22
        %s357 = smul.u32 4, %s22
        %p358 = scmp.lt.s32.totalorder %s357, 7
        %s359 = scalar_select %p358, %s357, 7
        %s360 = smul.addr %s359, 8
        %s361 = scalar_lea.vmem %s7, %s360
        %s362 = smul.u32 4, %s22
        %v364 = vld [vmem:[%s349] sm:$0xf]
        %v365 = vld [vmem:[%s349 + $0x4] sm:$0xf]
        %v366 = vld [vmem:[%s349 + $0x8] sm:$0xf]
        %v367 = vld [vmem:[%s349 + $0xc] sm:$0xf]
        %v368 = vld [vmem:[%s349 + $0x10] sm:$0xf]
        %v369 = vld [vmem:[%s349 + $0x14] sm:$0xf]
        %v370 = vld [vmem:[%s349 + $0x18] sm:$0xf]
        %v371 = vld [vmem:[%s349 + $0x1c] sm:$0xf]
        %v372 = vld [vmem:[%s349 + $0x20] sm:$0xf]
        %v373 = vld [vmem:[%s349 + $0x24] sm:$0xf]
        %v374 = vld [vmem:[%s349 + $0x28] sm:$0xf]
        %v375 = vld [vmem:[%s349 + $0x2c] sm:$0xf]
        %v376 = vld [vmem:[%s349 + $0x30] sm:$0xf]
        %v377 = vld [vmem:[%s349 + $0x34] sm:$0xf]
        %v378 = vld [vmem:[%s349 + $0x38] sm:$0xf]
        %v379 = vld [vmem:[%s349 + $0x3c] sm:$0xf]
        %v380 = vld [vmem:[%s349 + $0x40] sm:$0xf]
        %v381 = vld [vmem:[%s349 + $0x44] sm:$0xf]
        %v382 = vld [vmem:[%s349 + $0x48] sm:$0xf]
        %v383 = vld [vmem:[%s349 + $0x4c] sm:$0xf]
        %v384 = vld [vmem:[%s349 + $0x50] sm:$0xf]
        %v385 = vld [vmem:[%s349 + $0x54] sm:$0xf]
        %v386 = vld [vmem:[%s349 + $0x58] sm:$0xf]
        %v387 = vld [vmem:[%s349 + $0x5c] sm:$0xf]
        %v388 = vld [vmem:[%s349 + $0x60] sm:$0xf]
        %v389 = vld [vmem:[%s349 + $0x64] sm:$0xf]
        %v390 = vld [vmem:[%s349 + $0x68] sm:$0xf]
        %v391 = vld [vmem:[%s349 + $0x6c] sm:$0xf]
        %v392 = vld [vmem:[%s349 + $0x70] sm:$0xf]
        %v393 = vld [vmem:[%s349 + $0x74] sm:$0xf]
        %v394 = vld [vmem:[%s349 + $0x78] sm:$0xf]
        %v395 = vld [vmem:[%s349 + $0x7c] sm:$0xf]
        %v396 = vld [vmem:[%s298] sm:$0xff]
        %v397 = vld [vmem:[%s298 + $0x8] sm:$0xff]
        %v398 = vld [vmem:[%s298 + $0x10] sm:$0xff]
        %v399 = vld [vmem:[%s298 + $0x18] sm:$0xff]
        %v400 = vld [vmem:[%s298 + $0x20] sm:$0xff]
        %v401 = vld [vmem:[%s298 + $0x28] sm:$0xff]
        %v402 = vld [vmem:[%s298 + $0x30] sm:$0xff]
        %v403 = vld [vmem:[%s298 + $0x38] sm:$0xff]
        %v404 = vld [vmem:[%s298 + $0x40] sm:$0xff]
        %v405 = vld [vmem:[%s298 + $0x48] sm:$0xff]
        %v406 = vld [vmem:[%s298 + $0x50] sm:$0xff]
        %v407 = vld [vmem:[%s298 + $0x58] sm:$0xff]
        %v408 = vld [vmem:[%s298 + $0x60] sm:$0xff]
        %v409 = vld [vmem:[%s298 + $0x68] sm:$0xff]
        %v410 = vld [vmem:[%s298 + $0x70] sm:$0xff]
        %v411 = vld [vmem:[%s298 + $0x78] sm:$0xff]
        %v412 = vld [vmem:[%s298 + $0x80] sm:$0xff]
        %v413 = vld [vmem:[%s298 + $0x88] sm:$0xff]
        %v414 = vld [vmem:[%s298 + $0x90] sm:$0xff]
        %v415 = vld [vmem:[%s298 + $0x98] sm:$0xff]
        %v416 = vld [vmem:[%s298 + $0xa0] sm:$0xff]
        %v417 = vld [vmem:[%s298 + $0xa8] sm:$0xff]
        %v418 = vld [vmem:[%s298 + $0xb0] sm:$0xff]
        %v419 = vld [vmem:[%s298 + $0xb8] sm:$0xff]
        %v420 = vld [vmem:[%s298 + $0xc0] sm:$0xff]
        %v421 = vld [vmem:[%s298 + $0xc8] sm:$0xff]
        %v422 = vld [vmem:[%s298 + $0xd0] sm:$0xff]
        %v423 = vld [vmem:[%s298 + $0xd8] sm:$0xff]
        %v424 = vld [vmem:[%s298 + $0xe0] sm:$0xff]
        %v425 = vld [vmem:[%s298 + $0xe8] sm:$0xff]
        %v426 = vld [vmem:[%s298 + $0xf0] sm:$0xff]
        %v427 = vld [vmem:[%s298 + $0xf8] sm:$0xff]
        %v460 = vunpack.c.l.b16 %v396
        %v461 = vunpack.c.h.b16 %v396
        %v462 = vunpack.c.l.b16 %v397
        %v463 = vunpack.c.h.b16 %v397
        %v464 = vunpack.c.l.b16 %v398
        %v465 = vunpack.c.h.b16 %v398
        %v466 = vunpack.c.l.b16 %v399
        %v467 = vunpack.c.h.b16 %v399
        %v468 = vunpack.c.l.b16 %v400
        %v469 = vunpack.c.h.b16 %v400
        %v470 = vunpack.c.l.b16 %v401
        %v471 = vunpack.c.h.b16 %v401
        %v472 = vunpack.c.l.b16 %v402
        %v473 = vunpack.c.h.b16 %v402
        %v474 = vunpack.c.l.b16 %v403
        %v475 = vunpack.c.h.b16 %v403
        %v476 = vunpack.c.l.b16 %v404
        %v477 = vunpack.c.h.b16 %v404
        %v478 = vunpack.c.l.b16 %v405
        %v479 = vunpack.c.h.b16 %v405
        %v480 = vunpack.c.l.b16 %v406
        %v481 = vunpack.c.h.b16 %v406
        %v482 = vunpack.c.l.b16 %v407
        %v483 = vunpack.c.h.b16 %v407
        %v484 = vunpack.c.l.b16 %v408
        %v485 = vunpack.c.h.b16 %v408
        %v486 = vunpack.c.l.b16 %v409
        %v487 = vunpack.c.h.b16 %v409
        %v488 = vunpack.c.l.b16 %v410
        %v489 = vunpack.c.h.b16 %v410
        %v490 = vunpack.c.l.b16 %v411
        %v491 = vunpack.c.h.b16 %v411
        %v492 = vunpack.c.l.b16 %v412
        %v493 = vunpack.c.h.b16 %v412
        %v494 = vunpack.c.l.b16 %v413
        %v495 = vunpack.c.h.b16 %v413
        %v496 = vunpack.c.l.b16 %v414
        %v497 = vunpack.c.h.b16 %v414
        %v498 = vunpack.c.l.b16 %v415
        %v499 = vunpack.c.h.b16 %v415
        %v500 = vunpack.c.l.b16 %v416
        %v501 = vunpack.c.h.b16 %v416
        %v502 = vunpack.c.l.b16 %v417
        %v503 = vunpack.c.h.b16 %v417
        %v504 = vunpack.c.l.b16 %v418
        %v505 = vunpack.c.h.b16 %v418
        %v506 = vunpack.c.l.b16 %v419
        %v507 = vunpack.c.h.b16 %v419
        %v508 = vunpack.c.l.b16 %v420
        %v509 = vunpack.c.h.b16 %v420
        %v510 = vunpack.c.l.b16 %v421
        %v511 = vunpack.c.h.b16 %v421
        %v512 = vunpack.c.l.b16 %v422
        %v513 = vunpack.c.h.b16 %v422
        %v514 = vunpack.c.l.b16 %v423
        %v515 = vunpack.c.h.b16 %v423
        %v516 = vunpack.c.l.b16 %v424
        %v517 = vunpack.c.h.b16 %v424
        %v518 = vunpack.c.l.b16 %v425
        %v519 = vunpack.c.h.b16 %v425
        %v520 = vunpack.c.l.b16 %v426
        %v521 = vunpack.c.h.b16 %v426
        %v522 = vunpack.c.l.b16 %v427
        %v523 = vunpack.c.h.b16 %v427
        %v524 = vpack.c.b16 %v462, %v460
        %v525 = vpack.c.b16 %v463, %v461
        %v526 = vpack.c.b16 %v466, %v464
        %v527 = vpack.c.b16 %v467, %v465
        %v528 = vpack.c.b16 %v470, %v468
        %v529 = vpack.c.b16 %v471, %v469
        %v530 = vpack.c.b16 %v474, %v472
        %v531 = vpack.c.b16 %v475, %v473
        %v532 = vpack.c.b16 %v478, %v476
        %v533 = vpack.c.b16 %v479, %v477
        %v534 = vpack.c.b16 %v482, %v480
        %v535 = vpack.c.b16 %v483, %v481
        %v536 = vpack.c.b16 %v486, %v484
        %v537 = vpack.c.b16 %v487, %v485
        %v538 = vpack.c.b16 %v490, %v488
        %v539 = vpack.c.b16 %v491, %v489
        %v540 = vpack.c.b16 %v494, %v492
        %v541 = vpack.c.b16 %v495, %v493
        %v542 = vpack.c.b16 %v498, %v496
        %v543 = vpack.c.b16 %v499, %v497
        %v544 = vpack.c.b16 %v502, %v500
        %v545 = vpack.c.b16 %v503, %v501
        %v546 = vpack.c.b16 %v506, %v504
        %v547 = vpack.c.b16 %v507, %v505
        %v548 = vpack.c.b16 %v510, %v508
        %v549 = vpack.c.b16 %v511, %v509
        %v550 = vpack.c.b16 %v514, %v512
        %v551 = vpack.c.b16 %v515, %v513
        %v552 = vpack.c.b16 %v518, %v516
        %v553 = vpack.c.b16 %v519, %v517
        %v554 = vpack.c.b16 %v522, %v520
        %v555 = vpack.c.b16 %v523, %v521
        %v620 = vunpack.c.l.b16 %v364
        %v621 = vunpack.c.l.b16 %v365
        %v622 = vunpack.c.l.b16 %v366
        %v623 = vunpack.c.l.b16 %v367
        %v624 = vunpack.c.l.b16 %v368
        %v625 = vunpack.c.l.b16 %v369
        %v626 = vunpack.c.l.b16 %v370
        %v627 = vunpack.c.l.b16 %v371
        %v628 = vunpack.c.l.b16 %v372
        %v629 = vunpack.c.l.b16 %v373
        %v630 = vunpack.c.l.b16 %v374
        %v631 = vunpack.c.l.b16 %v375
        %v632 = vunpack.c.l.b16 %v376
        %v633 = vunpack.c.l.b16 %v377
        %v634 = vunpack.c.l.b16 %v378
        %v635 = vunpack.c.l.b16 %v379
        %v636 = vunpack.c.l.b16 %v380
        %v637 = vunpack.c.l.b16 %v381
        %v638 = vunpack.c.l.b16 %v382
        %v639 = vunpack.c.l.b16 %v383
        %v640 = vunpack.c.l.b16 %v384
        %v641 = vunpack.c.l.b16 %v385
        %v642 = vunpack.c.l.b16 %v386
        %v643 = vunpack.c.l.b16 %v387
        %v644 = vunpack.c.l.b16 %v388
        %v645 = vunpack.c.l.b16 %v389
        %v646 = vunpack.c.l.b16 %v390
        %v647 = vunpack.c.l.b16 %v391
        %v648 = vunpack.c.l.b16 %v392
        %v649 = vunpack.c.l.b16 %v393
        %v650 = vunpack.c.l.b16 %v394
        %v651 = vunpack.c.l.b16 %v395
        %v652 = vpack.c.b16 %v621, %v620
        %v653 = vpack.c.b16 %v623, %v622
        %v654 = vpack.c.b16 %v625, %v624
        %v655 = vpack.c.b16 %v627, %v626
        %v656 = vpack.c.b16 %v629, %v628
        %v657 = vpack.c.b16 %v631, %v630
        %v658 = vpack.c.b16 %v633, %v632
        %v659 = vpack.c.b16 %v635, %v634
        %v660 = vpack.c.b16 %v637, %v636
        %v661 = vpack.c.b16 %v639, %v638
        %v662 = vpack.c.b16 %v641, %v640
        %v663 = vpack.c.b16 %v643, %v642
        %v664 = vpack.c.b16 %v645, %v644
        %v665 = vpack.c.b16 %v647, %v646
        %v666 = vpack.c.b16 %v649, %v648
        %v667 = vpack.c.b16 %v651, %v650
        %684 = vmatpush.bf16.msra.mxu0 %v659
        %685 = vmatpush.bf16.msra.mxu0 %v658
        %686 = vmatpush.bf16.msra.mxu0 %v657
        %687 = vmatpush.bf16.msra.mxu0 %v656
        %688 = vmatpush.bf16.msra.mxu0 %v655
        %689 = vmatpush.bf16.msra.mxu0 %v654
        %690 = vmatpush.bf16.msra.mxu0 %v653
        %691 = vmatpush.bf16.msra.mxu0 %v652
        %692 = vmatmul.bf16.gmra.mxu0 %v524
        %v693 = vpop.f32.mrf.mxu0
        %v694 = vadd.f32 0.0, %v693
        %v695 = vpop.f32.mrf.mxu0
        %v696 = vadd.f32 0.0, %v695
        %697 = vmatmul.bf16.gmra.mxu0 %v526
        %v698 = vpop.f32.mrf.mxu0
        %v699 = vadd.f32 0.0, %v698
        %v700 = vpop.f32.mrf.mxu0
        %v701 = vadd.f32 0.0, %v700
        %702 = vmatmul.bf16.gmra.mxu0 %v528
        %v703 = vpop.f32.mrf.mxu0
        %v704 = vadd.f32 0.0, %v703
        %v705 = vpop.f32.mrf.mxu0
        %v706 = vadd.f32 0.0, %v705
        %707 = vmatmul.bf16.gmra.mxu0 %v530
        %v708 = vpop.f32.mrf.mxu0
        %v709 = vadd.f32 0.0, %v708
        %v710 = vpop.f32.mrf.mxu0
        %v711 = vadd.f32 0.0, %v710
        %712 = vmatmul.bf16.gmra.mxu0 %v532
        %v713 = vpop.f32.mrf.mxu0
        %v714 = vadd.f32 0.0, %v713
        %v715 = vpop.f32.mrf.mxu0
        %v716 = vadd.f32 0.0, %v715
        %717 = vmatmul.bf16.gmra.mxu0 %v534
        %v718 = vpop.f32.mrf.mxu0
        %v719 = vadd.f32 0.0, %v718
        %v720 = vpop.f32.mrf.mxu0
        %v721 = vadd.f32 0.0, %v720
        %722 = vmatmul.bf16.gmra.mxu0 %v536
        %v723 = vpop.f32.mrf.mxu0
        %v724 = vadd.f32 0.0, %v723
        %v725 = vpop.f32.mrf.mxu0
        %v726 = vadd.f32 0.0, %v725
        %727 = vmatmul.bf16.gmra.mxu0 %v538
        %v728 = vpop.f32.mrf.mxu0
        %v729 = vadd.f32 0.0, %v728
        %v730 = vpop.f32.mrf.mxu0
        %v731 = vadd.f32 0.0, %v730
        %732 = vmatmul.bf16.gmra.mxu0 %v540
        %v733 = vpop.f32.mrf.mxu0
        %v734 = vadd.f32 0.0, %v733
        %v735 = vpop.f32.mrf.mxu0
        %v736 = vadd.f32 0.0, %v735
        %737 = vmatmul.bf16.gmra.mxu0 %v542
        %v738 = vpop.f32.mrf.mxu0
        %v739 = vadd.f32 0.0, %v738
        %v740 = vpop.f32.mrf.mxu0
        %v741 = vadd.f32 0.0, %v740
        %742 = vmatmul.bf16.gmra.mxu0 %v544
        %v743 = vpop.f32.mrf.mxu0
        %v744 = vadd.f32 0.0, %v743
        %v745 = vpop.f32.mrf.mxu0
        %v746 = vadd.f32 0.0, %v745
        %747 = vmatmul.bf16.gmra.mxu0 %v546
        %v748 = vpop.f32.mrf.mxu0
        %v749 = vadd.f32 0.0, %v748
        %v750 = vpop.f32.mrf.mxu0
        %v751 = vadd.f32 0.0, %v750
        %752 = vmatmul.bf16.gmra.mxu0 %v548
        %v753 = vpop.f32.mrf.mxu0
        %v754 = vadd.f32 0.0, %v753
        %v755 = vpop.f32.mrf.mxu0
        %v756 = vadd.f32 0.0, %v755
        %757 = vmatmul.bf16.gmra.mxu0 %v550
        %v758 = vpop.f32.mrf.mxu0
        %v759 = vadd.f32 0.0, %v758
        %v760 = vpop.f32.mrf.mxu0
        %v761 = vadd.f32 0.0, %v760
        %762 = vmatmul.bf16.gmra.mxu0 %v552
        %v763 = vpop.f32.mrf.mxu0
        %v764 = vadd.f32 0.0, %v763
        %v765 = vpop.f32.mrf.mxu0
        %v766 = vadd.f32 0.0, %v765
        %767 = vmatmul.bf16.gmra.mxu0 %v554
        %v768 = vpop.f32.mrf.mxu0
        %v769 = vadd.f32 0.0, %v768
        %v770 = vpop.f32.mrf.mxu0
        %v771 = vadd.f32 0.0, %v770
        %772 = vdwg.mxu0
        %773 = vmatpush.bf16.msra.mxu0 %v667
        %774 = vmatpush.bf16.msra.mxu0 %v666
        %775 = vmatpush.bf16.msra.mxu0 %v665
        %776 = vmatpush.bf16.msra.mxu0 %v664
        %777 = vmatpush.bf16.msra.mxu0 %v663
        %778 = vmatpush.bf16.msra.mxu0 %v662
        %779 = vmatpush.bf16.msra.mxu0 %v661
        %780 = vmatpush.bf16.msra.mxu0 %v660
        %781 = vmatmul.bf16.gmra.mxu0 %v525
        %v782 = vpop.f32.mrf.mxu0
        %v783 = vadd.f32 %v694, %v782
        %v784 = vpop.f32.mrf.mxu0
        %v785 = vadd.f32 %v696, %v784
        %786 = vmatmul.bf16.gmra.mxu0 %v527
        %v787 = vpop.f32.mrf.mxu0
        %v788 = vadd.f32 %v699, %v787
        %v789 = vpop.f32.mrf.mxu0
        %v790 = vadd.f32 %v701, %v789
        %791 = vmatmul.bf16.gmra.mxu0 %v529
        %v792 = vpop.f32.mrf.mxu0
        %v793 = vadd.f32 %v704, %v792
        %v794 = vpop.f32.mrf.mxu0
        %v795 = vadd.f32 %v706, %v794
        %796 = vmatmul.bf16.gmra.mxu0 %v531
        %v797 = vpop.f32.mrf.mxu0
        %v798 = vadd.f32 %v709, %v797
        %v799 = vpop.f32.mrf.mxu0
        %v800 = vadd.f32 %v711, %v799
        %801 = vmatmul.bf16.gmra.mxu0 %v533
        %v802 = vpop.f32.mrf.mxu0
        %v803 = vadd.f32 %v714, %v802
        %v804 = vpop.f32.mrf.mxu0
        %v805 = vadd.f32 %v716, %v804
        %806 = vmatmul.bf16.gmra.mxu0 %v535
        %v807 = vpop.f32.mrf.mxu0
        %v808 = vadd.f32 %v719, %v807
        %v809 = vpop.f32.mrf.mxu0
        %v810 = vadd.f32 %v721, %v809
        %811 = vmatmul.bf16.gmra.mxu0 %v537
        %v812 = vpop.f32.mrf.mxu0
        %v813 = vadd.f32 %v724, %v812
        %v814 = vpop.f32.mrf.mxu0
        %v815 = vadd.f32 %v726, %v814
        %816 = vmatmul.bf16.gmra.mxu0 %v539
        %v817 = vpop.f32.mrf.mxu0
        %v818 = vadd.f32 %v729, %v817
        %v819 = vpop.f32.mrf.mxu0
        %v820 = vadd.f32 %v731, %v819
        %821 = vmatmul.bf16.gmra.mxu0 %v541
        %v822 = vpop.f32.mrf.mxu0
        %v823 = vadd.f32 %v734, %v822
        %v824 = vpop.f32.mrf.mxu0
        %v825 = vadd.f32 %v736, %v824
        %826 = vmatmul.bf16.gmra.mxu0 %v543
        %v827 = vpop.f32.mrf.mxu0
        %v828 = vadd.f32 %v739, %v827
        %v829 = vpop.f32.mrf.mxu0
        %v830 = vadd.f32 %v741, %v829
        %831 = vmatmul.bf16.gmra.mxu0 %v545
        %v832 = vpop.f32.mrf.mxu0
        %v833 = vadd.f32 %v744, %v832
        %v834 = vpop.f32.mrf.mxu0
        %v835 = vadd.f32 %v746, %v834
        %836 = vmatmul.bf16.gmra.mxu0 %v547
        %v837 = vpop.f32.mrf.mxu0
        %v838 = vadd.f32 %v749, %v837
        %v839 = vpop.f32.mrf.mxu0
        %v840 = vadd.f32 %v751, %v839
        %841 = vmatmul.bf16.gmra.mxu0 %v549
        %v842 = vpop.f32.mrf.mxu0
        %v843 = vadd.f32 %v754, %v842
        %v844 = vpop.f32.mrf.mxu0
        %v845 = vadd.f32 %v756, %v844
        %846 = vmatmul.bf16.gmra.mxu0 %v551
        %v847 = vpop.f32.mrf.mxu0
        %v848 = vadd.f32 %v759, %v847
        %v849 = vpop.f32.mrf.mxu0
        %v850 = vadd.f32 %v761, %v849
        %851 = vmatmul.bf16.gmra.mxu0 %v553
        %v852 = vpop.f32.mrf.mxu0
        %v853 = vadd.f32 %v764, %v852
        %v854 = vpop.f32.mrf.mxu0
        %v855 = vadd.f32 %v766, %v854
        %856 = vmatmul.bf16.gmra.mxu0 %v555
        %v857 = vpop.f32.mrf.mxu0
        %v858 = vadd.f32 %v769, %v857
        %v859 = vpop.f32.mrf.mxu0
        %v860 = vadd.f32 %v771, %v859
        %861 = vdwg.mxu0
        %v862 = vld [vmem:[%s3] sm:$0xff]
        %v863 = vld [vmem:[%s3 + $0x8] sm:$0xff]
        %v864 = vpack.c.bf16 %v785, %v783
        %v865 = vpack.c.bf16 %v790, %v788
        %v866 = vpack.c.bf16 %v795, %v793
        %v867 = vpack.c.bf16 %v800, %v798
        %v868 = vpack.c.bf16 %v805, %v803
        %v869 = vpack.c.bf16 %v810, %v808
        %v870 = vpack.c.bf16 %v815, %v813
        %v871 = vpack.c.bf16 %v820, %v818
        %v872 = vpack.c.bf16 %v825, %v823
        %v873 = vpack.c.bf16 %v830, %v828
        %v874 = vpack.c.bf16 %v835, %v833
        %v875 = vpack.c.bf16 %v840, %v838
        %v876 = vpack.c.bf16 %v845, %v843
        %v877 = vpack.c.bf16 %v850, %v848
        %v878 = vpack.c.bf16 %v855, %v853
        %v879 = vpack.c.bf16 %v860, %v858
        %v880 = vld [vmem:[%s6] ss:$8 sm:$0x3]
        %v882 = vperm.slane %v880, 0
        %v883 = vperm.slane %v880, 1
        %v888 = vunpack.c.l.b16 %v862
        %v889 = vunpack.c.h.b16 %v862
        %v890 = vunpack.c.l.b16 %v863
        %v891 = vunpack.c.h.b16 %v863
        %v892 = vpack.c.b16 %v890, %v888
        %v893 = vpack.c.b16 %v891, %v889
        %vm896 = vcmask 130048
        %v898 = vsel %vm896, %v864, 0
        %v901 = vsel %vm896, %v865, 0
        %v904 = vsel %vm896, %v866, 0
        %v907 = vsel %vm896, %v867, 0
        %v910 = vsel %vm896, %v868, 0
        %v913 = vsel %vm896, %v869, 0
        %v916 = vsel %vm896, %v870, 0
        %v919 = vsel %vm896, %v871, 0
        %v922 = vsel %vm896, %v872, 0
        %v925 = vsel %vm896, %v873, 0
        %v928 = vsel %vm896, %v874, 0
        %v931 = vsel %vm896, %v875, 0
        %v934 = vsel %vm896, %v876, 0
        %v937 = vsel %vm896, %v877, 0
        %v940 = vsel %vm896, %v878, 0
        %v943 = vsel %vm896, %v879, 0
        %945 = vmatpush.bf16.msra.mxu0 0
        %946 = vmatpush.bf16.msra.mxu0 0
        %947 = vmatpush.bf16.msra.mxu0 0
        %948 = vmatpush.bf16.msra.mxu0 0
        %949 = vmatpush.bf16.msra.mxu0 0
        %950 = vmatpush.bf16.msra.mxu0 0
        %951 = vmatpush.bf16.msra.mxu0 0
        %952 = vmatpush.bf16.msra.mxu0 %v892
        %953 = vmatmul.bf16.gmra.mxu0 %v898
        %v954 = vpop.f32.mrf.mxu0
        %v955 = vadd.f32 %v882, %v954
        %v956 = vpop.f32.mrf.mxu0
        %v957 = vadd.f32 %v882, %v956
        %958 = vmatmul.bf16.gmra.mxu0 %v901
        %v959 = vpop.f32.mrf.mxu0
        %v960 = vadd.f32 %v882, %v959
        %v961 = vpop.f32.mrf.mxu0
        %v962 = vadd.f32 %v882, %v961
        %963 = vmatmul.bf16.gmra.mxu0 %v904
        %v964 = vpop.f32.mrf.mxu0
        %v965 = vadd.f32 %v882, %v964
        %v966 = vpop.f32.mrf.mxu0
        %v967 = vadd.f32 %v882, %v966
        %968 = vmatmul.bf16.gmra.mxu0 %v907
        %v969 = vpop.f32.mrf.mxu0
        %v970 = vadd.f32 %v882, %v969
        %v971 = vpop.f32.mrf.mxu0
        %v972 = vadd.f32 %v882, %v971
        %973 = vmatmul.bf16.gmra.mxu0 %v910
        %v974 = vpop.f32.mrf.mxu0
        %v975 = vadd.f32 %v882, %v974
        %v976 = vpop.f32.mrf.mxu0
        %v977 = vadd.f32 %v882, %v976
        %978 = vmatmul.bf16.gmra.mxu0 %v913
        %v979 = vpop.f32.mrf.mxu0
        %v980 = vadd.f32 %v882, %v979
        %v981 = vpop.f32.mrf.mxu0
        %v982 = vadd.f32 %v882, %v981
        %983 = vmatmul.bf16.gmra.mxu0 %v916
        %v984 = vpop.f32.mrf.mxu0
        %v985 = vadd.f32 %v882, %v984
        %v986 = vpop.f32.mrf.mxu0
        %v987 = vadd.f32 %v882, %v986
        %988 = vmatmul.bf16.gmra.mxu0 %v919
        %v989 = vpop.f32.mrf.mxu0
        %v990 = vadd.f32 %v882, %v989
        %v991 = vpop.f32.mrf.mxu0
        %v992 = vadd.f32 %v882, %v991
        %993 = vmatmul.bf16.gmra.mxu0 %v922
        %v994 = vpop.f32.mrf.mxu0
        %v995 = vadd.f32 %v882, %v994
        %v996 = vpop.f32.mrf.mxu0
        %v997 = vadd.f32 %v882, %v996
        %998 = vmatmul.bf16.gmra.mxu0 %v925
        %v999 = vpop.f32.mrf.mxu0
        %v1000 = vadd.f32 %v882, %v999
        %v1001 = vpop.f32.mrf.mxu0
        %v1002 = vadd.f32 %v882, %v1001
        %1003 = vmatmul.bf16.gmra.mxu0 %v928
        %v1004 = vpop.f32.mrf.mxu0
        %v1005 = vadd.f32 %v882, %v1004
        %v1006 = vpop.f32.mrf.mxu0
        %v1007 = vadd.f32 %v882, %v1006
        %1008 = vmatmul.bf16.gmra.mxu0 %v931
        %v1009 = vpop.f32.mrf.mxu0
        %v1010 = vadd.f32 %v882, %v1009
        %v1011 = vpop.f32.mrf.mxu0
        %v1012 = vadd.f32 %v882, %v1011
        %1013 = vmatmul.bf16.gmra.mxu0 %v934
        %v1014 = vpop.f32.mrf.mxu0
        %v1015 = vadd.f32 %v882, %v1014
        %v1016 = vpop.f32.mrf.mxu0
        %v1017 = vadd.f32 %v882, %v1016
        %1018 = vmatmul.bf16.gmra.mxu0 %v937
        %v1019 = vpop.f32.mrf.mxu0
        %v1020 = vadd.f32 %v882, %v1019
        %v1021 = vpop.f32.mrf.mxu0
        %v1022 = vadd.f32 %v882, %v1021
        %1023 = vmatmul.bf16.gmra.mxu0 %v940
        %v1024 = vpop.f32.mrf.mxu0
        %v1025 = vadd.f32 %v882, %v1024
        %v1026 = vpop.f32.mrf.mxu0
        %v1027 = vadd.f32 %v882, %v1026
        %1028 = vmatmul.bf16.gmra.mxu0 %v943
        %v1029 = vpop.f32.mrf.mxu0
        %v1030 = vadd.f32 %v882, %v1029
        %v1031 = vpop.f32.mrf.mxu0
        %v1032 = vadd.f32 %v882, %v1031
        %1033 = vdwg.mxu0
        %1034 = vmatpush.bf16.msra.mxu0 0
        %1035 = vmatpush.bf16.msra.mxu0 0
        %1036 = vmatpush.bf16.msra.mxu0 0
        %1037 = vmatpush.bf16.msra.mxu0 0
        %1038 = vmatpush.bf16.msra.mxu0 0
        %1039 = vmatpush.bf16.msra.mxu0 0
        %1040 = vmatpush.bf16.msra.mxu0 0
        %1041 = vmatpush.bf16.msra.mxu0 %v893
        %1042 = vmatmul.bf16.gmra.mxu0 %v898
        %v1043 = vpop.f32.mrf.mxu0
        %v1044 = vadd.f32 %v883, %v1043
        %v1045 = vpop.f32.mrf.mxu0
        %v1046 = vadd.f32 %v883, %v1045
        %1047 = vmatmul.bf16.gmra.mxu0 %v901
        %v1048 = vpop.f32.mrf.mxu0
        %v1049 = vadd.f32 %v883, %v1048
        %v1050 = vpop.f32.mrf.mxu0
        %v1051 = vadd.f32 %v883, %v1050
        %1052 = vmatmul.bf16.gmra.mxu0 %v904
        %v1053 = vpop.f32.mrf.mxu0
        %v1054 = vadd.f32 %v883, %v1053
        %v1055 = vpop.f32.mrf.mxu0
        %v1056 = vadd.f32 %v883, %v1055
        %1057 = vmatmul.bf16.gmra.mxu0 %v907
        %v1058 = vpop.f32.mrf.mxu0
        %v1059 = vadd.f32 %v883, %v1058
        %v1060 = vpop.f32.mrf.mxu0
        %v1061 = vadd.f32 %v883, %v1060
        %1062 = vmatmul.bf16.gmra.mxu0 %v910
        %v1063 = vpop.f32.mrf.mxu0
        %v1064 = vadd.f32 %v883, %v1063
        %v1065 = vpop.f32.mrf.mxu0
        %v1066 = vadd.f32 %v883, %v1065
        %1067 = vmatmul.bf16.gmra.mxu0 %v913
        %v1068 = vpop.f32.mrf.mxu0
        %v1069 = vadd.f32 %v883, %v1068
        %v1070 = vpop.f32.mrf.mxu0
        %v1071 = vadd.f32 %v883, %v1070
        %1072 = vmatmul.bf16.gmra.mxu0 %v916
        %v1073 = vpop.f32.mrf.mxu0
        %v1074 = vadd.f32 %v883, %v1073
        %v1075 = vpop.f32.mrf.mxu0
        %v1076 = vadd.f32 %v883, %v1075
        %1077 = vmatmul.bf16.gmra.mxu0 %v919
        %v1078 = vpop.f32.mrf.mxu0
        %v1079 = vadd.f32 %v883, %v1078
        %v1080 = vpop.f32.mrf.mxu0
        %v1081 = vadd.f32 %v883, %v1080
        %1082 = vmatmul.bf16.gmra.mxu0 %v922
        %v1083 = vpop.f32.mrf.mxu0
        %v1084 = vadd.f32 %v883, %v1083
        %v1085 = vpop.f32.mrf.mxu0
        %v1086 = vadd.f32 %v883, %v1085
        %1087 = vmatmul.bf16.gmra.mxu0 %v925
        %v1088 = vpop.f32.mrf.mxu0
        %v1089 = vadd.f32 %v883, %v1088
        %v1090 = vpop.f32.mrf.mxu0
        %v1091 = vadd.f32 %v883, %v1090
        %1092 = vmatmul.bf16.gmra.mxu0 %v928
        %v1093 = vpop.f32.mrf.mxu0
        %v1094 = vadd.f32 %v883, %v1093
        %v1095 = vpop.f32.mrf.mxu0
        %v1096 = vadd.f32 %v883, %v1095
        %1097 = vmatmul.bf16.gmra.mxu0 %v931
        %v1098 = vpop.f32.mrf.mxu0
        %v1099 = vadd.f32 %v883, %v1098
        %v1100 = vpop.f32.mrf.mxu0
        %v1101 = vadd.f32 %v883, %v1100
        %1102 = vmatmul.bf16.gmra.mxu0 %v934
        %v1103 = vpop.f32.mrf.mxu0
        %v1104 = vadd.f32 %v883, %v1103
        %v1105 = vpop.f32.mrf.mxu0
        %v1106 = vadd.f32 %v883, %v1105
        %1107 = vmatmul.bf16.gmra.mxu0 %v937
        %v1108 = vpop.f32.mrf.mxu0
        %v1109 = vadd.f32 %v883, %v1108
        %v1110 = vpop.f32.mrf.mxu0
        %v1111 = vadd.f32 %v883, %v1110
        %1112 = vmatmul.bf16.gmra.mxu0 %v940
        %v1113 = vpop.f32.mrf.mxu0
        %v1114 = vadd.f32 %v883, %v1113
        %v1115 = vpop.f32.mrf.mxu0
        %v1116 = vadd.f32 %v883, %v1115
        %1117 = vmatmul.bf16.gmra.mxu0 %v943
        %v1118 = vpop.f32.mrf.mxu0
        %v1119 = vadd.f32 %v883, %v1118
        %v1120 = vpop.f32.mrf.mxu0
        %v1121 = vadd.f32 %v883, %v1120
        %1122 = vdwg.mxu0
        %s1123 = scalar_lea.vmem %s6, 1
        %v1124 = vld [vmem:[%s1123] ss:$8 sm:$0x3]
        %s1125 = scalar_lea.vmem %s6, 2
        %v1126 = vld [vmem:[%s1125] ss:$8 sm:$0x3]
        %v1127 = vadd.f32 %v955, %v1044
        %1128 = vadd.xlane.f32.xlu0 %v1127
        %v1129 = vpop.xlane.xlu0 %1128
        %v1130 = vadd.f32 %v957, %v1046
        %1131 = vadd.xlane.f32.xlu0 %v1130
        %v1132 = vpop.xlane.xlu0 %1131
        %v1133 = vadd.f32 %v960, %v1049
        %1134 = vadd.xlane.f32.xlu0 %v1133
        %v1135 = vpop.xlane.xlu0 %1134
        %v1136 = vadd.f32 %v962, %v1051
        %1137 = vadd.xlane.f32.xlu0 %v1136
        %v1138 = vpop.xlane.xlu0 %1137
        %v1139 = vadd.f32 %v965, %v1054
        %1140 = vadd.xlane.f32.xlu0 %v1139
        %v1141 = vpop.xlane.xlu0 %1140
        %v1142 = vadd.f32 %v967, %v1056
        %1143 = vadd.xlane.f32.xlu0 %v1142
        %v1144 = vpop.xlane.xlu0 %1143
        %v1145 = vadd.f32 %v970, %v1059
        %1146 = vadd.xlane.f32.xlu0 %v1145
        %v1147 = vpop.xlane.xlu0 %1146
        %v1148 = vadd.f32 %v972, %v1061
        %1149 = vadd.xlane.f32.xlu0 %v1148
        %v1150 = vpop.xlane.xlu0 %1149
        %v1151 = vadd.f32 %v975, %v1064
        %1152 = vadd.xlane.f32.xlu0 %v1151
        %v1153 = vpop.xlane.xlu0 %1152
        %v1154 = vadd.f32 %v977, %v1066
        %1155 = vadd.xlane.f32.xlu0 %v1154
        %v1156 = vpop.xlane.xlu0 %1155
        %v1157 = vadd.f32 %v980, %v1069
        %1158 = vadd.xlane.f32.xlu0 %v1157
        %v1159 = vpop.xlane.xlu0 %1158
        %v1160 = vadd.f32 %v982, %v1071
        %1161 = vadd.xlane.f32.xlu0 %v1160
        %v1162 = vpop.xlane.xlu0 %1161
        %v1163 = vadd.f32 %v985, %v1074
        %1164 = vadd.xlane.f32.xlu0 %v1163
        %v1165 = vpop.xlane.xlu0 %1164
        %v1166 = vadd.f32 %v987, %v1076
        %1167 = vadd.xlane.f32.xlu0 %v1166
        %v1168 = vpop.xlane.xlu0 %1167
        %v1169 = vadd.f32 %v990, %v1079
        %1170 = vadd.xlane.f32.xlu0 %v1169
        %v1171 = vpop.xlane.xlu0 %1170
        %v1172 = vadd.f32 %v992, %v1081
        %1173 = vadd.xlane.f32.xlu0 %v1172
        %v1174 = vpop.xlane.xlu0 %1173
        %v1175 = vadd.f32 %v995, %v1084
        %1176 = vadd.xlane.f32.xlu0 %v1175
        %v1177 = vpop.xlane.xlu0 %1176
        %v1178 = vadd.f32 %v997, %v1086
        %1179 = vadd.xlane.f32.xlu0 %v1178
        %v1180 = vpop.xlane.xlu0 %1179
        %v1181 = vadd.f32 %v1000, %v1089
        %1182 = vadd.xlane.f32.xlu0 %v1181
        %v1183 = vpop.xlane.xlu0 %1182
        %v1184 = vadd.f32 %v1002, %v1091
        %1185 = vadd.xlane.f32.xlu0 %v1184
        %v1186 = vpop.xlane.xlu0 %1185
        %v1187 = vadd.f32 %v1005, %v1094
        %1188 = vadd.xlane.f32.xlu0 %v1187
        %v1189 = vpop.xlane.xlu0 %1188
        %v1190 = vadd.f32 %v1007, %v1096
        %1191 = vadd.xlane.f32.xlu0 %v1190
        %v1192 = vpop.xlane.xlu0 %1191
        %v1193 = vadd.f32 %v1010, %v1099
        %1194 = vadd.xlane.f32.xlu0 %v1193
        %v1195 = vpop.xlane.xlu0 %1194
        %v1196 = vadd.f32 %v1012, %v1101
        %1197 = vadd.xlane.f32.xlu0 %v1196
        %v1198 = vpop.xlane.xlu0 %1197
        %v1199 = vadd.f32 %v1015, %v1104
        %1200 = vadd.xlane.f32.xlu0 %v1199
        %v1201 = vpop.xlane.xlu0 %1200
        %v1202 = vadd.f32 %v1017, %v1106
        %1203 = vadd.xlane.f32.xlu0 %v1202
        %v1204 = vpop.xlane.xlu0 %1203
        %v1205 = vadd.f32 %v1020, %v1109
        %1206 = vadd.xlane.f32.xlu0 %v1205
        %v1207 = vpop.xlane.xlu0 %1206
        %v1208 = vadd.f32 %v1022, %v1111
        %1209 = vadd.xlane.f32.xlu0 %v1208
        %v1210 = vpop.xlane.xlu0 %1209
        %v1211 = vadd.f32 %v1025, %v1114
        %1212 = vadd.xlane.f32.xlu0 %v1211
        %v1213 = vpop.xlane.xlu0 %1212
        %v1214 = vadd.f32 %v1027, %v1116
        %1215 = vadd.xlane.f32.xlu0 %v1214
        %v1216 = vpop.xlane.xlu0 %1215
        %v1217 = vadd.f32 %v1030, %v1119
        %1218 = vadd.xlane.f32.xlu0 %v1217
        %v1219 = vpop.xlane.xlu0 %1218
        %v1220 = vadd.f32 %v1032, %v1121
        %1221 = vadd.xlane.f32.xlu0 %v1220
        %v1222 = vpop.xlane.xlu0 %1221
        %v1223 = vrcp.pop 256.0
        %v1224 = vmul.f32 256.0, %v1223
        %v1225 = vsub.f32 1.0, %v1224
        %v1226 = vmul.f32 %v1223, %v1225
        %v1227 = vadd.f32 %v1223, %v1226
        %vm1228 = vweird.f32 %v1223
        %v1229 = vsel %vm1228, %v1223, %v1227
        %v1230 = vmul.f32 %v1129, %v1229
        %v1231 = vmul.f32 %v1132, %v1229
        %v1232 = vmul.f32 %v1135, %v1229
        %v1233 = vmul.f32 %v1138, %v1229
        %v1234 = vmul.f32 %v1141, %v1229
        %v1235 = vmul.f32 %v1144, %v1229
        %v1236 = vmul.f32 %v1147, %v1229
        %v1237 = vmul.f32 %v1150, %v1229
        %v1238 = vmul.f32 %v1153, %v1229
        %v1239 = vmul.f32 %v1156, %v1229
        %v1240 = vmul.f32 %v1159, %v1229
        %v1241 = vmul.f32 %v1162, %v1229
        %v1242 = vmul.f32 %v1165, %v1229
        %v1243 = vmul.f32 %v1168, %v1229
        %v1244 = vmul.f32 %v1171, %v1229
        %v1245 = vmul.f32 %v1174, %v1229
        %v1246 = vmul.f32 %v1177, %v1229
        %v1247 = vmul.f32 %v1180, %v1229
        %v1248 = vmul.f32 %v1183, %v1229
        %v1249 = vmul.f32 %v1186, %v1229
        %v1250 = vmul.f32 %v1189, %v1229
        %v1251 = vmul.f32 %v1192, %v1229
        %v1252 = vmul.f32 %v1195, %v1229
        %v1253 = vmul.f32 %v1198, %v1229
        %v1254 = vmul.f32 %v1201, %v1229
        %v1255 = vmul.f32 %v1204, %v1229
        %v1256 = vmul.f32 %v1207, %v1229
        %v1257 = vmul.f32 %v1210, %v1229
        %v1258 = vmul.f32 %v1213, %v1229
        %v1259 = vmul.f32 %v1216, %v1229
        %v1260 = vmul.f32 %v1219, %v1229
        %v1261 = vmul.f32 %v1222, %v1229
        %v1262 = vsub.f32 %v955, %v1230
        %v1263 = vsub.f32 %v1044, %v1230
        %v1264 = vsub.f32 %v957, %v1231
        %v1265 = vsub.f32 %v1046, %v1231
        %v1266 = vsub.f32 %v960, %v1232
        %v1267 = vsub.f32 %v1049, %v1232
        %v1268 = vsub.f32 %v962, %v1233
        %v1269 = vsub.f32 %v1051, %v1233
        %v1270 = vsub.f32 %v965, %v1234
        %v1271 = vsub.f32 %v1054, %v1234
        %v1272 = vsub.f32 %v967, %v1235
        %v1273 = vsub.f32 %v1056, %v1235
        %v1274 = vsub.f32 %v970, %v1236
        %v1275 = vsub.f32 %v1059, %v1236
        %v1276 = vsub.f32 %v972, %v1237
        %v1277 = vsub.f32 %v1061, %v1237
        %v1278 = vsub.f32 %v975, %v1238
        %v1279 = vsub.f32 %v1064, %v1238
        %v1280 = vsub.f32 %v977, %v1239
        %v1281 = vsub.f32 %v1066, %v1239
        %v1282 = vsub.f32 %v980, %v1240
        %v1283 = vsub.f32 %v1069, %v1240
        %v1284 = vsub.f32 %v982, %v1241
        %v1285 = vsub.f32 %v1071, %v1241
        %v1286 = vsub.f32 %v985, %v1242
        %v1287 = vsub.f32 %v1074, %v1242
        %v1288 = vsub.f32 %v987, %v1243
        %v1289 = vsub.f32 %v1076, %v1243
        %v1290 = vsub.f32 %v990, %v1244
        %v1291 = vsub.f32 %v1079, %v1244
        %v1292 = vsub.f32 %v992, %v1245
        %v1293 = vsub.f32 %v1081, %v1245
        %v1294 = vsub.f32 %v995, %v1246
        %v1295 = vsub.f32 %v1084, %v1246
        %v1296 = vsub.f32 %v997, %v1247
        %v1297 = vsub.f32 %v1086, %v1247
        %v1298 = vsub.f32 %v1000, %v1248
        %v1299 = vsub.f32 %v1089, %v1248
        %v1300 = vsub.f32 %v1002, %v1249
        %v1301 = vsub.f32 %v1091, %v1249
        %v1302 = vsub.f32 %v1005, %v1250
        %v1303 = vsub.f32 %v1094, %v1250
        %v1304 = vsub.f32 %v1007, %v1251
        %v1305 = vsub.f32 %v1096, %v1251
        %v1306 = vsub.f32 %v1010, %v1252
        %v1307 = vsub.f32 %v1099, %v1252
        %v1308 = vsub.f32 %v1012, %v1253
        %v1309 = vsub.f32 %v1101, %v1253
        %v1310 = vsub.f32 %v1015, %v1254
        %v1311 = vsub.f32 %v1104, %v1254
        %v1312 = vsub.f32 %v1017, %v1255
        %v1313 = vsub.f32 %v1106, %v1255
        %v1314 = vsub.f32 %v1020, %v1256
        %v1315 = vsub.f32 %v1109, %v1256
        %v1316 = vsub.f32 %v1022, %v1257
        %v1317 = vsub.f32 %v1111, %v1257
        %v1318 = vsub.f32 %v1025, %v1258
        %v1319 = vsub.f32 %v1114, %v1258
        %v1320 = vsub.f32 %v1027, %v1259
        %v1321 = vsub.f32 %v1116, %v1259
        %v1322 = vsub.f32 %v1030, %v1260
        %v1323 = vsub.f32 %v1119, %v1260
        %v1324 = vsub.f32 %v1032, %v1261
        %v1325 = vsub.f32 %v1121, %v1261
        %v1326 = vmul.f32 %v1262, %v1262
        %v1327 = vmul.f32 %v1263, %v1263
        %v1328 = vmul.f32 %v1264, %v1264
        %v1329 = vmul.f32 %v1265, %v1265
        %v1330 = vmul.f32 %v1266, %v1266
        %v1331 = vmul.f32 %v1267, %v1267
        %v1332 = vmul.f32 %v1268, %v1268
        %v1333 = vmul.f32 %v1269, %v1269
        %v1334 = vmul.f32 %v1270, %v1270
        %v1335 = vmul.f32 %v1271, %v1271
        %v1336 = vmul.f32 %v1272, %v1272
        %v1337 = vmul.f32 %v1273, %v1273
        %v1338 = vmul.f32 %v1274, %v1274
        %v1339 = vmul.f32 %v1275, %v1275
        %v1340 = vmul.f32 %v1276, %v1276
        %v1341 = vmul.f32 %v1277, %v1277
        %v1342 = vmul.f32 %v1278, %v1278
        %v1343 = vmul.f32 %v1279, %v1279
        %v1344 = vmul.f32 %v1280, %v1280
        %v1345 = vmul.f32 %v1281, %v1281
        %v1346 = vmul.f32 %v1282, %v1282
        %v1347 = vmul.f32 %v1283, %v1283
        %v1348 = vmul.f32 %v1284, %v1284
        %v1349 = vmul.f32 %v1285, %v1285
        %v1350 = vmul.f32 %v1286, %v1286
        %v1351 = vmul.f32 %v1287, %v1287
        %v1352 = vmul.f32 %v1288, %v1288
        %v1353 = vmul.f32 %v1289, %v1289
        %v1354 = vmul.f32 %v1290, %v1290
        %v1355 = vmul.f32 %v1291, %v1291
        %v1356 = vmul.f32 %v1292, %v1292
        %v1357 = vmul.f32 %v1293, %v1293
        %v1358 = vmul.f32 %v1294, %v1294
        %v1359 = vmul.f32 %v1295, %v1295
        %v1360 = vmul.f32 %v1296, %v1296
        %v1361 = vmul.f32 %v1297, %v1297
        %v1362 = vmul.f32 %v1298, %v1298
        %v1363 = vmul.f32 %v1299, %v1299
        %v1364 = vmul.f32 %v1300, %v1300
        %v1365 = vmul.f32 %v1301, %v1301
        %v1366 = vmul.f32 %v1302, %v1302
        %v1367 = vmul.f32 %v1303, %v1303
        %v1368 = vmul.f32 %v1304, %v1304
        %v1369 = vmul.f32 %v1305, %v1305
        %v1370 = vmul.f32 %v1306, %v1306
        %v1371 = vmul.f32 %v1307, %v1307
        %v1372 = vmul.f32 %v1308, %v1308
        %v1373 = vmul.f32 %v1309, %v1309
        %v1374 = vmul.f32 %v1310, %v1310
        %v1375 = vmul.f32 %v1311, %v1311
        %v1376 = vmul.f32 %v1312, %v1312
        %v1377 = vmul.f32 %v1313, %v1313
        %v1378 = vmul.f32 %v1314, %v1314
        %v1379 = vmul.f32 %v1315, %v1315
        %v1380 = vmul.f32 %v1316, %v1316
        %v1381 = vmul.f32 %v1317, %v1317
        %v1382 = vmul.f32 %v1318, %v1318
        %v1383 = vmul.f32 %v1319, %v1319
        %v1384 = vmul.f32 %v1320, %v1320
        %v1385 = vmul.f32 %v1321, %v1321
        %v1386 = vmul.f32 %v1322, %v1322
        %v1387 = vmul.f32 %v1323, %v1323
        %v1388 = vmul.f32 %v1324, %v1324
        %v1389 = vmul.f32 %v1325, %v1325
        %v1390 = vadd.f32 %v1326, %v1327
        %1391 = vadd.xlane.f32.xlu0 %v1390
        %v1392 = vpop.xlane.xlu0 %1391
        %v1393 = vadd.f32 %v1328, %v1329
        %1394 = vadd.xlane.f32.xlu0 %v1393
        %v1395 = vpop.xlane.xlu0 %1394
        %v1396 = vadd.f32 %v1330, %v1331
        %1397 = vadd.xlane.f32.xlu0 %v1396
        %v1398 = vpop.xlane.xlu0 %1397
        %v1399 = vadd.f32 %v1332, %v1333
        %1400 = vadd.xlane.f32.xlu0 %v1399
        %v1401 = vpop.xlane.xlu0 %1400
        %v1402 = vadd.f32 %v1334, %v1335
        %1403 = vadd.xlane.f32.xlu0 %v1402
        %v1404 = vpop.xlane.xlu0 %1403
        %v1405 = vadd.f32 %v1336, %v1337
        %1406 = vadd.xlane.f32.xlu0 %v1405
        %v1407 = vpop.xlane.xlu0 %1406
        %v1408 = vadd.f32 %v1338, %v1339
        %1409 = vadd.xlane.f32.xlu0 %v1408
        %v1410 = vpop.xlane.xlu0 %1409
        %v1411 = vadd.f32 %v1340, %v1341
        %1412 = vadd.xlane.f32.xlu0 %v1411
        %v1413 = vpop.xlane.xlu0 %1412
        %v1414 = vadd.f32 %v1342, %v1343
        %1415 = vadd.xlane.f32.xlu0 %v1414
        %v1416 = vpop.xlane.xlu0 %1415
        %v1417 = vadd.f32 %v1344, %v1345
        %1418 = vadd.xlane.f32.xlu0 %v1417
        %v1419 = vpop.xlane.xlu0 %1418
        %v1420 = vadd.f32 %v1346, %v1347
        %1421 = vadd.xlane.f32.xlu0 %v1420
        %v1422 = vpop.xlane.xlu0 %1421
        %v1423 = vadd.f32 %v1348, %v1349
        %1424 = vadd.xlane.f32.xlu0 %v1423
        %v1425 = vpop.xlane.xlu0 %1424
        %v1426 = vadd.f32 %v1350, %v1351
        %1427 = vadd.xlane.f32.xlu0 %v1426
        %v1428 = vpop.xlane.xlu0 %1427
        %v1429 = vadd.f32 %v1352, %v1353
        %1430 = vadd.xlane.f32.xlu0 %v1429
        %v1431 = vpop.xlane.xlu0 %1430
        %v1432 = vadd.f32 %v1354, %v1355
        %1433 = vadd.xlane.f32.xlu0 %v1432
        %v1434 = vpop.xlane.xlu0 %1433
        %v1435 = vadd.f32 %v1356, %v1357
        %1436 = vadd.xlane.f32.xlu0 %v1435
        %v1437 = vpop.xlane.xlu0 %1436
        %v1438 = vadd.f32 %v1358, %v1359
        %1439 = vadd.xlane.f32.xlu0 %v1438
        %v1440 = vpop.xlane.xlu0 %1439
        %v1441 = vadd.f32 %v1360, %v1361
        %1442 = vadd.xlane.f32.xlu0 %v1441
        %v1443 = vpop.xlane.xlu0 %1442
        %v1444 = vadd.f32 %v1362, %v1363
        %1445 = vadd.xlane.f32.xlu0 %v1444
        %v1446 = vpop.xlane.xlu0 %1445
        %v1447 = vadd.f32 %v1364, %v1365
        %1448 = vadd.xlane.f32.xlu0 %v1447
        %v1449 = vpop.xlane.xlu0 %1448
        %v1450 = vadd.f32 %v1366, %v1367
        %1451 = vadd.xlane.f32.xlu0 %v1450
        %v1452 = vpop.xlane.xlu0 %1451
        %v1453 = vadd.f32 %v1368, %v1369
        %1454 = vadd.xlane.f32.xlu0 %v1453
        %v1455 = vpop.xlane.xlu0 %1454
        %v1456 = vadd.f32 %v1370, %v1371
        %1457 = vadd.xlane.f32.xlu0 %v1456
        %v1458 = vpop.xlane.xlu0 %1457
        %v1459 = vadd.f32 %v1372, %v1373
        %1460 = vadd.xlane.f32.xlu0 %v1459
        %v1461 = vpop.xlane.xlu0 %1460
        %v1462 = vadd.f32 %v1374, %v1375
        %1463 = vadd.xlane.f32.xlu0 %v1462
        %v1464 = vpop.xlane.xlu0 %1463
        %v1465 = vadd.f32 %v1376, %v1377
        %1466 = vadd.xlane.f32.xlu0 %v1465
        %v1467 = vpop.xlane.xlu0 %1466
        %v1468 = vadd.f32 %v1378, %v1379
        %1469 = vadd.xlane.f32.xlu0 %v1468
        %v1470 = vpop.xlane.xlu0 %1469
        %v1471 = vadd.f32 %v1380, %v1381
        %1472 = vadd.xlane.f32.xlu0 %v1471
        %v1473 = vpop.xlane.xlu0 %1472
        %v1474 = vadd.f32 %v1382, %v1383
        %1475 = vadd.xlane.f32.xlu0 %v1474
        %v1476 = vpop.xlane.xlu0 %1475
        %v1477 = vadd.f32 %v1384, %v1385
        %1478 = vadd.xlane.f32.xlu0 %v1477
        %v1479 = vpop.xlane.xlu0 %1478
        %v1480 = vadd.f32 %v1386, %v1387
        %1481 = vadd.xlane.f32.xlu0 %v1480
        %v1482 = vpop.xlane.xlu0 %1481
        %v1483 = vadd.f32 %v1388, %v1389
        %1484 = vadd.xlane.f32.xlu0 %v1483
        %v1485 = vpop.xlane.xlu0 %1484
        %v1486 = vmul.f32 %v1392, %v1229
        %v1487 = vmul.f32 %v1395, %v1229
        %v1488 = vmul.f32 %v1398, %v1229
        %v1489 = vmul.f32 %v1401, %v1229
        %v1490 = vmul.f32 %v1404, %v1229
        %v1491 = vmul.f32 %v1407, %v1229
        %v1492 = vmul.f32 %v1410, %v1229
        %v1493 = vmul.f32 %v1413, %v1229
        %v1494 = vmul.f32 %v1416, %v1229
        %v1495 = vmul.f32 %v1419, %v1229
        %v1496 = vmul.f32 %v1422, %v1229
        %v1497 = vmul.f32 %v1425, %v1229
        %v1498 = vmul.f32 %v1428, %v1229
        %v1499 = vmul.f32 %v1431, %v1229
        %v1500 = vmul.f32 %v1434, %v1229
        %v1501 = vmul.f32 %v1437, %v1229
        %v1502 = vmul.f32 %v1440, %v1229
        %v1503 = vmul.f32 %v1443, %v1229
        %v1504 = vmul.f32 %v1446, %v1229
        %v1505 = vmul.f32 %v1449, %v1229
        %v1506 = vmul.f32 %v1452, %v1229
        %v1507 = vmul.f32 %v1455, %v1229
        %v1508 = vmul.f32 %v1458, %v1229
        %v1509 = vmul.f32 %v1461, %v1229
        %v1510 = vmul.f32 %v1464, %v1229
        %v1511 = vmul.f32 %v1467, %v1229
        %v1512 = vmul.f32 %v1470, %v1229
        %v1513 = vmul.f32 %v1473, %v1229
        %v1514 = vmul.f32 %v1476, %v1229
        %v1515 = vmul.f32 %v1479, %v1229
        %v1516 = vmul.f32 %v1482, %v1229
        %v1517 = vmul.f32 %v1485, %v1229
        %v1518 = vadd.f32 %v1486, 1e-05
        %v1519 = vadd.f32 %v1487, 1e-05
        %v1520 = vadd.f32 %v1488, 1e-05
        %v1521 = vadd.f32 %v1489, 1e-05
        %v1522 = vadd.f32 %v1490, 1e-05
        %v1523 = vadd.f32 %v1491, 1e-05
        %v1524 = vadd.f32 %v1492, 1e-05
        %v1525 = vadd.f32 %v1493, 1e-05
        %v1526 = vadd.f32 %v1494, 1e-05
        %v1527 = vadd.f32 %v1495, 1e-05
        %v1528 = vadd.f32 %v1496, 1e-05
        %v1529 = vadd.f32 %v1497, 1e-05
        %v1530 = vadd.f32 %v1498, 1e-05
        %v1531 = vadd.f32 %v1499, 1e-05
        %v1532 = vadd.f32 %v1500, 1e-05
        %v1533 = vadd.f32 %v1501, 1e-05
        %v1534 = vadd.f32 %v1502, 1e-05
        %v1535 = vadd.f32 %v1503, 1e-05
        %v1536 = vadd.f32 %v1504, 1e-05
        %v1537 = vadd.f32 %v1505, 1e-05
        %v1538 = vadd.f32 %v1506, 1e-05
        %v1539 = vadd.f32 %v1507, 1e-05
        %v1540 = vadd.f32 %v1508, 1e-05
        %v1541 = vadd.f32 %v1509, 1e-05
        %v1542 = vadd.f32 %v1510, 1e-05
        %v1543 = vadd.f32 %v1511, 1e-05
        %v1544 = vadd.f32 %v1512, 1e-05
        %v1545 = vadd.f32 %v1513, 1e-05
        %v1546 = vadd.f32 %v1514, 1e-05
        %v1547 = vadd.f32 %v1515, 1e-05
        %v1548 = vadd.f32 %v1516, 1e-05
        %v1549 = vadd.f32 %v1517, 1e-05
        %v1550 = vrsqrt.pop %v1518
        %v1551 = vmul.f32 %v1550, %v1518
        %v1552 = vmul.f32 %v1551, %v1550
        %v1553 = vmul.f32 0.5, %v1552
        %v1554 = vsub.f32 1.5, %v1553
        %v1555 = vmul.f32 %v1550, %v1554
        %vm1556 = vweird.f32 %v1518
        %vm1557 = vweird.f32 %v1550
        %vm1558 = vmor %vm1556, %vm1557
        %v1559 = vsel %vm1558, %v1550, %v1555
        %v1560 = vrsqrt.pop %v1519
        %v1561 = vmul.f32 %v1560, %v1519
        %v1562 = vmul.f32 %v1561, %v1560
        %v1563 = vmul.f32 0.5, %v1562
        %v1564 = vsub.f32 1.5, %v1563
        %v1565 = vmul.f32 %v1560, %v1564
        %vm1566 = vweird.f32 %v1519
        %vm1567 = vweird.f32 %v1560
        %vm1568 = vmor %vm1566, %vm1567
        %v1569 = vsel %vm1568, %v1560, %v1565
        %v1570 = vrsqrt.pop %v1520
        %v1571 = vmul.f32 %v1570, %v1520
        %v1572 = vmul.f32 %v1571, %v1570
        %v1573 = vmul.f32 0.5, %v1572
        %v1574 = vsub.f32 1.5, %v1573
        %v1575 = vmul.f32 %v1570, %v1574
        %vm1576 = vweird.f32 %v1520
        %vm1577 = vweird.f32 %v1570
        %vm1578 = vmor %vm1576, %vm1577
        %v1579 = vsel %vm1578, %v1570, %v1575
        %v1580 = vrsqrt.pop %v1521
        %v1581 = vmul.f32 %v1580, %v1521
        %v1582 = vmul.f32 %v1581, %v1580
        %v1583 = vmul.f32 0.5, %v1582
        %v1584 = vsub.f32 1.5, %v1583
        %v1585 = vmul.f32 %v1580, %v1584
        %vm1586 = vweird.f32 %v1521
        %vm1587 = vweird.f32 %v1580
        %vm1588 = vmor %vm1586, %vm1587
        %v1589 = vsel %vm1588, %v1580, %v1585
        %v1590 = vrsqrt.pop %v1522
        %v1591 = vmul.f32 %v1590, %v1522
        %v1592 = vmul.f32 %v1591, %v1590
        %v1593 = vmul.f32 0.5, %v1592
        %v1594 = vsub.f32 1.5, %v1593
        %v1595 = vmul.f32 %v1590, %v1594
        %vm1596 = vweird.f32 %v1522
        %vm1597 = vweird.f32 %v1590
        %vm1598 = vmor %vm1596, %vm1597
        %v1599 = vsel %vm1598, %v1590, %v1595
        %v1600 = vrsqrt.pop %v1523
        %v1601 = vmul.f32 %v1600, %v1523
        %v1602 = vmul.f32 %v1601, %v1600
        %v1603 = vmul.f32 0.5, %v1602
        %v1604 = vsub.f32 1.5, %v1603
        %v1605 = vmul.f32 %v1600, %v1604
        %vm1606 = vweird.f32 %v1523
        %vm1607 = vweird.f32 %v1600
        %vm1608 = vmor %vm1606, %vm1607
        %v1609 = vsel %vm1608, %v1600, %v1605
        %v1610 = vrsqrt.pop %v1524
        %v1611 = vmul.f32 %v1610, %v1524
        %v1612 = vmul.f32 %v1611, %v1610
        %v1613 = vmul.f32 0.5, %v1612
        %v1614 = vsub.f32 1.5, %v1613
        %v1615 = vmul.f32 %v1610, %v1614
        %vm1616 = vweird.f32 %v1524
        %vm1617 = vweird.f32 %v1610
        %vm1618 = vmor %vm1616, %vm1617
        %v1619 = vsel %vm1618, %v1610, %v1615
        %v1620 = vrsqrt.pop %v1525
        %v1621 = vmul.f32 %v1620, %v1525
        %v1622 = vmul.f32 %v1621, %v1620
        %v1623 = vmul.f32 0.5, %v1622
        %v1624 = vsub.f32 1.5, %v1623
        %v1625 = vmul.f32 %v1620, %v1624
        %vm1626 = vweird.f32 %v1525
        %vm1627 = vweird.f32 %v1620
        %vm1628 = vmor %vm1626, %vm1627
        %v1629 = vsel %vm1628, %v1620, %v1625
        %v1630 = vrsqrt.pop %v1526
        %v1631 = vmul.f32 %v1630, %v1526
        %v1632 = vmul.f32 %v1631, %v1630
        %v1633 = vmul.f32 0.5, %v1632
        %v1634 = vsub.f32 1.5, %v1633
        %v1635 = vmul.f32 %v1630, %v1634
        %vm1636 = vweird.f32 %v1526
        %vm1637 = vweird.f32 %v1630
        %vm1638 = vmor %vm1636, %vm1637
        %v1639 = vsel %vm1638, %v1630, %v1635
        %v1640 = vrsqrt.pop %v1527
        %v1641 = vmul.f32 %v1640, %v1527
        %v1642 = vmul.f32 %v1641, %v1640
        %v1643 = vmul.f32 0.5, %v1642
        %v1644 = vsub.f32 1.5, %v1643
        %v1645 = vmul.f32 %v1640, %v1644
        %vm1646 = vweird.f32 %v1527
        %vm1647 = vweird.f32 %v1640
        %vm1648 = vmor %vm1646, %vm1647
        %v1649 = vsel %vm1648, %v1640, %v1645
        %v1650 = vrsqrt.pop %v1528
        %v1651 = vmul.f32 %v1650, %v1528
        %v1652 = vmul.f32 %v1651, %v1650
        %v1653 = vmul.f32 0.5, %v1652
        %v1654 = vsub.f32 1.5, %v1653
        %v1655 = vmul.f32 %v1650, %v1654
        %vm1656 = vweird.f32 %v1528
        %vm1657 = vweird.f32 %v1650
        %vm1658 = vmor %vm1656, %vm1657
        %v1659 = vsel %vm1658, %v1650, %v1655
        %v1660 = vrsqrt.pop %v1529
        %v1661 = vmul.f32 %v1660, %v1529
        %v1662 = vmul.f32 %v1661, %v1660
        %v1663 = vmul.f32 0.5, %v1662
        %v1664 = vsub.f32 1.5, %v1663
        %v1665 = vmul.f32 %v1660, %v1664
        %vm1666 = vweird.f32 %v1529
        %vm1667 = vweird.f32 %v1660
        %vm1668 = vmor %vm1666, %vm1667
        %v1669 = vsel %vm1668, %v1660, %v1665
        %v1670 = vrsqrt.pop %v1530
        %v1671 = vmul.f32 %v1670, %v1530
        %v1672 = vmul.f32 %v1671, %v1670
        %v1673 = vmul.f32 0.5, %v1672
        %v1674 = vsub.f32 1.5, %v1673
        %v1675 = vmul.f32 %v1670, %v1674
        %vm1676 = vweird.f32 %v1530
        %vm1677 = vweird.f32 %v1670
        %vm1678 = vmor %vm1676, %vm1677
        %v1679 = vsel %vm1678, %v1670, %v1675
        %v1680 = vrsqrt.pop %v1531
        %v1681 = vmul.f32 %v1680, %v1531
        %v1682 = vmul.f32 %v1681, %v1680
        %v1683 = vmul.f32 0.5, %v1682
        %v1684 = vsub.f32 1.5, %v1683
        %v1685 = vmul.f32 %v1680, %v1684
        %vm1686 = vweird.f32 %v1531
        %vm1687 = vweird.f32 %v1680
        %vm1688 = vmor %vm1686, %vm1687
        %v1689 = vsel %vm1688, %v1680, %v1685
        %v1690 = vrsqrt.pop %v1532
        %v1691 = vmul.f32 %v1690, %v1532
        %v1692 = vmul.f32 %v1691, %v1690
        %v1693 = vmul.f32 0.5, %v1692
        %v1694 = vsub.f32 1.5, %v1693
        %v1695 = vmul.f32 %v1690, %v1694
        %vm1696 = vweird.f32 %v1532
        %vm1697 = vweird.f32 %v1690
        %vm1698 = vmor %vm1696, %vm1697
        %v1699 = vsel %vm1698, %v1690, %v1695
        %v1700 = vrsqrt.pop %v1533
        %v1701 = vmul.f32 %v1700, %v1533
        %v1702 = vmul.f32 %v1701, %v1700
        %v1703 = vmul.f32 0.5, %v1702
        %v1704 = vsub.f32 1.5, %v1703
        %v1705 = vmul.f32 %v1700, %v1704
        %vm1706 = vweird.f32 %v1533
        %vm1707 = vweird.f32 %v1700
        %vm1708 = vmor %vm1706, %vm1707
        %v1709 = vsel %vm1708, %v1700, %v1705
        %v1710 = vrsqrt.pop %v1534
        %v1711 = vmul.f32 %v1710, %v1534
        %v1712 = vmul.f32 %v1711, %v1710
        %v1713 = vmul.f32 0.5, %v1712
        %v1714 = vsub.f32 1.5, %v1713
        %v1715 = vmul.f32 %v1710, %v1714
        %vm1716 = vweird.f32 %v1534
        %vm1717 = vweird.f32 %v1710
        %vm1718 = vmor %vm1716, %vm1717
        %v1719 = vsel %vm1718, %v1710, %v1715
        %v1720 = vrsqrt.pop %v1535
        %v1721 = vmul.f32 %v1720, %v1535
        %v1722 = vmul.f32 %v1721, %v1720
        %v1723 = vmul.f32 0.5, %v1722
        %v1724 = vsub.f32 1.5, %v1723
        %v1725 = vmul.f32 %v1720, %v1724
        %vm1726 = vweird.f32 %v1535
        %vm1727 = vweird.f32 %v1720
        %vm1728 = vmor %vm1726, %vm1727
        %v1729 = vsel %vm1728, %v1720, %v1725
        %v1730 = vrsqrt.pop %v1536
        %v1731 = vmul.f32 %v1730, %v1536
        %v1732 = vmul.f32 %v1731, %v1730
        %v1733 = vmul.f32 0.5, %v1732
        %v1734 = vsub.f32 1.5, %v1733
        %v1735 = vmul.f32 %v1730, %v1734
        %vm1736 = vweird.f32 %v1536
        %vm1737 = vweird.f32 %v1730
        %vm1738 = vmor %vm1736, %vm1737
        %v1739 = vsel %vm1738, %v1730, %v1735
        %v1740 = vrsqrt.pop %v1537
        %v1741 = vmul.f32 %v1740, %v1537
        %v1742 = vmul.f32 %v1741, %v1740
        %v1743 = vmul.f32 0.5, %v1742
        %v1744 = vsub.f32 1.5, %v1743
        %v1745 = vmul.f32 %v1740, %v1744
        %vm1746 = vweird.f32 %v1537
        %vm1747 = vweird.f32 %v1740
        %vm1748 = vmor %vm1746, %vm1747
        %v1749 = vsel %vm1748, %v1740, %v1745
        %v1750 = vrsqrt.pop %v1538
        %v1751 = vmul.f32 %v1750, %v1538
        %v1752 = vmul.f32 %v1751, %v1750
        %v1753 = vmul.f32 0.5, %v1752
        %v1754 = vsub.f32 1.5, %v1753
        %v1755 = vmul.f32 %v1750, %v1754
        %vm1756 = vweird.f32 %v1538
        %vm1757 = vweird.f32 %v1750
        %vm1758 = vmor %vm1756, %vm1757
        %v1759 = vsel %vm1758, %v1750, %v1755
        %v1760 = vrsqrt.pop %v1539
        %v1761 = vmul.f32 %v1760, %v1539
        %v1762 = vmul.f32 %v1761, %v1760
        %v1763 = vmul.f32 0.5, %v1762
        %v1764 = vsub.f32 1.5, %v1763
        %v1765 = vmul.f32 %v1760, %v1764
        %vm1766 = vweird.f32 %v1539
        %vm1767 = vweird.f32 %v1760
        %vm1768 = vmor %vm1766, %vm1767
        %v1769 = vsel %vm1768, %v1760, %v1765
        %v1770 = vrsqrt.pop %v1540
        %v1771 = vmul.f32 %v1770, %v1540
        %v1772 = vmul.f32 %v1771, %v1770
        %v1773 = vmul.f32 0.5, %v1772
        %v1774 = vsub.f32 1.5, %v1773
        %v1775 = vmul.f32 %v1770, %v1774
        %vm1776 = vweird.f32 %v1540
        %vm1777 = vweird.f32 %v1770
        %vm1778 = vmor %vm1776, %vm1777
        %v1779 = vsel %vm1778, %v1770, %v1775
        %v1780 = vrsqrt.pop %v1541
        %v1781 = vmul.f32 %v1780, %v1541
        %v1782 = vmul.f32 %v1781, %v1780
        %v1783 = vmul.f32 0.5, %v1782
        %v1784 = vsub.f32 1.5, %v1783
        %v1785 = vmul.f32 %v1780, %v1784
        %vm1786 = vweird.f32 %v1541
        %vm1787 = vweird.f32 %v1780
        %vm1788 = vmor %vm1786, %vm1787
        %v1789 = vsel %vm1788, %v1780, %v1785
        %v1790 = vrsqrt.pop %v1542
        %v1791 = vmul.f32 %v1790, %v1542
        %v1792 = vmul.f32 %v1791, %v1790
        %v1793 = vmul.f32 0.5, %v1792
        %v1794 = vsub.f32 1.5, %v1793
        %v1795 = vmul.f32 %v1790, %v1794
        %vm1796 = vweird.f32 %v1542
        %vm1797 = vweird.f32 %v1790
        %vm1798 = vmor %vm1796, %vm1797
        %v1799 = vsel %vm1798, %v1790, %v1795
        %v1800 = vrsqrt.pop %v1543
        %v1801 = vmul.f32 %v1800, %v1543
        %v1802 = vmul.f32 %v1801, %v1800
        %v1803 = vmul.f32 0.5, %v1802
        %v1804 = vsub.f32 1.5, %v1803
        %v1805 = vmul.f32 %v1800, %v1804
        %vm1806 = vweird.f32 %v1543
        %vm1807 = vweird.f32 %v1800
        %vm1808 = vmor %vm1806, %vm1807
        %v1809 = vsel %vm1808, %v1800, %v1805
        %v1810 = vrsqrt.pop %v1544
        %v1811 = vmul.f32 %v1810, %v1544
        %v1812 = vmul.f32 %v1811, %v1810
        %v1813 = vmul.f32 0.5, %v1812
        %v1814 = vsub.f32 1.5, %v1813
        %v1815 = vmul.f32 %v1810, %v1814
        %vm1816 = vweird.f32 %v1544
        %vm1817 = vweird.f32 %v1810
        %vm1818 = vmor %vm1816, %vm1817
        %v1819 = vsel %vm1818, %v1810, %v1815
        %v1820 = vrsqrt.pop %v1545
        %v1821 = vmul.f32 %v1820, %v1545
        %v1822 = vmul.f32 %v1821, %v1820
        %v1823 = vmul.f32 0.5, %v1822
        %v1824 = vsub.f32 1.5, %v1823
        %v1825 = vmul.f32 %v1820, %v1824
        %vm1826 = vweird.f32 %v1545
        %vm1827 = vweird.f32 %v1820
        %vm1828 = vmor %vm1826, %vm1827
        %v1829 = vsel %vm1828, %v1820, %v1825
        %v1830 = vrsqrt.pop %v1546
        %v1831 = vmul.f32 %v1830, %v1546
        %v1832 = vmul.f32 %v1831, %v1830
        %v1833 = vmul.f32 0.5, %v1832
        %v1834 = vsub.f32 1.5, %v1833
        %v1835 = vmul.f32 %v1830, %v1834
        %vm1836 = vweird.f32 %v1546
        %vm1837 = vweird.f32 %v1830
        %vm1838 = vmor %vm1836, %vm1837
        %v1839 = vsel %vm1838, %v1830, %v1835
        %v1840 = vrsqrt.pop %v1547
        %v1841 = vmul.f32 %v1840, %v1547
        %v1842 = vmul.f32 %v1841, %v1840
        %v1843 = vmul.f32 0.5, %v1842
        %v1844 = vsub.f32 1.5, %v1843
        %v1845 = vmul.f32 %v1840, %v1844
        %vm1846 = vweird.f32 %v1547
        %vm1847 = vweird.f32 %v1840
        %vm1848 = vmor %vm1846, %vm1847
        %v1849 = vsel %vm1848, %v1840, %v1845
        %v1850 = vrsqrt.pop %v1548
        %v1851 = vmul.f32 %v1850, %v1548
        %v1852 = vmul.f32 %v1851, %v1850
        %v1853 = vmul.f32 0.5, %v1852
        %v1854 = vsub.f32 1.5, %v1853
        %v1855 = vmul.f32 %v1850, %v1854
        %vm1856 = vweird.f32 %v1548
        %vm1857 = vweird.f32 %v1850
        %vm1858 = vmor %vm1856, %vm1857
        %v1859 = vsel %vm1858, %v1850, %v1855
        %v1860 = vrsqrt.pop %v1549
        %v1861 = vmul.f32 %v1860, %v1549
        %v1862 = vmul.f32 %v1861, %v1860
        %v1863 = vmul.f32 0.5, %v1862
        %v1864 = vsub.f32 1.5, %v1863
        %v1865 = vmul.f32 %v1860, %v1864
        %vm1866 = vweird.f32 %v1549
        %vm1867 = vweird.f32 %v1860
        %vm1868 = vmor %vm1866, %vm1867
        %v1869 = vsel %vm1868, %v1860, %v1865
        %v1870 = vmul.f32 %v1262, %v1559
        %v1871 = vmul.f32 %v1263, %v1559
        %v1872 = vmul.f32 %v1264, %v1569
        %v1873 = vmul.f32 %v1265, %v1569
        %v1874 = vmul.f32 %v1266, %v1579
        %v1875 = vmul.f32 %v1267, %v1579
        %v1876 = vmul.f32 %v1268, %v1589
        %v1877 = vmul.f32 %v1269, %v1589
        %v1878 = vmul.f32 %v1270, %v1599
        %v1879 = vmul.f32 %v1271, %v1599
        %v1880 = vmul.f32 %v1272, %v1609
        %v1881 = vmul.f32 %v1273, %v1609
        %v1882 = vmul.f32 %v1274, %v1619
        %v1883 = vmul.f32 %v1275, %v1619
        %v1884 = vmul.f32 %v1276, %v1629
        %v1885 = vmul.f32 %v1277, %v1629
        %v1886 = vmul.f32 %v1278, %v1639
        %v1887 = vmul.f32 %v1279, %v1639
        %v1888 = vmul.f32 %v1280, %v1649
        %v1889 = vmul.f32 %v1281, %v1649
        %v1890 = vmul.f32 %v1282, %v1659
        %v1891 = vmul.f32 %v1283, %v1659
        %v1892 = vmul.f32 %v1284, %v1669
        %v1893 = vmul.f32 %v1285, %v1669
        %v1894 = vmul.f32 %v1286, %v1679
        %v1895 = vmul.f32 %v1287, %v1679
        %v1896 = vmul.f32 %v1288, %v1689
        %v1897 = vmul.f32 %v1289, %v1689
        %v1898 = vmul.f32 %v1290, %v1699
        %v1899 = vmul.f32 %v1291, %v1699
        %v1900 = vmul.f32 %v1292, %v1709
        %v1901 = vmul.f32 %v1293, %v1709
        %v1902 = vmul.f32 %v1294, %v1719
        %v1903 = vmul.f32 %v1295, %v1719
        %v1904 = vmul.f32 %v1296, %v1729
        %v1905 = vmul.f32 %v1297, %v1729
        %v1906 = vmul.f32 %v1298, %v1739
        %v1907 = vmul.f32 %v1299, %v1739
        %v1908 = vmul.f32 %v1300, %v1749
        %v1909 = vmul.f32 %v1301, %v1749
        %v1910 = vmul.f32 %v1302, %v1759
        %v1911 = vmul.f32 %v1303, %v1759
        %v1912 = vmul.f32 %v1304, %v1769
        %v1913 = vmul.f32 %v1305, %v1769
        %v1914 = vmul.f32 %v1306, %v1779
        %v1915 = vmul.f32 %v1307, %v1779
        %v1916 = vmul.f32 %v1308, %v1789
        %v1917 = vmul.f32 %v1309, %v1789
        %v1918 = vmul.f32 %v1310, %v1799
        %v1919 = vmul.f32 %v1311, %v1799
        %v1920 = vmul.f32 %v1312, %v1809
        %v1921 = vmul.f32 %v1313, %v1809
        %v1922 = vmul.f32 %v1314, %v1819
        %v1923 = vmul.f32 %v1315, %v1819
        %v1924 = vmul.f32 %v1316, %v1829
        %v1925 = vmul.f32 %v1317, %v1829
        %v1926 = vmul.f32 %v1318, %v1839
        %v1927 = vmul.f32 %v1319, %v1839
        %v1928 = vmul.f32 %v1320, %v1849
        %v1929 = vmul.f32 %v1321, %v1849
        %v1930 = vmul.f32 %v1322, %v1859
        %v1931 = vmul.f32 %v1323, %v1859
        %v1932 = vmul.f32 %v1324, %v1869
        %v1933 = vmul.f32 %v1325, %v1869
        %v1935 = vperm.slane %v1124, 0
        %v1936 = vperm.slane %v1124, 1
        %v1939 = vmul.f32 %v1870, %v1935
        %v1940 = vmul.f32 %v1871, %v1936
        %v1941 = vmul.f32 %v1872, %v1935
        %v1942 = vmul.f32 %v1873, %v1936
        %v1943 = vmul.f32 %v1874, %v1935
        %v1944 = vmul.f32 %v1875, %v1936
        %v1945 = vmul.f32 %v1876, %v1935
        %v1946 = vmul.f32 %v1877, %v1936
        %v1947 = vmul.f32 %v1878, %v1935
        %v1948 = vmul.f32 %v1879, %v1936
        %v1949 = vmul.f32 %v1880, %v1935
        %v1950 = vmul.f32 %v1881, %v1936
        %v1951 = vmul.f32 %v1882, %v1935
        %v1952 = vmul.f32 %v1883, %v1936
        %v1953 = vmul.f32 %v1884, %v1935
        %v1954 = vmul.f32 %v1885, %v1936
        %v1955 = vmul.f32 %v1886, %v1935
        %v1956 = vmul.f32 %v1887, %v1936
        %v1957 = vmul.f32 %v1888, %v1935
        %v1958 = vmul.f32 %v1889, %v1936
        %v1959 = vmul.f32 %v1890, %v1935
        %v1960 = vmul.f32 %v1891, %v1936
        %v1961 = vmul.f32 %v1892, %v1935
        %v1962 = vmul.f32 %v1893, %v1936
        %v1963 = vmul.f32 %v1894, %v1935
        %v1964 = vmul.f32 %v1895, %v1936
        %v1965 = vmul.f32 %v1896, %v1935
        %v1966 = vmul.f32 %v1897, %v1936
        %v1967 = vmul.f32 %v1898, %v1935
        %v1968 = vmul.f32 %v1899, %v1936
        %v1969 = vmul.f32 %v1900, %v1935
        %v1970 = vmul.f32 %v1901, %v1936
        %v1971 = vmul.f32 %v1902, %v1935
        %v1972 = vmul.f32 %v1903, %v1936
        %v1973 = vmul.f32 %v1904, %v1935
        %v1974 = vmul.f32 %v1905, %v1936
        %v1975 = vmul.f32 %v1906, %v1935
        %v1976 = vmul.f32 %v1907, %v1936
        %v1977 = vmul.f32 %v1908, %v1935
        %v1978 = vmul.f32 %v1909, %v1936
        %v1979 = vmul.f32 %v1910, %v1935
        %v1980 = vmul.f32 %v1911, %v1936
        %v1981 = vmul.f32 %v1912, %v1935
        %v1982 = vmul.f32 %v1913, %v1936
        %v1983 = vmul.f32 %v1914, %v1935
        %v1984 = vmul.f32 %v1915, %v1936
        %v1985 = vmul.f32 %v1916, %v1935
        %v1986 = vmul.f32 %v1917, %v1936
        %v1987 = vmul.f32 %v1918, %v1935
        %v1988 = vmul.f32 %v1919, %v1936
        %v1989 = vmul.f32 %v1920, %v1935
        %v1990 = vmul.f32 %v1921, %v1936
        %v1991 = vmul.f32 %v1922, %v1935
        %v1992 = vmul.f32 %v1923, %v1936
        %v1993 = vmul.f32 %v1924, %v1935
        %v1994 = vmul.f32 %v1925, %v1936
        %v1995 = vmul.f32 %v1926, %v1935
        %v1996 = vmul.f32 %v1927, %v1936
        %v1997 = vmul.f32 %v1928, %v1935
        %v1998 = vmul.f32 %v1929, %v1936
        %v1999 = vmul.f32 %v1930, %v1935
        %v2000 = vmul.f32 %v1931, %v1936
        %v2001 = vmul.f32 %v1932, %v1935
        %v2002 = vmul.f32 %v1933, %v1936
        %v2004 = vperm.slane %v1126, 0
        %v2005 = vperm.slane %v1126, 1
        %v2008 = vadd.f32 %v1939, %v2004
        %v2009 = vadd.f32 %v1940, %v2005
        %v2010 = vadd.f32 %v1941, %v2004
        %v2011 = vadd.f32 %v1942, %v2005
        %v2012 = vadd.f32 %v1943, %v2004
        %v2013 = vadd.f32 %v1944, %v2005
        %v2014 = vadd.f32 %v1945, %v2004
        %v2015 = vadd.f32 %v1946, %v2005
        %v2016 = vadd.f32 %v1947, %v2004
        %v2017 = vadd.f32 %v1948, %v2005
        %v2018 = vadd.f32 %v1949, %v2004
        %v2019 = vadd.f32 %v1950, %v2005
        %v2020 = vadd.f32 %v1951, %v2004
        %v2021 = vadd.f32 %v1952, %v2005
        %v2022 = vadd.f32 %v1953, %v2004
        %v2023 = vadd.f32 %v1954, %v2005
        %v2024 = vadd.f32 %v1955, %v2004
        %v2025 = vadd.f32 %v1956, %v2005
        %v2026 = vadd.f32 %v1957, %v2004
        %v2027 = vadd.f32 %v1958, %v2005
        %v2028 = vadd.f32 %v1959, %v2004
        %v2029 = vadd.f32 %v1960, %v2005
        %v2030 = vadd.f32 %v1961, %v2004
        %v2031 = vadd.f32 %v1962, %v2005
        %v2032 = vadd.f32 %v1963, %v2004
        %v2033 = vadd.f32 %v1964, %v2005
        %v2034 = vadd.f32 %v1965, %v2004
        %v2035 = vadd.f32 %v1966, %v2005
        %v2036 = vadd.f32 %v1967, %v2004
        %v2037 = vadd.f32 %v1968, %v2005
        %v2038 = vadd.f32 %v1969, %v2004
        %v2039 = vadd.f32 %v1970, %v2005
        %v2040 = vadd.f32 %v1971, %v2004
        %v2041 = vadd.f32 %v1972, %v2005
        %v2042 = vadd.f32 %v1973, %v2004
        %v2043 = vadd.f32 %v1974, %v2005
        %v2044 = vadd.f32 %v1975, %v2004
        %v2045 = vadd.f32 %v1976, %v2005
        %v2046 = vadd.f32 %v1977, %v2004
        %v2047 = vadd.f32 %v1978, %v2005
        %v2048 = vadd.f32 %v1979, %v2004
        %v2049 = vadd.f32 %v1980, %v2005
        %v2050 = vadd.f32 %v1981, %v2004
        %v2051 = vadd.f32 %v1982, %v2005
        %v2052 = vadd.f32 %v1983, %v2004
        %v2053 = vadd.f32 %v1984, %v2005
        %v2054 = vadd.f32 %v1985, %v2004
        %v2055 = vadd.f32 %v1986, %v2005
        %v2056 = vadd.f32 %v1987, %v2004
        %v2057 = vadd.f32 %v1988, %v2005
        %v2058 = vadd.f32 %v1989, %v2004
        %v2059 = vadd.f32 %v1990, %v2005
        %v2060 = vadd.f32 %v1991, %v2004
        %v2061 = vadd.f32 %v1992, %v2005
        %v2062 = vadd.f32 %v1993, %v2004
        %v2063 = vadd.f32 %v1994, %v2005
        %v2064 = vadd.f32 %v1995, %v2004
        %v2065 = vadd.f32 %v1996, %v2005
        %v2066 = vadd.f32 %v1997, %v2004
        %v2067 = vadd.f32 %v1998, %v2005
        %v2068 = vadd.f32 %v1999, %v2004
        %v2069 = vadd.f32 %v2000, %v2005
        %v2070 = vadd.f32 %v2001, %v2004
        %v2071 = vadd.f32 %v2002, %v2005
        %vm2072 = vcmp.gt.f32.partialorder %v2008, 0.0
        %vm2073 = vcmp.gt.f32.partialorder %v2009, 0.0
        %vm2074 = vcmp.gt.f32.partialorder %v2010, 0.0
        %vm2075 = vcmp.gt.f32.partialorder %v2011, 0.0
        %vm2076 = vcmp.gt.f32.partialorder %v2012, 0.0
        %vm2077 = vcmp.gt.f32.partialorder %v2013, 0.0
        %vm2078 = vcmp.gt.f32.partialorder %v2014, 0.0
        %vm2079 = vcmp.gt.f32.partialorder %v2015, 0.0
        %vm2080 = vcmp.gt.f32.partialorder %v2016, 0.0
        %vm2081 = vcmp.gt.f32.partialorder %v2017, 0.0
        %vm2082 = vcmp.gt.f32.partialorder %v2018, 0.0
        %vm2083 = vcmp.gt.f32.partialorder %v2019, 0.0
        %vm2084 = vcmp.gt.f32.partialorder %v2020, 0.0
        %vm2085 = vcmp.gt.f32.partialorder %v2021, 0.0
        %vm2086 = vcmp.gt.f32.partialorder %v2022, 0.0
        %vm2087 = vcmp.gt.f32.partialorder %v2023, 0.0
        %vm2088 = vcmp.gt.f32.partialorder %v2024, 0.0
        %vm2089 = vcmp.gt.f32.partialorder %v2025, 0.0
        %vm2090 = vcmp.gt.f32.partialorder %v2026, 0.0
        %vm2091 = vcmp.gt.f32.partialorder %v2027, 0.0
        %vm2092 = vcmp.gt.f32.partialorder %v2028, 0.0
        %vm2093 = vcmp.gt.f32.partialorder %v2029, 0.0
        %vm2094 = vcmp.gt.f32.partialorder %v2030, 0.0
        %vm2095 = vcmp.gt.f32.partialorder %v2031, 0.0
        %vm2096 = vcmp.gt.f32.partialorder %v2032, 0.0
        %vm2097 = vcmp.gt.f32.partialorder %v2033, 0.0
        %vm2098 = vcmp.gt.f32.partialorder %v2034, 0.0
        %vm2099 = vcmp.gt.f32.partialorder %v2035, 0.0
        %vm2100 = vcmp.gt.f32.partialorder %v2036, 0.0
        %vm2101 = vcmp.gt.f32.partialorder %v2037, 0.0
        %vm2102 = vcmp.gt.f32.partialorder %v2038, 0.0
        %vm2103 = vcmp.gt.f32.partialorder %v2039, 0.0
        %vm2104 = vcmp.gt.f32.partialorder %v2040, 0.0
        %vm2105 = vcmp.gt.f32.partialorder %v2041, 0.0
        %vm2106 = vcmp.gt.f32.partialorder %v2042, 0.0
        %vm2107 = vcmp.gt.f32.partialorder %v2043, 0.0
        %vm2108 = vcmp.gt.f32.partialorder %v2044, 0.0
        %vm2109 = vcmp.gt.f32.partialorder %v2045, 0.0
        %vm2110 = vcmp.gt.f32.partialorder %v2046, 0.0
        %vm2111 = vcmp.gt.f32.partialorder %v2047, 0.0
        %vm2112 = vcmp.gt.f32.partialorder %v2048, 0.0
        %vm2113 = vcmp.gt.f32.partialorder %v2049, 0.0
        %vm2114 = vcmp.gt.f32.partialorder %v2050, 0.0
        %vm2115 = vcmp.gt.f32.partialorder %v2051, 0.0
        %vm2116 = vcmp.gt.f32.partialorder %v2052, 0.0
        %vm2117 = vcmp.gt.f32.partialorder %v2053, 0.0
        %vm2118 = vcmp.gt.f32.partialorder %v2054, 0.0
        %vm2119 = vcmp.gt.f32.partialorder %v2055, 0.0
        %vm2120 = vcmp.gt.f32.partialorder %v2056, 0.0
        %vm2121 = vcmp.gt.f32.partialorder %v2057, 0.0
        %vm2122 = vcmp.gt.f32.partialorder %v2058, 0.0
        %vm2123 = vcmp.gt.f32.partialorder %v2059, 0.0
        %vm2124 = vcmp.gt.f32.partialorder %v2060, 0.0
        %vm2125 = vcmp.gt.f32.partialorder %v2061, 0.0
        %vm2126 = vcmp.gt.f32.partialorder %v2062, 0.0
        %vm2127 = vcmp.gt.f32.partialorder %v2063, 0.0
        %vm2128 = vcmp.gt.f32.partialorder %v2064, 0.0
        %vm2129 = vcmp.gt.f32.partialorder %v2065, 0.0
        %vm2130 = vcmp.gt.f32.partialorder %v2066, 0.0
        %vm2131 = vcmp.gt.f32.partialorder %v2067, 0.0
        %vm2132 = vcmp.gt.f32.partialorder %v2068, 0.0
        %vm2133 = vcmp.gt.f32.partialorder %v2069, 0.0
        %vm2134 = vcmp.gt.f32.partialorder %v2070, 0.0
        %vm2135 = vcmp.gt.f32.partialorder %v2071, 0.0
        %v2136 = vmul.f32 %v2008, 0.01
        %v2137 = vmul.f32 %v2009, 0.01
        %v2138 = vmul.f32 %v2010, 0.01
        %v2139 = vmul.f32 %v2011, 0.01
        %v2140 = vmul.f32 %v2012, 0.01
        %v2141 = vmul.f32 %v2013, 0.01
        %v2142 = vmul.f32 %v2014, 0.01
        %v2143 = vmul.f32 %v2015, 0.01
        %v2144 = vmul.f32 %v2016, 0.01
        %v2145 = vmul.f32 %v2017, 0.01
        %v2146 = vmul.f32 %v2018, 0.01
        %v2147 = vmul.f32 %v2019, 0.01
        %v2148 = vmul.f32 %v2020, 0.01
        %v2149 = vmul.f32 %v2021, 0.01
        %v2150 = vmul.f32 %v2022, 0.01
        %v2151 = vmul.f32 %v2023, 0.01
        %v2152 = vmul.f32 %v2024, 0.01
        %v2153 = vmul.f32 %v2025, 0.01
        %v2154 = vmul.f32 %v2026, 0.01
        %v2155 = vmul.f32 %v2027, 0.01
        %v2156 = vmul.f32 %v2028, 0.01
        %v2157 = vmul.f32 %v2029, 0.01
        %v2158 = vmul.f32 %v2030, 0.01
        %v2159 = vmul.f32 %v2031, 0.01
        %v2160 = vmul.f32 %v2032, 0.01
        %v2161 = vmul.f32 %v2033, 0.01
        %v2162 = vmul.f32 %v2034, 0.01
        %v2163 = vmul.f32 %v2035, 0.01
        %v2164 = vmul.f32 %v2036, 0.01
        %v2165 = vmul.f32 %v2037, 0.01
        %v2166 = vmul.f32 %v2038, 0.01
        %v2167 = vmul.f32 %v2039, 0.01
        %v2168 = vmul.f32 %v2040, 0.01
        %v2169 = vmul.f32 %v2041, 0.01
        %v2170 = vmul.f32 %v2042, 0.01
        %v2171 = vmul.f32 %v2043, 0.01
        %v2172 = vmul.f32 %v2044, 0.01
        %v2173 = vmul.f32 %v2045, 0.01
        %v2174 = vmul.f32 %v2046, 0.01
        %v2175 = vmul.f32 %v2047, 0.01
        %v2176 = vmul.f32 %v2048, 0.01
        %v2177 = vmul.f32 %v2049, 0.01
        %v2178 = vmul.f32 %v2050, 0.01
        %v2179 = vmul.f32 %v2051, 0.01
        %v2180 = vmul.f32 %v2052, 0.01
        %v2181 = vmul.f32 %v2053, 0.01
        %v2182 = vmul.f32 %v2054, 0.01
        %v2183 = vmul.f32 %v2055, 0.01
        %v2184 = vmul.f32 %v2056, 0.01
        %v2185 = vmul.f32 %v2057, 0.01
        %v2186 = vmul.f32 %v2058, 0.01
        %v2187 = vmul.f32 %v2059, 0.01
        %v2188 = vmul.f32 %v2060, 0.01
        %v2189 = vmul.f32 %v2061, 0.01
        %v2190 = vmul.f32 %v2062, 0.01
        %v2191 = vmul.f32 %v2063, 0.01
        %v2192 = vmul.f32 %v2064, 0.01
        %v2193 = vmul.f32 %v2065, 0.01
        %v2194 = vmul.f32 %v2066, 0.01
        %v2195 = vmul.f32 %v2067, 0.01
        %v2196 = vmul.f32 %v2068, 0.01
        %v2197 = vmul.f32 %v2069, 0.01
        %v2198 = vmul.f32 %v2070, 0.01
        %v2199 = vmul.f32 %v2071, 0.01
        %v2200 = vsel %vm2072, %v2008, %v2136
        %v2201 = vsel %vm2073, %v2009, %v2137
        %v2202 = vsel %vm2074, %v2010, %v2138
        %v2203 = vsel %vm2075, %v2011, %v2139
        %v2204 = vsel %vm2076, %v2012, %v2140
        %v2205 = vsel %vm2077, %v2013, %v2141
        %v2206 = vsel %vm2078, %v2014, %v2142
        %v2207 = vsel %vm2079, %v2015, %v2143
        %v2208 = vsel %vm2080, %v2016, %v2144
        %v2209 = vsel %vm2081, %v2017, %v2145
        %v2210 = vsel %vm2082, %v2018, %v2146
        %v2211 = vsel %vm2083, %v2019, %v2147
        %v2212 = vsel %vm2084, %v2020, %v2148
        %v2213 = vsel %vm2085, %v2021, %v2149
        %v2214 = vsel %vm2086, %v2022, %v2150
        %v2215 = vsel %vm2087, %v2023, %v2151
        %v2216 = vsel %vm2088, %v2024, %v2152
        %v2217 = vsel %vm2089, %v2025, %v2153
        %v2218 = vsel %vm2090, %v2026, %v2154
        %v2219 = vsel %vm2091, %v2027, %v2155
        %v2220 = vsel %vm2092, %v2028, %v2156
        %v2221 = vsel %vm2093, %v2029, %v2157
        %v2222 = vsel %vm2094, %v2030, %v2158
        %v2223 = vsel %vm2095, %v2031, %v2159
        %v2224 = vsel %vm2096, %v2032, %v2160
        %v2225 = vsel %vm2097, %v2033, %v2161
        %v2226 = vsel %vm2098, %v2034, %v2162
        %v2227 = vsel %vm2099, %v2035, %v2163
        %v2228 = vsel %vm2100, %v2036, %v2164
        %v2229 = vsel %vm2101, %v2037, %v2165
        %v2230 = vsel %vm2102, %v2038, %v2166
        %v2231 = vsel %vm2103, %v2039, %v2167
        %v2232 = vsel %vm2104, %v2040, %v2168
        %v2233 = vsel %vm2105, %v2041, %v2169
        %v2234 = vsel %vm2106, %v2042, %v2170
        %v2235 = vsel %vm2107, %v2043, %v2171
        %v2236 = vsel %vm2108, %v2044, %v2172
        %v2237 = vsel %vm2109, %v2045, %v2173
        %v2238 = vsel %vm2110, %v2046, %v2174
        %v2239 = vsel %vm2111, %v2047, %v2175
        %v2240 = vsel %vm2112, %v2048, %v2176
        %v2241 = vsel %vm2113, %v2049, %v2177
        %v2242 = vsel %vm2114, %v2050, %v2178
        %v2243 = vsel %vm2115, %v2051, %v2179
        %v2244 = vsel %vm2116, %v2052, %v2180
        %v2245 = vsel %vm2117, %v2053, %v2181
        %v2246 = vsel %vm2118, %v2054, %v2182
        %v2247 = vsel %vm2119, %v2055, %v2183
        %v2248 = vsel %vm2120, %v2056, %v2184
        %v2249 = vsel %vm2121, %v2057, %v2185
        %v2250 = vsel %vm2122, %v2058, %v2186
        %v2251 = vsel %vm2123, %v2059, %v2187
        %v2252 = vsel %vm2124, %v2060, %v2188
        %v2253 = vsel %vm2125, %v2061, %v2189
        %v2254 = vsel %vm2126, %v2062, %v2190
        %v2255 = vsel %vm2127, %v2063, %v2191
        %v2256 = vsel %vm2128, %v2064, %v2192
        %v2257 = vsel %vm2129, %v2065, %v2193
        %v2258 = vsel %vm2130, %v2066, %v2194
        %v2259 = vsel %vm2131, %v2067, %v2195
        %v2260 = vsel %vm2132, %v2068, %v2196
        %v2261 = vsel %vm2133, %v2069, %v2197
        %v2262 = vsel %vm2134, %v2070, %v2198
        %v2263 = vsel %vm2135, %v2071, %v2199
        %v2264 = vld [vmem:[%s3 + $0x10] sm:$0xff]
        %v2265 = vld [vmem:[%s3 + $0x18] sm:$0xff]
        %v2266 = vld [vmem:[%s3 + $0x20] sm:$0xff]
        %v2267 = vld [vmem:[%s3 + $0x28] sm:$0xff]
        %v2268 = vld [vmem:[%s3 + $0x30] sm:$0xff]
        %v2269 = vld [vmem:[%s3 + $0x38] sm:$0xff]
        %v2270 = vld [vmem:[%s3 + $0x40] sm:$0xff]
        %v2271 = vld [vmem:[%s3 + $0x48] sm:$0xff]
        %v2272 = vld [vmem:[%s3 + $0x50] sm:$0xff]
        %v2273 = vld [vmem:[%s3 + $0x58] sm:$0xff]
        %v2274 = vld [vmem:[%s3 + $0x60] sm:$0xff]
        %v2275 = vld [vmem:[%s3 + $0x68] sm:$0xff]
        %v2276 = vld [vmem:[%s3 + $0x70] sm:$0xff]
        %v2277 = vld [vmem:[%s3 + $0x78] sm:$0xff]
        %v2278 = vld [vmem:[%s3 + $0x80] sm:$0xff]
        %v2279 = vld [vmem:[%s3 + $0x88] sm:$0xff]
        %v2280 = vld [vmem:[%s3 + $0x90] sm:$0xff]
        %v2281 = vld [vmem:[%s3 + $0x98] sm:$0xff]
        %v2282 = vld [vmem:[%s3 + $0xa0] sm:$0xff]
        %v2283 = vld [vmem:[%s3 + $0xa8] sm:$0xff]
        %v2284 = vld [vmem:[%s3 + $0xb0] sm:$0xff]
        %v2285 = vld [vmem:[%s3 + $0xb8] sm:$0xff]
        %v2286 = vld [vmem:[%s3 + $0xc0] sm:$0xff]
        %v2287 = vld [vmem:[%s3 + $0xc8] sm:$0xff]
        %v2288 = vld [vmem:[%s3 + $0xd0] sm:$0xff]
        %v2289 = vld [vmem:[%s3 + $0xd8] sm:$0xff]
        %v2290 = vld [vmem:[%s3 + $0xe0] sm:$0xff]
        %v2291 = vld [vmem:[%s3 + $0xe8] sm:$0xff]
        %v2292 = vld [vmem:[%s3 + $0xf0] sm:$0xff]
        %v2293 = vld [vmem:[%s3 + $0xf8] sm:$0xff]
        %v2294 = vld [vmem:[%s3 + $0x100] sm:$0xff]
        %v2295 = vld [vmem:[%s3 + $0x108] sm:$0xff]
        %v2296 = vpack.c.bf16 %v2202, %v2200
        %v2297 = vpack.c.bf16 %v2203, %v2201
        %v2298 = vpack.c.bf16 %v2206, %v2204
        %v2299 = vpack.c.bf16 %v2207, %v2205
        %v2300 = vpack.c.bf16 %v2210, %v2208
        %v2301 = vpack.c.bf16 %v2211, %v2209
        %v2302 = vpack.c.bf16 %v2214, %v2212
        %v2303 = vpack.c.bf16 %v2215, %v2213
        %v2304 = vpack.c.bf16 %v2218, %v2216
        %v2305 = vpack.c.bf16 %v2219, %v2217
        %v2306 = vpack.c.bf16 %v2222, %v2220
        %v2307 = vpack.c.bf16 %v2223, %v2221
        %v2308 = vpack.c.bf16 %v2226, %v2224
        %v2309 = vpack.c.bf16 %v2227, %v2225
        %v2310 = vpack.c.bf16 %v2230, %v2228
        %v2311 = vpack.c.bf16 %v2231, %v2229
        %v2312 = vpack.c.bf16 %v2234, %v2232
        %v2313 = vpack.c.bf16 %v2235, %v2233
        %v2314 = vpack.c.bf16 %v2238, %v2236
        %v2315 = vpack.c.bf16 %v2239, %v2237
        %v2316 = vpack.c.bf16 %v2242, %v2240
        %v2317 = vpack.c.bf16 %v2243, %v2241
        %v2318 = vpack.c.bf16 %v2246, %v2244
        %v2319 = vpack.c.bf16 %v2247, %v2245
        %v2320 = vpack.c.bf16 %v2250, %v2248
        %v2321 = vpack.c.bf16 %v2251, %v2249
        %v2322 = vpack.c.bf16 %v2254, %v2252
        %v2323 = vpack.c.bf16 %v2255, %v2253
        %v2324 = vpack.c.bf16 %v2258, %v2256
        %v2325 = vpack.c.bf16 %v2259, %v2257
        %v2326 = vpack.c.bf16 %v2262, %v2260
        %v2327 = vpack.c.bf16 %v2263, %v2261
        %v2360 = vunpack.c.l.b16 %v2264
        %v2361 = vunpack.c.h.b16 %v2264
        %v2362 = vunpack.c.l.b16 %v2265
        %v2363 = vunpack.c.h.b16 %v2265
        %v2364 = vunpack.c.l.b16 %v2266
        %v2365 = vunpack.c.h.b16 %v2266
        %v2366 = vunpack.c.l.b16 %v2267
        %v2367 = vunpack.c.h.b16 %v2267
        %v2368 = vunpack.c.l.b16 %v2268
        %v2369 = vunpack.c.h.b16 %v2268
        %v2370 = vunpack.c.l.b16 %v2269
        %v2371 = vunpack.c.h.b16 %v2269
        %v2372 = vunpack.c.l.b16 %v2270
        %v2373 = vunpack.c.h.b16 %v2270
        %v2374 = vunpack.c.l.b16 %v2271
        %v2375 = vunpack.c.h.b16 %v2271
        %v2376 = vunpack.c.l.b16 %v2272
        %v2377 = vunpack.c.h.b16 %v2272
        %v2378 = vunpack.c.l.b16 %v2273
        %v2379 = vunpack.c.h.b16 %v2273
        %v2380 = vunpack.c.l.b16 %v2274
        %v2381 = vunpack.c.h.b16 %v2274
        %v2382 = vunpack.c.l.b16 %v2275
        %v2383 = vunpack.c.h.b16 %v2275
        %v2384 = vunpack.c.l.b16 %v2276
        %v2385 = vunpack.c.h.b16 %v2276
        %v2386 = vunpack.c.l.b16 %v2277
        %v2387 = vunpack.c.h.b16 %v2277
        %v2388 = vunpack.c.l.b16 %v2278
        %v2389 = vunpack.c.h.b16 %v2278
        %v2390 = vunpack.c.l.b16 %v2279
        %v2391 = vunpack.c.h.b16 %v2279
        %v2392 = vunpack.c.l.b16 %v2280
        %v2393 = vunpack.c.h.b16 %v2280
        %v2394 = vunpack.c.l.b16 %v2281
        %v2395 = vunpack.c.h.b16 %v2281
        %v2396 = vunpack.c.l.b16 %v2282
        %v2397 = vunpack.c.h.b16 %v2282
        %v2398 = vunpack.c.l.b16 %v2283
        %v2399 = vunpack.c.h.b16 %v2283
        %v2400 = vunpack.c.l.b16 %v2284
        %v2401 = vunpack.c.h.b16 %v2284
        %v2402 = vunpack.c.l.b16 %v2285
        %v2403 = vunpack.c.h.b16 %v2285
        %v2404 = vunpack.c.l.b16 %v2286
        %v2405 = vunpack.c.h.b16 %v2286
        %v2406 = vunpack.c.l.b16 %v2287
        %v2407 = vunpack.c.h.b16 %v2287
        %v2408 = vunpack.c.l.b16 %v2288
        %v2409 = vunpack.c.h.b16 %v2288
        %v2410 = vunpack.c.l.b16 %v2289
        %v2411 = vunpack.c.h.b16 %v2289
        %v2412 = vunpack.c.l.b16 %v2290
        %v2413 = vunpack.c.h.b16 %v2290
        %v2414 = vunpack.c.l.b16 %v2291
        %v2415 = vunpack.c.h.b16 %v2291
        %v2416 = vunpack.c.l.b16 %v2292
        %v2417 = vunpack.c.h.b16 %v2292
        %v2418 = vunpack.c.l.b16 %v2293
        %v2419 = vunpack.c.h.b16 %v2293
        %v2420 = vunpack.c.l.b16 %v2294
        %v2421 = vunpack.c.h.b16 %v2294
        %v2422 = vunpack.c.l.b16 %v2295
        %v2423 = vunpack.c.h.b16 %v2295
        %v2424 = vpack.c.b16 %v2362, %v2360
        %v2425 = vpack.c.b16 %v2363, %v2361
        %v2426 = vpack.c.b16 %v2366, %v2364
        %v2427 = vpack.c.b16 %v2367, %v2365
        %v2428 = vpack.c.b16 %v2370, %v2368
        %v2429 = vpack.c.b16 %v2371, %v2369
        %v2430 = vpack.c.b16 %v2374, %v2372
        %v2431 = vpack.c.b16 %v2375, %v2373
        %v2432 = vpack.c.b16 %v2378, %v2376
        %v2433 = vpack.c.b16 %v2379, %v2377
        %v2434 = vpack.c.b16 %v2382, %v2380
        %v2435 = vpack.c.b16 %v2383, %v2381
        %v2436 = vpack.c.b16 %v2386, %v2384
        %v2437 = vpack.c.b16 %v2387, %v2385
        %v2438 = vpack.c.b16 %v2390, %v2388
        %v2439 = vpack.c.b16 %v2391, %v2389
        %v2440 = vpack.c.b16 %v2394, %v2392
        %v2441 = vpack.c.b16 %v2395, %v2393
        %v2442 = vpack.c.b16 %v2398, %v2396
        %v2443 = vpack.c.b16 %v2399, %v2397
        %v2444 = vpack.c.b16 %v2402, %v2400
        %v2445 = vpack.c.b16 %v2403, %v2401
        %v2446 = vpack.c.b16 %v2406, %v2404
        %v2447 = vpack.c.b16 %v2407, %v2405
        %v2448 = vpack.c.b16 %v2410, %v2408
        %v2449 = vpack.c.b16 %v2411, %v2409
        %v2450 = vpack.c.b16 %v2414, %v2412
        %v2451 = vpack.c.b16 %v2415, %v2413
        %v2452 = vpack.c.b16 %v2418, %v2416
        %v2453 = vpack.c.b16 %v2419, %v2417
        %v2454 = vpack.c.b16 %v2422, %v2420
        %v2455 = vpack.c.b16 %v2423, %v2421
        %2488 = vmatpush.bf16.msra.mxu0 %v2438
        %2489 = vmatpush.bf16.msra.mxu0 %v2436
        %2490 = vmatpush.bf16.msra.mxu0 %v2434
        %2491 = vmatpush.bf16.msra.mxu0 %v2432
        %2492 = vmatpush.bf16.msra.mxu0 %v2430
        %2493 = vmatpush.bf16.msra.mxu0 %v2428
        %2494 = vmatpush.bf16.msra.mxu0 %v2426
        %2495 = vmatpush.bf16.msra.mxu0 %v2424
        %2496 = vmatmul.bf16.gmra.mxu0 %v2296
        %v2497 = vpop.f32.mrf.mxu0
        %v2498 = vadd.f32 0.0, %v2497
        %v2499 = vpop.f32.mrf.mxu0
        %v2500 = vadd.f32 0.0, %v2499
        %2501 = vmatmul.bf16.gmra.mxu0 %v2298
        %v2502 = vpop.f32.mrf.mxu0
        %v2503 = vadd.f32 0.0, %v2502
        %v2504 = vpop.f32.mrf.mxu0
        %v2505 = vadd.f32 0.0, %v2504
        %2506 = vmatmul.bf16.gmra.mxu0 %v2300
        %v2507 = vpop.f32.mrf.mxu0
        %v2508 = vadd.f32 0.0, %v2507
        %v2509 = vpop.f32.mrf.mxu0
        %v2510 = vadd.f32 0.0, %v2509
        %2511 = vmatmul.bf16.gmra.mxu0 %v2302
        %v2512 = vpop.f32.mrf.mxu0
        %v2513 = vadd.f32 0.0, %v2512
        %v2514 = vpop.f32.mrf.mxu0
        %v2515 = vadd.f32 0.0, %v2514
        %2516 = vmatmul.bf16.gmra.mxu0 %v2304
        %v2517 = vpop.f32.mrf.mxu0
        %v2518 = vadd.f32 0.0, %v2517
        %v2519 = vpop.f32.mrf.mxu0
        %v2520 = vadd.f32 0.0, %v2519
        %2521 = vmatmul.bf16.gmra.mxu0 %v2306
        %v2522 = vpop.f32.mrf.mxu0
        %v2523 = vadd.f32 0.0, %v2522
        %v2524 = vpop.f32.mrf.mxu0
        %v2525 = vadd.f32 0.0, %v2524
        %2526 = vmatmul.bf16.gmra.mxu0 %v2308
        %v2527 = vpop.f32.mrf.mxu0
        %v2528 = vadd.f32 0.0, %v2527
        %v2529 = vpop.f32.mrf.mxu0
        %v2530 = vadd.f32 0.0, %v2529
        %2531 = vmatmul.bf16.gmra.mxu0 %v2310
        %v2532 = vpop.f32.mrf.mxu0
        %v2533 = vadd.f32 0.0, %v2532
        %v2534 = vpop.f32.mrf.mxu0
        %v2535 = vadd.f32 0.0, %v2534
        %2536 = vmatmul.bf16.gmra.mxu0 %v2312
        %v2537 = vpop.f32.mrf.mxu0
        %v2538 = vadd.f32 0.0, %v2537
        %v2539 = vpop.f32.mrf.mxu0
        %v2540 = vadd.f32 0.0, %v2539
        %2541 = vmatmul.bf16.gmra.mxu0 %v2314
        %v2542 = vpop.f32.mrf.mxu0
        %v2543 = vadd.f32 0.0, %v2542
        %v2544 = vpop.f32.mrf.mxu0
        %v2545 = vadd.f32 0.0, %v2544
        %2546 = vmatmul.bf16.gmra.mxu0 %v2316
        %v2547 = vpop.f32.mrf.mxu0
        %v2548 = vadd.f32 0.0, %v2547
        %v2549 = vpop.f32.mrf.mxu0
        %v2550 = vadd.f32 0.0, %v2549
        %2551 = vmatmul.bf16.gmra.mxu0 %v2318
        %v2552 = vpop.f32.mrf.mxu0
        %v2553 = vadd.f32 0.0, %v2552
        %v2554 = vpop.f32.mrf.mxu0
        %v2555 = vadd.f32 0.0, %v2554
        %2556 = vmatmul.bf16.gmra.mxu0 %v2320
        %v2557 = vpop.f32.mrf.mxu0
        %v2558 = vadd.f32 0.0, %v2557
        %v2559 = vpop.f32.mrf.mxu0
        %v2560 = vadd.f32 0.0, %v2559
        %2561 = vmatmul.bf16.gmra.mxu0 %v2322
        %v2562 = vpop.f32.mrf.mxu0
        %v2563 = vadd.f32 0.0, %v2562
        %v2564 = vpop.f32.mrf.mxu0
        %v2565 = vadd.f32 0.0, %v2564
        %2566 = vmatmul.bf16.gmra.mxu0 %v2324
        %v2567 = vpop.f32.mrf.mxu0
        %v2568 = vadd.f32 0.0, %v2567
        %v2569 = vpop.f32.mrf.mxu0
        %v2570 = vadd.f32 0.0, %v2569
        %2571 = vmatmul.bf16.gmra.mxu0 %v2326
        %v2572 = vpop.f32.mrf.mxu0
        %v2573 = vadd.f32 0.0, %v2572
        %v2574 = vpop.f32.mrf.mxu0
        %v2575 = vadd.f32 0.0, %v2574
        %2576 = vdwg.mxu0
        %2577 = vmatpush.bf16.msra.mxu0 %v2454
        %2578 = vmatpush.bf16.msra.mxu0 %v2452
        %2579 = vmatpush.bf16.msra.mxu0 %v2450
        %2580 = vmatpush.bf16.msra.mxu0 %v2448
        %2581 = vmatpush.bf16.msra.mxu0 %v2446
        %2582 = vmatpush.bf16.msra.mxu0 %v2444
        %2583 = vmatpush.bf16.msra.mxu0 %v2442
        %2584 = vmatpush.bf16.msra.mxu0 %v2440
        %2585 = vmatmul.bf16.gmra.mxu0 %v2297
        %v2586 = vpop.f32.mrf.mxu0
        %v2587 = vadd.f32 %v2498, %v2586
        %v2588 = vpop.f32.mrf.mxu0
        %v2589 = vadd.f32 %v2500, %v2588
        %2590 = vmatmul.bf16.gmra.mxu0 %v2299
        %v2591 = vpop.f32.mrf.mxu0
        %v2592 = vadd.f32 %v2503, %v2591
        %v2593 = vpop.f32.mrf.mxu0
        %v2594 = vadd.f32 %v2505, %v2593
        %2595 = vmatmul.bf16.gmra.mxu0 %v2301
        %v2596 = vpop.f32.mrf.mxu0
        %v2597 = vadd.f32 %v2508, %v2596
        %v2598 = vpop.f32.mrf.mxu0
        %v2599 = vadd.f32 %v2510, %v2598
        %2600 = vmatmul.bf16.gmra.mxu0 %v2303
        %v2601 = vpop.f32.mrf.mxu0
        %v2602 = vadd.f32 %v2513, %v2601
        %v2603 = vpop.f32.mrf.mxu0
        %v2604 = vadd.f32 %v2515, %v2603
        %2605 = vmatmul.bf16.gmra.mxu0 %v2305
        %v2606 = vpop.f32.mrf.mxu0
        %v2607 = vadd.f32 %v2518, %v2606
        %v2608 = vpop.f32.mrf.mxu0
        %v2609 = vadd.f32 %v2520, %v2608
        %2610 = vmatmul.bf16.gmra.mxu0 %v2307
        %v2611 = vpop.f32.mrf.mxu0
        %v2612 = vadd.f32 %v2523, %v2611
        %v2613 = vpop.f32.mrf.mxu0
        %v2614 = vadd.f32 %v2525, %v2613
        %2615 = vmatmul.bf16.gmra.mxu0 %v2309
        %v2616 = vpop.f32.mrf.mxu0
        %v2617 = vadd.f32 %v2528, %v2616
        %v2618 = vpop.f32.mrf.mxu0
        %v2619 = vadd.f32 %v2530, %v2618
        %2620 = vmatmul.bf16.gmra.mxu0 %v2311
        %v2621 = vpop.f32.mrf.mxu0
        %v2622 = vadd.f32 %v2533, %v2621
        %v2623 = vpop.f32.mrf.mxu0
        %v2624 = vadd.f32 %v2535, %v2623
        %2625 = vmatmul.bf16.gmra.mxu0 %v2313
        %v2626 = vpop.f32.mrf.mxu0
        %v2627 = vadd.f32 %v2538, %v2626
        %v2628 = vpop.f32.mrf.mxu0
        %v2629 = vadd.f32 %v2540, %v2628
        %2630 = vmatmul.bf16.gmra.mxu0 %v2315
        %v2631 = vpop.f32.mrf.mxu0
        %v2632 = vadd.f32 %v2543, %v2631
        %v2633 = vpop.f32.mrf.mxu0
        %v2634 = vadd.f32 %v2545, %v2633
        %2635 = vmatmul.bf16.gmra.mxu0 %v2317
        %v2636 = vpop.f32.mrf.mxu0
        %v2637 = vadd.f32 %v2548, %v2636
        %v2638 = vpop.f32.mrf.mxu0
        %v2639 = vadd.f32 %v2550, %v2638
        %2640 = vmatmul.bf16.gmra.mxu0 %v2319
        %v2641 = vpop.f32.mrf.mxu0
        %v2642 = vadd.f32 %v2553, %v2641
        %v2643 = vpop.f32.mrf.mxu0
        %v2644 = vadd.f32 %v2555, %v2643
        %2645 = vmatmul.bf16.gmra.mxu0 %v2321
        %v2646 = vpop.f32.mrf.mxu0
        %v2647 = vadd.f32 %v2558, %v2646
        %v2648 = vpop.f32.mrf.mxu0
        %v2649 = vadd.f32 %v2560, %v2648
        %2650 = vmatmul.bf16.gmra.mxu0 %v2323
        %v2651 = vpop.f32.mrf.mxu0
        %v2652 = vadd.f32 %v2563, %v2651
        %v2653 = vpop.f32.mrf.mxu0
        %v2654 = vadd.f32 %v2565, %v2653
        %2655 = vmatmul.bf16.gmra.mxu0 %v2325
        %v2656 = vpop.f32.mrf.mxu0
        %v2657 = vadd.f32 %v2568, %v2656
        %v2658 = vpop.f32.mrf.mxu0
        %v2659 = vadd.f32 %v2570, %v2658
        %2660 = vmatmul.bf16.gmra.mxu0 %v2327
        %v2661 = vpop.f32.mrf.mxu0
        %v2662 = vadd.f32 %v2573, %v2661
        %v2663 = vpop.f32.mrf.mxu0
        %v2664 = vadd.f32 %v2575, %v2663
        %2665 = vdwg.mxu0
        %2666 = vmatpush.bf16.msra.mxu0 %v2439
        %2667 = vmatpush.bf16.msra.mxu0 %v2437
        %2668 = vmatpush.bf16.msra.mxu0 %v2435
        %2669 = vmatpush.bf16.msra.mxu0 %v2433
        %2670 = vmatpush.bf16.msra.mxu0 %v2431
        %2671 = vmatpush.bf16.msra.mxu0 %v2429
        %2672 = vmatpush.bf16.msra.mxu0 %v2427
        %2673 = vmatpush.bf16.msra.mxu0 %v2425
        %2674 = vmatmul.bf16.gmra.mxu0 %v2296
        %v2675 = vpop.f32.mrf.mxu0
        %v2676 = vadd.f32 0.0, %v2675
        %v2677 = vpop.f32.mrf.mxu0
        %v2678 = vadd.f32 0.0, %v2677
        %2679 = vmatmul.bf16.gmra.mxu0 %v2298
        %v2680 = vpop.f32.mrf.mxu0
        %v2681 = vadd.f32 0.0, %v2680
        %v2682 = vpop.f32.mrf.mxu0
        %v2683 = vadd.f32 0.0, %v2682
        %2684 = vmatmul.bf16.gmra.mxu0 %v2300
        %v2685 = vpop.f32.mrf.mxu0
        %v2686 = vadd.f32 0.0, %v2685
        %v2687 = vpop.f32.mrf.mxu0
        %v2688 = vadd.f32 0.0, %v2687
        %2689 = vmatmul.bf16.gmra.mxu0 %v2302
        %v2690 = vpop.f32.mrf.mxu0
        %v2691 = vadd.f32 0.0, %v2690
        %v2692 = vpop.f32.mrf.mxu0
        %v2693 = vadd.f32 0.0, %v2692
        %2694 = vmatmul.bf16.gmra.mxu0 %v2304
        %v2695 = vpop.f32.mrf.mxu0
        %v2696 = vadd.f32 0.0, %v2695
        %v2697 = vpop.f32.mrf.mxu0
        %v2698 = vadd.f32 0.0, %v2697
        %2699 = vmatmul.bf16.gmra.mxu0 %v2306
        %v2700 = vpop.f32.mrf.mxu0
        %v2701 = vadd.f32 0.0, %v2700
        %v2702 = vpop.f32.mrf.mxu0
        %v2703 = vadd.f32 0.0, %v2702
        %2704 = vmatmul.bf16.gmra.mxu0 %v2308
        %v2705 = vpop.f32.mrf.mxu0
        %v2706 = vadd.f32 0.0, %v2705
        %v2707 = vpop.f32.mrf.mxu0
        %v2708 = vadd.f32 0.0, %v2707
        %2709 = vmatmul.bf16.gmra.mxu0 %v2310
        %v2710 = vpop.f32.mrf.mxu0
        %v2711 = vadd.f32 0.0, %v2710
        %v2712 = vpop.f32.mrf.mxu0
        %v2713 = vadd.f32 0.0, %v2712
        %2714 = vmatmul.bf16.gmra.mxu0 %v2312
        %v2715 = vpop.f32.mrf.mxu0
        %v2716 = vadd.f32 0.0, %v2715
        %v2717 = vpop.f32.mrf.mxu0
        %v2718 = vadd.f32 0.0, %v2717
        %2719 = vmatmul.bf16.gmra.mxu0 %v2314
        %v2720 = vpop.f32.mrf.mxu0
        %v2721 = vadd.f32 0.0, %v2720
        %v2722 = vpop.f32.mrf.mxu0
        %v2723 = vadd.f32 0.0, %v2722
        %2724 = vmatmul.bf16.gmra.mxu0 %v2316
        %v2725 = vpop.f32.mrf.mxu0
        %v2726 = vadd.f32 0.0, %v2725
        %v2727 = vpop.f32.mrf.mxu0
        %v2728 = vadd.f32 0.0, %v2727
        %2729 = vmatmul.bf16.gmra.mxu0 %v2318
        %v2730 = vpop.f32.mrf.mxu0
        %v2731 = vadd.f32 0.0, %v2730
        %v2732 = vpop.f32.mrf.mxu0
        %v2733 = vadd.f32 0.0, %v2732
        %2734 = vmatmul.bf16.gmra.mxu0 %v2320
        %v2735 = vpop.f32.mrf.mxu0
        %v2736 = vadd.f32 0.0, %v2735
        %v2737 = vpop.f32.mrf.mxu0
        %v2738 = vadd.f32 0.0, %v2737
        %2739 = vmatmul.bf16.gmra.mxu0 %v2322
        %v2740 = vpop.f32.mrf.mxu0
        %v2741 = vadd.f32 0.0, %v2740
        %v2742 = vpop.f32.mrf.mxu0
        %v2743 = vadd.f32 0.0, %v2742
        %2744 = vmatmul.bf16.gmra.mxu0 %v2324
        %v2745 = vpop.f32.mrf.mxu0
        %v2746 = vadd.f32 0.0, %v2745
        %v2747 = vpop.f32.mrf.mxu0
        %v2748 = vadd.f32 0.0, %v2747
        %2749 = vmatmul.bf16.gmra.mxu0 %v2326
        %v2750 = vpop.f32.mrf.mxu0
        %v2751 = vadd.f32 0.0, %v2750
        %v2752 = vpop.f32.mrf.mxu0
        %v2753 = vadd.f32 0.0, %v2752
        %2754 = vdwg.mxu0
        %2755 = vmatpush.bf16.msra.mxu0 %v2455
        %2756 = vmatpush.bf16.msra.mxu0 %v2453
        %2757 = vmatpush.bf16.msra.mxu0 %v2451
        %2758 = vmatpush.bf16.msra.mxu0 %v2449
        %2759 = vmatpush.bf16.msra.mxu0 %v2447
        %2760 = vmatpush.bf16.msra.mxu0 %v2445
        %2761 = vmatpush.bf16.msra.mxu0 %v2443
        %2762 = vmatpush.bf16.msra.mxu0 %v2441
        %2763 = vmatmul.bf16.gmra.mxu0 %v2297
        %v2764 = vpop.f32.mrf.mxu0
        %v2765 = vadd.f32 %v2676, %v2764
        %v2766 = vpop.f32.mrf.mxu0
        %v2767 = vadd.f32 %v2678, %v2766
        %2768 = vmatmul.bf16.gmra.mxu0 %v2299
        %v2769 = vpop.f32.mrf.mxu0
        %v2770 = vadd.f32 %v2681, %v2769
        %v2771 = vpop.f32.mrf.mxu0
        %v2772 = vadd.f32 %v2683, %v2771
        %2773 = vmatmul.bf16.gmra.mxu0 %v2301
        %v2774 = vpop.f32.mrf.mxu0
        %v2775 = vadd.f32 %v2686, %v2774
        %v2776 = vpop.f32.mrf.mxu0
        %v2777 = vadd.f32 %v2688, %v2776
        %2778 = vmatmul.bf16.gmra.mxu0 %v2303
        %v2779 = vpop.f32.mrf.mxu0
        %v2780 = vadd.f32 %v2691, %v2779
        %v2781 = vpop.f32.mrf.mxu0
        %v2782 = vadd.f32 %v2693, %v2781
        %2783 = vmatmul.bf16.gmra.mxu0 %v2305
        %v2784 = vpop.f32.mrf.mxu0
        %v2785 = vadd.f32 %v2696, %v2784
        %v2786 = vpop.f32.mrf.mxu0
        %v2787 = vadd.f32 %v2698, %v2786
        %2788 = vmatmul.bf16.gmra.mxu0 %v2307
        %v2789 = vpop.f32.mrf.mxu0
        %v2790 = vadd.f32 %v2701, %v2789
        %v2791 = vpop.f32.mrf.mxu0
        %v2792 = vadd.f32 %v2703, %v2791
        %2793 = vmatmul.bf16.gmra.mxu0 %v2309
        %v2794 = vpop.f32.mrf.mxu0
        %v2795 = vadd.f32 %v2706, %v2794
        %v2796 = vpop.f32.mrf.mxu0
        %v2797 = vadd.f32 %v2708, %v2796
        %2798 = vmatmul.bf16.gmra.mxu0 %v2311
        %v2799 = vpop.f32.mrf.mxu0
        %v2800 = vadd.f32 %v2711, %v2799
        %v2801 = vpop.f32.mrf.mxu0
        %v2802 = vadd.f32 %v2713, %v2801
        %2803 = vmatmul.bf16.gmra.mxu0 %v2313
        %v2804 = vpop.f32.mrf.mxu0
        %v2805 = vadd.f32 %v2716, %v2804
        %v2806 = vpop.f32.mrf.mxu0
        %v2807 = vadd.f32 %v2718, %v2806
        %2808 = vmatmul.bf16.gmra.mxu0 %v2315
        %v2809 = vpop.f32.mrf.mxu0
        %v2810 = vadd.f32 %v2721, %v2809
        %v2811 = vpop.f32.mrf.mxu0
        %v2812 = vadd.f32 %v2723, %v2811
        %2813 = vmatmul.bf16.gmra.mxu0 %v2317
        %v2814 = vpop.f32.mrf.mxu0
        %v2815 = vadd.f32 %v2726, %v2814
        %v2816 = vpop.f32.mrf.mxu0
        %v2817 = vadd.f32 %v2728, %v2816
        %2818 = vmatmul.bf16.gmra.mxu0 %v2319
        %v2819 = vpop.f32.mrf.mxu0
        %v2820 = vadd.f32 %v2731, %v2819
        %v2821 = vpop.f32.mrf.mxu0
        %v2822 = vadd.f32 %v2733, %v2821
        %2823 = vmatmul.bf16.gmra.mxu0 %v2321
        %v2824 = vpop.f32.mrf.mxu0
        %v2825 = vadd.f32 %v2736, %v2824
        %v2826 = vpop.f32.mrf.mxu0
        %v2827 = vadd.f32 %v2738, %v2826
        %2828 = vmatmul.bf16.gmra.mxu0 %v2323
        %v2829 = vpop.f32.mrf.mxu0
        %v2830 = vadd.f32 %v2741, %v2829
        %v2831 = vpop.f32.mrf.mxu0
        %v2832 = vadd.f32 %v2743, %v2831
        %2833 = vmatmul.bf16.gmra.mxu0 %v2325
        %v2834 = vpop.f32.mrf.mxu0
        %v2835 = vadd.f32 %v2746, %v2834
        %v2836 = vpop.f32.mrf.mxu0
        %v2837 = vadd.f32 %v2748, %v2836
        %2838 = vmatmul.bf16.gmra.mxu0 %v2327
        %v2839 = vpop.f32.mrf.mxu0
        %v2840 = vadd.f32 %v2751, %v2839
        %v2841 = vpop.f32.mrf.mxu0
        %v2842 = vadd.f32 %v2753, %v2841
        %2843 = vdwg.mxu0
        %v2844 = vpack.c.bf16 %v2589, %v2587
        %v2845 = vpack.c.bf16 %v2767, %v2765
        %v2846 = vpack.c.bf16 %v2594, %v2592
        %v2847 = vpack.c.bf16 %v2772, %v2770
        %v2848 = vpack.c.bf16 %v2599, %v2597
        %v2849 = vpack.c.bf16 %v2777, %v2775
        %v2850 = vpack.c.bf16 %v2604, %v2602
        %v2851 = vpack.c.bf16 %v2782, %v2780
        %v2852 = vpack.c.bf16 %v2609, %v2607
        %v2853 = vpack.c.bf16 %v2787, %v2785
        %v2854 = vpack.c.bf16 %v2614, %v2612
        %v2855 = vpack.c.bf16 %v2792, %v2790
        %v2856 = vpack.c.bf16 %v2619, %v2617
        %v2857 = vpack.c.bf16 %v2797, %v2795
        %v2858 = vpack.c.bf16 %v2624, %v2622
        %v2859 = vpack.c.bf16 %v2802, %v2800
        %v2860 = vpack.c.bf16 %v2629, %v2627
        %v2861 = vpack.c.bf16 %v2807, %v2805
        %v2862 = vpack.c.bf16 %v2634, %v2632
        %v2863 = vpack.c.bf16 %v2812, %v2810
        %v2864 = vpack.c.bf16 %v2639, %v2637
        %v2865 = vpack.c.bf16 %v2817, %v2815
        %v2866 = vpack.c.bf16 %v2644, %v2642
        %v2867 = vpack.c.bf16 %v2822, %v2820
        %v2868 = vpack.c.bf16 %v2649, %v2647
        %v2869 = vpack.c.bf16 %v2827, %v2825
        %v2870 = vpack.c.bf16 %v2654, %v2652
        %v2871 = vpack.c.bf16 %v2832, %v2830
        %v2872 = vpack.c.bf16 %v2659, %v2657
        %v2873 = vpack.c.bf16 %v2837, %v2835
        %v2874 = vpack.c.bf16 %v2664, %v2662
        %v2875 = vpack.c.bf16 %v2842, %v2840
        %s2876 = scalar_lea.vmem %s6, 3
        %v2877 = vld [vmem:[%s2876] ss:$8 sm:$0x3]
        %v2879 = vperm.slane %v2877, 0
        %v2880 = vperm.slane %v2877, 1
        %2883 = vmatpush.bf16.msra.mxu0 %v2858
        %2884 = vmatpush.bf16.msra.mxu0 %v2856
        %2885 = vmatpush.bf16.msra.mxu0 %v2854
        %2886 = vmatpush.bf16.msra.mxu0 %v2852
        %2887 = vmatpush.bf16.msra.mxu0 %v2850
        %2888 = vmatpush.bf16.msra.mxu0 %v2848
        %2889 = vmatpush.bf16.msra.mxu0 %v2846
        %2890 = vmatpush.bf16.msra.mxu0 %v2844
        %2891 = vmatmul.bf16.gmra.mxu0 %v524
        %v2892 = vpop.f32.mrf.mxu0
        %v2893 = vadd.f32 %v2879, %v2892
        %v2894 = vpop.f32.mrf.mxu0
        %v2895 = vadd.f32 %v2879, %v2894
        %2896 = vmatmul.bf16.gmra.mxu0 %v526
        %v2897 = vpop.f32.mrf.mxu0
        %v2898 = vadd.f32 %v2879, %v2897
        %v2899 = vpop.f32.mrf.mxu0
        %v2900 = vadd.f32 %v2879, %v2899
        %2901 = vmatmul.bf16.gmra.mxu0 %v528
        %v2902 = vpop.f32.mrf.mxu0
        %v2903 = vadd.f32 %v2879, %v2902
        %v2904 = vpop.f32.mrf.mxu0
        %v2905 = vadd.f32 %v2879, %v2904
        %2906 = vmatmul.bf16.gmra.mxu0 %v530
        %v2907 = vpop.f32.mrf.mxu0
        %v2908 = vadd.f32 %v2879, %v2907
        %v2909 = vpop.f32.mrf.mxu0
        %v2910 = vadd.f32 %v2879, %v2909
        %2911 = vmatmul.bf16.gmra.mxu0 %v532
        %v2912 = vpop.f32.mrf.mxu0
        %v2913 = vadd.f32 %v2879, %v2912
        %v2914 = vpop.f32.mrf.mxu0
        %v2915 = vadd.f32 %v2879, %v2914
        %2916 = vmatmul.bf16.gmra.mxu0 %v534
        %v2917 = vpop.f32.mrf.mxu0
        %v2918 = vadd.f32 %v2879, %v2917
        %v2919 = vpop.f32.mrf.mxu0
        %v2920 = vadd.f32 %v2879, %v2919
        %2921 = vmatmul.bf16.gmra.mxu0 %v536
        %v2922 = vpop.f32.mrf.mxu0
        %v2923 = vadd.f32 %v2879, %v2922
        %v2924 = vpop.f32.mrf.mxu0
        %v2925 = vadd.f32 %v2879, %v2924
        %2926 = vmatmul.bf16.gmra.mxu0 %v538
        %v2927 = vpop.f32.mrf.mxu0
        %v2928 = vadd.f32 %v2879, %v2927
        %v2929 = vpop.f32.mrf.mxu0
        %v2930 = vadd.f32 %v2879, %v2929
        %2931 = vmatmul.bf16.gmra.mxu0 %v540
        %v2932 = vpop.f32.mrf.mxu0
        %v2933 = vadd.f32 %v2879, %v2932
        %v2934 = vpop.f32.mrf.mxu0
        %v2935 = vadd.f32 %v2879, %v2934
        %2936 = vmatmul.bf16.gmra.mxu0 %v542
        %v2937 = vpop.f32.mrf.mxu0
        %v2938 = vadd.f32 %v2879, %v2937
        %v2939 = vpop.f32.mrf.mxu0
        %v2940 = vadd.f32 %v2879, %v2939
        %2941 = vmatmul.bf16.gmra.mxu0 %v544
        %v2942 = vpop.f32.mrf.mxu0
        %v2943 = vadd.f32 %v2879, %v2942
        %v2944 = vpop.f32.mrf.mxu0
        %v2945 = vadd.f32 %v2879, %v2944
        %2946 = vmatmul.bf16.gmra.mxu0 %v546
        %v2947 = vpop.f32.mrf.mxu0
        %v2948 = vadd.f32 %v2879, %v2947
        %v2949 = vpop.f32.mrf.mxu0
        %v2950 = vadd.f32 %v2879, %v2949
        %2951 = vmatmul.bf16.gmra.mxu0 %v548
        %v2952 = vpop.f32.mrf.mxu0
        %v2953 = vadd.f32 %v2879, %v2952
        %v2954 = vpop.f32.mrf.mxu0
        %v2955 = vadd.f32 %v2879, %v2954
        %2956 = vmatmul.bf16.gmra.mxu0 %v550
        %v2957 = vpop.f32.mrf.mxu0
        %v2958 = vadd.f32 %v2879, %v2957
        %v2959 = vpop.f32.mrf.mxu0
        %v2960 = vadd.f32 %v2879, %v2959
        %2961 = vmatmul.bf16.gmra.mxu0 %v552
        %v2962 = vpop.f32.mrf.mxu0
        %v2963 = vadd.f32 %v2879, %v2962
        %v2964 = vpop.f32.mrf.mxu0
        %v2965 = vadd.f32 %v2879, %v2964
        %2966 = vmatmul.bf16.gmra.mxu0 %v554
        %v2967 = vpop.f32.mrf.mxu0
        %v2968 = vadd.f32 %v2879, %v2967
        %v2969 = vpop.f32.mrf.mxu0
        %v2970 = vadd.f32 %v2879, %v2969
        %2971 = vdwg.mxu0
        %2972 = vmatpush.bf16.msra.mxu0 %v2874
        %2973 = vmatpush.bf16.msra.mxu0 %v2872
        %2974 = vmatpush.bf16.msra.mxu0 %v2870
        %2975 = vmatpush.bf16.msra.mxu0 %v2868
        %2976 = vmatpush.bf16.msra.mxu0 %v2866
        %2977 = vmatpush.bf16.msra.mxu0 %v2864
        %2978 = vmatpush.bf16.msra.mxu0 %v2862
        %2979 = vmatpush.bf16.msra.mxu0 %v2860
        %2980 = vmatmul.bf16.gmra.mxu0 %v525
        %v2981 = vpop.f32.mrf.mxu0
        %v2982 = vadd.f32 %v2893, %v2981
        %v2983 = vpop.f32.mrf.mxu0
        %v2984 = vadd.f32 %v2895, %v2983
        %2985 = vmatmul.bf16.gmra.mxu0 %v527
        %v2986 = vpop.f32.mrf.mxu0
        %v2987 = vadd.f32 %v2898, %v2986
        %v2988 = vpop.f32.mrf.mxu0
        %v2989 = vadd.f32 %v2900, %v2988
        %2990 = vmatmul.bf16.gmra.mxu0 %v529
        %v2991 = vpop.f32.mrf.mxu0
        %v2992 = vadd.f32 %v2903, %v2991
        %v2993 = vpop.f32.mrf.mxu0
        %v2994 = vadd.f32 %v2905, %v2993
        %2995 = vmatmul.bf16.gmra.mxu0 %v531
        %v2996 = vpop.f32.mrf.mxu0
        %v2997 = vadd.f32 %v2908, %v2996
        %v2998 = vpop.f32.mrf.mxu0
        %v2999 = vadd.f32 %v2910, %v2998
        %3000 = vmatmul.bf16.gmra.mxu0 %v533
        %v3001 = vpop.f32.mrf.mxu0
        %v3002 = vadd.f32 %v2913, %v3001
        %v3003 = vpop.f32.mrf.mxu0
        %v3004 = vadd.f32 %v2915, %v3003
        %3005 = vmatmul.bf16.gmra.mxu0 %v535
        %v3006 = vpop.f32.mrf.mxu0
        %v3007 = vadd.f32 %v2918, %v3006
        %v3008 = vpop.f32.mrf.mxu0
        %v3009 = vadd.f32 %v2920, %v3008
        %3010 = vmatmul.bf16.gmra.mxu0 %v537
        %v3011 = vpop.f32.mrf.mxu0
        %v3012 = vadd.f32 %v2923, %v3011
        %v3013 = vpop.f32.mrf.mxu0
        %v3014 = vadd.f32 %v2925, %v3013
        %3015 = vmatmul.bf16.gmra.mxu0 %v539
        %v3016 = vpop.f32.mrf.mxu0
        %v3017 = vadd.f32 %v2928, %v3016
        %v3018 = vpop.f32.mrf.mxu0
        %v3019 = vadd.f32 %v2930, %v3018
        %3020 = vmatmul.bf16.gmra.mxu0 %v541
        %v3021 = vpop.f32.mrf.mxu0
        %v3022 = vadd.f32 %v2933, %v3021
        %v3023 = vpop.f32.mrf.mxu0
        %v3024 = vadd.f32 %v2935, %v3023
        %3025 = vmatmul.bf16.gmra.mxu0 %v543
        %v3026 = vpop.f32.mrf.mxu0
        %v3027 = vadd.f32 %v2938, %v3026
        %v3028 = vpop.f32.mrf.mxu0
        %v3029 = vadd.f32 %v2940, %v3028
        %3030 = vmatmul.bf16.gmra.mxu0 %v545
        %v3031 = vpop.f32.mrf.mxu0
        %v3032 = vadd.f32 %v2943, %v3031
        %v3033 = vpop.f32.mrf.mxu0
        %v3034 = vadd.f32 %v2945, %v3033
        %3035 = vmatmul.bf16.gmra.mxu0 %v547
        %v3036 = vpop.f32.mrf.mxu0
        %v3037 = vadd.f32 %v2948, %v3036
        %v3038 = vpop.f32.mrf.mxu0
        %v3039 = vadd.f32 %v2950, %v3038
        %3040 = vmatmul.bf16.gmra.mxu0 %v549
        %v3041 = vpop.f32.mrf.mxu0
        %v3042 = vadd.f32 %v2953, %v3041
        %v3043 = vpop.f32.mrf.mxu0
        %v3044 = vadd.f32 %v2955, %v3043
        %3045 = vmatmul.bf16.gmra.mxu0 %v551
        %v3046 = vpop.f32.mrf.mxu0
        %v3047 = vadd.f32 %v2958, %v3046
        %v3048 = vpop.f32.mrf.mxu0
        %v3049 = vadd.f32 %v2960, %v3048
        %3050 = vmatmul.bf16.gmra.mxu0 %v553
        %v3051 = vpop.f32.mrf.mxu0
        %v3052 = vadd.f32 %v2963, %v3051
        %v3053 = vpop.f32.mrf.mxu0
        %v3054 = vadd.f32 %v2965, %v3053
        %3055 = vmatmul.bf16.gmra.mxu0 %v555
        %v3056 = vpop.f32.mrf.mxu0
        %v3057 = vadd.f32 %v2968, %v3056
        %v3058 = vpop.f32.mrf.mxu0
        %v3059 = vadd.f32 %v2970, %v3058
        %3060 = vdwg.mxu0
        %3061 = vmatpush.bf16.msra.mxu0 %v2859
        %3062 = vmatpush.bf16.msra.mxu0 %v2857
        %3063 = vmatpush.bf16.msra.mxu0 %v2855
        %3064 = vmatpush.bf16.msra.mxu0 %v2853
        %3065 = vmatpush.bf16.msra.mxu0 %v2851
        %3066 = vmatpush.bf16.msra.mxu0 %v2849
        %3067 = vmatpush.bf16.msra.mxu0 %v2847
        %3068 = vmatpush.bf16.msra.mxu0 %v2845
        %3069 = vmatmul.bf16.gmra.mxu0 %v524
        %v3070 = vpop.f32.mrf.mxu0
        %v3071 = vadd.f32 %v2880, %v3070
        %v3072 = vpop.f32.mrf.mxu0
        %v3073 = vadd.f32 %v2880, %v3072
        %3074 = vmatmul.bf16.gmra.mxu0 %v526
        %v3075 = vpop.f32.mrf.mxu0
        %v3076 = vadd.f32 %v2880, %v3075
        %v3077 = vpop.f32.mrf.mxu0
        %v3078 = vadd.f32 %v2880, %v3077
        %3079 = vmatmul.bf16.gmra.mxu0 %v528
        %v3080 = vpop.f32.mrf.mxu0
        %v3081 = vadd.f32 %v2880, %v3080
        %v3082 = vpop.f32.mrf.mxu0
        %v3083 = vadd.f32 %v2880, %v3082
        %3084 = vmatmul.bf16.gmra.mxu0 %v530
        %v3085 = vpop.f32.mrf.mxu0
        %v3086 = vadd.f32 %v2880, %v3085
        %v3087 = vpop.f32.mrf.mxu0
        %v3088 = vadd.f32 %v2880, %v3087
        %3089 = vmatmul.bf16.gmra.mxu0 %v532
        %v3090 = vpop.f32.mrf.mxu0
        %v3091 = vadd.f32 %v2880, %v3090
        %v3092 = vpop.f32.mrf.mxu0
        %v3093 = vadd.f32 %v2880, %v3092
        %3094 = vmatmul.bf16.gmra.mxu0 %v534
        %v3095 = vpop.f32.mrf.mxu0
        %v3096 = vadd.f32 %v2880, %v3095
        %v3097 = vpop.f32.mrf.mxu0
        %v3098 = vadd.f32 %v2880, %v3097
        %3099 = vmatmul.bf16.gmra.mxu0 %v536
        %v3100 = vpop.f32.mrf.mxu0
        %v3101 = vadd.f32 %v2880, %v3100
        %v3102 = vpop.f32.mrf.mxu0
        %v3103 = vadd.f32 %v2880, %v3102
        %3104 = vmatmul.bf16.gmra.mxu0 %v538
        %v3105 = vpop.f32.mrf.mxu0
        %v3106 = vadd.f32 %v2880, %v3105
        %v3107 = vpop.f32.mrf.mxu0
        %v3108 = vadd.f32 %v2880, %v3107
        %3109 = vmatmul.bf16.gmra.mxu0 %v540
        %v3110 = vpop.f32.mrf.mxu0
        %v3111 = vadd.f32 %v2880, %v3110
        %v3112 = vpop.f32.mrf.mxu0
        %v3113 = vadd.f32 %v2880, %v3112
        %3114 = vmatmul.bf16.gmra.mxu0 %v542
        %v3115 = vpop.f32.mrf.mxu0
        %v3116 = vadd.f32 %v2880, %v3115
        %v3117 = vpop.f32.mrf.mxu0
        %v3118 = vadd.f32 %v2880, %v3117
        %3119 = vmatmul.bf16.gmra.mxu0 %v544
        %v3120 = vpop.f32.mrf.mxu0
        %v3121 = vadd.f32 %v2880, %v3120
        %v3122 = vpop.f32.mrf.mxu0
        %v3123 = vadd.f32 %v2880, %v3122
        %3124 = vmatmul.bf16.gmra.mxu0 %v546
        %v3125 = vpop.f32.mrf.mxu0
        %v3126 = vadd.f32 %v2880, %v3125
        %v3127 = vpop.f32.mrf.mxu0
        %v3128 = vadd.f32 %v2880, %v3127
        %3129 = vmatmul.bf16.gmra.mxu0 %v548
        %v3130 = vpop.f32.mrf.mxu0
        %v3131 = vadd.f32 %v2880, %v3130
        %v3132 = vpop.f32.mrf.mxu0
        %v3133 = vadd.f32 %v2880, %v3132
        %3134 = vmatmul.bf16.gmra.mxu0 %v550
        %v3135 = vpop.f32.mrf.mxu0
        %v3136 = vadd.f32 %v2880, %v3135
        %v3137 = vpop.f32.mrf.mxu0
        %v3138 = vadd.f32 %v2880, %v3137
        %3139 = vmatmul.bf16.gmra.mxu0 %v552
        %v3140 = vpop.f32.mrf.mxu0
        %v3141 = vadd.f32 %v2880, %v3140
        %v3142 = vpop.f32.mrf.mxu0
        %v3143 = vadd.f32 %v2880, %v3142
        %3144 = vmatmul.bf16.gmra.mxu0 %v554
        %v3145 = vpop.f32.mrf.mxu0
        %v3146 = vadd.f32 %v2880, %v3145
        %v3147 = vpop.f32.mrf.mxu0
        %v3148 = vadd.f32 %v2880, %v3147
        %3149 = vdwg.mxu0
        %3150 = vmatpush.bf16.msra.mxu0 %v2875
        %3151 = vmatpush.bf16.msra.mxu0 %v2873
        %3152 = vmatpush.bf16.msra.mxu0 %v2871
        %3153 = vmatpush.bf16.msra.mxu0 %v2869
        %3154 = vmatpush.bf16.msra.mxu0 %v2867
        %3155 = vmatpush.bf16.msra.mxu0 %v2865
        %3156 = vmatpush.bf16.msra.mxu0 %v2863
        %3157 = vmatpush.bf16.msra.mxu0 %v2861
        %3158 = vmatmul.bf16.gmra.mxu0 %v525
        %v3159 = vpop.f32.mrf.mxu0
        %v3160 = vadd.f32 %v3071, %v3159
        %v3161 = vpop.f32.mrf.mxu0
        %v3162 = vadd.f32 %v3073, %v3161
        %3163 = vmatmul.bf16.gmra.mxu0 %v527
        %v3164 = vpop.f32.mrf.mxu0
        %v3165 = vadd.f32 %v3076, %v3164
        %v3166 = vpop.f32.mrf.mxu0
        %v3167 = vadd.f32 %v3078, %v3166
        %3168 = vmatmul.bf16.gmra.mxu0 %v529
        %v3169 = vpop.f32.mrf.mxu0
        %v3170 = vadd.f32 %v3081, %v3169
        %v3171 = vpop.f32.mrf.mxu0
        %v3172 = vadd.f32 %v3083, %v3171
        %3173 = vmatmul.bf16.gmra.mxu0 %v531
        %v3174 = vpop.f32.mrf.mxu0
        %v3175 = vadd.f32 %v3086, %v3174
        %v3176 = vpop.f32.mrf.mxu0
        %v3177 = vadd.f32 %v3088, %v3176
        %3178 = vmatmul.bf16.gmra.mxu0 %v533
        %v3179 = vpop.f32.mrf.mxu0
        %v3180 = vadd.f32 %v3091, %v3179
        %v3181 = vpop.f32.mrf.mxu0
        %v3182 = vadd.f32 %v3093, %v3181
        %3183 = vmatmul.bf16.gmra.mxu0 %v535
        %v3184 = vpop.f32.mrf.mxu0
        %v3185 = vadd.f32 %v3096, %v3184
        %v3186 = vpop.f32.mrf.mxu0
        %v3187 = vadd.f32 %v3098, %v3186
        %3188 = vmatmul.bf16.gmra.mxu0 %v537
        %v3189 = vpop.f32.mrf.mxu0
        %v3190 = vadd.f32 %v3101, %v3189
        %v3191 = vpop.f32.mrf.mxu0
        %v3192 = vadd.f32 %v3103, %v3191
        %3193 = vmatmul.bf16.gmra.mxu0 %v539
        %v3194 = vpop.f32.mrf.mxu0
        %v3195 = vadd.f32 %v3106, %v3194
        %v3196 = vpop.f32.mrf.mxu0
        %v3197 = vadd.f32 %v3108, %v3196
        %3198 = vmatmul.bf16.gmra.mxu0 %v541
        %v3199 = vpop.f32.mrf.mxu0
        %v3200 = vadd.f32 %v3111, %v3199
        %v3201 = vpop.f32.mrf.mxu0
        %v3202 = vadd.f32 %v3113, %v3201
        %3203 = vmatmul.bf16.gmra.mxu0 %v543
        %v3204 = vpop.f32.mrf.mxu0
        %v3205 = vadd.f32 %v3116, %v3204
        %v3206 = vpop.f32.mrf.mxu0
        %v3207 = vadd.f32 %v3118, %v3206
        %3208 = vmatmul.bf16.gmra.mxu0 %v545
        %v3209 = vpop.f32.mrf.mxu0
        %v3210 = vadd.f32 %v3121, %v3209
        %v3211 = vpop.f32.mrf.mxu0
        %v3212 = vadd.f32 %v3123, %v3211
        %3213 = vmatmul.bf16.gmra.mxu0 %v547
        %v3214 = vpop.f32.mrf.mxu0
        %v3215 = vadd.f32 %v3126, %v3214
        %v3216 = vpop.f32.mrf.mxu0
        %v3217 = vadd.f32 %v3128, %v3216
        %3218 = vmatmul.bf16.gmra.mxu0 %v549
        %v3219 = vpop.f32.mrf.mxu0
        %v3220 = vadd.f32 %v3131, %v3219
        %v3221 = vpop.f32.mrf.mxu0
        %v3222 = vadd.f32 %v3133, %v3221
        %3223 = vmatmul.bf16.gmra.mxu0 %v551
        %v3224 = vpop.f32.mrf.mxu0
        %v3225 = vadd.f32 %v3136, %v3224
        %v3226 = vpop.f32.mrf.mxu0
        %v3227 = vadd.f32 %v3138, %v3226
        %3228 = vmatmul.bf16.gmra.mxu0 %v553
        %v3229 = vpop.f32.mrf.mxu0
        %v3230 = vadd.f32 %v3141, %v3229
        %v3231 = vpop.f32.mrf.mxu0
        %v3232 = vadd.f32 %v3143, %v3231
        %3233 = vmatmul.bf16.gmra.mxu0 %v555
        %v3234 = vpop.f32.mrf.mxu0
        %v3235 = vadd.f32 %v3146, %v3234
        %v3236 = vpop.f32.mrf.mxu0
        %v3237 = vadd.f32 %v3148, %v3236
        %3238 = vdwg.mxu0
        %s3239 = scalar_lea.vmem %s6, 4
        %v3240 = vld [vmem:[%s3239] ss:$8 sm:$0x3]
        %s3241 = scalar_lea.vmem %s6, 5
        %v3242 = vld [vmem:[%s3241] ss:$8 sm:$0x3]
        %v3243 = vadd.f32 %v2982, %v3160
        %3244 = vadd.xlane.f32.xlu0 %v3243
        %v3245 = vpop.xlane.xlu0 %3244
        %v3246 = vadd.f32 %v2984, %v3162
        %3247 = vadd.xlane.f32.xlu0 %v3246
        %v3248 = vpop.xlane.xlu0 %3247
        %v3249 = vadd.f32 %v2987, %v3165
        %3250 = vadd.xlane.f32.xlu0 %v3249
        %v3251 = vpop.xlane.xlu0 %3250
        %v3252 = vadd.f32 %v2989, %v3167
        %3253 = vadd.xlane.f32.xlu0 %v3252
        %v3254 = vpop.xlane.xlu0 %3253
        %v3255 = vadd.f32 %v2992, %v3170
        %3256 = vadd.xlane.f32.xlu0 %v3255
        %v3257 = vpop.xlane.xlu0 %3256
        %v3258 = vadd.f32 %v2994, %v3172
        %3259 = vadd.xlane.f32.xlu0 %v3258
        %v3260 = vpop.xlane.xlu0 %3259
        %v3261 = vadd.f32 %v2997, %v3175
        %3262 = vadd.xlane.f32.xlu0 %v3261
        %v3263 = vpop.xlane.xlu0 %3262
        %v3264 = vadd.f32 %v2999, %v3177
        %3265 = vadd.xlane.f32.xlu0 %v3264
        %v3266 = vpop.xlane.xlu0 %3265
        %v3267 = vadd.f32 %v3002, %v3180
        %3268 = vadd.xlane.f32.xlu0 %v3267
        %v3269 = vpop.xlane.xlu0 %3268
        %v3270 = vadd.f32 %v3004, %v3182
        %3271 = vadd.xlane.f32.xlu0 %v3270
        %v3272 = vpop.xlane.xlu0 %3271
        %v3273 = vadd.f32 %v3007, %v3185
        %3274 = vadd.xlane.f32.xlu0 %v3273
        %v3275 = vpop.xlane.xlu0 %3274
        %v3276 = vadd.f32 %v3009, %v3187
        %3277 = vadd.xlane.f32.xlu0 %v3276
        %v3278 = vpop.xlane.xlu0 %3277
        %v3279 = vadd.f32 %v3012, %v3190
        %3280 = vadd.xlane.f32.xlu0 %v3279
        %v3281 = vpop.xlane.xlu0 %3280
        %v3282 = vadd.f32 %v3014, %v3192
        %3283 = vadd.xlane.f32.xlu0 %v3282
        %v3284 = vpop.xlane.xlu0 %3283
        %v3285 = vadd.f32 %v3017, %v3195
        %3286 = vadd.xlane.f32.xlu0 %v3285
        %v3287 = vpop.xlane.xlu0 %3286
        %v3288 = vadd.f32 %v3019, %v3197
        %3289 = vadd.xlane.f32.xlu0 %v3288
        %v3290 = vpop.xlane.xlu0 %3289
        %v3291 = vadd.f32 %v3022, %v3200
        %3292 = vadd.xlane.f32.xlu0 %v3291
        %v3293 = vpop.xlane.xlu0 %3292
        %v3294 = vadd.f32 %v3024, %v3202
        %3295 = vadd.xlane.f32.xlu0 %v3294
        %v3296 = vpop.xlane.xlu0 %3295
        %v3297 = vadd.f32 %v3027, %v3205
        %3298 = vadd.xlane.f32.xlu0 %v3297
        %v3299 = vpop.xlane.xlu0 %3298
        %v3300 = vadd.f32 %v3029, %v3207
        %3301 = vadd.xlane.f32.xlu0 %v3300
        %v3302 = vpop.xlane.xlu0 %3301
        %v3303 = vadd.f32 %v3032, %v3210
        %3304 = vadd.xlane.f32.xlu0 %v3303
        %v3305 = vpop.xlane.xlu0 %3304
        %v3306 = vadd.f32 %v3034, %v3212
        %3307 = vadd.xlane.f32.xlu0 %v3306
        %v3308 = vpop.xlane.xlu0 %3307
        %v3309 = vadd.f32 %v3037, %v3215
        %3310 = vadd.xlane.f32.xlu0 %v3309
        %v3311 = vpop.xlane.xlu0 %3310
        %v3312 = vadd.f32 %v3039, %v3217
        %3313 = vadd.xlane.f32.xlu0 %v3312
        %v3314 = vpop.xlane.xlu0 %3313
        %v3315 = vadd.f32 %v3042, %v3220
        %3316 = vadd.xlane.f32.xlu0 %v3315
        %v3317 = vpop.xlane.xlu0 %3316
        %v3318 = vadd.f32 %v3044, %v3222
        %3319 = vadd.xlane.f32.xlu0 %v3318
        %v3320 = vpop.xlane.xlu0 %3319
        %v3321 = vadd.f32 %v3047, %v3225
        %3322 = vadd.xlane.f32.xlu0 %v3321
        %v3323 = vpop.xlane.xlu0 %3322
        %v3324 = vadd.f32 %v3049, %v3227
        %3325 = vadd.xlane.f32.xlu0 %v3324
        %v3326 = vpop.xlane.xlu0 %3325
        %v3327 = vadd.f32 %v3052, %v3230
        %3328 = vadd.xlane.f32.xlu0 %v3327
        %v3329 = vpop.xlane.xlu0 %3328
        %v3330 = vadd.f32 %v3054, %v3232
        %3331 = vadd.xlane.f32.xlu0 %v3330
        %v3332 = vpop.xlane.xlu0 %3331
        %v3333 = vadd.f32 %v3057, %v3235
        %3334 = vadd.xlane.f32.xlu0 %v3333
        %v3335 = vpop.xlane.xlu0 %3334
        %v3336 = vadd.f32 %v3059, %v3237
        %3337 = vadd.xlane.f32.xlu0 %v3336
        %v3338 = vpop.xlane.xlu0 %3337
        %v3339 = vmul.f32 %v3245, %v1229
        %v3340 = vmul.f32 %v3248, %v1229
        %v3341 = vmul.f32 %v3251, %v1229
        %v3342 = vmul.f32 %v3254, %v1229
        %v3343 = vmul.f32 %v3257, %v1229
        %v3344 = vmul.f32 %v3260, %v1229
        %v3345 = vmul.f32 %v3263, %v1229
        %v3346 = vmul.f32 %v3266, %v1229
        %v3347 = vmul.f32 %v3269, %v1229
        %v3348 = vmul.f32 %v3272, %v1229
        %v3349 = vmul.f32 %v3275, %v1229
        %v3350 = vmul.f32 %v3278, %v1229
        %v3351 = vmul.f32 %v3281, %v1229
        %v3352 = vmul.f32 %v3284, %v1229
        %v3353 = vmul.f32 %v3287, %v1229
        %v3354 = vmul.f32 %v3290, %v1229
        %v3355 = vmul.f32 %v3293, %v1229
        %v3356 = vmul.f32 %v3296, %v1229
        %v3357 = vmul.f32 %v3299, %v1229
        %v3358 = vmul.f32 %v3302, %v1229
        %v3359 = vmul.f32 %v3305, %v1229
        %v3360 = vmul.f32 %v3308, %v1229
        %v3361 = vmul.f32 %v3311, %v1229
        %v3362 = vmul.f32 %v3314, %v1229
        %v3363 = vmul.f32 %v3317, %v1229
        %v3364 = vmul.f32 %v3320, %v1229
        %v3365 = vmul.f32 %v3323, %v1229
        %v3366 = vmul.f32 %v3326, %v1229
        %v3367 = vmul.f32 %v3329, %v1229
        %v3368 = vmul.f32 %v3332, %v1229
        %v3369 = vmul.f32 %v3335, %v1229
        %v3370 = vmul.f32 %v3338, %v1229
        %v3371 = vsub.f32 %v2982, %v3339
        %v3372 = vsub.f32 %v3160, %v3339
        %v3373 = vsub.f32 %v2984, %v3340
        %v3374 = vsub.f32 %v3162, %v3340
        %v3375 = vsub.f32 %v2987, %v3341
        %v3376 = vsub.f32 %v3165, %v3341
        %v3377 = vsub.f32 %v2989, %v3342
        %v3378 = vsub.f32 %v3167, %v3342
        %v3379 = vsub.f32 %v2992, %v3343
        %v3380 = vsub.f32 %v3170, %v3343
        %v3381 = vsub.f32 %v2994, %v3344
        %v3382 = vsub.f32 %v3172, %v3344
        %v3383 = vsub.f32 %v2997, %v3345
        %v3384 = vsub.f32 %v3175, %v3345
        %v3385 = vsub.f32 %v2999, %v3346
        %v3386 = vsub.f32 %v3177, %v3346
        %v3387 = vsub.f32 %v3002, %v3347
        %v3388 = vsub.f32 %v3180, %v3347
        %v3389 = vsub.f32 %v3004, %v3348
        %v3390 = vsub.f32 %v3182, %v3348
        %v3391 = vsub.f32 %v3007, %v3349
        %v3392 = vsub.f32 %v3185, %v3349
        %v3393 = vsub.f32 %v3009, %v3350
        %v3394 = vsub.f32 %v3187, %v3350
        %v3395 = vsub.f32 %v3012, %v3351
        %v3396 = vsub.f32 %v3190, %v3351
        %v3397 = vsub.f32 %v3014, %v3352
        %v3398 = vsub.f32 %v3192, %v3352
        %v3399 = vsub.f32 %v3017, %v3353
        %v3400 = vsub.f32 %v3195, %v3353
        %v3401 = vsub.f32 %v3019, %v3354
        %v3402 = vsub.f32 %v3197, %v3354
        %v3403 = vsub.f32 %v3022, %v3355
        %v3404 = vsub.f32 %v3200, %v3355
        %v3405 = vsub.f32 %v3024, %v3356
        %v3406 = vsub.f32 %v3202, %v3356
        %v3407 = vsub.f32 %v3027, %v3357
        %v3408 = vsub.f32 %v3205, %v3357
        %v3409 = vsub.f32 %v3029, %v3358
        %v3410 = vsub.f32 %v3207, %v3358
        %v3411 = vsub.f32 %v3032, %v3359
        %v3412 = vsub.f32 %v3210, %v3359
        %v3413 = vsub.f32 %v3034, %v3360
        %v3414 = vsub.f32 %v3212, %v3360
        %v3415 = vsub.f32 %v3037, %v3361
        %v3416 = vsub.f32 %v3215, %v3361
        %v3417 = vsub.f32 %v3039, %v3362
        %v3418 = vsub.f32 %v3217, %v3362
        %v3419 = vsub.f32 %v3042, %v3363
        %v3420 = vsub.f32 %v3220, %v3363
        %v3421 = vsub.f32 %v3044, %v3364
        %v3422 = vsub.f32 %v3222, %v3364
        %v3423 = vsub.f32 %v3047, %v3365
        %v3424 = vsub.f32 %v3225, %v3365
        %v3425 = vsub.f32 %v3049, %v3366
        %v3426 = vsub.f32 %v3227, %v3366
        %v3427 = vsub.f32 %v3052, %v3367
        %v3428 = vsub.f32 %v3230, %v3367
        %v3429 = vsub.f32 %v3054, %v3368
        %v3430 = vsub.f32 %v3232, %v3368
        %v3431 = vsub.f32 %v3057, %v3369
        %v3432 = vsub.f32 %v3235, %v3369
        %v3433 = vsub.f32 %v3059, %v3370
        %v3434 = vsub.f32 %v3237, %v3370
        %v3435 = vmul.f32 %v3371, %v3371
        %v3436 = vmul.f32 %v3372, %v3372
        %v3437 = vmul.f32 %v3373, %v3373
        %v3438 = vmul.f32 %v3374, %v3374
        %v3439 = vmul.f32 %v3375, %v3375
        %v3440 = vmul.f32 %v3376, %v3376
        %v3441 = vmul.f32 %v3377, %v3377
        %v3442 = vmul.f32 %v3378, %v3378
        %v3443 = vmul.f32 %v3379, %v3379
        %v3444 = vmul.f32 %v3380, %v3380
        %v3445 = vmul.f32 %v3381, %v3381
        %v3446 = vmul.f32 %v3382, %v3382
        %v3447 = vmul.f32 %v3383, %v3383
        %v3448 = vmul.f32 %v3384, %v3384
        %v3449 = vmul.f32 %v3385, %v3385
        %v3450 = vmul.f32 %v3386, %v3386
        %v3451 = vmul.f32 %v3387, %v3387
        %v3452 = vmul.f32 %v3388, %v3388
        %v3453 = vmul.f32 %v3389, %v3389
        %v3454 = vmul.f32 %v3390, %v3390
        %v3455 = vmul.f32 %v3391, %v3391
        %v3456 = vmul.f32 %v3392, %v3392
        %v3457 = vmul.f32 %v3393, %v3393
        %v3458 = vmul.f32 %v3394, %v3394
        %v3459 = vmul.f32 %v3395, %v3395
        %v3460 = vmul.f32 %v3396, %v3396
        %v3461 = vmul.f32 %v3397, %v3397
        %v3462 = vmul.f32 %v3398, %v3398
        %v3463 = vmul.f32 %v3399, %v3399
        %v3464 = vmul.f32 %v3400, %v3400
        %v3465 = vmul.f32 %v3401, %v3401
        %v3466 = vmul.f32 %v3402, %v3402
        %v3467 = vmul.f32 %v3403, %v3403
        %v3468 = vmul.f32 %v3404, %v3404
        %v3469 = vmul.f32 %v3405, %v3405
        %v3470 = vmul.f32 %v3406, %v3406
        %v3471 = vmul.f32 %v3407, %v3407
        %v3472 = vmul.f32 %v3408, %v3408
        %v3473 = vmul.f32 %v3409, %v3409
        %v3474 = vmul.f32 %v3410, %v3410
        %v3475 = vmul.f32 %v3411, %v3411
        %v3476 = vmul.f32 %v3412, %v3412
        %v3477 = vmul.f32 %v3413, %v3413
        %v3478 = vmul.f32 %v3414, %v3414
        %v3479 = vmul.f32 %v3415, %v3415
        %v3480 = vmul.f32 %v3416, %v3416
        %v3481 = vmul.f32 %v3417, %v3417
        %v3482 = vmul.f32 %v3418, %v3418
        %v3483 = vmul.f32 %v3419, %v3419
        %v3484 = vmul.f32 %v3420, %v3420
        %v3485 = vmul.f32 %v3421, %v3421
        %v3486 = vmul.f32 %v3422, %v3422
        %v3487 = vmul.f32 %v3423, %v3423
        %v3488 = vmul.f32 %v3424, %v3424
        %v3489 = vmul.f32 %v3425, %v3425
        %v3490 = vmul.f32 %v3426, %v3426
        %v3491 = vmul.f32 %v3427, %v3427
        %v3492 = vmul.f32 %v3428, %v3428
        %v3493 = vmul.f32 %v3429, %v3429
        %v3494 = vmul.f32 %v3430, %v3430
        %v3495 = vmul.f32 %v3431, %v3431
        %v3496 = vmul.f32 %v3432, %v3432
        %v3497 = vmul.f32 %v3433, %v3433
        %v3498 = vmul.f32 %v3434, %v3434
        %v3499 = vadd.f32 %v3435, %v3436
        %3500 = vadd.xlane.f32.xlu0 %v3499
        %v3501 = vpop.xlane.xlu0 %3500
        %v3502 = vadd.f32 %v3437, %v3438
        %3503 = vadd.xlane.f32.xlu0 %v3502
        %v3504 = vpop.xlane.xlu0 %3503
        %v3505 = vadd.f32 %v3439, %v3440
        %3506 = vadd.xlane.f32.xlu0 %v3505
        %v3507 = vpop.xlane.xlu0 %3506
        %v3508 = vadd.f32 %v3441, %v3442
        %3509 = vadd.xlane.f32.xlu0 %v3508
        %v3510 = vpop.xlane.xlu0 %3509
        %v3511 = vadd.f32 %v3443, %v3444
        %3512 = vadd.xlane.f32.xlu0 %v3511
        %v3513 = vpop.xlane.xlu0 %3512
        %v3514 = vadd.f32 %v3445, %v3446
        %3515 = vadd.xlane.f32.xlu0 %v3514
        %v3516 = vpop.xlane.xlu0 %3515
        %v3517 = vadd.f32 %v3447, %v3448
        %3518 = vadd.xlane.f32.xlu0 %v3517
        %v3519 = vpop.xlane.xlu0 %3518
        %v3520 = vadd.f32 %v3449, %v3450
        %3521 = vadd.xlane.f32.xlu0 %v3520
        %v3522 = vpop.xlane.xlu0 %3521
        %v3523 = vadd.f32 %v3451, %v3452
        %3524 = vadd.xlane.f32.xlu0 %v3523
        %v3525 = vpop.xlane.xlu0 %3524
        %v3526 = vadd.f32 %v3453, %v3454
        %3527 = vadd.xlane.f32.xlu0 %v3526
        %v3528 = vpop.xlane.xlu0 %3527
        %v3529 = vadd.f32 %v3455, %v3456
        %3530 = vadd.xlane.f32.xlu0 %v3529
        %v3531 = vpop.xlane.xlu0 %3530
        %v3532 = vadd.f32 %v3457, %v3458
        %3533 = vadd.xlane.f32.xlu0 %v3532
        %v3534 = vpop.xlane.xlu0 %3533
        %v3535 = vadd.f32 %v3459, %v3460
        %3536 = vadd.xlane.f32.xlu0 %v3535
        %v3537 = vpop.xlane.xlu0 %3536
        %v3538 = vadd.f32 %v3461, %v3462
        %3539 = vadd.xlane.f32.xlu0 %v3538
        %v3540 = vpop.xlane.xlu0 %3539
        %v3541 = vadd.f32 %v3463, %v3464
        %3542 = vadd.xlane.f32.xlu0 %v3541
        %v3543 = vpop.xlane.xlu0 %3542
        %v3544 = vadd.f32 %v3465, %v3466
        %3545 = vadd.xlane.f32.xlu0 %v3544
        %v3546 = vpop.xlane.xlu0 %3545
        %v3547 = vadd.f32 %v3467, %v3468
        %3548 = vadd.xlane.f32.xlu0 %v3547
        %v3549 = vpop.xlane.xlu0 %3548
        %v3550 = vadd.f32 %v3469, %v3470
        %3551 = vadd.xlane.f32.xlu0 %v3550
        %v3552 = vpop.xlane.xlu0 %3551
        %v3553 = vadd.f32 %v3471, %v3472
        %3554 = vadd.xlane.f32.xlu0 %v3553
        %v3555 = vpop.xlane.xlu0 %3554
        %v3556 = vadd.f32 %v3473, %v3474
        %3557 = vadd.xlane.f32.xlu0 %v3556
        %v3558 = vpop.xlane.xlu0 %3557
        %v3559 = vadd.f32 %v3475, %v3476
        %3560 = vadd.xlane.f32.xlu0 %v3559
        %v3561 = vpop.xlane.xlu0 %3560
        %v3562 = vadd.f32 %v3477, %v3478
        %3563 = vadd.xlane.f32.xlu0 %v3562
        %v3564 = vpop.xlane.xlu0 %3563
        %v3565 = vadd.f32 %v3479, %v3480
        %3566 = vadd.xlane.f32.xlu0 %v3565
        %v3567 = vpop.xlane.xlu0 %3566
        %v3568 = vadd.f32 %v3481, %v3482
        %3569 = vadd.xlane.f32.xlu0 %v3568
        %v3570 = vpop.xlane.xlu0 %3569
        %v3571 = vadd.f32 %v3483, %v3484
        %3572 = vadd.xlane.f32.xlu0 %v3571
        %v3573 = vpop.xlane.xlu0 %3572
        %v3574 = vadd.f32 %v3485, %v3486
        %3575 = vadd.xlane.f32.xlu0 %v3574
        %v3576 = vpop.xlane.xlu0 %3575
        %v3577 = vadd.f32 %v3487, %v3488
        %3578 = vadd.xlane.f32.xlu0 %v3577
        %v3579 = vpop.xlane.xlu0 %3578
        %v3580 = vadd.f32 %v3489, %v3490
        %3581 = vadd.xlane.f32.xlu0 %v3580
        %v3582 = vpop.xlane.xlu0 %3581
        %v3583 = vadd.f32 %v3491, %v3492
        %3584 = vadd.xlane.f32.xlu0 %v3583
        %v3585 = vpop.xlane.xlu0 %3584
        %v3586 = vadd.f32 %v3493, %v3494
        %3587 = vadd.xlane.f32.xlu0 %v3586
        %v3588 = vpop.xlane.xlu0 %3587
        %v3589 = vadd.f32 %v3495, %v3496
        %3590 = vadd.xlane.f32.xlu0 %v3589
        %v3591 = vpop.xlane.xlu0 %3590
        %v3592 = vadd.f32 %v3497, %v3498
        %3593 = vadd.xlane.f32.xlu0 %v3592
        %v3594 = vpop.xlane.xlu0 %3593
        %v3595 = vmul.f32 %v3501, %v1229
        %v3596 = vmul.f32 %v3504, %v1229
        %v3597 = vmul.f32 %v3507, %v1229
        %v3598 = vmul.f32 %v3510, %v1229
        %v3599 = vmul.f32 %v3513, %v1229
        %v3600 = vmul.f32 %v3516, %v1229
        %v3601 = vmul.f32 %v3519, %v1229
        %v3602 = vmul.f32 %v3522, %v1229
        %v3603 = vmul.f32 %v3525, %v1229
        %v3604 = vmul.f32 %v3528, %v1229
        %v3605 = vmul.f32 %v3531, %v1229
        %v3606 = vmul.f32 %v3534, %v1229
        %v3607 = vmul.f32 %v3537, %v1229
        %v3608 = vmul.f32 %v3540, %v1229
        %v3609 = vmul.f32 %v3543, %v1229
        %v3610 = vmul.f32 %v3546, %v1229
        %v3611 = vmul.f32 %v3549, %v1229
        %v3612 = vmul.f32 %v3552, %v1229
        %v3613 = vmul.f32 %v3555, %v1229
        %v3614 = vmul.f32 %v3558, %v1229
        %v3615 = vmul.f32 %v3561, %v1229
        %v3616 = vmul.f32 %v3564, %v1229
        %v3617 = vmul.f32 %v3567, %v1229
        %v3618 = vmul.f32 %v3570, %v1229
        %v3619 = vmul.f32 %v3573, %v1229
        %v3620 = vmul.f32 %v3576, %v1229
        %v3621 = vmul.f32 %v3579, %v1229
        %v3622 = vmul.f32 %v3582, %v1229
        %v3623 = vmul.f32 %v3585, %v1229
        %v3624 = vmul.f32 %v3588, %v1229
        %v3625 = vmul.f32 %v3591, %v1229
        %v3626 = vmul.f32 %v3594, %v1229
        %v3627 = vadd.f32 %v3595, 1e-05
        %v3628 = vadd.f32 %v3596, 1e-05
        %v3629 = vadd.f32 %v3597, 1e-05
        %v3630 = vadd.f32 %v3598, 1e-05
        %v3631 = vadd.f32 %v3599, 1e-05
        %v3632 = vadd.f32 %v3600, 1e-05
        %v3633 = vadd.f32 %v3601, 1e-05
        %v3634 = vadd.f32 %v3602, 1e-05
        %v3635 = vadd.f32 %v3603, 1e-05
        %v3636 = vadd.f32 %v3604, 1e-05
        %v3637 = vadd.f32 %v3605, 1e-05
        %v3638 = vadd.f32 %v3606, 1e-05
        %v3639 = vadd.f32 %v3607, 1e-05
        %v3640 = vadd.f32 %v3608, 1e-05
        %v3641 = vadd.f32 %v3609, 1e-05
        %v3642 = vadd.f32 %v3610, 1e-05
        %v3643 = vadd.f32 %v3611, 1e-05
        %v3644 = vadd.f32 %v3612, 1e-05
        %v3645 = vadd.f32 %v3613, 1e-05
        %v3646 = vadd.f32 %v3614, 1e-05
        %v3647 = vadd.f32 %v3615, 1e-05
        %v3648 = vadd.f32 %v3616, 1e-05
        %v3649 = vadd.f32 %v3617, 1e-05
        %v3650 = vadd.f32 %v3618, 1e-05
        %v3651 = vadd.f32 %v3619, 1e-05
        %v3652 = vadd.f32 %v3620, 1e-05
        %v3653 = vadd.f32 %v3621, 1e-05
        %v3654 = vadd.f32 %v3622, 1e-05
        %v3655 = vadd.f32 %v3623, 1e-05
        %v3656 = vadd.f32 %v3624, 1e-05
        %v3657 = vadd.f32 %v3625, 1e-05
        %v3658 = vadd.f32 %v3626, 1e-05
        %v3659 = vrsqrt.pop %v3627
        %v3660 = vmul.f32 %v3659, %v3627
        %v3661 = vmul.f32 %v3660, %v3659
        %v3662 = vmul.f32 0.5, %v3661
        %v3663 = vsub.f32 1.5, %v3662
        %v3664 = vmul.f32 %v3659, %v3663
        %vm3665 = vweird.f32 %v3627
        %vm3666 = vweird.f32 %v3659
        %vm3667 = vmor %vm3665, %vm3666
        %v3668 = vsel %vm3667, %v3659, %v3664
        %v3669 = vrsqrt.pop %v3628
        %v3670 = vmul.f32 %v3669, %v3628
        %v3671 = vmul.f32 %v3670, %v3669
        %v3672 = vmul.f32 0.5, %v3671
        %v3673 = vsub.f32 1.5, %v3672
        %v3674 = vmul.f32 %v3669, %v3673
        %vm3675 = vweird.f32 %v3628
        %vm3676 = vweird.f32 %v3669
        %vm3677 = vmor %vm3675, %vm3676
        %v3678 = vsel %vm3677, %v3669, %v3674
        %v3679 = vrsqrt.pop %v3629
        %v3680 = vmul.f32 %v3679, %v3629
        %v3681 = vmul.f32 %v3680, %v3679
        %v3682 = vmul.f32 0.5, %v3681
        %v3683 = vsub.f32 1.5, %v3682
        %v3684 = vmul.f32 %v3679, %v3683
        %vm3685 = vweird.f32 %v3629
        %vm3686 = vweird.f32 %v3679
        %vm3687 = vmor %vm3685, %vm3686
        %v3688 = vsel %vm3687, %v3679, %v3684
        %v3689 = vrsqrt.pop %v3630
        %v3690 = vmul.f32 %v3689, %v3630
        %v3691 = vmul.f32 %v3690, %v3689
        %v3692 = vmul.f32 0.5, %v3691
        %v3693 = vsub.f32 1.5, %v3692
        %v3694 = vmul.f32 %v3689, %v3693
        %vm3695 = vweird.f32 %v3630
        %vm3696 = vweird.f32 %v3689
        %vm3697 = vmor %vm3695, %vm3696
        %v3698 = vsel %vm3697, %v3689, %v3694
        %v3699 = vrsqrt.pop %v3631
        %v3700 = vmul.f32 %v3699, %v3631
        %v3701 = vmul.f32 %v3700, %v3699
        %v3702 = vmul.f32 0.5, %v3701
        %v3703 = vsub.f32 1.5, %v3702
        %v3704 = vmul.f32 %v3699, %v3703
        %vm3705 = vweird.f32 %v3631
        %vm3706 = vweird.f32 %v3699
        %vm3707 = vmor %vm3705, %vm3706
        %v3708 = vsel %vm3707, %v3699, %v3704
        %v3709 = vrsqrt.pop %v3632
        %v3710 = vmul.f32 %v3709, %v3632
        %v3711 = vmul.f32 %v3710, %v3709
        %v3712 = vmul.f32 0.5, %v3711
        %v3713 = vsub.f32 1.5, %v3712
        %v3714 = vmul.f32 %v3709, %v3713
        %vm3715 = vweird.f32 %v3632
        %vm3716 = vweird.f32 %v3709
        %vm3717 = vmor %vm3715, %vm3716
        %v3718 = vsel %vm3717, %v3709, %v3714
        %v3719 = vrsqrt.pop %v3633
        %v3720 = vmul.f32 %v3719, %v3633
        %v3721 = vmul.f32 %v3720, %v3719
        %v3722 = vmul.f32 0.5, %v3721
        %v3723 = vsub.f32 1.5, %v3722
        %v3724 = vmul.f32 %v3719, %v3723
        %vm3725 = vweird.f32 %v3633
        %vm3726 = vweird.f32 %v3719
        %vm3727 = vmor %vm3725, %vm3726
        %v3728 = vsel %vm3727, %v3719, %v3724
        %v3729 = vrsqrt.pop %v3634
        %v3730 = vmul.f32 %v3729, %v3634
        %v3731 = vmul.f32 %v3730, %v3729
        %v3732 = vmul.f32 0.5, %v3731
        %v3733 = vsub.f32 1.5, %v3732
        %v3734 = vmul.f32 %v3729, %v3733
        %vm3735 = vweird.f32 %v3634
        %vm3736 = vweird.f32 %v3729
        %vm3737 = vmor %vm3735, %vm3736
        %v3738 = vsel %vm3737, %v3729, %v3734
        %v3739 = vrsqrt.pop %v3635
        %v3740 = vmul.f32 %v3739, %v3635
        %v3741 = vmul.f32 %v3740, %v3739
        %v3742 = vmul.f32 0.5, %v3741
        %v3743 = vsub.f32 1.5, %v3742
        %v3744 = vmul.f32 %v3739, %v3743
        %vm3745 = vweird.f32 %v3635
        %vm3746 = vweird.f32 %v3739
        %vm3747 = vmor %vm3745, %vm3746
        %v3748 = vsel %vm3747, %v3739, %v3744
        %v3749 = vrsqrt.pop %v3636
        %v3750 = vmul.f32 %v3749, %v3636
        %v3751 = vmul.f32 %v3750, %v3749
        %v3752 = vmul.f32 0.5, %v3751
        %v3753 = vsub.f32 1.5, %v3752
        %v3754 = vmul.f32 %v3749, %v3753
        %vm3755 = vweird.f32 %v3636
        %vm3756 = vweird.f32 %v3749
        %vm3757 = vmor %vm3755, %vm3756
        %v3758 = vsel %vm3757, %v3749, %v3754
        %v3759 = vrsqrt.pop %v3637
        %v3760 = vmul.f32 %v3759, %v3637
        %v3761 = vmul.f32 %v3760, %v3759
        %v3762 = vmul.f32 0.5, %v3761
        %v3763 = vsub.f32 1.5, %v3762
        %v3764 = vmul.f32 %v3759, %v3763
        %vm3765 = vweird.f32 %v3637
        %vm3766 = vweird.f32 %v3759
        %vm3767 = vmor %vm3765, %vm3766
        %v3768 = vsel %vm3767, %v3759, %v3764
        %v3769 = vrsqrt.pop %v3638
        %v3770 = vmul.f32 %v3769, %v3638
        %v3771 = vmul.f32 %v3770, %v3769
        %v3772 = vmul.f32 0.5, %v3771
        %v3773 = vsub.f32 1.5, %v3772
        %v3774 = vmul.f32 %v3769, %v3773
        %vm3775 = vweird.f32 %v3638
        %vm3776 = vweird.f32 %v3769
        %vm3777 = vmor %vm3775, %vm3776
        %v3778 = vsel %vm3777, %v3769, %v3774
        %v3779 = vrsqrt.pop %v3639
        %v3780 = vmul.f32 %v3779, %v3639
        %v3781 = vmul.f32 %v3780, %v3779
        %v3782 = vmul.f32 0.5, %v3781
        %v3783 = vsub.f32 1.5, %v3782
        %v3784 = vmul.f32 %v3779, %v3783
        %vm3785 = vweird.f32 %v3639
        %vm3786 = vweird.f32 %v3779
        %vm3787 = vmor %vm3785, %vm3786
        %v3788 = vsel %vm3787, %v3779, %v3784
        %v3789 = vrsqrt.pop %v3640
        %v3790 = vmul.f32 %v3789, %v3640
        %v3791 = vmul.f32 %v3790, %v3789
        %v3792 = vmul.f32 0.5, %v3791
        %v3793 = vsub.f32 1.5, %v3792
        %v3794 = vmul.f32 %v3789, %v3793
        %vm3795 = vweird.f32 %v3640
        %vm3796 = vweird.f32 %v3789
        %vm3797 = vmor %vm3795, %vm3796
        %v3798 = vsel %vm3797, %v3789, %v3794
        %v3799 = vrsqrt.pop %v3641
        %v3800 = vmul.f32 %v3799, %v3641
        %v3801 = vmul.f32 %v3800, %v3799
        %v3802 = vmul.f32 0.5, %v3801
        %v3803 = vsub.f32 1.5, %v3802
        %v3804 = vmul.f32 %v3799, %v3803
        %vm3805 = vweird.f32 %v3641
        %vm3806 = vweird.f32 %v3799
        %vm3807 = vmor %vm3805, %vm3806
        %v3808 = vsel %vm3807, %v3799, %v3804
        %v3809 = vrsqrt.pop %v3642
        %v3810 = vmul.f32 %v3809, %v3642
        %v3811 = vmul.f32 %v3810, %v3809
        %v3812 = vmul.f32 0.5, %v3811
        %v3813 = vsub.f32 1.5, %v3812
        %v3814 = vmul.f32 %v3809, %v3813
        %vm3815 = vweird.f32 %v3642
        %vm3816 = vweird.f32 %v3809
        %vm3817 = vmor %vm3815, %vm3816
        %v3818 = vsel %vm3817, %v3809, %v3814
        %v3819 = vrsqrt.pop %v3643
        %v3820 = vmul.f32 %v3819, %v3643
        %v3821 = vmul.f32 %v3820, %v3819
        %v3822 = vmul.f32 0.5, %v3821
        %v3823 = vsub.f32 1.5, %v3822
        %v3824 = vmul.f32 %v3819, %v3823
        %vm3825 = vweird.f32 %v3643
        %vm3826 = vweird.f32 %v3819
        %vm3827 = vmor %vm3825, %vm3826
        %v3828 = vsel %vm3827, %v3819, %v3824
        %v3829 = vrsqrt.pop %v3644
        %v3830 = vmul.f32 %v3829, %v3644
        %v3831 = vmul.f32 %v3830, %v3829
        %v3832 = vmul.f32 0.5, %v3831
        %v3833 = vsub.f32 1.5, %v3832
        %v3834 = vmul.f32 %v3829, %v3833
        %vm3835 = vweird.f32 %v3644
        %vm3836 = vweird.f32 %v3829
        %vm3837 = vmor %vm3835, %vm3836
        %v3838 = vsel %vm3837, %v3829, %v3834
        %v3839 = vrsqrt.pop %v3645
        %v3840 = vmul.f32 %v3839, %v3645
        %v3841 = vmul.f32 %v3840, %v3839
        %v3842 = vmul.f32 0.5, %v3841
        %v3843 = vsub.f32 1.5, %v3842
        %v3844 = vmul.f32 %v3839, %v3843
        %vm3845 = vweird.f32 %v3645
        %vm3846 = vweird.f32 %v3839
        %vm3847 = vmor %vm3845, %vm3846
        %v3848 = vsel %vm3847, %v3839, %v3844
        %v3849 = vrsqrt.pop %v3646
        %v3850 = vmul.f32 %v3849, %v3646
        %v3851 = vmul.f32 %v3850, %v3849
        %v3852 = vmul.f32 0.5, %v3851
        %v3853 = vsub.f32 1.5, %v3852
        %v3854 = vmul.f32 %v3849, %v3853
        %vm3855 = vweird.f32 %v3646
        %vm3856 = vweird.f32 %v3849
        %vm3857 = vmor %vm3855, %vm3856
        %v3858 = vsel %vm3857, %v3849, %v3854
        %v3859 = vrsqrt.pop %v3647
        %v3860 = vmul.f32 %v3859, %v3647
        %v3861 = vmul.f32 %v3860, %v3859
        %v3862 = vmul.f32 0.5, %v3861
        %v3863 = vsub.f32 1.5, %v3862
        %v3864 = vmul.f32 %v3859, %v3863
        %vm3865 = vweird.f32 %v3647
        %vm3866 = vweird.f32 %v3859
        %vm3867 = vmor %vm3865, %vm3866
        %v3868 = vsel %vm3867, %v3859, %v3864
        %v3869 = vrsqrt.pop %v3648
        %v3870 = vmul.f32 %v3869, %v3648
        %v3871 = vmul.f32 %v3870, %v3869
        %v3872 = vmul.f32 0.5, %v3871
        %v3873 = vsub.f32 1.5, %v3872
        %v3874 = vmul.f32 %v3869, %v3873
        %vm3875 = vweird.f32 %v3648
        %vm3876 = vweird.f32 %v3869
        %vm3877 = vmor %vm3875, %vm3876
        %v3878 = vsel %vm3877, %v3869, %v3874
        %v3879 = vrsqrt.pop %v3649
        %v3880 = vmul.f32 %v3879, %v3649
        %v3881 = vmul.f32 %v3880, %v3879
        %v3882 = vmul.f32 0.5, %v3881
        %v3883 = vsub.f32 1.5, %v3882
        %v3884 = vmul.f32 %v3879, %v3883
        %vm3885 = vweird.f32 %v3649
        %vm3886 = vweird.f32 %v3879
        %vm3887 = vmor %vm3885, %vm3886
        %v3888 = vsel %vm3887, %v3879, %v3884
        %v3889 = vrsqrt.pop %v3650
        %v3890 = vmul.f32 %v3889, %v3650
        %v3891 = vmul.f32 %v3890, %v3889
        %v3892 = vmul.f32 0.5, %v3891
        %v3893 = vsub.f32 1.5, %v3892
        %v3894 = vmul.f32 %v3889, %v3893
        %vm3895 = vweird.f32 %v3650
        %vm3896 = vweird.f32 %v3889
        %vm3897 = vmor %vm3895, %vm3896
        %v3898 = vsel %vm3897, %v3889, %v3894
        %v3899 = vrsqrt.pop %v3651
        %v3900 = vmul.f32 %v3899, %v3651
        %v3901 = vmul.f32 %v3900, %v3899
        %v3902 = vmul.f32 0.5, %v3901
        %v3903 = vsub.f32 1.5, %v3902
        %v3904 = vmul.f32 %v3899, %v3903
        %vm3905 = vweird.f32 %v3651
        %vm3906 = vweird.f32 %v3899
        %vm3907 = vmor %vm3905, %vm3906
        %v3908 = vsel %vm3907, %v3899, %v3904
        %v3909 = vrsqrt.pop %v3652
        %v3910 = vmul.f32 %v3909, %v3652
        %v3911 = vmul.f32 %v3910, %v3909
        %v3912 = vmul.f32 0.5, %v3911
        %v3913 = vsub.f32 1.5, %v3912
        %v3914 = vmul.f32 %v3909, %v3913
        %vm3915 = vweird.f32 %v3652
        %vm3916 = vweird.f32 %v3909
        %vm3917 = vmor %vm3915, %vm3916
        %v3918 = vsel %vm3917, %v3909, %v3914
        %v3919 = vrsqrt.pop %v3653
        %v3920 = vmul.f32 %v3919, %v3653
        %v3921 = vmul.f32 %v3920, %v3919
        %v3922 = vmul.f32 0.5, %v3921
        %v3923 = vsub.f32 1.5, %v3922
        %v3924 = vmul.f32 %v3919, %v3923
        %vm3925 = vweird.f32 %v3653
        %vm3926 = vweird.f32 %v3919
        %vm3927 = vmor %vm3925, %vm3926
        %v3928 = vsel %vm3927, %v3919, %v3924
        %v3929 = vrsqrt.pop %v3654
        %v3930 = vmul.f32 %v3929, %v3654
        %v3931 = vmul.f32 %v3930, %v3929
        %v3932 = vmul.f32 0.5, %v3931
        %v3933 = vsub.f32 1.5, %v3932
        %v3934 = vmul.f32 %v3929, %v3933
        %vm3935 = vweird.f32 %v3654
        %vm3936 = vweird.f32 %v3929
        %vm3937 = vmor %vm3935, %vm3936
        %v3938 = vsel %vm3937, %v3929, %v3934
        %v3939 = vrsqrt.pop %v3655
        %v3940 = vmul.f32 %v3939, %v3655
        %v3941 = vmul.f32 %v3940, %v3939
        %v3942 = vmul.f32 0.5, %v3941
        %v3943 = vsub.f32 1.5, %v3942
        %v3944 = vmul.f32 %v3939, %v3943
        %vm3945 = vweird.f32 %v3655
        %vm3946 = vweird.f32 %v3939
        %vm3947 = vmor %vm3945, %vm3946
        %v3948 = vsel %vm3947, %v3939, %v3944
        %v3949 = vrsqrt.pop %v3656
        %v3950 = vmul.f32 %v3949, %v3656
        %v3951 = vmul.f32 %v3950, %v3949
        %v3952 = vmul.f32 0.5, %v3951
        %v3953 = vsub.f32 1.5, %v3952
        %v3954 = vmul.f32 %v3949, %v3953
        %vm3955 = vweird.f32 %v3656
        %vm3956 = vweird.f32 %v3949
        %vm3957 = vmor %vm3955, %vm3956
        %v3958 = vsel %vm3957, %v3949, %v3954
        %v3959 = vrsqrt.pop %v3657
        %v3960 = vmul.f32 %v3959, %v3657
        %v3961 = vmul.f32 %v3960, %v3959
        %v3962 = vmul.f32 0.5, %v3961
        %v3963 = vsub.f32 1.5, %v3962
        %v3964 = vmul.f32 %v3959, %v3963
        %vm3965 = vweird.f32 %v3657
        %vm3966 = vweird.f32 %v3959
        %vm3967 = vmor %vm3965, %vm3966
        %v3968 = vsel %vm3967, %v3959, %v3964
        %v3969 = vrsqrt.pop %v3658
        %v3970 = vmul.f32 %v3969, %v3658
        %v3971 = vmul.f32 %v3970, %v3969
        %v3972 = vmul.f32 0.5, %v3971
        %v3973 = vsub.f32 1.5, %v3972
        %v3974 = vmul.f32 %v3969, %v3973
        %vm3975 = vweird.f32 %v3658
        %vm3976 = vweird.f32 %v3969
        %vm3977 = vmor %vm3975, %vm3976
        %v3978 = vsel %vm3977, %v3969, %v3974
        %v3979 = vmul.f32 %v3371, %v3668
        %v3980 = vmul.f32 %v3372, %v3668
        %v3981 = vmul.f32 %v3373, %v3678
        %v3982 = vmul.f32 %v3374, %v3678
        %v3983 = vmul.f32 %v3375, %v3688
        %v3984 = vmul.f32 %v3376, %v3688
        %v3985 = vmul.f32 %v3377, %v3698
        %v3986 = vmul.f32 %v3378, %v3698
        %v3987 = vmul.f32 %v3379, %v3708
        %v3988 = vmul.f32 %v3380, %v3708
        %v3989 = vmul.f32 %v3381, %v3718
        %v3990 = vmul.f32 %v3382, %v3718
        %v3991 = vmul.f32 %v3383, %v3728
        %v3992 = vmul.f32 %v3384, %v3728
        %v3993 = vmul.f32 %v3385, %v3738
        %v3994 = vmul.f32 %v3386, %v3738
        %v3995 = vmul.f32 %v3387, %v3748
        %v3996 = vmul.f32 %v3388, %v3748
        %v3997 = vmul.f32 %v3389, %v3758
        %v3998 = vmul.f32 %v3390, %v3758
        %v3999 = vmul.f32 %v3391, %v3768
        %v4000 = vmul.f32 %v3392, %v3768
        %v4001 = vmul.f32 %v3393, %v3778
        %v4002 = vmul.f32 %v3394, %v3778
        %v4003 = vmul.f32 %v3395, %v3788
        %v4004 = vmul.f32 %v3396, %v3788
        %v4005 = vmul.f32 %v3397, %v3798
        %v4006 = vmul.f32 %v3398, %v3798
        %v4007 = vmul.f32 %v3399, %v3808
        %v4008 = vmul.f32 %v3400, %v3808
        %v4009 = vmul.f32 %v3401, %v3818
        %v4010 = vmul.f32 %v3402, %v3818
        %v4011 = vmul.f32 %v3403, %v3828
        %v4012 = vmul.f32 %v3404, %v3828
        %v4013 = vmul.f32 %v3405, %v3838
        %v4014 = vmul.f32 %v3406, %v3838
        %v4015 = vmul.f32 %v3407, %v3848
        %v4016 = vmul.f32 %v3408, %v3848
        %v4017 = vmul.f32 %v3409, %v3858
        %v4018 = vmul.f32 %v3410, %v3858
        %v4019 = vmul.f32 %v3411, %v3868
        %v4020 = vmul.f32 %v3412, %v3868
        %v4021 = vmul.f32 %v3413, %v3878
        %v4022 = vmul.f32 %v3414, %v3878
        %v4023 = vmul.f32 %v3415, %v3888
        %v4024 = vmul.f32 %v3416, %v3888
        %v4025 = vmul.f32 %v3417, %v3898
        %v4026 = vmul.f32 %v3418, %v3898
        %v4027 = vmul.f32 %v3419, %v3908
        %v4028 = vmul.f32 %v3420, %v3908
        %v4029 = vmul.f32 %v3421, %v3918
        %v4030 = vmul.f32 %v3422, %v3918
        %v4031 = vmul.f32 %v3423, %v3928
        %v4032 = vmul.f32 %v3424, %v3928
        %v4033 = vmul.f32 %v3425, %v3938
        %v4034 = vmul.f32 %v3426, %v3938
        %v4035 = vmul.f32 %v3427, %v3948
        %v4036 = vmul.f32 %v3428, %v3948
        %v4037 = vmul.f32 %v3429, %v3958
        %v4038 = vmul.f32 %v3430, %v3958
        %v4039 = vmul.f32 %v3431, %v3968
        %v4040 = vmul.f32 %v3432, %v3968
        %v4041 = vmul.f32 %v3433, %v3978
        %v4042 = vmul.f32 %v3434, %v3978
        %v4044 = vperm.slane %v3240, 0
        %v4045 = vperm.slane %v3240, 1
        %v4048 = vmul.f32 %v3979, %v4044
        %v4049 = vmul.f32 %v3980, %v4045
        %v4050 = vmul.f32 %v3981, %v4044
        %v4051 = vmul.f32 %v3982, %v4045
        %v4052 = vmul.f32 %v3983, %v4044
        %v4053 = vmul.f32 %v3984, %v4045
        %v4054 = vmul.f32 %v3985, %v4044
        %v4055 = vmul.f32 %v3986, %v4045
        %v4056 = vmul.f32 %v3987, %v4044
        %v4057 = vmul.f32 %v3988, %v4045
        %v4058 = vmul.f32 %v3989, %v4044
        %v4059 = vmul.f32 %v3990, %v4045
        %v4060 = vmul.f32 %v3991, %v4044
        %v4061 = vmul.f32 %v3992, %v4045
        %v4062 = vmul.f32 %v3993, %v4044
        %v4063 = vmul.f32 %v3994, %v4045
        %v4064 = vmul.f32 %v3995, %v4044
        %v4065 = vmul.f32 %v3996, %v4045
        %v4066 = vmul.f32 %v3997, %v4044
        %v4067 = vmul.f32 %v3998, %v4045
        %v4068 = vmul.f32 %v3999, %v4044
        %v4069 = vmul.f32 %v4000, %v4045
        %v4070 = vmul.f32 %v4001, %v4044
        %v4071 = vmul.f32 %v4002, %v4045
        %v4072 = vmul.f32 %v4003, %v4044
        %v4073 = vmul.f32 %v4004, %v4045
        %v4074 = vmul.f32 %v4005, %v4044
        %v4075 = vmul.f32 %v4006, %v4045
        %v4076 = vmul.f32 %v4007, %v4044
        %v4077 = vmul.f32 %v4008, %v4045
        %v4078 = vmul.f32 %v4009, %v4044
        %v4079 = vmul.f32 %v4010, %v4045
        %v4080 = vmul.f32 %v4011, %v4044
        %v4081 = vmul.f32 %v4012, %v4045
        %v4082 = vmul.f32 %v4013, %v4044
        %v4083 = vmul.f32 %v4014, %v4045
        %v4084 = vmul.f32 %v4015, %v4044
        %v4085 = vmul.f32 %v4016, %v4045
        %v4086 = vmul.f32 %v4017, %v4044
        %v4087 = vmul.f32 %v4018, %v4045
        %v4088 = vmul.f32 %v4019, %v4044
        %v4089 = vmul.f32 %v4020, %v4045
        %v4090 = vmul.f32 %v4021, %v4044
        %v4091 = vmul.f32 %v4022, %v4045
        %v4092 = vmul.f32 %v4023, %v4044
        %v4093 = vmul.f32 %v4024, %v4045
        %v4094 = vmul.f32 %v4025, %v4044
        %v4095 = vmul.f32 %v4026, %v4045
        %v4096 = vmul.f32 %v4027, %v4044
        %v4097 = vmul.f32 %v4028, %v4045
        %v4098 = vmul.f32 %v4029, %v4044
        %v4099 = vmul.f32 %v4030, %v4045
        %v4100 = vmul.f32 %v4031, %v4044
        %v4101 = vmul.f32 %v4032, %v4045
        %v4102 = vmul.f32 %v4033, %v4044
        %v4103 = vmul.f32 %v4034, %v4045
        %v4104 = vmul.f32 %v4035, %v4044
        %v4105 = vmul.f32 %v4036, %v4045
        %v4106 = vmul.f32 %v4037, %v4044
        %v4107 = vmul.f32 %v4038, %v4045
        %v4108 = vmul.f32 %v4039, %v4044
        %v4109 = vmul.f32 %v4040, %v4045
        %v4110 = vmul.f32 %v4041, %v4044
        %v4111 = vmul.f32 %v4042, %v4045
        %v4113 = vperm.slane %v3242, 0
        %v4114 = vperm.slane %v3242, 1
        %v4117 = vadd.f32 %v4048, %v4113
        %v4118 = vadd.f32 %v4049, %v4114
        %v4119 = vadd.f32 %v4050, %v4113
        %v4120 = vadd.f32 %v4051, %v4114
        %v4121 = vadd.f32 %v4052, %v4113
        %v4122 = vadd.f32 %v4053, %v4114
        %v4123 = vadd.f32 %v4054, %v4113
        %v4124 = vadd.f32 %v4055, %v4114
        %v4125 = vadd.f32 %v4056, %v4113
        %v4126 = vadd.f32 %v4057, %v4114
        %v4127 = vadd.f32 %v4058, %v4113
        %v4128 = vadd.f32 %v4059, %v4114
        %v4129 = vadd.f32 %v4060, %v4113
        %v4130 = vadd.f32 %v4061, %v4114
        %v4131 = vadd.f32 %v4062, %v4113
        %v4132 = vadd.f32 %v4063, %v4114
        %v4133 = vadd.f32 %v4064, %v4113
        %v4134 = vadd.f32 %v4065, %v4114
        %v4135 = vadd.f32 %v4066, %v4113
        %v4136 = vadd.f32 %v4067, %v4114
        %v4137 = vadd.f32 %v4068, %v4113
        %v4138 = vadd.f32 %v4069, %v4114
        %v4139 = vadd.f32 %v4070, %v4113
        %v4140 = vadd.f32 %v4071, %v4114
        %v4141 = vadd.f32 %v4072, %v4113
        %v4142 = vadd.f32 %v4073, %v4114
        %v4143 = vadd.f32 %v4074, %v4113
        %v4144 = vadd.f32 %v4075, %v4114
        %v4145 = vadd.f32 %v4076, %v4113
        %v4146 = vadd.f32 %v4077, %v4114
        %v4147 = vadd.f32 %v4078, %v4113
        %v4148 = vadd.f32 %v4079, %v4114
        %v4149 = vadd.f32 %v4080, %v4113
        %v4150 = vadd.f32 %v4081, %v4114
        %v4151 = vadd.f32 %v4082, %v4113
        %v4152 = vadd.f32 %v4083, %v4114
        %v4153 = vadd.f32 %v4084, %v4113
        %v4154 = vadd.f32 %v4085, %v4114
        %v4155 = vadd.f32 %v4086, %v4113
        %v4156 = vadd.f32 %v4087, %v4114
        %v4157 = vadd.f32 %v4088, %v4113
        %v4158 = vadd.f32 %v4089, %v4114
        %v4159 = vadd.f32 %v4090, %v4113
        %v4160 = vadd.f32 %v4091, %v4114
        %v4161 = vadd.f32 %v4092, %v4113
        %v4162 = vadd.f32 %v4093, %v4114
        %v4163 = vadd.f32 %v4094, %v4113
        %v4164 = vadd.f32 %v4095, %v4114
        %v4165 = vadd.f32 %v4096, %v4113
        %v4166 = vadd.f32 %v4097, %v4114
        %v4167 = vadd.f32 %v4098, %v4113
        %v4168 = vadd.f32 %v4099, %v4114
        %v4169 = vadd.f32 %v4100, %v4113
        %v4170 = vadd.f32 %v4101, %v4114
        %v4171 = vadd.f32 %v4102, %v4113
        %v4172 = vadd.f32 %v4103, %v4114
        %v4173 = vadd.f32 %v4104, %v4113
        %v4174 = vadd.f32 %v4105, %v4114
        %v4175 = vadd.f32 %v4106, %v4113
        %v4176 = vadd.f32 %v4107, %v4114
        %v4177 = vadd.f32 %v4108, %v4113
        %v4178 = vadd.f32 %v4109, %v4114
        %v4179 = vadd.f32 %v4110, %v4113
        %v4180 = vadd.f32 %v4111, %v4114
        %vm4181 = vcmp.gt.f32.partialorder %v4117, 0.0
        %vm4182 = vcmp.gt.f32.partialorder %v4118, 0.0
        %vm4183 = vcmp.gt.f32.partialorder %v4119, 0.0
        %vm4184 = vcmp.gt.f32.partialorder %v4120, 0.0
        %vm4185 = vcmp.gt.f32.partialorder %v4121, 0.0
        %vm4186 = vcmp.gt.f32.partialorder %v4122, 0.0
        %vm4187 = vcmp.gt.f32.partialorder %v4123, 0.0
        %vm4188 = vcmp.gt.f32.partialorder %v4124, 0.0
        %vm4189 = vcmp.gt.f32.partialorder %v4125, 0.0
        %vm4190 = vcmp.gt.f32.partialorder %v4126, 0.0
        %vm4191 = vcmp.gt.f32.partialorder %v4127, 0.0
        %vm4192 = vcmp.gt.f32.partialorder %v4128, 0.0
        %vm4193 = vcmp.gt.f32.partialorder %v4129, 0.0
        %vm4194 = vcmp.gt.f32.partialorder %v4130, 0.0
        %vm4195 = vcmp.gt.f32.partialorder %v4131, 0.0
        %vm4196 = vcmp.gt.f32.partialorder %v4132, 0.0
        %vm4197 = vcmp.gt.f32.partialorder %v4133, 0.0
        %vm4198 = vcmp.gt.f32.partialorder %v4134, 0.0
        %vm4199 = vcmp.gt.f32.partialorder %v4135, 0.0
        %vm4200 = vcmp.gt.f32.partialorder %v4136, 0.0
        %vm4201 = vcmp.gt.f32.partialorder %v4137, 0.0
        %vm4202 = vcmp.gt.f32.partialorder %v4138, 0.0
        %vm4203 = vcmp.gt.f32.partialorder %v4139, 0.0
        %vm4204 = vcmp.gt.f32.partialorder %v4140, 0.0
        %vm4205 = vcmp.gt.f32.partialorder %v4141, 0.0
        %vm4206 = vcmp.gt.f32.partialorder %v4142, 0.0
        %vm4207 = vcmp.gt.f32.partialorder %v4143, 0.0
        %vm4208 = vcmp.gt.f32.partialorder %v4144, 0.0
        %vm4209 = vcmp.gt.f32.partialorder %v4145, 0.0
        %vm4210 = vcmp.gt.f32.partialorder %v4146, 0.0
        %vm4211 = vcmp.gt.f32.partialorder %v4147, 0.0
        %vm4212 = vcmp.gt.f32.partialorder %v4148, 0.0
        %vm4213 = vcmp.gt.f32.partialorder %v4149, 0.0
        %vm4214 = vcmp.gt.f32.partialorder %v4150, 0.0
        %vm4215 = vcmp.gt.f32.partialorder %v4151, 0.0
        %vm4216 = vcmp.gt.f32.partialorder %v4152, 0.0
        %vm4217 = vcmp.gt.f32.partialorder %v4153, 0.0
        %vm4218 = vcmp.gt.f32.partialorder %v4154, 0.0
        %vm4219 = vcmp.gt.f32.partialorder %v4155, 0.0
        %vm4220 = vcmp.gt.f32.partialorder %v4156, 0.0
        %vm4221 = vcmp.gt.f32.partialorder %v4157, 0.0
        %vm4222 = vcmp.gt.f32.partialorder %v4158, 0.0
        %vm4223 = vcmp.gt.f32.partialorder %v4159, 0.0
        %vm4224 = vcmp.gt.f32.partialorder %v4160, 0.0
        %vm4225 = vcmp.gt.f32.partialorder %v4161, 0.0
        %vm4226 = vcmp.gt.f32.partialorder %v4162, 0.0
        %vm4227 = vcmp.gt.f32.partialorder %v4163, 0.0
        %vm4228 = vcmp.gt.f32.partialorder %v4164, 0.0
        %vm4229 = vcmp.gt.f32.partialorder %v4165, 0.0
        %vm4230 = vcmp.gt.f32.partialorder %v4166, 0.0
        %vm4231 = vcmp.gt.f32.partialorder %v4167, 0.0
        %vm4232 = vcmp.gt.f32.partialorder %v4168, 0.0
        %vm4233 = vcmp.gt.f32.partialorder %v4169, 0.0
        %vm4234 = vcmp.gt.f32.partialorder %v4170, 0.0
        %vm4235 = vcmp.gt.f32.partialorder %v4171, 0.0
        %vm4236 = vcmp.gt.f32.partialorder %v4172, 0.0
        %vm4237 = vcmp.gt.f32.partialorder %v4173, 0.0
        %vm4238 = vcmp.gt.f32.partialorder %v4174, 0.0
        %vm4239 = vcmp.gt.f32.partialorder %v4175, 0.0
        %vm4240 = vcmp.gt.f32.partialorder %v4176, 0.0
        %vm4241 = vcmp.gt.f32.partialorder %v4177, 0.0
        %vm4242 = vcmp.gt.f32.partialorder %v4178, 0.0
        %vm4243 = vcmp.gt.f32.partialorder %v4179, 0.0
        %vm4244 = vcmp.gt.f32.partialorder %v4180, 0.0
        %v4245 = vmul.f32 %v4117, 0.01
        %v4246 = vmul.f32 %v4118, 0.01
        %v4247 = vmul.f32 %v4119, 0.01
        %v4248 = vmul.f32 %v4120, 0.01
        %v4249 = vmul.f32 %v4121, 0.01
        %v4250 = vmul.f32 %v4122, 0.01
        %v4251 = vmul.f32 %v4123, 0.01
        %v4252 = vmul.f32 %v4124, 0.01
        %v4253 = vmul.f32 %v4125, 0.01
        %v4254 = vmul.f32 %v4126, 0.01
        %v4255 = vmul.f32 %v4127, 0.01
        %v4256 = vmul.f32 %v4128, 0.01
        %v4257 = vmul.f32 %v4129, 0.01
        %v4258 = vmul.f32 %v4130, 0.01
        %v4259 = vmul.f32 %v4131, 0.01
        %v4260 = vmul.f32 %v4132, 0.01
        %v4261 = vmul.f32 %v4133, 0.01
        %v4262 = vmul.f32 %v4134, 0.01
        %v4263 = vmul.f32 %v4135, 0.01
        %v4264 = vmul.f32 %v4136, 0.01
        %v4265 = vmul.f32 %v4137, 0.01
        %v4266 = vmul.f32 %v4138, 0.01
        %v4267 = vmul.f32 %v4139, 0.01
        %v4268 = vmul.f32 %v4140, 0.01
        %v4269 = vmul.f32 %v4141, 0.01
        %v4270 = vmul.f32 %v4142, 0.01
        %v4271 = vmul.f32 %v4143, 0.01
        %v4272 = vmul.f32 %v4144, 0.01
        %v4273 = vmul.f32 %v4145, 0.01
        %v4274 = vmul.f32 %v4146, 0.01
        %v4275 = vmul.f32 %v4147, 0.01
        %v4276 = vmul.f32 %v4148, 0.01
        %v4277 = vmul.f32 %v4149, 0.01
        %v4278 = vmul.f32 %v4150, 0.01
        %v4279 = vmul.f32 %v4151, 0.01
        %v4280 = vmul.f32 %v4152, 0.01
        %v4281 = vmul.f32 %v4153, 0.01
        %v4282 = vmul.f32 %v4154, 0.01
        %v4283 = vmul.f32 %v4155, 0.01
        %v4284 = vmul.f32 %v4156, 0.01
        %v4285 = vmul.f32 %v4157, 0.01
        %v4286 = vmul.f32 %v4158, 0.01
        %v4287 = vmul.f32 %v4159, 0.01
        %v4288 = vmul.f32 %v4160, 0.01
        %v4289 = vmul.f32 %v4161, 0.01
        %v4290 = vmul.f32 %v4162, 0.01
        %v4291 = vmul.f32 %v4163, 0.01
        %v4292 = vmul.f32 %v4164, 0.01
        %v4293 = vmul.f32 %v4165, 0.01
        %v4294 = vmul.f32 %v4166, 0.01
        %v4295 = vmul.f32 %v4167, 0.01
        %v4296 = vmul.f32 %v4168, 0.01
        %v4297 = vmul.f32 %v4169, 0.01
        %v4298 = vmul.f32 %v4170, 0.01
        %v4299 = vmul.f32 %v4171, 0.01
        %v4300 = vmul.f32 %v4172, 0.01
        %v4301 = vmul.f32 %v4173, 0.01
        %v4302 = vmul.f32 %v4174, 0.01
        %v4303 = vmul.f32 %v4175, 0.01
        %v4304 = vmul.f32 %v4176, 0.01
        %v4305 = vmul.f32 %v4177, 0.01
        %v4306 = vmul.f32 %v4178, 0.01
        %v4307 = vmul.f32 %v4179, 0.01
        %v4308 = vmul.f32 %v4180, 0.01
        %v4309 = vsel %vm4181, %v4117, %v4245
        %v4310 = vsel %vm4182, %v4118, %v4246
        %v4311 = vsel %vm4183, %v4119, %v4247
        %v4312 = vsel %vm4184, %v4120, %v4248
        %v4313 = vsel %vm4185, %v4121, %v4249
        %v4314 = vsel %vm4186, %v4122, %v4250
        %v4315 = vsel %vm4187, %v4123, %v4251
        %v4316 = vsel %vm4188, %v4124, %v4252
        %v4317 = vsel %vm4189, %v4125, %v4253
        %v4318 = vsel %vm4190, %v4126, %v4254
        %v4319 = vsel %vm4191, %v4127, %v4255
        %v4320 = vsel %vm4192, %v4128, %v4256
        %v4321 = vsel %vm4193, %v4129, %v4257
        %v4322 = vsel %vm4194, %v4130, %v4258
        %v4323 = vsel %vm4195, %v4131, %v4259
        %v4324 = vsel %vm4196, %v4132, %v4260
        %v4325 = vsel %vm4197, %v4133, %v4261
        %v4326 = vsel %vm4198, %v4134, %v4262
        %v4327 = vsel %vm4199, %v4135, %v4263
        %v4328 = vsel %vm4200, %v4136, %v4264
        %v4329 = vsel %vm4201, %v4137, %v4265
        %v4330 = vsel %vm4202, %v4138, %v4266
        %v4331 = vsel %vm4203, %v4139, %v4267
        %v4332 = vsel %vm4204, %v4140, %v4268
        %v4333 = vsel %vm4205, %v4141, %v4269
        %v4334 = vsel %vm4206, %v4142, %v4270
        %v4335 = vsel %vm4207, %v4143, %v4271
        %v4336 = vsel %vm4208, %v4144, %v4272
        %v4337 = vsel %vm4209, %v4145, %v4273
        %v4338 = vsel %vm4210, %v4146, %v4274
        %v4339 = vsel %vm4211, %v4147, %v4275
        %v4340 = vsel %vm4212, %v4148, %v4276
        %v4341 = vsel %vm4213, %v4149, %v4277
        %v4342 = vsel %vm4214, %v4150, %v4278
        %v4343 = vsel %vm4215, %v4151, %v4279
        %v4344 = vsel %vm4216, %v4152, %v4280
        %v4345 = vsel %vm4217, %v4153, %v4281
        %v4346 = vsel %vm4218, %v4154, %v4282
        %v4347 = vsel %vm4219, %v4155, %v4283
        %v4348 = vsel %vm4220, %v4156, %v4284
        %v4349 = vsel %vm4221, %v4157, %v4285
        %v4350 = vsel %vm4222, %v4158, %v4286
        %v4351 = vsel %vm4223, %v4159, %v4287
        %v4352 = vsel %vm4224, %v4160, %v4288
        %v4353 = vsel %vm4225, %v4161, %v4289
        %v4354 = vsel %vm4226, %v4162, %v4290
        %v4355 = vsel %vm4227, %v4163, %v4291
        %v4356 = vsel %vm4228, %v4164, %v4292
        %v4357 = vsel %vm4229, %v4165, %v4293
        %v4358 = vsel %vm4230, %v4166, %v4294
        %v4359 = vsel %vm4231, %v4167, %v4295
        %v4360 = vsel %vm4232, %v4168, %v4296
        %v4361 = vsel %vm4233, %v4169, %v4297
        %v4362 = vsel %vm4234, %v4170, %v4298
        %v4363 = vsel %vm4235, %v4171, %v4299
        %v4364 = vsel %vm4236, %v4172, %v4300
        %v4365 = vsel %vm4237, %v4173, %v4301
        %v4366 = vsel %vm4238, %v4174, %v4302
        %v4367 = vsel %vm4239, %v4175, %v4303
        %v4368 = vsel %vm4240, %v4176, %v4304
        %v4369 = vsel %vm4241, %v4177, %v4305
        %v4370 = vsel %vm4242, %v4178, %v4306
        %v4371 = vsel %vm4243, %v4179, %v4307
        %v4372 = vsel %vm4244, %v4180, %v4308
        %v4373 = vrot.slane %v4309, 4
        %v4374 = vmax.f32 %v4309, %v4373
        %v4375 = vrot.slane %v4374, 2
        %v4376 = vmax.f32 %v4374, %v4375
        %v4377 = vrot.slane %v4376, 1
        %v4378 = vmax.f32 %v4376, %v4377
        %v4379 = vrot.slane %v4310, 4
        %v4380 = vmax.f32 %v4310, %v4379
        %v4381 = vrot.slane %v4380, 2
        %v4382 = vmax.f32 %v4380, %v4381
        %v4383 = vrot.slane %v4382, 1
        %v4384 = vmax.f32 %v4382, %v4383
        %v4385 = vrot.slane %v4311, 4
        %v4386 = vmax.f32 %v4311, %v4385
        %v4387 = vrot.slane %v4386, 2
        %v4388 = vmax.f32 %v4386, %v4387
        %v4389 = vrot.slane %v4388, 1
        %v4390 = vmax.f32 %v4388, %v4389
        %v4391 = vrot.slane %v4312, 4
        %v4392 = vmax.f32 %v4312, %v4391
        %v4393 = vrot.slane %v4392, 2
        %v4394 = vmax.f32 %v4392, %v4393
        %v4395 = vrot.slane %v4394, 1
        %v4396 = vmax.f32 %v4394, %v4395
        %v4397 = vrot.slane %v4313, 4
        %v4398 = vmax.f32 %v4313, %v4397
        %v4399 = vrot.slane %v4398, 2
        %v4400 = vmax.f32 %v4398, %v4399
        %v4401 = vrot.slane %v4400, 1
        %v4402 = vmax.f32 %v4400, %v4401
        %v4403 = vrot.slane %v4314, 4
        %v4404 = vmax.f32 %v4314, %v4403
        %v4405 = vrot.slane %v4404, 2
        %v4406 = vmax.f32 %v4404, %v4405
        %v4407 = vrot.slane %v4406, 1
        %v4408 = vmax.f32 %v4406, %v4407
        %v4409 = vrot.slane %v4315, 4
        %v4410 = vmax.f32 %v4315, %v4409
        %v4411 = vrot.slane %v4410, 2
        %v4412 = vmax.f32 %v4410, %v4411
        %v4413 = vrot.slane %v4412, 1
        %v4414 = vmax.f32 %v4412, %v4413
        %v4415 = vrot.slane %v4316, 4
        %v4416 = vmax.f32 %v4316, %v4415
        %v4417 = vrot.slane %v4416, 2
        %v4418 = vmax.f32 %v4416, %v4417
        %v4419 = vrot.slane %v4418, 1
        %v4420 = vmax.f32 %v4418, %v4419
        %v4421 = vrot.slane %v4317, 4
        %v4422 = vmax.f32 %v4317, %v4421
        %v4423 = vrot.slane %v4422, 2
        %v4424 = vmax.f32 %v4422, %v4423
        %v4425 = vrot.slane %v4424, 1
        %v4426 = vmax.f32 %v4424, %v4425
        %v4427 = vrot.slane %v4318, 4
        %v4428 = vmax.f32 %v4318, %v4427
        %v4429 = vrot.slane %v4428, 2
        %v4430 = vmax.f32 %v4428, %v4429
        %v4431 = vrot.slane %v4430, 1
        %v4432 = vmax.f32 %v4430, %v4431
        %v4433 = vrot.slane %v4319, 4
        %v4434 = vmax.f32 %v4319, %v4433
        %v4435 = vrot.slane %v4434, 2
        %v4436 = vmax.f32 %v4434, %v4435
        %v4437 = vrot.slane %v4436, 1
        %v4438 = vmax.f32 %v4436, %v4437
        %v4439 = vrot.slane %v4320, 4
        %v4440 = vmax.f32 %v4320, %v4439
        %v4441 = vrot.slane %v4440, 2
        %v4442 = vmax.f32 %v4440, %v4441
        %v4443 = vrot.slane %v4442, 1
        %v4444 = vmax.f32 %v4442, %v4443
        %v4445 = vrot.slane %v4321, 4
        %v4446 = vmax.f32 %v4321, %v4445
        %v4447 = vrot.slane %v4446, 2
        %v4448 = vmax.f32 %v4446, %v4447
        %v4449 = vrot.slane %v4448, 1
        %v4450 = vmax.f32 %v4448, %v4449
        %v4451 = vrot.slane %v4322, 4
        %v4452 = vmax.f32 %v4322, %v4451
        %v4453 = vrot.slane %v4452, 2
        %v4454 = vmax.f32 %v4452, %v4453
        %v4455 = vrot.slane %v4454, 1
        %v4456 = vmax.f32 %v4454, %v4455
        %v4457 = vrot.slane %v4323, 4
        %v4458 = vmax.f32 %v4323, %v4457
        %v4459 = vrot.slane %v4458, 2
        %v4460 = vmax.f32 %v4458, %v4459
        %v4461 = vrot.slane %v4460, 1
        %v4462 = vmax.f32 %v4460, %v4461
        %v4463 = vrot.slane %v4324, 4
        %v4464 = vmax.f32 %v4324, %v4463
        %v4465 = vrot.slane %v4464, 2
        %v4466 = vmax.f32 %v4464, %v4465
        %v4467 = vrot.slane %v4466, 1
        %v4468 = vmax.f32 %v4466, %v4467
        %v4469 = vrot.slane %v4325, 4
        %v4470 = vmax.f32 %v4325, %v4469
        %v4471 = vrot.slane %v4470, 2
        %v4472 = vmax.f32 %v4470, %v4471
        %v4473 = vrot.slane %v4472, 1
        %v4474 = vmax.f32 %v4472, %v4473
        %v4475 = vrot.slane %v4326, 4
        %v4476 = vmax.f32 %v4326, %v4475
        %v4477 = vrot.slane %v4476, 2
        %v4478 = vmax.f32 %v4476, %v4477
        %v4479 = vrot.slane %v4478, 1
        %v4480 = vmax.f32 %v4478, %v4479
        %v4481 = vrot.slane %v4327, 4
        %v4482 = vmax.f32 %v4327, %v4481
        %v4483 = vrot.slane %v4482, 2
        %v4484 = vmax.f32 %v4482, %v4483
        %v4485 = vrot.slane %v4484, 1
        %v4486 = vmax.f32 %v4484, %v4485
        %v4487 = vrot.slane %v4328, 4
        %v4488 = vmax.f32 %v4328, %v4487
        %v4489 = vrot.slane %v4488, 2
        %v4490 = vmax.f32 %v4488, %v4489
        %v4491 = vrot.slane %v4490, 1
        %v4492 = vmax.f32 %v4490, %v4491
        %v4493 = vrot.slane %v4329, 4
        %v4494 = vmax.f32 %v4329, %v4493
        %v4495 = vrot.slane %v4494, 2
        %v4496 = vmax.f32 %v4494, %v4495
        %v4497 = vrot.slane %v4496, 1
        %v4498 = vmax.f32 %v4496, %v4497
        %v4499 = vrot.slane %v4330, 4
        %v4500 = vmax.f32 %v4330, %v4499
        %v4501 = vrot.slane %v4500, 2
        %v4502 = vmax.f32 %v4500, %v4501
        %v4503 = vrot.slane %v4502, 1
        %v4504 = vmax.f32 %v4502, %v4503
        %v4505 = vrot.slane %v4331, 4
        %v4506 = vmax.f32 %v4331, %v4505
        %v4507 = vrot.slane %v4506, 2
        %v4508 = vmax.f32 %v4506, %v4507
        %v4509 = vrot.slane %v4508, 1
        %v4510 = vmax.f32 %v4508, %v4509
        %v4511 = vrot.slane %v4332, 4
        %v4512 = vmax.f32 %v4332, %v4511
        %v4513 = vrot.slane %v4512, 2
        %v4514 = vmax.f32 %v4512, %v4513
        %v4515 = vrot.slane %v4514, 1
        %v4516 = vmax.f32 %v4514, %v4515
        %v4517 = vrot.slane %v4333, 4
        %v4518 = vmax.f32 %v4333, %v4517
        %v4519 = vrot.slane %v4518, 2
        %v4520 = vmax.f32 %v4518, %v4519
        %v4521 = vrot.slane %v4520, 1
        %v4522 = vmax.f32 %v4520, %v4521
        %v4523 = vrot.slane %v4334, 4
        %v4524 = vmax.f32 %v4334, %v4523
        %v4525 = vrot.slane %v4524, 2
        %v4526 = vmax.f32 %v4524, %v4525
        %v4527 = vrot.slane %v4526, 1
        %v4528 = vmax.f32 %v4526, %v4527
        %v4529 = vrot.slane %v4335, 4
        %v4530 = vmax.f32 %v4335, %v4529
        %v4531 = vrot.slane %v4530, 2
        %v4532 = vmax.f32 %v4530, %v4531
        %v4533 = vrot.slane %v4532, 1
        %v4534 = vmax.f32 %v4532, %v4533
        %v4535 = vrot.slane %v4336, 4
        %v4536 = vmax.f32 %v4336, %v4535
        %v4537 = vrot.slane %v4536, 2
        %v4538 = vmax.f32 %v4536, %v4537
        %v4539 = vrot.slane %v4538, 1
        %v4540 = vmax.f32 %v4538, %v4539
        %v4541 = vrot.slane %v4337, 4
        %v4542 = vmax.f32 %v4337, %v4541
        %v4543 = vrot.slane %v4542, 2
        %v4544 = vmax.f32 %v4542, %v4543
        %v4545 = vrot.slane %v4544, 1
        %v4546 = vmax.f32 %v4544, %v4545
        %v4547 = vrot.slane %v4338, 4
        %v4548 = vmax.f32 %v4338, %v4547
        %v4549 = vrot.slane %v4548, 2
        %v4550 = vmax.f32 %v4548, %v4549
        %v4551 = vrot.slane %v4550, 1
        %v4552 = vmax.f32 %v4550, %v4551
        %v4553 = vrot.slane %v4339, 4
        %v4554 = vmax.f32 %v4339, %v4553
        %v4555 = vrot.slane %v4554, 2
        %v4556 = vmax.f32 %v4554, %v4555
        %v4557 = vrot.slane %v4556, 1
        %v4558 = vmax.f32 %v4556, %v4557
        %v4559 = vrot.slane %v4340, 4
        %v4560 = vmax.f32 %v4340, %v4559
        %v4561 = vrot.slane %v4560, 2
        %v4562 = vmax.f32 %v4560, %v4561
        %v4563 = vrot.slane %v4562, 1
        %v4564 = vmax.f32 %v4562, %v4563
        %v4565 = vrot.slane %v4341, 4
        %v4566 = vmax.f32 %v4341, %v4565
        %v4567 = vrot.slane %v4566, 2
        %v4568 = vmax.f32 %v4566, %v4567
        %v4569 = vrot.slane %v4568, 1
        %v4570 = vmax.f32 %v4568, %v4569
        %v4571 = vrot.slane %v4342, 4
        %v4572 = vmax.f32 %v4342, %v4571
        %v4573 = vrot.slane %v4572, 2
        %v4574 = vmax.f32 %v4572, %v4573
        %v4575 = vrot.slane %v4574, 1
        %v4576 = vmax.f32 %v4574, %v4575
        %v4577 = vrot.slane %v4343, 4
        %v4578 = vmax.f32 %v4343, %v4577
        %v4579 = vrot.slane %v4578, 2
        %v4580 = vmax.f32 %v4578, %v4579
        %v4581 = vrot.slane %v4580, 1
        %v4582 = vmax.f32 %v4580, %v4581
        %v4583 = vrot.slane %v4344, 4
        %v4584 = vmax.f32 %v4344, %v4583
        %v4585 = vrot.slane %v4584, 2
        %v4586 = vmax.f32 %v4584, %v4585
        %v4587 = vrot.slane %v4586, 1
        %v4588 = vmax.f32 %v4586, %v4587
        %v4589 = vrot.slane %v4345, 4
        %v4590 = vmax.f32 %v4345, %v4589
        %v4591 = vrot.slane %v4590, 2
        %v4592 = vmax.f32 %v4590, %v4591
        %v4593 = vrot.slane %v4592, 1
        %v4594 = vmax.f32 %v4592, %v4593
        %v4595 = vrot.slane %v4346, 4
        %v4596 = vmax.f32 %v4346, %v4595
        %v4597 = vrot.slane %v4596, 2
        %v4598 = vmax.f32 %v4596, %v4597
        %v4599 = vrot.slane %v4598, 1
        %v4600 = vmax.f32 %v4598, %v4599
        %v4601 = vrot.slane %v4347, 4
        %v4602 = vmax.f32 %v4347, %v4601
        %v4603 = vrot.slane %v4602, 2
        %v4604 = vmax.f32 %v4602, %v4603
        %v4605 = vrot.slane %v4604, 1
        %v4606 = vmax.f32 %v4604, %v4605
        %v4607 = vrot.slane %v4348, 4
        %v4608 = vmax.f32 %v4348, %v4607
        %v4609 = vrot.slane %v4608, 2
        %v4610 = vmax.f32 %v4608, %v4609
        %v4611 = vrot.slane %v4610, 1
        %v4612 = vmax.f32 %v4610, %v4611
        %v4613 = vrot.slane %v4349, 4
        %v4614 = vmax.f32 %v4349, %v4613
        %v4615 = vrot.slane %v4614, 2
        %v4616 = vmax.f32 %v4614, %v4615
        %v4617 = vrot.slane %v4616, 1
        %v4618 = vmax.f32 %v4616, %v4617
        %v4619 = vrot.slane %v4350, 4
        %v4620 = vmax.f32 %v4350, %v4619
        %v4621 = vrot.slane %v4620, 2
        %v4622 = vmax.f32 %v4620, %v4621
        %v4623 = vrot.slane %v4622, 1
        %v4624 = vmax.f32 %v4622, %v4623
        %v4625 = vrot.slane %v4351, 4
        %v4626 = vmax.f32 %v4351, %v4625
        %v4627 = vrot.slane %v4626, 2
        %v4628 = vmax.f32 %v4626, %v4627
        %v4629 = vrot.slane %v4628, 1
        %v4630 = vmax.f32 %v4628, %v4629
        %v4631 = vrot.slane %v4352, 4
        %v4632 = vmax.f32 %v4352, %v4631
        %v4633 = vrot.slane %v4632, 2
        %v4634 = vmax.f32 %v4632, %v4633
        %v4635 = vrot.slane %v4634, 1
        %v4636 = vmax.f32 %v4634, %v4635
        %v4637 = vrot.slane %v4353, 4
        %v4638 = vmax.f32 %v4353, %v4637
        %v4639 = vrot.slane %v4638, 2
        %v4640 = vmax.f32 %v4638, %v4639
        %v4641 = vrot.slane %v4640, 1
        %v4642 = vmax.f32 %v4640, %v4641
        %v4643 = vrot.slane %v4354, 4
        %v4644 = vmax.f32 %v4354, %v4643
        %v4645 = vrot.slane %v4644, 2
        %v4646 = vmax.f32 %v4644, %v4645
        %v4647 = vrot.slane %v4646, 1
        %v4648 = vmax.f32 %v4646, %v4647
        %v4649 = vrot.slane %v4355, 4
        %v4650 = vmax.f32 %v4355, %v4649
        %v4651 = vrot.slane %v4650, 2
        %v4652 = vmax.f32 %v4650, %v4651
        %v4653 = vrot.slane %v4652, 1
        %v4654 = vmax.f32 %v4652, %v4653
        %v4655 = vrot.slane %v4356, 4
        %v4656 = vmax.f32 %v4356, %v4655
        %v4657 = vrot.slane %v4656, 2
        %v4658 = vmax.f32 %v4656, %v4657
        %v4659 = vrot.slane %v4658, 1
        %v4660 = vmax.f32 %v4658, %v4659
        %v4661 = vrot.slane %v4357, 4
        %v4662 = vmax.f32 %v4357, %v4661
        %v4663 = vrot.slane %v4662, 2
        %v4664 = vmax.f32 %v4662, %v4663
        %v4665 = vrot.slane %v4664, 1
        %v4666 = vmax.f32 %v4664, %v4665
        %v4667 = vrot.slane %v4358, 4
        %v4668 = vmax.f32 %v4358, %v4667
        %v4669 = vrot.slane %v4668, 2
        %v4670 = vmax.f32 %v4668, %v4669
        %v4671 = vrot.slane %v4670, 1
        %v4672 = vmax.f32 %v4670, %v4671
        %v4673 = vrot.slane %v4359, 4
        %v4674 = vmax.f32 %v4359, %v4673
        %v4675 = vrot.slane %v4674, 2
        %v4676 = vmax.f32 %v4674, %v4675
        %v4677 = vrot.slane %v4676, 1
        %v4678 = vmax.f32 %v4676, %v4677
        %v4679 = vrot.slane %v4360, 4
        %v4680 = vmax.f32 %v4360, %v4679
        %v4681 = vrot.slane %v4680, 2
        %v4682 = vmax.f32 %v4680, %v4681
        %v4683 = vrot.slane %v4682, 1
        %v4684 = vmax.f32 %v4682, %v4683
        %v4685 = vrot.slane %v4361, 4
        %v4686 = vmax.f32 %v4361, %v4685
        %v4687 = vrot.slane %v4686, 2
        %v4688 = vmax.f32 %v4686, %v4687
        %v4689 = vrot.slane %v4688, 1
        %v4690 = vmax.f32 %v4688, %v4689
        %v4691 = vrot.slane %v4362, 4
        %v4692 = vmax.f32 %v4362, %v4691
        %v4693 = vrot.slane %v4692, 2
        %v4694 = vmax.f32 %v4692, %v4693
        %v4695 = vrot.slane %v4694, 1
        %v4696 = vmax.f32 %v4694, %v4695
        %v4697 = vrot.slane %v4363, 4
        %v4698 = vmax.f32 %v4363, %v4697
        %v4699 = vrot.slane %v4698, 2
        %v4700 = vmax.f32 %v4698, %v4699
        %v4701 = vrot.slane %v4700, 1
        %v4702 = vmax.f32 %v4700, %v4701
        %v4703 = vrot.slane %v4364, 4
        %v4704 = vmax.f32 %v4364, %v4703
        %v4705 = vrot.slane %v4704, 2
        %v4706 = vmax.f32 %v4704, %v4705
        %v4707 = vrot.slane %v4706, 1
        %v4708 = vmax.f32 %v4706, %v4707
        %v4709 = vrot.slane %v4365, 4
        %v4710 = vmax.f32 %v4365, %v4709
        %v4711 = vrot.slane %v4710, 2
        %v4712 = vmax.f32 %v4710, %v4711
        %v4713 = vrot.slane %v4712, 1
        %v4714 = vmax.f32 %v4712, %v4713
        %v4715 = vrot.slane %v4366, 4
        %v4716 = vmax.f32 %v4366, %v4715
        %v4717 = vrot.slane %v4716, 2
        %v4718 = vmax.f32 %v4716, %v4717
        %v4719 = vrot.slane %v4718, 1
        %v4720 = vmax.f32 %v4718, %v4719
        %v4721 = vrot.slane %v4367, 4
        %v4722 = vmax.f32 %v4367, %v4721
        %v4723 = vrot.slane %v4722, 2
        %v4724 = vmax.f32 %v4722, %v4723
        %v4725 = vrot.slane %v4724, 1
        %v4726 = vmax.f32 %v4724, %v4725
        %v4727 = vrot.slane %v4368, 4
        %v4728 = vmax.f32 %v4368, %v4727
        %v4729 = vrot.slane %v4728, 2
        %v4730 = vmax.f32 %v4728, %v4729
        %v4731 = vrot.slane %v4730, 1
        %v4732 = vmax.f32 %v4730, %v4731
        %v4733 = vrot.slane %v4369, 4
        %v4734 = vmax.f32 %v4369, %v4733
        %v4735 = vrot.slane %v4734, 2
        %v4736 = vmax.f32 %v4734, %v4735
        %v4737 = vrot.slane %v4736, 1
        %v4738 = vmax.f32 %v4736, %v4737
        %v4739 = vrot.slane %v4370, 4
        %v4740 = vmax.f32 %v4370, %v4739
        %v4741 = vrot.slane %v4740, 2
        %v4742 = vmax.f32 %v4740, %v4741
        %v4743 = vrot.slane %v4742, 1
        %v4744 = vmax.f32 %v4742, %v4743
        %v4745 = vrot.slane %v4371, 4
        %v4746 = vmax.f32 %v4371, %v4745
        %v4747 = vrot.slane %v4746, 2
        %v4748 = vmax.f32 %v4746, %v4747
        %v4749 = vrot.slane %v4748, 1
        %v4750 = vmax.f32 %v4748, %v4749
        %v4751 = vrot.slane %v4372, 4
        %v4752 = vmax.f32 %v4372, %v4751
        %v4753 = vrot.slane %v4752, 2
        %v4754 = vmax.f32 %v4752, %v4753
        %v4755 = vrot.slane %v4754, 1
        %v4756 = vmax.f32 %v4754, %v4755
        %v4757 = vld [vmem:[%s3 + $0x110] sm:$0xf]
        %v4758 = vld [vmem:[%s3 + $0x118] sm:$0xf]
        %v4759 = vld [vmem:[%s3 + $0x120] sm:$0xf]
        %v4760 = vld [vmem:[%s3 + $0x128] sm:$0xf]
        %v4761 = vld [vmem:[%s3 + $0x130] sm:$0xf]
        %v4762 = vld [vmem:[%s3 + $0x138] sm:$0xf]
        %v4763 = vld [vmem:[%s3 + $0x140] sm:$0xf]
        %v4764 = vld [vmem:[%s3 + $0x148] sm:$0xf]
        %v4765 = vld [vmem:[%s3 + $0x150] sm:$0xf]
        %v4766 = vld [vmem:[%s3 + $0x158] sm:$0xf]
        %v4767 = vld [vmem:[%s3 + $0x160] sm:$0xf]
        %v4768 = vld [vmem:[%s3 + $0x168] sm:$0xf]
        %v4769 = vld [vmem:[%s3 + $0x170] sm:$0xf]
        %v4770 = vld [vmem:[%s3 + $0x178] sm:$0xf]
        %v4771 = vld [vmem:[%s3 + $0x180] sm:$0xf]
        %v4772 = vld [vmem:[%s3 + $0x188] sm:$0xf]
        %v4773 = vld [vmem:[%s3 + $0x190] sm:$0xf]
        %v4774 = vld [vmem:[%s3 + $0x198] sm:$0xf]
        %v4775 = vld [vmem:[%s3 + $0x1a0] sm:$0xf]
        %v4776 = vld [vmem:[%s3 + $0x1a8] sm:$0xf]
        %v4777 = vld [vmem:[%s3 + $0x1b0] sm:$0xf]
        %v4778 = vld [vmem:[%s3 + $0x1b8] sm:$0xf]
        %v4779 = vld [vmem:[%s3 + $0x1c0] sm:$0xf]
        %v4780 = vld [vmem:[%s3 + $0x1c8] sm:$0xf]
        %v4781 = vld [vmem:[%s3 + $0x1d0] sm:$0xf]
        %v4782 = vld [vmem:[%s3 + $0x1d8] sm:$0xf]
        %v4783 = vld [vmem:[%s3 + $0x1e0] sm:$0xf]
        %v4784 = vld [vmem:[%s3 + $0x1e8] sm:$0xf]
        %v4785 = vld [vmem:[%s3 + $0x1f0] sm:$0xf]
        %v4786 = vld [vmem:[%s3 + $0x1f8] sm:$0xf]
        %v4787 = vld [vmem:[%s3 + $0x200] sm:$0xf]
        %v4788 = vld [vmem:[%s3 + $0x208] sm:$0xf]
        %v4789 = vpack.c.bf16 %v4378, %v4378
        %v4790 = vpack.c.bf16 %v4384, %v4384
        %v4791 = vpack.c.bf16 %v4390, %v4390
        %v4792 = vpack.c.bf16 %v4396, %v4396
        %v4793 = vpack.c.bf16 %v4402, %v4402
        %v4794 = vpack.c.bf16 %v4408, %v4408
        %v4795 = vpack.c.bf16 %v4414, %v4414
        %v4796 = vpack.c.bf16 %v4420, %v4420
        %v4797 = vpack.c.bf16 %v4426, %v4426
        %v4798 = vpack.c.bf16 %v4432, %v4432
        %v4799 = vpack.c.bf16 %v4438, %v4438
        %v4800 = vpack.c.bf16 %v4444, %v4444
        %v4801 = vpack.c.bf16 %v4450, %v4450
        %v4802 = vpack.c.bf16 %v4456, %v4456
        %v4803 = vpack.c.bf16 %v4462, %v4462
        %v4804 = vpack.c.bf16 %v4468, %v4468
        %v4805 = vpack.c.bf16 %v4474, %v4474
        %v4806 = vpack.c.bf16 %v4480, %v4480
        %v4807 = vpack.c.bf16 %v4486, %v4486
        %v4808 = vpack.c.bf16 %v4492, %v4492
        %v4809 = vpack.c.bf16 %v4498, %v4498
        %v4810 = vpack.c.bf16 %v4504, %v4504
        %v4811 = vpack.c.bf16 %v4510, %v4510
        %v4812 = vpack.c.bf16 %v4516, %v4516
        %v4813 = vpack.c.bf16 %v4522, %v4522
        %v4814 = vpack.c.bf16 %v4528, %v4528
        %v4815 = vpack.c.bf16 %v4534, %v4534
        %v4816 = vpack.c.bf16 %v4540, %v4540
        %v4817 = vpack.c.bf16 %v4546, %v4546
        %v4818 = vpack.c.bf16 %v4552, %v4552
        %v4819 = vpack.c.bf16 %v4558, %v4558
        %v4820 = vpack.c.bf16 %v4564, %v4564
        %v4821 = vpack.c.bf16 %v4570, %v4570
        %v4822 = vpack.c.bf16 %v4576, %v4576
        %v4823 = vpack.c.bf16 %v4582, %v4582
        %v4824 = vpack.c.bf16 %v4588, %v4588
        %v4825 = vpack.c.bf16 %v4594, %v4594
        %v4826 = vpack.c.bf16 %v4600, %v4600
        %v4827 = vpack.c.bf16 %v4606, %v4606
        %v4828 = vpack.c.bf16 %v4612, %v4612
        %v4829 = vpack.c.bf16 %v4618, %v4618
        %v4830 = vpack.c.bf16 %v4624, %v4624
        %v4831 = vpack.c.bf16 %v4630, %v4630
        %v4832 = vpack.c.bf16 %v4636, %v4636
        %v4833 = vpack.c.bf16 %v4642, %v4642
        %v4834 = vpack.c.bf16 %v4648, %v4648
        %v4835 = vpack.c.bf16 %v4654, %v4654
        %v4836 = vpack.c.bf16 %v4660, %v4660
        %v4837 = vpack.c.bf16 %v4666, %v4666
        %v4838 = vpack.c.bf16 %v4672, %v4672
        %v4839 = vpack.c.bf16 %v4678, %v4678
        %v4840 = vpack.c.bf16 %v4684, %v4684
        %v4841 = vpack.c.bf16 %v4690, %v4690
        %v4842 = vpack.c.bf16 %v4696, %v4696
        %v4843 = vpack.c.bf16 %v4702, %v4702
        %v4844 = vpack.c.bf16 %v4708, %v4708
        %v4845 = vpack.c.bf16 %v4714, %v4714
        %v4846 = vpack.c.bf16 %v4720, %v4720
        %v4847 = vpack.c.bf16 %v4726, %v4726
        %v4848 = vpack.c.bf16 %v4732, %v4732
        %v4849 = vpack.c.bf16 %v4738, %v4738
        %v4850 = vpack.c.bf16 %v4744, %v4744
        %v4851 = vpack.c.bf16 %v4750, %v4750
        %v4852 = vpack.c.bf16 %v4756, %v4756
        %v4853 = vld [vmem:[%s6 + $0x6] ss:$0 sm:$0xff]
        %v4918 = vunpack.c.l.b16 %v4789
        %v4919 = vunpack.c.l.b16 %v4790
        %v4920 = vunpack.c.l.b16 %v4791
        %v4921 = vunpack.c.l.b16 %v4792
        %v4922 = vunpack.c.l.b16 %v4793
        %v4923 = vunpack.c.l.b16 %v4794
        %v4924 = vunpack.c.l.b16 %v4795
        %v4925 = vunpack.c.l.b16 %v4796
        %v4926 = vunpack.c.l.b16 %v4797
        %v4927 = vunpack.c.l.b16 %v4798
        %v4928 = vunpack.c.l.b16 %v4799
        %v4929 = vunpack.c.l.b16 %v4800
        %v4930 = vunpack.c.l.b16 %v4801
        %v4931 = vunpack.c.l.b16 %v4802
        %v4932 = vunpack.c.l.b16 %v4803
        %v4933 = vunpack.c.l.b16 %v4804
        %v4934 = vunpack.c.l.b16 %v4805
        %v4935 = vunpack.c.l.b16 %v4806
        %v4936 = vunpack.c.l.b16 %v4807
        %v4937 = vunpack.c.l.b16 %v4808
        %v4938 = vunpack.c.l.b16 %v4809
        %v4939 = vunpack.c.l.b16 %v4810
        %v4940 = vunpack.c.l.b16 %v4811
        %v4941 = vunpack.c.l.b16 %v4812
        %v4942 = vunpack.c.l.b16 %v4813
        %v4943 = vunpack.c.l.b16 %v4814
        %v4944 = vunpack.c.l.b16 %v4815
        %v4945 = vunpack.c.l.b16 %v4816
        %v4946 = vunpack.c.l.b16 %v4817
        %v4947 = vunpack.c.l.b16 %v4818
        %v4948 = vunpack.c.l.b16 %v4819
        %v4949 = vunpack.c.l.b16 %v4820
        %v4950 = vunpack.c.l.b16 %v4821
        %v4951 = vunpack.c.l.b16 %v4822
        %v4952 = vunpack.c.l.b16 %v4823
        %v4953 = vunpack.c.l.b16 %v4824
        %v4954 = vunpack.c.l.b16 %v4825
        %v4955 = vunpack.c.l.b16 %v4826
        %v4956 = vunpack.c.l.b16 %v4827
        %v4957 = vunpack.c.l.b16 %v4828
        %v4958 = vunpack.c.l.b16 %v4829
        %v4959 = vunpack.c.l.b16 %v4830
        %v4960 = vunpack.c.l.b16 %v4831
        %v4961 = vunpack.c.l.b16 %v4832
        %v4962 = vunpack.c.l.b16 %v4833
        %v4963 = vunpack.c.l.b16 %v4834
        %v4964 = vunpack.c.l.b16 %v4835
        %v4965 = vunpack.c.l.b16 %v4836
        %v4966 = vunpack.c.l.b16 %v4837
        %v4967 = vunpack.c.l.b16 %v4838
        %v4968 = vunpack.c.l.b16 %v4839
        %v4969 = vunpack.c.l.b16 %v4840
        %v4970 = vunpack.c.l.b16 %v4841
        %v4971 = vunpack.c.l.b16 %v4842
        %v4972 = vunpack.c.l.b16 %v4843
        %v4973 = vunpack.c.l.b16 %v4844
        %v4974 = vunpack.c.l.b16 %v4845
        %v4975 = vunpack.c.l.b16 %v4846
        %v4976 = vunpack.c.l.b16 %v4847
        %v4977 = vunpack.c.l.b16 %v4848
        %v4978 = vunpack.c.l.b16 %v4849
        %v4979 = vunpack.c.l.b16 %v4850
        %v4980 = vunpack.c.l.b16 %v4851
        %v4981 = vunpack.c.l.b16 %v4852
        %vm4982 = vcmask 1041409
        %v4983 = vsel %vm4982, %v4920, %v4918
        %vm4984 = vcmask 1042434
        %v4985 = vsel %vm4984, %v4922, %v4983
        %vm4986 = vcmask 1043459
        %v4987 = vsel %vm4986, %v4924, %v4985
        %vm4988 = vcmask 1044484
        %v4989 = vsel %vm4988, %v4926, %v4987
        %vm4990 = vcmask 1045509
        %v4991 = vsel %vm4990, %v4928, %v4989
        %vm4992 = vcmask 1046534
        %v4993 = vsel %vm4992, %v4930, %v4991
        %vm4994 = vcmask 1047559
        %v4995 = vsel %vm4994, %v4932, %v4993
        %v4996 = vsel %vm4982, %v4921, %v4919
        %v4997 = vsel %vm4984, %v4923, %v4996
        %v4998 = vsel %vm4986, %v4925, %v4997
        %v4999 = vsel %vm4988, %v4927, %v4998
        %v5000 = vsel %vm4990, %v4929, %v4999
        %v5001 = vsel %vm4992, %v4931, %v5000
        %v5002 = vsel %vm4994, %v4933, %v5001
        %v5003 = vsel %vm4982, %v4936, %v4934
        %v5004 = vsel %vm4984, %v4938, %v5003
        %v5005 = vsel %vm4986, %v4940, %v5004
        %v5006 = vsel %vm4988, %v4942, %v5005
        %v5007 = vsel %vm4990, %v4944, %v5006
        %v5008 = vsel %vm4992, %v4946, %v5007
        %v5009 = vsel %vm4994, %v4948, %v5008
        %v5010 = vsel %vm4982, %v4937, %v4935
        %v5011 = vsel %vm4984, %v4939, %v5010
        %v5012 = vsel %vm4986, %v4941, %v5011
        %v5013 = vsel %vm4988, %v4943, %v5012
        %v5014 = vsel %vm4990, %v4945, %v5013
        %v5015 = vsel %vm4992, %v4947, %v5014
        %v5016 = vsel %vm4994, %v4949, %v5015
        %v5017 = vsel %vm4982, %v4952, %v4950
        %v5018 = vsel %vm4984, %v4954, %v5017
        %v5019 = vsel %vm4986, %v4956, %v5018
        %v5020 = vsel %vm4988, %v4958, %v5019
        %v5021 = vsel %vm4990, %v4960, %v5020
        %v5022 = vsel %vm4992, %v4962, %v5021
        %v5023 = vsel %vm4994, %v4964, %v5022
        %v5024 = vsel %vm4982, %v4953, %v4951
        %v5025 = vsel %vm4984, %v4955, %v5024
        %v5026 = vsel %vm4986, %v4957, %v5025
        %v5027 = vsel %vm4988, %v4959, %v5026
        %v5028 = vsel %vm4990, %v4961, %v5027
        %v5029 = vsel %vm4992, %v4963, %v5028
        %v5030 = vsel %vm4994, %v4965, %v5029
        %v5031 = vsel %vm4982, %v4968, %v4966
        %v5032 = vsel %vm4984, %v4970, %v5031
        %v5033 = vsel %vm4986, %v4972, %v5032
        %v5034 = vsel %vm4988, %v4974, %v5033
        %v5035 = vsel %vm4990, %v4976, %v5034
        %v5036 = vsel %vm4992, %v4978, %v5035
        %v5037 = vsel %vm4994, %v4980, %v5036
        %v5038 = vsel %vm4982, %v4969, %v4967
        %v5039 = vsel %vm4984, %v4971, %v5038
        %v5040 = vsel %vm4986, %v4973, %v5039
        %v5041 = vsel %vm4988, %v4975, %v5040
        %v5042 = vsel %vm4990, %v4977, %v5041
        %v5043 = vsel %vm4992, %v4979, %v5042
        %v5044 = vsel %vm4994, %v4981, %v5043
        %v5045 = vpack.c.b16 %v5009, %v4995
        %v5046 = vpack.c.b16 %v5016, %v5002
        %v5047 = vpack.c.b16 %v5037, %v5023
        %v5048 = vpack.c.b16 %v5044, %v5030
        %v5085 = vunpack.c.l.b16 %v4757
        %v5086 = vunpack.c.l.b16 %v4758
        %v5087 = vunpack.c.l.b16 %v4759
        %v5088 = vunpack.c.l.b16 %v4760
        %v5089 = vunpack.c.l.b16 %v4761
        %v5090 = vunpack.c.l.b16 %v4762
        %v5091 = vunpack.c.l.b16 %v4763
        %v5092 = vunpack.c.l.b16 %v4764
        %v5093 = vunpack.c.l.b16 %v4765
        %v5094 = vunpack.c.l.b16 %v4766
        %v5095 = vunpack.c.l.b16 %v4767
        %v5096 = vunpack.c.l.b16 %v4768
        %v5097 = vunpack.c.l.b16 %v4769
        %v5098 = vunpack.c.l.b16 %v4770
        %v5099 = vunpack.c.l.b16 %v4771
        %v5100 = vunpack.c.l.b16 %v4772
        %v5101 = vunpack.c.l.b16 %v4773
        %v5102 = vunpack.c.l.b16 %v4774
        %v5103 = vunpack.c.l.b16 %v4775
        %v5104 = vunpack.c.l.b16 %v4776
        %v5105 = vunpack.c.l.b16 %v4777
        %v5106 = vunpack.c.l.b16 %v4778
        %v5107 = vunpack.c.l.b16 %v4779
        %v5108 = vunpack.c.l.b16 %v4780
        %v5109 = vunpack.c.l.b16 %v4781
        %v5110 = vunpack.c.l.b16 %v4782
        %v5111 = vunpack.c.l.b16 %v4783
        %v5112 = vunpack.c.l.b16 %v4784
        %v5113 = vunpack.c.l.b16 %v4785
        %v5114 = vunpack.c.l.b16 %v4786
        %v5115 = vunpack.c.l.b16 %v4787
        %v5116 = vunpack.c.l.b16 %v4788
        %v5117 = vpack.c.b16 %v5086, %v5085
        %v5118 = vpack.c.b16 %v5088, %v5087
        %v5119 = vpack.c.b16 %v5090, %v5089
        %v5120 = vpack.c.b16 %v5092, %v5091
        %v5121 = vpack.c.b16 %v5094, %v5093
        %v5122 = vpack.c.b16 %v5096, %v5095
        %v5123 = vpack.c.b16 %v5098, %v5097
        %v5124 = vpack.c.b16 %v5100, %v5099
        %v5125 = vpack.c.b16 %v5102, %v5101
        %v5126 = vpack.c.b16 %v5104, %v5103
        %v5127 = vpack.c.b16 %v5106, %v5105
        %v5128 = vpack.c.b16 %v5108, %v5107
        %v5129 = vpack.c.b16 %v5110, %v5109
        %v5130 = vpack.c.b16 %v5112, %v5111
        %v5131 = vpack.c.b16 %v5114, %v5113
        %v5132 = vpack.c.b16 %v5116, %v5115
        %5149 = vmatpush.bf16.msra.mxu0 %v5124
        %5150 = vmatpush.bf16.msra.mxu0 %v5123
        %5151 = vmatpush.bf16.msra.mxu0 %v5122
        %5152 = vmatpush.bf16.msra.mxu0 %v5121
        %5153 = vmatpush.bf16.msra.mxu0 %v5120
        %5154 = vmatpush.bf16.msra.mxu0 %v5119
        %5155 = vmatpush.bf16.msra.mxu0 %v5118
        %5156 = vmatpush.bf16.msra.mxu0 %v5117
        %5157 = vmatmul.bf16.gmra.mxu0 %v5045
        %v5158 = vpop.f32.mrf.mxu0
        %v5159 = vadd.f32 %v4853, %v5158
        %v5160 = vpop.f32.mrf.mxu0
        %v5161 = vadd.f32 %v4853, %v5160
        %5162 = vmatmul.bf16.gmra.mxu0 %v5047
        %v5163 = vpop.f32.mrf.mxu0
        %v5164 = vadd.f32 %v4853, %v5163
        %v5165 = vpop.f32.mrf.mxu0
        %v5166 = vadd.f32 %v4853, %v5165
        %5167 = vdwg.mxu0
        %5168 = vmatpush.bf16.msra.mxu0 %v5132
        %5169 = vmatpush.bf16.msra.mxu0 %v5131
        %5170 = vmatpush.bf16.msra.mxu0 %v5130
        %5171 = vmatpush.bf16.msra.mxu0 %v5129
        %5172 = vmatpush.bf16.msra.mxu0 %v5128
        %5173 = vmatpush.bf16.msra.mxu0 %v5127
        %5174 = vmatpush.bf16.msra.mxu0 %v5126
        %5175 = vmatpush.bf16.msra.mxu0 %v5125
        %5176 = vmatmul.bf16.gmra.mxu0 %v5046
        %v5177 = vpop.f32.mrf.mxu0
        %v5178 = vadd.f32 %v5159, %v5177
        %v5179 = vpop.f32.mrf.mxu0
        %v5180 = vadd.f32 %v5161, %v5179
        %5181 = vmatmul.bf16.gmra.mxu0 %v5048
        %v5182 = vpop.f32.mrf.mxu0
        %v5183 = vadd.f32 %v5164, %v5182
        %v5184 = vpop.f32.mrf.mxu0
        %v5185 = vadd.f32 %v5166, %v5184
        %5186 = vdwg.mxu0
        %v5187 = vld [vmem:[%s6 + $0x7] ss:$0 sm:$0xff]
        %v5188 = vld [vmem:[%s6 + $0x10] ss:$0 sm:$0xff]
        %5189 = vadd.xlane.f32.xlu0 %v5178
        %v5190 = vpop.xlane.xlu0 %5189
        %5191 = vadd.xlane.f32.xlu0 %v5180
        %v5192 = vpop.xlane.xlu0 %5191
        %5193 = vadd.xlane.f32.xlu0 %v5183
        %v5194 = vpop.xlane.xlu0 %5193
        %5195 = vadd.xlane.f32.xlu0 %v5185
        %v5196 = vpop.xlane.xlu0 %5195
        %v5197 = vmul.f32 %v5178, %v5178
        %v5198 = vmul.f32 %v5180, %v5180
        %v5199 = vmul.f32 %v5183, %v5183
        %v5200 = vmul.f32 %v5185, %v5185
        %5201 = vadd.xlane.f32.xlu0 %v5197
        %v5202 = vpop.xlane.xlu0 %5201
        %5203 = vadd.xlane.f32.xlu0 %v5198
        %v5204 = vpop.xlane.xlu0 %5203
        %5205 = vadd.xlane.f32.xlu0 %v5199
        %v5206 = vpop.xlane.xlu0 %5205
        %5207 = vadd.xlane.f32.xlu0 %v5200
        %v5208 = vpop.xlane.xlu0 %5207
        %v5209 = vmul.f32 %v5190, 0.015625
        %v5210 = vmul.f32 %v5192, 0.015625
        %v5211 = vmul.f32 %v5194, 0.015625
        %v5212 = vmul.f32 %v5196, 0.015625
        %v5213 = vmul.f32 %v5202, 0.015625
        %v5214 = vmul.f32 %v5204, 0.015625
        %v5215 = vmul.f32 %v5206, 0.015625
        %v5216 = vmul.f32 %v5208, 0.015625
        %v5217 = vmul.f32 %v5209, %v5209
        %v5218 = vmul.f32 %v5210, %v5210
        %v5219 = vmul.f32 %v5211, %v5211
        %v5220 = vmul.f32 %v5212, %v5212
        %v5221 = vsub.f32 %v5213, %v5217
        %v5222 = vsub.f32 %v5214, %v5218
        %v5223 = vsub.f32 %v5215, %v5219
        %v5224 = vsub.f32 %v5216, %v5220
        %v5225 = vsub.f32 %v5178, %v5209
        %v5226 = vsub.f32 %v5180, %v5210
        %v5227 = vsub.f32 %v5183, %v5211
        %v5228 = vsub.f32 %v5185, %v5212
        %v5229 = vadd.f32 %v5221, 1e-05
        %v5230 = vadd.f32 %v5222, 1e-05
        %v5231 = vadd.f32 %v5223, 1e-05
        %v5232 = vadd.f32 %v5224, 1e-05
        %v5233 = vrsqrt.pop %v5229
        %v5234 = vmul.f32 %v5233, %v5229
        %v5235 = vmul.f32 %v5234, %v5233
        %v5236 = vmul.f32 0.5, %v5235
        %v5237 = vsub.f32 1.5, %v5236
        %v5238 = vmul.f32 %v5233, %v5237
        %vm5239 = vweird.f32 %v5229
        %vm5240 = vweird.f32 %v5233
        %vm5241 = vmor %vm5239, %vm5240
        %v5242 = vsel %vm5241, %v5233, %v5238
        %v5243 = vrsqrt.pop %v5230
        %v5244 = vmul.f32 %v5243, %v5230
        %v5245 = vmul.f32 %v5244, %v5243
        %v5246 = vmul.f32 0.5, %v5245
        %v5247 = vsub.f32 1.5, %v5246
        %v5248 = vmul.f32 %v5243, %v5247
        %vm5249 = vweird.f32 %v5230
        %vm5250 = vweird.f32 %v5243
        %vm5251 = vmor %vm5249, %vm5250
        %v5252 = vsel %vm5251, %v5243, %v5248
        %v5253 = vrsqrt.pop %v5231
        %v5254 = vmul.f32 %v5253, %v5231
        %v5255 = vmul.f32 %v5254, %v5253
        %v5256 = vmul.f32 0.5, %v5255
        %v5257 = vsub.f32 1.5, %v5256
        %v5258 = vmul.f32 %v5253, %v5257
        %vm5259 = vweird.f32 %v5231
        %vm5260 = vweird.f32 %v5253
        %vm5261 = vmor %vm5259, %vm5260
        %v5262 = vsel %vm5261, %v5253, %v5258
        %v5263 = vrsqrt.pop %v5232
        %v5264 = vmul.f32 %v5263, %v5232
        %v5265 = vmul.f32 %v5264, %v5263
        %v5266 = vmul.f32 0.5, %v5265
        %v5267 = vsub.f32 1.5, %v5266
        %v5268 = vmul.f32 %v5263, %v5267
        %vm5269 = vweird.f32 %v5232
        %vm5270 = vweird.f32 %v5263
        %vm5271 = vmor %vm5269, %vm5270
        %v5272 = vsel %vm5271, %v5263, %v5268
        %v5273 = vmul.f32 %v5225, %v5242
        %v5274 = vmul.f32 %v5226, %v5252
        %v5275 = vmul.f32 %v5227, %v5262
        %v5276 = vmul.f32 %v5228, %v5272
        %v5277 = vmul.f32 %v5273, %v5187
        %v5278 = vmul.f32 %v5274, %v5187
        %v5279 = vmul.f32 %v5275, %v5187
        %v5280 = vmul.f32 %v5276, %v5187
        %v5281 = vadd.f32 %v5277, %v5188
        %v5282 = vadd.f32 %v5278, %v5188
        %v5283 = vadd.f32 %v5279, %v5188
        %v5284 = vadd.f32 %v5280, %v5188
        %vm5285 = vcmp.gt.f32.partialorder %v5281, 0.0
        %vm5286 = vcmp.gt.f32.partialorder %v5282, 0.0
        %vm5287 = vcmp.gt.f32.partialorder %v5283, 0.0
        %vm5288 = vcmp.gt.f32.partialorder %v5284, 0.0
        %v5289 = vmul.f32 %v5281, 0.01
        %v5290 = vmul.f32 %v5282, 0.01
        %v5291 = vmul.f32 %v5283, 0.01
        %v5292 = vmul.f32 %v5284, 0.01
        %v5293 = vsel %vm5285, %v5281, %v5289
        %v5294 = vsel %vm5286, %v5282, %v5290
        %v5295 = vsel %vm5287, %v5283, %v5291
        %v5296 = vsel %vm5288, %v5284, %v5292
        %v5297 = vld [vmem:[%s355] sm:$0xf]
        %v5298 = vld [vmem:[%s355 + $0x4] sm:$0xf]
        %v5299 = vld [vmem:[%s355 + $0x8] sm:$0xf]
        %v5300 = vld [vmem:[%s355 + $0xc] sm:$0xf]
        %v5301 = vld [vmem:[%s4] sm:$0xf]
        %v5302 = vld [vmem:[%s4 + $0x4] sm:$0xf]
        %v5303 = vld [vmem:[%s6 + $0x11] ss:$0 sm:$0xff]
        %v5308 = vunpack.c.l.b16 %v5297
        %v5309 = vunpack.c.l.b16 %v5298
        %v5310 = vunpack.c.l.b16 %v5299
        %v5311 = vunpack.c.l.b16 %v5300
        %v5312 = vpack.c.b16 %v5309, %v5308
        %v5313 = vpack.c.b16 %v5311, %v5310
        %v5316 = vunpack.c.l.b16 %v5301
        %v5317 = vunpack.c.l.b16 %v5302
        %v5318 = vpack.c.b16 %v5317, %v5316
        %v5321 = vsel %vm896, %v5312, 0
        %v5324 = vsel %vm896, %v5313, 0
        %5326 = vmatpush.bf16.msra.mxu0 0
        %5327 = vmatpush.bf16.msra.mxu0 0
        %5328 = vmatpush.bf16.msra.mxu0 0
        %5329 = vmatpush.bf16.msra.mxu0 0
        %5330 = vmatpush.bf16.msra.mxu0 0
        %5331 = vmatpush.bf16.msra.mxu0 0
        %5332 = vmatpush.bf16.msra.mxu0 0
        %5333 = vmatpush.bf16.msra.mxu0 %v5318
        %5334 = vmatmul.bf16.gmra.mxu0 %v5321
        %v5335 = vpop.f32.mrf.mxu0
        %v5336 = vadd.f32 %v5303, %v5335
        %v5337 = vpop.f32.mrf.mxu0
        %v5338 = vadd.f32 %v5303, %v5337
        %5339 = vmatmul.bf16.gmra.mxu0 %v5324
        %v5340 = vpop.f32.mrf.mxu0
        %v5341 = vadd.f32 %v5303, %v5340
        %v5342 = vpop.f32.mrf.mxu0
        %v5343 = vadd.f32 %v5303, %v5342
        %5344 = vdwg.mxu0
        %v5345 = vld [vmem:[%s4 + $0x8] sm:$0xf]
        %v5346 = vld [vmem:[%s4 + $0xc] sm:$0xf]
        %v5347 = vld [vmem:[%s4 + $0x10] sm:$0xf]
        %v5348 = vld [vmem:[%s4 + $0x14] sm:$0xf]
        %v5349 = vld [vmem:[%s4 + $0x18] sm:$0xf]
        %v5350 = vld [vmem:[%s4 + $0x1c] sm:$0xf]
        %v5351 = vld [vmem:[%s4 + $0x20] sm:$0xf]
        %v5352 = vld [vmem:[%s4 + $0x24] sm:$0xf]
        %v5353 = vld [vmem:[%s4 + $0x28] sm:$0xf]
        %v5354 = vld [vmem:[%s4 + $0x2c] sm:$0xf]
        %v5355 = vld [vmem:[%s4 + $0x30] sm:$0xf]
        %v5356 = vld [vmem:[%s4 + $0x34] sm:$0xf]
        %v5357 = vld [vmem:[%s4 + $0x38] sm:$0xf]
        %v5358 = vld [vmem:[%s4 + $0x3c] sm:$0xf]
        %v5359 = vld [vmem:[%s4 + $0x40] sm:$0xf]
        %v5360 = vld [vmem:[%s4 + $0x44] sm:$0xf]
        %v5361 = vpack.c.bf16 %v5338, %v5336
        %v5362 = vpack.c.bf16 %v5343, %v5341
        %v5363 = vld [vmem:[%s6 + $0x12] ss:$0 sm:$0xff]
        %v5380 = vunpack.c.l.b16 %v5345
        %v5381 = vunpack.c.l.b16 %v5346
        %v5382 = vunpack.c.l.b16 %v5347
        %v5383 = vunpack.c.l.b16 %v5348
        %v5384 = vunpack.c.l.b16 %v5349
        %v5385 = vunpack.c.l.b16 %v5350
        %v5386 = vunpack.c.l.b16 %v5351
        %v5387 = vunpack.c.l.b16 %v5352
        %v5388 = vunpack.c.l.b16 %v5353
        %v5389 = vunpack.c.l.b16 %v5354
        %v5390 = vunpack.c.l.b16 %v5355
        %v5391 = vunpack.c.l.b16 %v5356
        %v5392 = vunpack.c.l.b16 %v5357
        %v5393 = vunpack.c.l.b16 %v5358
        %v5394 = vunpack.c.l.b16 %v5359
        %v5395 = vunpack.c.l.b16 %v5360
        %v5396 = vpack.c.b16 %v5381, %v5380
        %v5397 = vpack.c.b16 %v5383, %v5382
        %v5398 = vpack.c.b16 %v5385, %v5384
        %v5399 = vpack.c.b16 %v5387, %v5386
        %v5400 = vpack.c.b16 %v5389, %v5388
        %v5401 = vpack.c.b16 %v5391, %v5390
        %v5402 = vpack.c.b16 %v5393, %v5392
        %v5403 = vpack.c.b16 %v5395, %v5394
        %5412 = vmatpush.bf16.msra.mxu0 %v5403
        %5413 = vmatpush.bf16.msra.mxu0 %v5402
        %5414 = vmatpush.bf16.msra.mxu0 %v5401
        %5415 = vmatpush.bf16.msra.mxu0 %v5400
        %5416 = vmatpush.bf16.msra.mxu0 %v5399
        %5417 = vmatpush.bf16.msra.mxu0 %v5398
        %5418 = vmatpush.bf16.msra.mxu0 %v5397
        %5419 = vmatpush.bf16.msra.mxu0 %v5396
        %5420 = vmatmul.bf16.gmra.mxu0 %v5361
        %v5421 = vpop.f32.mrf.mxu0
        %v5422 = vadd.f32 %v5363, %v5421
        %v5423 = vpop.f32.mrf.mxu0
        %v5424 = vadd.f32 %v5363, %v5423
        %5425 = vmatmul.bf16.gmra.mxu0 %v5362
        %v5426 = vpop.f32.mrf.mxu0
        %v5427 = vadd.f32 %v5363, %v5426
        %v5428 = vpop.f32.mrf.mxu0
        %v5429 = vadd.f32 %v5363, %v5428
        %5430 = vdwg.mxu0
        %v5431 = vld [vmem:[%s6 + $0x13] ss:$0 sm:$0xff]
        %v5432 = vld [vmem:[%s6 + $0x14] ss:$0 sm:$0xff]
        %5433 = vadd.xlane.f32.xlu0 %v5422
        %v5434 = vpop.xlane.xlu0 %5433
        %5435 = vadd.xlane.f32.xlu0 %v5424
        %v5436 = vpop.xlane.xlu0 %5435
        %5437 = vadd.xlane.f32.xlu0 %v5427
        %v5438 = vpop.xlane.xlu0 %5437
        %5439 = vadd.xlane.f32.xlu0 %v5429
        %v5440 = vpop.xlane.xlu0 %5439
        %v5441 = vrcp.pop 128.0
        %v5442 = vmul.f32 128.0, %v5441
        %v5443 = vsub.f32 1.0, %v5442
        %v5444 = vmul.f32 %v5441, %v5443
        %v5445 = vadd.f32 %v5441, %v5444
        %vm5446 = vweird.f32 %v5441
        %v5447 = vsel %vm5446, %v5441, %v5445
        %v5448 = vmul.f32 %v5434, %v5447
        %v5449 = vmul.f32 %v5436, %v5447
        %v5450 = vmul.f32 %v5438, %v5447
        %v5451 = vmul.f32 %v5440, %v5447
        %v5452 = vsub.f32 %v5422, %v5448
        %v5453 = vsub.f32 %v5424, %v5449
        %v5454 = vsub.f32 %v5427, %v5450
        %v5455 = vsub.f32 %v5429, %v5451
        %v5456 = vmul.f32 %v5452, %v5452
        %v5457 = vmul.f32 %v5453, %v5453
        %v5458 = vmul.f32 %v5454, %v5454
        %v5459 = vmul.f32 %v5455, %v5455
        %5460 = vadd.xlane.f32.xlu0 %v5456
        %v5461 = vpop.xlane.xlu0 %5460
        %5462 = vadd.xlane.f32.xlu0 %v5457
        %v5463 = vpop.xlane.xlu0 %5462
        %5464 = vadd.xlane.f32.xlu0 %v5458
        %v5465 = vpop.xlane.xlu0 %5464
        %5466 = vadd.xlane.f32.xlu0 %v5459
        %v5467 = vpop.xlane.xlu0 %5466
        %v5468 = vmul.f32 %v5461, %v5447
        %v5469 = vmul.f32 %v5463, %v5447
        %v5470 = vmul.f32 %v5465, %v5447
        %v5471 = vmul.f32 %v5467, %v5447
        %v5472 = vadd.f32 %v5468, 1e-05
        %v5473 = vadd.f32 %v5469, 1e-05
        %v5474 = vadd.f32 %v5470, 1e-05
        %v5475 = vadd.f32 %v5471, 1e-05
        %v5476 = vrsqrt.pop %v5472
        %v5477 = vmul.f32 %v5476, %v5472
        %v5478 = vmul.f32 %v5477, %v5476
        %v5479 = vmul.f32 0.5, %v5478
        %v5480 = vsub.f32 1.5, %v5479
        %v5481 = vmul.f32 %v5476, %v5480
        %vm5482 = vweird.f32 %v5472
        %vm5483 = vweird.f32 %v5476
        %vm5484 = vmor %vm5482, %vm5483
        %v5485 = vsel %vm5484, %v5476, %v5481
        %v5486 = vrsqrt.pop %v5473
        %v5487 = vmul.f32 %v5486, %v5473
        %v5488 = vmul.f32 %v5487, %v5486
        %v5489 = vmul.f32 0.5, %v5488
        %v5490 = vsub.f32 1.5, %v5489
        %v5491 = vmul.f32 %v5486, %v5490
        %vm5492 = vweird.f32 %v5473
        %vm5493 = vweird.f32 %v5486
        %vm5494 = vmor %vm5492, %vm5493
        %v5495 = vsel %vm5494, %v5486, %v5491
        %v5496 = vrsqrt.pop %v5474
        %v5497 = vmul.f32 %v5496, %v5474
        %v5498 = vmul.f32 %v5497, %v5496
        %v5499 = vmul.f32 0.5, %v5498
        %v5500 = vsub.f32 1.5, %v5499
        %v5501 = vmul.f32 %v5496, %v5500
        %vm5502 = vweird.f32 %v5474
        %vm5503 = vweird.f32 %v5496
        %vm5504 = vmor %vm5502, %vm5503
        %v5505 = vsel %vm5504, %v5496, %v5501
        %v5506 = vrsqrt.pop %v5475
        %v5507 = vmul.f32 %v5506, %v5475
        %v5508 = vmul.f32 %v5507, %v5506
        %v5509 = vmul.f32 0.5, %v5508
        %v5510 = vsub.f32 1.5, %v5509
        %v5511 = vmul.f32 %v5506, %v5510
        %vm5512 = vweird.f32 %v5475
        %vm5513 = vweird.f32 %v5506
        %vm5514 = vmor %vm5512, %vm5513
        %v5515 = vsel %vm5514, %v5506, %v5511
        %v5516 = vmul.f32 %v5452, %v5485
        %v5517 = vmul.f32 %v5453, %v5495
        %v5518 = vmul.f32 %v5454, %v5505
        %v5519 = vmul.f32 %v5455, %v5515
        %v5520 = vmul.f32 %v5516, %v5431
        %v5521 = vmul.f32 %v5517, %v5431
        %v5522 = vmul.f32 %v5518, %v5431
        %v5523 = vmul.f32 %v5519, %v5431
        %v5524 = vadd.f32 %v5520, %v5432
        %v5525 = vadd.f32 %v5521, %v5432
        %v5526 = vadd.f32 %v5522, %v5432
        %v5527 = vadd.f32 %v5523, %v5432
        %v5528 = vld [vmem:[%s6 + $0x15] ss:$0 sm:$0xff]
        %v5529 = vld [vmem:[%s6 + $0x16] ss:$0 sm:$0xff]
        %5530 = vadd.xlane.f32.xlu0 %v5524
        %v5531 = vpop.xlane.xlu0 %5530
        %5532 = vadd.xlane.f32.xlu0 %v5525
        %v5533 = vpop.xlane.xlu0 %5532
        %5534 = vadd.xlane.f32.xlu0 %v5526
        %v5535 = vpop.xlane.xlu0 %5534
        %5536 = vadd.xlane.f32.xlu0 %v5527
        %v5537 = vpop.xlane.xlu0 %5536
        %v5538 = vmul.f32 %v5531, %v5447
        %v5539 = vmul.f32 %v5533, %v5447
        %v5540 = vmul.f32 %v5535, %v5447
        %v5541 = vmul.f32 %v5537, %v5447
        %v5542 = vsub.f32 %v5524, %v5538
        %v5543 = vsub.f32 %v5525, %v5539
        %v5544 = vsub.f32 %v5526, %v5540
        %v5545 = vsub.f32 %v5527, %v5541
        %v5546 = vmul.f32 %v5542, %v5542
        %v5547 = vmul.f32 %v5543, %v5543
        %v5548 = vmul.f32 %v5544, %v5544
        %v5549 = vmul.f32 %v5545, %v5545
        %5550 = vadd.xlane.f32.xlu0 %v5546
        %v5551 = vpop.xlane.xlu0 %5550
        %5552 = vadd.xlane.f32.xlu0 %v5547
        %v5553 = vpop.xlane.xlu0 %5552
        %5554 = vadd.xlane.f32.xlu0 %v5548
        %v5555 = vpop.xlane.xlu0 %5554
        %5556 = vadd.xlane.f32.xlu0 %v5549
        %v5557 = vpop.xlane.xlu0 %5556
        %v5558 = vmul.f32 %v5551, %v5447
        %v5559 = vmul.f32 %v5553, %v5447
        %v5560 = vmul.f32 %v5555, %v5447
        %v5561 = vmul.f32 %v5557, %v5447
        %v5562 = vadd.f32 %v5558, 1e-05
        %v5563 = vadd.f32 %v5559, 1e-05
        %v5564 = vadd.f32 %v5560, 1e-05
        %v5565 = vadd.f32 %v5561, 1e-05
        %v5566 = vrsqrt.pop %v5562
        %v5567 = vmul.f32 %v5566, %v5562
        %v5568 = vmul.f32 %v5567, %v5566
        %v5569 = vmul.f32 0.5, %v5568
        %v5570 = vsub.f32 1.5, %v5569
        %v5571 = vmul.f32 %v5566, %v5570
        %vm5572 = vweird.f32 %v5562
        %vm5573 = vweird.f32 %v5566
        %vm5574 = vmor %vm5572, %vm5573
        %v5575 = vsel %vm5574, %v5566, %v5571
        %v5576 = vrsqrt.pop %v5563
        %v5577 = vmul.f32 %v5576, %v5563
        %v5578 = vmul.f32 %v5577, %v5576
        %v5579 = vmul.f32 0.5, %v5578
        %v5580 = vsub.f32 1.5, %v5579
        %v5581 = vmul.f32 %v5576, %v5580
        %vm5582 = vweird.f32 %v5563
        %vm5583 = vweird.f32 %v5576
        %vm5584 = vmor %vm5582, %vm5583
        %v5585 = vsel %vm5584, %v5576, %v5581
        %v5586 = vrsqrt.pop %v5564
        %v5587 = vmul.f32 %v5586, %v5564
        %v5588 = vmul.f32 %v5587, %v5586
        %v5589 = vmul.f32 0.5, %v5588
        %v5590 = vsub.f32 1.5, %v5589
        %v5591 = vmul.f32 %v5586, %v5590
        %vm5592 = vweird.f32 %v5564
        %vm5593 = vweird.f32 %v5586
        %vm5594 = vmor %vm5592, %vm5593
        %v5595 = vsel %vm5594, %v5586, %v5591
        %v5596 = vrsqrt.pop %v5565
        %v5597 = vmul.f32 %v5596, %v5565
        %v5598 = vmul.f32 %v5597, %v5596
        %v5599 = vmul.f32 0.5, %v5598
        %v5600 = vsub.f32 1.5, %v5599
        %v5601 = vmul.f32 %v5596, %v5600
        %vm5602 = vweird.f32 %v5565
        %vm5603 = vweird.f32 %v5596
        %vm5604 = vmor %vm5602, %vm5603
        %v5605 = vsel %vm5604, %v5596, %v5601
        %v5606 = vmul.f32 %v5542, %v5575
        %v5607 = vmul.f32 %v5543, %v5585
        %v5608 = vmul.f32 %v5544, %v5595
        %v5609 = vmul.f32 %v5545, %v5605
        %v5610 = vmul.f32 %v5606, %v5528
        %v5611 = vmul.f32 %v5607, %v5528
        %v5612 = vmul.f32 %v5608, %v5528
        %v5613 = vmul.f32 %v5609, %v5528
        %v5614 = vadd.f32 %v5610, %v5529
        %v5615 = vadd.f32 %v5611, %v5529
        %v5616 = vadd.f32 %v5612, %v5529
        %v5617 = vadd.f32 %v5613, %v5529
        %v5618 = vld [vmem:[%s4 + $0x48] sm:$0xf]
        %v5619 = vld [vmem:[%s4 + $0x4c] sm:$0xf]
        %v5620 = vld [vmem:[%s4 + $0x50] sm:$0xf]
        %v5621 = vld [vmem:[%s4 + $0x54] sm:$0xf]
        %v5622 = vld [vmem:[%s4 + $0x58] sm:$0xf]
        %v5623 = vld [vmem:[%s4 + $0x5c] sm:$0xf]
        %v5624 = vld [vmem:[%s4 + $0x60] sm:$0xf]
        %v5625 = vld [vmem:[%s4 + $0x64] sm:$0xf]
        %v5626 = vld [vmem:[%s4 + $0x68] sm:$0xf]
        %v5627 = vld [vmem:[%s4 + $0x6c] sm:$0xf]
        %v5628 = vld [vmem:[%s4 + $0x70] sm:$0xf]
        %v5629 = vld [vmem:[%s4 + $0x74] sm:$0xf]
        %v5630 = vld [vmem:[%s4 + $0x78] sm:$0xf]
        %v5631 = vld [vmem:[%s4 + $0x7c] sm:$0xf]
        %v5632 = vld [vmem:[%s4 + $0x80] sm:$0xf]
        %v5633 = vld [vmem:[%s4 + $0x84] sm:$0xf]
        %v5634 = vpack.c.bf16 %v5615, %v5614
        %v5635 = vpack.c.bf16 %v5617, %v5616
        %v5636 = vld [vmem:[%s6 + $0x17] ss:$0 sm:$0xff]
        %v5653 = vunpack.c.l.b16 %v5618
        %v5654 = vunpack.c.l.b16 %v5619
        %v5655 = vunpack.c.l.b16 %v5620
        %v5656 = vunpack.c.l.b16 %v5621
        %v5657 = vunpack.c.l.b16 %v5622
        %v5658 = vunpack.c.l.b16 %v5623
        %v5659 = vunpack.c.l.b16 %v5624
        %v5660 = vunpack.c.l.b16 %v5625
        %v5661 = vunpack.c.l.b16 %v5626
        %v5662 = vunpack.c.l.b16 %v5627
        %v5663 = vunpack.c.l.b16 %v5628
        %v5664 = vunpack.c.l.b16 %v5629
        %v5665 = vunpack.c.l.b16 %v5630
        %v5666 = vunpack.c.l.b16 %v5631
        %v5667 = vunpack.c.l.b16 %v5632
        %v5668 = vunpack.c.l.b16 %v5633
        %v5669 = vpack.c.b16 %v5654, %v5653
        %v5670 = vpack.c.b16 %v5656, %v5655
        %v5671 = vpack.c.b16 %v5658, %v5657
        %v5672 = vpack.c.b16 %v5660, %v5659
        %v5673 = vpack.c.b16 %v5662, %v5661
        %v5674 = vpack.c.b16 %v5664, %v5663
        %v5675 = vpack.c.b16 %v5666, %v5665
        %v5676 = vpack.c.b16 %v5668, %v5667
        %5685 = vmatpush.bf16.msra.mxu0 %v5676
        %5686 = vmatpush.bf16.msra.mxu0 %v5675
        %5687 = vmatpush.bf16.msra.mxu0 %v5674
        %5688 = vmatpush.bf16.msra.mxu0 %v5673
        %5689 = vmatpush.bf16.msra.mxu0 %v5672
        %5690 = vmatpush.bf16.msra.mxu0 %v5671
        %5691 = vmatpush.bf16.msra.mxu0 %v5670
        %5692 = vmatpush.bf16.msra.mxu0 %v5669
        %5693 = vmatmul.bf16.gmra.mxu0 %v5634
        %v5694 = vpop.f32.mrf.mxu0
        %v5695 = vadd.f32 %v5636, %v5694
        %v5696 = vpop.f32.mrf.mxu0
        %v5697 = vadd.f32 %v5636, %v5696
        %5698 = vmatmul.bf16.gmra.mxu0 %v5635
        %v5699 = vpop.f32.mrf.mxu0
        %v5700 = vadd.f32 %v5636, %v5699
        %v5701 = vpop.f32.mrf.mxu0
        %v5702 = vadd.f32 %v5636, %v5701
        %5703 = vdwg.mxu0
        %v5704 = vld [vmem:[%s6 + $0x20] ss:$0 sm:$0xff]
        %v5705 = vld [vmem:[%s6 + $0x21] ss:$0 sm:$0xff]
        %5706 = vadd.xlane.f32.xlu0 %v5695
        %v5707 = vpop.xlane.xlu0 %5706
        %5708 = vadd.xlane.f32.xlu0 %v5697
        %v5709 = vpop.xlane.xlu0 %5708
        %5710 = vadd.xlane.f32.xlu0 %v5700
        %v5711 = vpop.xlane.xlu0 %5710
        %5712 = vadd.xlane.f32.xlu0 %v5702
        %v5713 = vpop.xlane.xlu0 %5712
        %v5714 = vmul.f32 %v5707, %v5447
        %v5715 = vmul.f32 %v5709, %v5447
        %v5716 = vmul.f32 %v5711, %v5447
        %v5717 = vmul.f32 %v5713, %v5447
        %v5718 = vsub.f32 %v5695, %v5714
        %v5719 = vsub.f32 %v5697, %v5715
        %v5720 = vsub.f32 %v5700, %v5716
        %v5721 = vsub.f32 %v5702, %v5717
        %v5722 = vmul.f32 %v5718, %v5718
        %v5723 = vmul.f32 %v5719, %v5719
        %v5724 = vmul.f32 %v5720, %v5720
        %v5725 = vmul.f32 %v5721, %v5721
        %5726 = vadd.xlane.f32.xlu0 %v5722
        %v5727 = vpop.xlane.xlu0 %5726
        %5728 = vadd.xlane.f32.xlu0 %v5723
        %v5729 = vpop.xlane.xlu0 %5728
        %5730 = vadd.xlane.f32.xlu0 %v5724
        %v5731 = vpop.xlane.xlu0 %5730
        %5732 = vadd.xlane.f32.xlu0 %v5725
        %v5733 = vpop.xlane.xlu0 %5732
        %v5734 = vmul.f32 %v5727, %v5447
        %v5735 = vmul.f32 %v5729, %v5447
        %v5736 = vmul.f32 %v5731, %v5447
        %v5737 = vmul.f32 %v5733, %v5447
        %v5738 = vadd.f32 %v5734, 1e-05
        %v5739 = vadd.f32 %v5735, 1e-05
        %v5740 = vadd.f32 %v5736, 1e-05
        %v5741 = vadd.f32 %v5737, 1e-05
        %v5742 = vrsqrt.pop %v5738
        %v5743 = vmul.f32 %v5742, %v5738
        %v5744 = vmul.f32 %v5743, %v5742
        %v5745 = vmul.f32 0.5, %v5744
        %v5746 = vsub.f32 1.5, %v5745
        %v5747 = vmul.f32 %v5742, %v5746
        %vm5748 = vweird.f32 %v5738
        %vm5749 = vweird.f32 %v5742
        %vm5750 = vmor %vm5748, %vm5749
        %v5751 = vsel %vm5750, %v5742, %v5747
        %v5752 = vrsqrt.pop %v5739
        %v5753 = vmul.f32 %v5752, %v5739
        %v5754 = vmul.f32 %v5753, %v5752
        %v5755 = vmul.f32 0.5, %v5754
        %v5756 = vsub.f32 1.5, %v5755
        %v5757 = vmul.f32 %v5752, %v5756
        %vm5758 = vweird.f32 %v5739
        %vm5759 = vweird.f32 %v5752
        %vm5760 = vmor %vm5758, %vm5759
        %v5761 = vsel %vm5760, %v5752, %v5757
        %v5762 = vrsqrt.pop %v5740
        %v5763 = vmul.f32 %v5762, %v5740
        %v5764 = vmul.f32 %v5763, %v5762
        %v5765 = vmul.f32 0.5, %v5764
        %v5766 = vsub.f32 1.5, %v5765
        %v5767 = vmul.f32 %v5762, %v5766
        %vm5768 = vweird.f32 %v5740
        %vm5769 = vweird.f32 %v5762
        %vm5770 = vmor %vm5768, %vm5769
        %v5771 = vsel %vm5770, %v5762, %v5767
        %v5772 = vrsqrt.pop %v5741
        %v5773 = vmul.f32 %v5772, %v5741
        %v5774 = vmul.f32 %v5773, %v5772
        %v5775 = vmul.f32 0.5, %v5774
        %v5776 = vsub.f32 1.5, %v5775
        %v5777 = vmul.f32 %v5772, %v5776
        %vm5778 = vweird.f32 %v5741
        %vm5779 = vweird.f32 %v5772
        %vm5780 = vmor %vm5778, %vm5779
        %v5781 = vsel %vm5780, %v5772, %v5777
        %v5782 = vmul.f32 %v5718, %v5751
        %v5783 = vmul.f32 %v5719, %v5761
        %v5784 = vmul.f32 %v5720, %v5771
        %v5785 = vmul.f32 %v5721, %v5781
        %v5786 = vmul.f32 %v5782, %v5704
        %v5787 = vmul.f32 %v5783, %v5704
        %v5788 = vmul.f32 %v5784, %v5704
        %v5789 = vmul.f32 %v5785, %v5704
        %v5790 = vadd.f32 %v5786, %v5705
        %v5791 = vadd.f32 %v5787, %v5705
        %v5792 = vadd.f32 %v5788, %v5705
        %v5793 = vadd.f32 %v5789, %v5705
        %v5794 = vld [vmem:[%s6 + $0x22] ss:$0 sm:$0xff]
        %v5795 = vld [vmem:[%s6 + $0x23] ss:$0 sm:$0xff]
        %5796 = vadd.xlane.f32.xlu0 %v5790
        %v5797 = vpop.xlane.xlu0 %5796
        %5798 = vadd.xlane.f32.xlu0 %v5791
        %v5799 = vpop.xlane.xlu0 %5798
        %5800 = vadd.xlane.f32.xlu0 %v5792
        %v5801 = vpop.xlane.xlu0 %5800
        %5802 = vadd.xlane.f32.xlu0 %v5793
        %v5803 = vpop.xlane.xlu0 %5802
        %v5804 = vmul.f32 %v5797, %v5447
        %v5805 = vmul.f32 %v5799, %v5447
        %v5806 = vmul.f32 %v5801, %v5447
        %v5807 = vmul.f32 %v5803, %v5447
        %v5808 = vsub.f32 %v5790, %v5804
        %v5809 = vsub.f32 %v5791, %v5805
        %v5810 = vsub.f32 %v5792, %v5806
        %v5811 = vsub.f32 %v5793, %v5807
        %v5812 = vmul.f32 %v5808, %v5808
        %v5813 = vmul.f32 %v5809, %v5809
        %v5814 = vmul.f32 %v5810, %v5810
        %v5815 = vmul.f32 %v5811, %v5811
        %5816 = vadd.xlane.f32.xlu0 %v5812
        %v5817 = vpop.xlane.xlu0 %5816
        %5818 = vadd.xlane.f32.xlu0 %v5813
        %v5819 = vpop.xlane.xlu0 %5818
        %5820 = vadd.xlane.f32.xlu0 %v5814
        %v5821 = vpop.xlane.xlu0 %5820
        %5822 = vadd.xlane.f32.xlu0 %v5815
        %v5823 = vpop.xlane.xlu0 %5822
        %v5824 = vmul.f32 %v5817, %v5447
        %v5825 = vmul.f32 %v5819, %v5447
        %v5826 = vmul.f32 %v5821, %v5447
        %v5827 = vmul.f32 %v5823, %v5447
        %v5828 = vadd.f32 %v5824, 1e-05
        %v5829 = vadd.f32 %v5825, 1e-05
        %v5830 = vadd.f32 %v5826, 1e-05
        %v5831 = vadd.f32 %v5827, 1e-05
        %v5832 = vrsqrt.pop %v5828
        %v5833 = vmul.f32 %v5832, %v5828
        %v5834 = vmul.f32 %v5833, %v5832
        %v5835 = vmul.f32 0.5, %v5834
        %v5836 = vsub.f32 1.5, %v5835
        %v5837 = vmul.f32 %v5832, %v5836
        %vm5838 = vweird.f32 %v5828
        %vm5839 = vweird.f32 %v5832
        %vm5840 = vmor %vm5838, %vm5839
        %v5841 = vsel %vm5840, %v5832, %v5837
        %v5842 = vrsqrt.pop %v5829
        %v5843 = vmul.f32 %v5842, %v5829
        %v5844 = vmul.f32 %v5843, %v5842
        %v5845 = vmul.f32 0.5, %v5844
        %v5846 = vsub.f32 1.5, %v5845
        %v5847 = vmul.f32 %v5842, %v5846
        %vm5848 = vweird.f32 %v5829
        %vm5849 = vweird.f32 %v5842
        %vm5850 = vmor %vm5848, %vm5849
        %v5851 = vsel %vm5850, %v5842, %v5847
        %v5852 = vrsqrt.pop %v5830
        %v5853 = vmul.f32 %v5852, %v5830
        %v5854 = vmul.f32 %v5853, %v5852
        %v5855 = vmul.f32 0.5, %v5854
        %v5856 = vsub.f32 1.5, %v5855
        %v5857 = vmul.f32 %v5852, %v5856
        %vm5858 = vweird.f32 %v5830
        %vm5859 = vweird.f32 %v5852
        %vm5860 = vmor %vm5858, %vm5859
        %v5861 = vsel %vm5860, %v5852, %v5857
        %v5862 = vrsqrt.pop %v5831
        %v5863 = vmul.f32 %v5862, %v5831
        %v5864 = vmul.f32 %v5863, %v5862
        %v5865 = vmul.f32 0.5, %v5864
        %v5866 = vsub.f32 1.5, %v5865
        %v5867 = vmul.f32 %v5862, %v5866
        %vm5868 = vweird.f32 %v5831
        %vm5869 = vweird.f32 %v5862
        %vm5870 = vmor %vm5868, %vm5869
        %v5871 = vsel %vm5870, %v5862, %v5867
        %v5872 = vmul.f32 %v5808, %v5841
        %v5873 = vmul.f32 %v5809, %v5851
        %v5874 = vmul.f32 %v5810, %v5861
        %v5875 = vmul.f32 %v5811, %v5871
        %v5876 = vmul.f32 %v5872, %v5794
        %v5877 = vmul.f32 %v5873, %v5794
        %v5878 = vmul.f32 %v5874, %v5794
        %v5879 = vmul.f32 %v5875, %v5794
        %v5880 = vadd.f32 %v5876, %v5795
        %v5881 = vadd.f32 %v5877, %v5795
        %v5882 = vadd.f32 %v5878, %v5795
        %v5883 = vadd.f32 %v5879, %v5795
        %v5884 = vld [vmem:[%s4 + $0x88] sm:$0xf]
        %v5885 = vld [vmem:[%s4 + $0x8c] sm:$0xf]
        %v5886 = vld [vmem:[%s4 + $0x90] sm:$0xf]
        %v5887 = vld [vmem:[%s4 + $0x94] sm:$0xf]
        %v5888 = vld [vmem:[%s4 + $0x98] sm:$0xf]
        %v5889 = vld [vmem:[%s4 + $0x9c] sm:$0xf]
        %v5890 = vld [vmem:[%s4 + $0xa0] sm:$0xf]
        %v5891 = vld [vmem:[%s4 + $0xa4] sm:$0xf]
        %v5892 = vld [vmem:[%s4 + $0xa8] sm:$0xf]
        %v5893 = vld [vmem:[%s4 + $0xac] sm:$0xf]
        %v5894 = vld [vmem:[%s4 + $0xb0] sm:$0xf]
        %v5895 = vld [vmem:[%s4 + $0xb4] sm:$0xf]
        %v5896 = vld [vmem:[%s4 + $0xb8] sm:$0xf]
        %v5897 = vld [vmem:[%s4 + $0xbc] sm:$0xf]
        %v5898 = vld [vmem:[%s4 + $0xc0] sm:$0xf]
        %v5899 = vld [vmem:[%s4 + $0xc4] sm:$0xf]
        %v5900 = vpack.c.bf16 %v5881, %v5880
        %v5901 = vpack.c.bf16 %v5883, %v5882
        %v5902 = vld [vmem:[%s6 + $0x24] ss:$0 sm:$0xff]
        %v5919 = vunpack.c.l.b16 %v5884
        %v5920 = vunpack.c.l.b16 %v5885
        %v5921 = vunpack.c.l.b16 %v5886
        %v5922 = vunpack.c.l.b16 %v5887
        %v5923 = vunpack.c.l.b16 %v5888
        %v5924 = vunpack.c.l.b16 %v5889
        %v5925 = vunpack.c.l.b16 %v5890
        %v5926 = vunpack.c.l.b16 %v5891
        %v5927 = vunpack.c.l.b16 %v5892
        %v5928 = vunpack.c.l.b16 %v5893
        %v5929 = vunpack.c.l.b16 %v5894
        %v5930 = vunpack.c.l.b16 %v5895
        %v5931 = vunpack.c.l.b16 %v5896
        %v5932 = vunpack.c.l.b16 %v5897
        %v5933 = vunpack.c.l.b16 %v5898
        %v5934 = vunpack.c.l.b16 %v5899
        %v5935 = vpack.c.b16 %v5920, %v5919
        %v5936 = vpack.c.b16 %v5922, %v5921
        %v5937 = vpack.c.b16 %v5924, %v5923
        %v5938 = vpack.c.b16 %v5926, %v5925
        %v5939 = vpack.c.b16 %v5928, %v5927
        %v5940 = vpack.c.b16 %v5930, %v5929
        %v5941 = vpack.c.b16 %v5932, %v5931
        %v5942 = vpack.c.b16 %v5934, %v5933
        %5951 = vmatpush.bf16.msra.mxu0 %v5942
        %5952 = vmatpush.bf16.msra.mxu0 %v5941
        %5953 = vmatpush.bf16.msra.mxu0 %v5940
        %5954 = vmatpush.bf16.msra.mxu0 %v5939
        %5955 = vmatpush.bf16.msra.mxu0 %v5938
        %5956 = vmatpush.bf16.msra.mxu0 %v5937
        %5957 = vmatpush.bf16.msra.mxu0 %v5936
        %5958 = vmatpush.bf16.msra.mxu0 %v5935
        %5959 = vmatmul.bf16.gmra.mxu0 %v5900
        %v5960 = vpop.f32.mrf.mxu0
        %v5961 = vadd.f32 %v5902, %v5960
        %v5962 = vpop.f32.mrf.mxu0
        %v5963 = vadd.f32 %v5902, %v5962
        %5964 = vmatmul.bf16.gmra.mxu0 %v5901
        %v5965 = vpop.f32.mrf.mxu0
        %v5966 = vadd.f32 %v5902, %v5965
        %v5967 = vpop.f32.mrf.mxu0
        %v5968 = vadd.f32 %v5902, %v5967
        %5969 = vdwg.mxu0
        %v5970 = vld [vmem:[%s6 + $0x25] ss:$0 sm:$0xff]
        %v5971 = vld [vmem:[%s6 + $0x26] ss:$0 sm:$0xff]
        %5972 = vadd.xlane.f32.xlu0 %v5961
        %v5973 = vpop.xlane.xlu0 %5972
        %5974 = vadd.xlane.f32.xlu0 %v5963
        %v5975 = vpop.xlane.xlu0 %5974
        %5976 = vadd.xlane.f32.xlu0 %v5966
        %v5977 = vpop.xlane.xlu0 %5976
        %5978 = vadd.xlane.f32.xlu0 %v5968
        %v5979 = vpop.xlane.xlu0 %5978
        %v5980 = vmul.f32 %v5973, %v5447
        %v5981 = vmul.f32 %v5975, %v5447
        %v5982 = vmul.f32 %v5977, %v5447
        %v5983 = vmul.f32 %v5979, %v5447
        %v5984 = vsub.f32 %v5961, %v5980
        %v5985 = vsub.f32 %v5963, %v5981
        %v5986 = vsub.f32 %v5966, %v5982
        %v5987 = vsub.f32 %v5968, %v5983
        %v5988 = vmul.f32 %v5984, %v5984
        %v5989 = vmul.f32 %v5985, %v5985
        %v5990 = vmul.f32 %v5986, %v5986
        %v5991 = vmul.f32 %v5987, %v5987
        %5992 = vadd.xlane.f32.xlu0 %v5988
        %v5993 = vpop.xlane.xlu0 %5992
        %5994 = vadd.xlane.f32.xlu0 %v5989
        %v5995 = vpop.xlane.xlu0 %5994
        %5996 = vadd.xlane.f32.xlu0 %v5990
        %v5997 = vpop.xlane.xlu0 %5996
        %5998 = vadd.xlane.f32.xlu0 %v5991
        %v5999 = vpop.xlane.xlu0 %5998
        %v6000 = vmul.f32 %v5993, %v5447
        %v6001 = vmul.f32 %v5995, %v5447
        %v6002 = vmul.f32 %v5997, %v5447
        %v6003 = vmul.f32 %v5999, %v5447
        %v6004 = vadd.f32 %v6000, 1e-05
        %v6005 = vadd.f32 %v6001, 1e-05
        %v6006 = vadd.f32 %v6002, 1e-05
        %v6007 = vadd.f32 %v6003, 1e-05
        %v6008 = vrsqrt.pop %v6004
        %v6009 = vmul.f32 %v6008, %v6004
        %v6010 = vmul.f32 %v6009, %v6008
        %v6011 = vmul.f32 0.5, %v6010
        %v6012 = vsub.f32 1.5, %v6011
        %v6013 = vmul.f32 %v6008, %v6012
        %vm6014 = vweird.f32 %v6004
        %vm6015 = vweird.f32 %v6008
        %vm6016 = vmor %vm6014, %vm6015
        %v6017 = vsel %vm6016, %v6008, %v6013
        %v6018 = vrsqrt.pop %v6005
        %v6019 = vmul.f32 %v6018, %v6005
        %v6020 = vmul.f32 %v6019, %v6018
        %v6021 = vmul.f32 0.5, %v6020
        %v6022 = vsub.f32 1.5, %v6021
        %v6023 = vmul.f32 %v6018, %v6022
        %vm6024 = vweird.f32 %v6005
        %vm6025 = vweird.f32 %v6018
        %vm6026 = vmor %vm6024, %vm6025
        %v6027 = vsel %vm6026, %v6018, %v6023
        %v6028 = vrsqrt.pop %v6006
        %v6029 = vmul.f32 %v6028, %v6006
        %v6030 = vmul.f32 %v6029, %v6028
        %v6031 = vmul.f32 0.5, %v6030
        %v6032 = vsub.f32 1.5, %v6031
        %v6033 = vmul.f32 %v6028, %v6032
        %vm6034 = vweird.f32 %v6006
        %vm6035 = vweird.f32 %v6028
        %vm6036 = vmor %vm6034, %vm6035
        %v6037 = vsel %vm6036, %v6028, %v6033
        %v6038 = vrsqrt.pop %v6007
        %v6039 = vmul.f32 %v6038, %v6007
        %v6040 = vmul.f32 %v6039, %v6038
        %v6041 = vmul.f32 0.5, %v6040
        %v6042 = vsub.f32 1.5, %v6041
        %v6043 = vmul.f32 %v6038, %v6042
        %vm6044 = vweird.f32 %v6007
        %vm6045 = vweird.f32 %v6038
        %vm6046 = vmor %vm6044, %vm6045
        %v6047 = vsel %vm6046, %v6038, %v6043
        %v6048 = vmul.f32 %v5984, %v6017
        %v6049 = vmul.f32 %v5985, %v6027
        %v6050 = vmul.f32 %v5986, %v6037
        %v6051 = vmul.f32 %v5987, %v6047
        %v6052 = vmul.f32 %v6048, %v5970
        %v6053 = vmul.f32 %v6049, %v5970
        %v6054 = vmul.f32 %v6050, %v5970
        %v6055 = vmul.f32 %v6051, %v5970
        %v6056 = vadd.f32 %v6052, %v5971
        %v6057 = vadd.f32 %v6053, %v5971
        %v6058 = vadd.f32 %v6054, %v5971
        %v6059 = vadd.f32 %v6055, %v5971
        %v6060 = vld [vmem:[%s6 + $0x27] ss:$0 sm:$0xff]
        %v6061 = vld [vmem:[%s6 + $0x30] ss:$0 sm:$0xff]
        %6062 = vadd.xlane.f32.xlu0 %v6056
        %v6063 = vpop.xlane.xlu0 %6062
        %6064 = vadd.xlane.f32.xlu0 %v6057
        %v6065 = vpop.xlane.xlu0 %6064
        %6066 = vadd.xlane.f32.xlu0 %v6058
        %v6067 = vpop.xlane.xlu0 %6066
        %6068 = vadd.xlane.f32.xlu0 %v6059
        %v6069 = vpop.xlane.xlu0 %6068
        %v6070 = vmul.f32 %v6063, %v5447
        %v6071 = vmul.f32 %v6065, %v5447
        %v6072 = vmul.f32 %v6067, %v5447
        %v6073 = vmul.f32 %v6069, %v5447
        %v6074 = vsub.f32 %v6056, %v6070
        %v6075 = vsub.f32 %v6057, %v6071
        %v6076 = vsub.f32 %v6058, %v6072
        %v6077 = vsub.f32 %v6059, %v6073
        %v6078 = vmul.f32 %v6074, %v6074
        %v6079 = vmul.f32 %v6075, %v6075
        %v6080 = vmul.f32 %v6076, %v6076
        %v6081 = vmul.f32 %v6077, %v6077
        %6082 = vadd.xlane.f32.xlu0 %v6078
        %v6083 = vpop.xlane.xlu0 %6082
        %6084 = vadd.xlane.f32.xlu0 %v6079
        %v6085 = vpop.xlane.xlu0 %6084
        %6086 = vadd.xlane.f32.xlu0 %v6080
        %v6087 = vpop.xlane.xlu0 %6086
        %6088 = vadd.xlane.f32.xlu0 %v6081
        %v6089 = vpop.xlane.xlu0 %6088
        %v6090 = vmul.f32 %v6083, %v5447
        %v6091 = vmul.f32 %v6085, %v5447
        %v6092 = vmul.f32 %v6087, %v5447
        %v6093 = vmul.f32 %v6089, %v5447
        %v6094 = vadd.f32 %v6090, 1e-05
        %v6095 = vadd.f32 %v6091, 1e-05
        %v6096 = vadd.f32 %v6092, 1e-05
        %v6097 = vadd.f32 %v6093, 1e-05
        %v6098 = vrsqrt.pop %v6094
        %v6099 = vmul.f32 %v6098, %v6094
        %v6100 = vmul.f32 %v6099, %v6098
        %v6101 = vmul.f32 0.5, %v6100
        %v6102 = vsub.f32 1.5, %v6101
        %v6103 = vmul.f32 %v6098, %v6102
        %vm6104 = vweird.f32 %v6094
        %vm6105 = vweird.f32 %v6098
        %vm6106 = vmor %vm6104, %vm6105
        %v6107 = vsel %vm6106, %v6098, %v6103
        %v6108 = vrsqrt.pop %v6095
        %v6109 = vmul.f32 %v6108, %v6095
        %v6110 = vmul.f32 %v6109, %v6108
        %v6111 = vmul.f32 0.5, %v6110
        %v6112 = vsub.f32 1.5, %v6111
        %v6113 = vmul.f32 %v6108, %v6112
        %vm6114 = vweird.f32 %v6095
        %vm6115 = vweird.f32 %v6108
        %vm6116 = vmor %vm6114, %vm6115
        %v6117 = vsel %vm6116, %v6108, %v6113
        %v6118 = vrsqrt.pop %v6096
        %v6119 = vmul.f32 %v6118, %v6096
        %v6120 = vmul.f32 %v6119, %v6118
        %v6121 = vmul.f32 0.5, %v6120
        %v6122 = vsub.f32 1.5, %v6121
        %v6123 = vmul.f32 %v6118, %v6122
        %vm6124 = vweird.f32 %v6096
        %vm6125 = vweird.f32 %v6118
        %vm6126 = vmor %vm6124, %vm6125
        %v6127 = vsel %vm6126, %v6118, %v6123
        %v6128 = vrsqrt.pop %v6097
        %v6129 = vmul.f32 %v6128, %v6097
        %v6130 = vmul.f32 %v6129, %v6128
        %v6131 = vmul.f32 0.5, %v6130
        %v6132 = vsub.f32 1.5, %v6131
        %v6133 = vmul.f32 %v6128, %v6132
        %vm6134 = vweird.f32 %v6097
        %vm6135 = vweird.f32 %v6128
        %vm6136 = vmor %vm6134, %vm6135
        %v6137 = vsel %vm6136, %v6128, %v6133
        %v6138 = vmul.f32 %v6074, %v6107
        %v6139 = vmul.f32 %v6075, %v6117
        %v6140 = vmul.f32 %v6076, %v6127
        %v6141 = vmul.f32 %v6077, %v6137
        %v6142 = vmul.f32 %v6138, %v6060
        %v6143 = vmul.f32 %v6139, %v6060
        %v6144 = vmul.f32 %v6140, %v6060
        %v6145 = vmul.f32 %v6141, %v6060
        %v6146 = vadd.f32 %v6142, %v6061
        %v6147 = vadd.f32 %v6143, %v6061
        %v6148 = vadd.f32 %v6144, %v6061
        %v6149 = vadd.f32 %v6145, %v6061
        %v6150 = vld [vmem:[%s4 + $0xc8] sm:$0xf]
        %v6151 = vld [vmem:[%s4 + $0xcc] sm:$0xf]
        %v6152 = vld [vmem:[%s4 + $0xd0] sm:$0xf]
        %v6153 = vld [vmem:[%s4 + $0xd4] sm:$0xf]
        %v6154 = vld [vmem:[%s4 + $0xd8] sm:$0xf]
        %v6155 = vld [vmem:[%s4 + $0xdc] sm:$0xf]
        %v6156 = vld [vmem:[%s4 + $0xe0] sm:$0xf]
        %v6157 = vld [vmem:[%s4 + $0xe4] sm:$0xf]
        %v6158 = vld [vmem:[%s4 + $0xe8] sm:$0xf]
        %v6159 = vld [vmem:[%s4 + $0xec] sm:$0xf]
        %v6160 = vld [vmem:[%s4 + $0xf0] sm:$0xf]
        %v6161 = vld [vmem:[%s4 + $0xf4] sm:$0xf]
        %v6162 = vld [vmem:[%s4 + $0xf8] sm:$0xf]
        %v6163 = vld [vmem:[%s4 + $0xfc] sm:$0xf]
        %v6164 = vld [vmem:[%s4 + $0x100] sm:$0xf]
        %v6165 = vld [vmem:[%s4 + $0x104] sm:$0xf]
        %v6166 = vpack.c.bf16 %v6147, %v6146
        %v6167 = vpack.c.bf16 %v6149, %v6148
        %v6168 = vld [vmem:[%s6 + $0x31] ss:$0 sm:$0xff]
        %v6185 = vunpack.c.l.b16 %v6150
        %v6186 = vunpack.c.l.b16 %v6151
        %v6187 = vunpack.c.l.b16 %v6152
        %v6188 = vunpack.c.l.b16 %v6153
        %v6189 = vunpack.c.l.b16 %v6154
        %v6190 = vunpack.c.l.b16 %v6155
        %v6191 = vunpack.c.l.b16 %v6156
        %v6192 = vunpack.c.l.b16 %v6157
        %v6193 = vunpack.c.l.b16 %v6158
        %v6194 = vunpack.c.l.b16 %v6159
        %v6195 = vunpack.c.l.b16 %v6160
        %v6196 = vunpack.c.l.b16 %v6161
        %v6197 = vunpack.c.l.b16 %v6162
        %v6198 = vunpack.c.l.b16 %v6163
        %v6199 = vunpack.c.l.b16 %v6164
        %v6200 = vunpack.c.l.b16 %v6165
        %v6201 = vpack.c.b16 %v6186, %v6185
        %v6202 = vpack.c.b16 %v6188, %v6187
        %v6203 = vpack.c.b16 %v6190, %v6189
        %v6204 = vpack.c.b16 %v6192, %v6191
        %v6205 = vpack.c.b16 %v6194, %v6193
        %v6206 = vpack.c.b16 %v6196, %v6195
        %v6207 = vpack.c.b16 %v6198, %v6197
        %v6208 = vpack.c.b16 %v6200, %v6199
        %6217 = vmatpush.bf16.msra.mxu0 %v6208
        %6218 = vmatpush.bf16.msra.mxu0 %v6207
        %6219 = vmatpush.bf16.msra.mxu0 %v6206
        %6220 = vmatpush.bf16.msra.mxu0 %v6205
        %6221 = vmatpush.bf16.msra.mxu0 %v6204
        %6222 = vmatpush.bf16.msra.mxu0 %v6203
        %6223 = vmatpush.bf16.msra.mxu0 %v6202
        %6224 = vmatpush.bf16.msra.mxu0 %v6201
        %6225 = vmatmul.bf16.gmra.mxu0 %v6166
        %v6226 = vpop.f32.mrf.mxu0
        %v6227 = vadd.f32 %v6168, %v6226
        %v6228 = vpop.f32.mrf.mxu0
        %v6229 = vadd.f32 %v6168, %v6228
        %6230 = vmatmul.bf16.gmra.mxu0 %v6167
        %v6231 = vpop.f32.mrf.mxu0
        %v6232 = vadd.f32 %v6168, %v6231
        %v6233 = vpop.f32.mrf.mxu0
        %v6234 = vadd.f32 %v6168, %v6233
        %6235 = vdwg.mxu0
        %v6236 = vld [vmem:[#allocation4] sm:$0xf]
        %v6237 = vld [vmem:[#allocation4 + $0x4] sm:$0xf]
        %v6238 = vld [vmem:[#allocation4 + $0x8] sm:$0xf]
        %v6239 = vld [vmem:[#allocation4 + $0xc] sm:$0xf]
        %v6240 = vld [vmem:[#allocation4 + $0x10] sm:$0xf]
        %v6241 = vld [vmem:[#allocation4 + $0x14] sm:$0xf]
        %v6242 = vld [vmem:[#allocation4 + $0x18] sm:$0xf]
        %v6243 = vld [vmem:[#allocation4 + $0x1c] sm:$0xf]
        %v6244 = vld [vmem:[#allocation4 + $0x20] sm:$0xf]
        %v6245 = vld [vmem:[#allocation4 + $0x24] sm:$0xf]
        %v6246 = vld [vmem:[#allocation4 + $0x28] sm:$0xf]
        %v6247 = vld [vmem:[#allocation4 + $0x2c] sm:$0xf]
        %v6248 = vld [vmem:[#allocation4 + $0x30] sm:$0xf]
        %v6249 = vld [vmem:[#allocation4 + $0x34] sm:$0xf]
        %v6250 = vld [vmem:[#allocation4 + $0x38] sm:$0xf]
        %v6251 = vld [vmem:[#allocation4 + $0x3c] sm:$0xf]
        %v6252 = vpack.c.bf16 %v5294, %v5293
        %v6253 = vpack.c.bf16 %v5296, %v5295
        %v6254 = vld [vmem:[#allocation4 + $0x40] sm:$0xf]
        %v6255 = vld [vmem:[#allocation4 + $0x44] sm:$0xf]
        %v6256 = vld [vmem:[#allocation4 + $0x48] sm:$0xf]
        %v6257 = vld [vmem:[#allocation4 + $0x4c] sm:$0xf]
        %v6258 = vld [vmem:[#allocation4 + $0x50] sm:$0xf]
        %v6259 = vld [vmem:[#allocation4 + $0x54] sm:$0xf]
        %v6260 = vld [vmem:[#allocation4 + $0x58] sm:$0xf]
        %v6261 = vld [vmem:[#allocation4 + $0x5c] sm:$0xf]
        %v6262 = vld [vmem:[#allocation4 + $0x60] sm:$0xf]
        %v6263 = vld [vmem:[#allocation4 + $0x64] sm:$0xf]
        %v6264 = vld [vmem:[#allocation4 + $0x68] sm:$0xf]
        %v6265 = vld [vmem:[#allocation4 + $0x6c] sm:$0xf]
        %v6266 = vld [vmem:[#allocation4 + $0x70] sm:$0xf]
        %v6267 = vld [vmem:[#allocation4 + $0x74] sm:$0xf]
        %v6268 = vld [vmem:[#allocation4 + $0x78] sm:$0xf]
        %v6269 = vld [vmem:[#allocation4 + $0x7c] sm:$0xf]
        %v6270 = vpack.c.bf16 %v6229, %v6227
        %v6271 = vpack.c.bf16 %v6234, %v6232
        %v6288 = vunpack.c.l.b16 %v6254
        %v6289 = vunpack.c.l.b16 %v6255
        %v6290 = vunpack.c.l.b16 %v6256
        %v6291 = vunpack.c.l.b16 %v6257
        %v6292 = vunpack.c.l.b16 %v6258
        %v6293 = vunpack.c.l.b16 %v6259
        %v6294 = vunpack.c.l.b16 %v6260
        %v6295 = vunpack.c.l.b16 %v6261
        %v6296 = vunpack.c.l.b16 %v6262
        %v6297 = vunpack.c.l.b16 %v6263
        %v6298 = vunpack.c.l.b16 %v6264
        %v6299 = vunpack.c.l.b16 %v6265
        %v6300 = vunpack.c.l.b16 %v6266
        %v6301 = vunpack.c.l.b16 %v6267
        %v6302 = vunpack.c.l.b16 %v6268
        %v6303 = vunpack.c.l.b16 %v6269
        %v6304 = vpack.c.b16 %v6289, %v6288
        %v6305 = vpack.c.b16 %v6291, %v6290
        %v6306 = vpack.c.b16 %v6293, %v6292
        %v6307 = vpack.c.b16 %v6295, %v6294
        %v6308 = vpack.c.b16 %v6297, %v6296
        %v6309 = vpack.c.b16 %v6299, %v6298
        %v6310 = vpack.c.b16 %v6301, %v6300
        %v6311 = vpack.c.b16 %v6303, %v6302
        %6320 = vmatpush.bf16.msra.mxu0 %v6311
        %6321 = vmatpush.bf16.msra.mxu0 %v6310
        %6322 = vmatpush.bf16.msra.mxu0 %v6309
        %6323 = vmatpush.bf16.msra.mxu0 %v6308
        %6324 = vmatpush.bf16.msra.mxu0 %v6307
        %6325 = vmatpush.bf16.msra.mxu0 %v6306
        %6326 = vmatpush.bf16.msra.mxu0 %v6305
        %6327 = vmatpush.bf16.msra.mxu0 %v6304
        %6328 = vmatmul.bf16.gmra.mxu0 %v6270
        %v6329 = vpop.f32.mrf.mxu0
        %v6330 = vadd.f32 0.0, %v6329
        %v6331 = vpop.f32.mrf.mxu0
        %v6332 = vadd.f32 0.0, %v6331
        %6333 = vmatmul.bf16.gmra.mxu0 %v6271
        %v6334 = vpop.f32.mrf.mxu0
        %v6335 = vadd.f32 0.0, %v6334
        %v6336 = vpop.f32.mrf.mxu0
        %v6337 = vadd.f32 0.0, %v6336
        %6338 = vdwg.mxu0
        %v6355 = vunpack.c.l.b16 %v6236
        %v6356 = vunpack.c.l.b16 %v6237
        %v6357 = vunpack.c.l.b16 %v6238
        %v6358 = vunpack.c.l.b16 %v6239
        %v6359 = vunpack.c.l.b16 %v6240
        %v6360 = vunpack.c.l.b16 %v6241
        %v6361 = vunpack.c.l.b16 %v6242
        %v6362 = vunpack.c.l.b16 %v6243
        %v6363 = vunpack.c.l.b16 %v6244
        %v6364 = vunpack.c.l.b16 %v6245
        %v6365 = vunpack.c.l.b16 %v6246
        %v6366 = vunpack.c.l.b16 %v6247
        %v6367 = vunpack.c.l.b16 %v6248
        %v6368 = vunpack.c.l.b16 %v6249
        %v6369 = vunpack.c.l.b16 %v6250
        %v6370 = vunpack.c.l.b16 %v6251
        %v6371 = vpack.c.b16 %v6356, %v6355
        %v6372 = vpack.c.b16 %v6358, %v6357
        %v6373 = vpack.c.b16 %v6360, %v6359
        %v6374 = vpack.c.b16 %v6362, %v6361
        %v6375 = vpack.c.b16 %v6364, %v6363
        %v6376 = vpack.c.b16 %v6366, %v6365
        %v6377 = vpack.c.b16 %v6368, %v6367
        %v6378 = vpack.c.b16 %v6370, %v6369
        %6387 = vmatpush.bf16.msra.mxu0 %v6378
        %6388 = vmatpush.bf16.msra.mxu0 %v6377
        %6389 = vmatpush.bf16.msra.mxu0 %v6376
        %6390 = vmatpush.bf16.msra.mxu0 %v6375
        %6391 = vmatpush.bf16.msra.mxu0 %v6374
        %6392 = vmatpush.bf16.msra.mxu0 %v6373
        %6393 = vmatpush.bf16.msra.mxu0 %v6372
        %6394 = vmatpush.bf16.msra.mxu0 %v6371
        %6395 = vmatmul.bf16.gmra.mxu0 %v6252
        %v6396 = vpop.f32.mrf.mxu0
        %v6397 = vadd.f32 %v6330, %v6396
        %v6398 = vpop.f32.mrf.mxu0
        %v6399 = vadd.f32 %v6332, %v6398
        %6400 = vmatmul.bf16.gmra.mxu0 %v6253
        %v6401 = vpop.f32.mrf.mxu0
        %v6402 = vadd.f32 %v6335, %v6401
        %v6403 = vpop.f32.mrf.mxu0
        %v6404 = vadd.f32 %v6337, %v6403
        %6405 = vdwg.mxu0
        %v6406 = vmul.f32 %v5293, %v6227
        %v6407 = vmul.f32 %v5294, %v6229
        %v6408 = vmul.f32 %v5295, %v6232
        %v6409 = vmul.f32 %v5296, %v6234
        %v6410 = vld [vmem:[#allocation4 + $0x80] sm:$0xf]
        %v6411 = vld [vmem:[#allocation4 + $0x84] sm:$0xf]
        %v6412 = vld [vmem:[#allocation4 + $0x88] sm:$0xf]
        %v6413 = vld [vmem:[#allocation4 + $0x8c] sm:$0xf]
        %v6414 = vld [vmem:[#allocation4 + $0x90] sm:$0xf]
        %v6415 = vld [vmem:[#allocation4 + $0x94] sm:$0xf]
        %v6416 = vld [vmem:[#allocation4 + $0x98] sm:$0xf]
        %v6417 = vld [vmem:[#allocation4 + $0x9c] sm:$0xf]
        %v6418 = vld [vmem:[#allocation4 + $0xa0] sm:$0xf]
        %v6419 = vld [vmem:[#allocation4 + $0xa4] sm:$0xf]
        %v6420 = vld [vmem:[#allocation4 + $0xa8] sm:$0xf]
        %v6421 = vld [vmem:[#allocation4 + $0xac] sm:$0xf]
        %v6422 = vld [vmem:[#allocation4 + $0xb0] sm:$0xf]
        %v6423 = vld [vmem:[#allocation4 + $0xb4] sm:$0xf]
        %v6424 = vld [vmem:[#allocation4 + $0xb8] sm:$0xf]
        %v6425 = vld [vmem:[#allocation4 + $0xbc] sm:$0xf]
        %v6426 = vpack.c.bf16 %v6407, %v6406
        %v6427 = vpack.c.bf16 %v6409, %v6408
        %v6444 = vunpack.c.l.b16 %v6410
        %v6445 = vunpack.c.l.b16 %v6411
        %v6446 = vunpack.c.l.b16 %v6412
        %v6447 = vunpack.c.l.b16 %v6413
        %v6448 = vunpack.c.l.b16 %v6414
        %v6449 = vunpack.c.l.b16 %v6415
        %v6450 = vunpack.c.l.b16 %v6416
        %v6451 = vunpack.c.l.b16 %v6417
        %v6452 = vunpack.c.l.b16 %v6418
        %v6453 = vunpack.c.l.b16 %v6419
        %v6454 = vunpack.c.l.b16 %v6420
        %v6455 = vunpack.c.l.b16 %v6421
        %v6456 = vunpack.c.l.b16 %v6422
        %v6457 = vunpack.c.l.b16 %v6423
        %v6458 = vunpack.c.l.b16 %v6424
        %v6459 = vunpack.c.l.b16 %v6425
        %v6460 = vpack.c.b16 %v6445, %v6444
        %v6461 = vpack.c.b16 %v6447, %v6446
        %v6462 = vpack.c.b16 %v6449, %v6448
        %v6463 = vpack.c.b16 %v6451, %v6450
        %v6464 = vpack.c.b16 %v6453, %v6452
        %v6465 = vpack.c.b16 %v6455, %v6454
        %v6466 = vpack.c.b16 %v6457, %v6456
        %v6467 = vpack.c.b16 %v6459, %v6458
        %6476 = vmatpush.bf16.msra.mxu0 %v6467
        %6477 = vmatpush.bf16.msra.mxu0 %v6466
        %6478 = vmatpush.bf16.msra.mxu0 %v6465
        %6479 = vmatpush.bf16.msra.mxu0 %v6464
        %6480 = vmatpush.bf16.msra.mxu0 %v6463
        %6481 = vmatpush.bf16.msra.mxu0 %v6462
        %6482 = vmatpush.bf16.msra.mxu0 %v6461
        %6483 = vmatpush.bf16.msra.mxu0 %v6460
        %6484 = vmatmul.bf16.gmra.mxu0 %v6426
        %v6485 = vpop.f32.mrf.mxu0
        %v6486 = vadd.f32 0.0, %v6485
        %v6487 = vpop.f32.mrf.mxu0
        %v6488 = vadd.f32 0.0, %v6487
        %6489 = vmatmul.bf16.gmra.mxu0 %v6427
        %v6490 = vpop.f32.mrf.mxu0
        %v6491 = vadd.f32 0.0, %v6490
        %v6492 = vpop.f32.mrf.mxu0
        %v6493 = vadd.f32 0.0, %v6492
        %6494 = vdwg.mxu0
        %v6495 = vadd.f32 %v6397, %v6486
        %v6496 = vadd.f32 %v6399, %v6488
        %v6497 = vadd.f32 %v6402, %v6491
        %v6498 = vadd.f32 %v6404, %v6493
        %v6499 = vld [vmem:[%s6 + $0x32] ss:$0 sm:$0xff]
        %v6500 = vadd.f32 %v6495, %v6499
        %v6501 = vadd.f32 %v6496, %v6499
        %v6502 = vadd.f32 %v6497, %v6499
        %v6503 = vadd.f32 %v6498, %v6499
        %v6504 = vld [vmem:[#allocation4 + $0xc0] sm:$0xf]
        %v6505 = vld [vmem:[#allocation4 + $0xc4] sm:$0xf]
        %v6506 = vld [vmem:[#allocation4 + $0xc8] sm:$0xf]
        %v6507 = vld [vmem:[#allocation4 + $0xcc] sm:$0xf]
        %v6508 = vld [vmem:[#allocation4 + $0xd0] sm:$0xf]
        %v6509 = vld [vmem:[#allocation4 + $0xd4] sm:$0xf]
        %v6510 = vld [vmem:[#allocation4 + $0xd8] sm:$0xf]
        %v6511 = vld [vmem:[#allocation4 + $0xdc] sm:$0xf]
        %v6512 = vld [vmem:[#allocation4 + $0xe0] sm:$0xf]
        %v6513 = vld [vmem:[#allocation4 + $0xe4] sm:$0xf]
        %v6514 = vld [vmem:[#allocation4 + $0xe8] sm:$0xf]
        %v6515 = vld [vmem:[#allocation4 + $0xec] sm:$0xf]
        %v6516 = vld [vmem:[#allocation4 + $0xf0] sm:$0xf]
        %v6517 = vld [vmem:[#allocation4 + $0xf4] sm:$0xf]
        %v6518 = vld [vmem:[#allocation4 + $0xf8] sm:$0xf]
        %v6519 = vld [vmem:[#allocation4 + $0xfc] sm:$0xf]
        %v6520 = vpack.c.bf16 %v6501, %v6500
        %v6521 = vpack.c.bf16 %v6503, %v6502
        %v6522 = vld [vmem:[%s6 + $0x33] ss:$0 sm:$0xff]
        %v6539 = vunpack.c.l.b16 %v6504
        %v6540 = vunpack.c.l.b16 %v6505
        %v6541 = vunpack.c.l.b16 %v6506
        %v6542 = vunpack.c.l.b16 %v6507
        %v6543 = vunpack.c.l.b16 %v6508
        %v6544 = vunpack.c.l.b16 %v6509
        %v6545 = vunpack.c.l.b16 %v6510
        %v6546 = vunpack.c.l.b16 %v6511
        %v6547 = vunpack.c.l.b16 %v6512
        %v6548 = vunpack.c.l.b16 %v6513
        %v6549 = vunpack.c.l.b16 %v6514
        %v6550 = vunpack.c.l.b16 %v6515
        %v6551 = vunpack.c.l.b16 %v6516
        %v6552 = vunpack.c.l.b16 %v6517
        %v6553 = vunpack.c.l.b16 %v6518
        %v6554 = vunpack.c.l.b16 %v6519
        %v6555 = vpack.c.b16 %v6540, %v6539
        %v6556 = vpack.c.b16 %v6542, %v6541
        %v6557 = vpack.c.b16 %v6544, %v6543
        %v6558 = vpack.c.b16 %v6546, %v6545
        %v6559 = vpack.c.b16 %v6548, %v6547
        %v6560 = vpack.c.b16 %v6550, %v6549
        %v6561 = vpack.c.b16 %v6552, %v6551
        %v6562 = vpack.c.b16 %v6554, %v6553
        %6571 = vmatpush.bf16.msra.mxu0 %v6562
        %6572 = vmatpush.bf16.msra.mxu0 %v6561
        %6573 = vmatpush.bf16.msra.mxu0 %v6560
        %6574 = vmatpush.bf16.msra.mxu0 %v6559
        %6575 = vmatpush.bf16.msra.mxu0 %v6558
        %6576 = vmatpush.bf16.msra.mxu0 %v6557
        %6577 = vmatpush.bf16.msra.mxu0 %v6556
        %6578 = vmatpush.bf16.msra.mxu0 %v6555
        %6579 = vmatmul.bf16.gmra.mxu0 %v6520
        %v6580 = vpop.f32.mrf.mxu0
        %v6581 = vadd.f32 %v6522, %v6580
        %v6582 = vpop.f32.mrf.mxu0
        %v6583 = vadd.f32 %v6522, %v6582
        %6584 = vmatmul.bf16.gmra.mxu0 %v6521
        %v6585 = vpop.f32.mrf.mxu0
        %v6586 = vadd.f32 %v6522, %v6585
        %v6587 = vpop.f32.mrf.mxu0
        %v6588 = vadd.f32 %v6522, %v6587
        %6589 = vdwg.mxu0
        %v6590 = vld [vmem:[%s6 + $0x34] ss:$0 sm:$0xff]
        %v6591 = vld [vmem:[%s6 + $0x35] ss:$0 sm:$0xff]
        %6592 = vadd.xlane.f32.xlu0 %v6581
        %v6593 = vpop.xlane.xlu0 %6592
        %6594 = vadd.xlane.f32.xlu0 %v6583
        %v6595 = vpop.xlane.xlu0 %6594
        %6596 = vadd.xlane.f32.xlu0 %v6586
        %v6597 = vpop.xlane.xlu0 %6596
        %6598 = vadd.xlane.f32.xlu0 %v6588
        %v6599 = vpop.xlane.xlu0 %6598
        %v6600 = vmul.f32 %v6593, %v5447
        %v6601 = vmul.f32 %v6595, %v5447
        %v6602 = vmul.f32 %v6597, %v5447
        %v6603 = vmul.f32 %v6599, %v5447
        %v6604 = vsub.f32 %v6581, %v6600
        %v6605 = vsub.f32 %v6583, %v6601
        %v6606 = vsub.f32 %v6586, %v6602
        %v6607 = vsub.f32 %v6588, %v6603
        %v6608 = vmul.f32 %v6604, %v6604
        %v6609 = vmul.f32 %v6605, %v6605
        %v6610 = vmul.f32 %v6606, %v6606
        %v6611 = vmul.f32 %v6607, %v6607
        %6612 = vadd.xlane.f32.xlu0 %v6608
        %v6613 = vpop.xlane.xlu0 %6612
        %6614 = vadd.xlane.f32.xlu0 %v6609
        %v6615 = vpop.xlane.xlu0 %6614
        %6616 = vadd.xlane.f32.xlu0 %v6610
        %v6617 = vpop.xlane.xlu0 %6616
        %6618 = vadd.xlane.f32.xlu0 %v6611
        %v6619 = vpop.xlane.xlu0 %6618
        %v6620 = vmul.f32 %v6613, %v5447
        %v6621 = vmul.f32 %v6615, %v5447
        %v6622 = vmul.f32 %v6617, %v5447
        %v6623 = vmul.f32 %v6619, %v5447
        %v6624 = vadd.f32 %v6620, 1e-05
        %v6625 = vadd.f32 %v6621, 1e-05
        %v6626 = vadd.f32 %v6622, 1e-05
        %v6627 = vadd.f32 %v6623, 1e-05
        %v6628 = vrsqrt.pop %v6624
        %v6629 = vmul.f32 %v6628, %v6624
        %v6630 = vmul.f32 %v6629, %v6628
        %v6631 = vmul.f32 0.5, %v6630
        %v6632 = vsub.f32 1.5, %v6631
        %v6633 = vmul.f32 %v6628, %v6632
        %vm6634 = vweird.f32 %v6624
        %vm6635 = vweird.f32 %v6628
        %vm6636 = vmor %vm6634, %vm6635
        %v6637 = vsel %vm6636, %v6628, %v6633
        %v6638 = vrsqrt.pop %v6625
        %v6639 = vmul.f32 %v6638, %v6625
        %v6640 = vmul.f32 %v6639, %v6638
        %v6641 = vmul.f32 0.5, %v6640
        %v6642 = vsub.f32 1.5, %v6641
        %v6643 = vmul.f32 %v6638, %v6642
        %vm6644 = vweird.f32 %v6625
        %vm6645 = vweird.f32 %v6638
        %vm6646 = vmor %vm6644, %vm6645
        %v6647 = vsel %vm6646, %v6638, %v6643
        %v6648 = vrsqrt.pop %v6626
        %v6649 = vmul.f32 %v6648, %v6626
        %v6650 = vmul.f32 %v6649, %v6648
        %v6651 = vmul.f32 0.5, %v6650
        %v6652 = vsub.f32 1.5, %v6651
        %v6653 = vmul.f32 %v6648, %v6652
        %vm6654 = vweird.f32 %v6626
        %vm6655 = vweird.f32 %v6648
        %vm6656 = vmor %vm6654, %vm6655
        %v6657 = vsel %vm6656, %v6648, %v6653
        %v6658 = vrsqrt.pop %v6627
        %v6659 = vmul.f32 %v6658, %v6627
        %v6660 = vmul.f32 %v6659, %v6658
        %v6661 = vmul.f32 0.5, %v6660
        %v6662 = vsub.f32 1.5, %v6661
        %v6663 = vmul.f32 %v6658, %v6662
        %vm6664 = vweird.f32 %v6627
        %vm6665 = vweird.f32 %v6658
        %vm6666 = vmor %vm6664, %vm6665
        %v6667 = vsel %vm6666, %v6658, %v6663
        %v6668 = vmul.f32 %v6604, %v6637
        %v6669 = vmul.f32 %v6605, %v6647
        %v6670 = vmul.f32 %v6606, %v6657
        %v6671 = vmul.f32 %v6607, %v6667
        %v6672 = vmul.f32 %v6668, %v6590
        %v6673 = vmul.f32 %v6669, %v6590
        %v6674 = vmul.f32 %v6670, %v6590
        %v6675 = vmul.f32 %v6671, %v6590
        %v6676 = vadd.f32 %v6672, %v6591
        %v6677 = vadd.f32 %v6673, %v6591
        %v6678 = vadd.f32 %v6674, %v6591
        %v6679 = vadd.f32 %v6675, %v6591
        %vm6680 = vcmp.gt.f32.partialorder %v6676, 0.0
        %vm6681 = vcmp.gt.f32.partialorder %v6677, 0.0
        %vm6682 = vcmp.gt.f32.partialorder %v6678, 0.0
        %vm6683 = vcmp.gt.f32.partialorder %v6679, 0.0
        %v6684 = vmul.f32 %v6676, 0.01
        %v6685 = vmul.f32 %v6677, 0.01
        %v6686 = vmul.f32 %v6678, 0.01
        %v6687 = vmul.f32 %v6679, 0.01
        %v6688 = vsel %vm6680, %v6676, %v6684
        %v6689 = vsel %vm6681, %v6677, %v6685
        %v6690 = vsel %vm6682, %v6678, %v6686
        %v6691 = vsel %vm6683, %v6679, %v6687
        %v6692 = vld [vmem:[#allocation4 + $0x100] sm:$0xf]
        %v6693 = vld [vmem:[#allocation4 + $0x104] sm:$0xf]
        %v6694 = vld [vmem:[#allocation4 + $0x108] sm:$0xf]
        %v6695 = vld [vmem:[#allocation4 + $0x10c] sm:$0xf]
        %v6696 = vld [vmem:[#allocation4 + $0x110] sm:$0xf]
        %v6697 = vld [vmem:[#allocation4 + $0x114] sm:$0xf]
        %v6698 = vld [vmem:[#allocation4 + $0x118] sm:$0xf]
        %v6699 = vld [vmem:[#allocation4 + $0x11c] sm:$0xf]
        %v6700 = vld [vmem:[#allocation4 + $0x120] sm:$0xf]
        %v6701 = vld [vmem:[#allocation4 + $0x124] sm:$0xf]
        %v6702 = vld [vmem:[#allocation4 + $0x128] sm:$0xf]
        %v6703 = vld [vmem:[#allocation4 + $0x12c] sm:$0xf]
        %v6704 = vld [vmem:[#allocation4 + $0x130] sm:$0xf]
        %v6705 = vld [vmem:[#allocation4 + $0x134] sm:$0xf]
        %v6706 = vld [vmem:[#allocation4 + $0x138] sm:$0xf]
        %v6707 = vld [vmem:[#allocation4 + $0x13c] sm:$0xf]
        %v6708 = vpack.c.bf16 %v6689, %v6688
        %v6709 = vpack.c.bf16 %v6691, %v6690
        %v6710 = vld [vmem:[%s6 + $0x36] ss:$0 sm:$0xff]
        %v6727 = vunpack.c.l.b16 %v6692
        %v6728 = vunpack.c.l.b16 %v6693
        %v6729 = vunpack.c.l.b16 %v6694
        %v6730 = vunpack.c.l.b16 %v6695
        %v6731 = vunpack.c.l.b16 %v6696
        %v6732 = vunpack.c.l.b16 %v6697
        %v6733 = vunpack.c.l.b16 %v6698
        %v6734 = vunpack.c.l.b16 %v6699
        %v6735 = vunpack.c.l.b16 %v6700
        %v6736 = vunpack.c.l.b16 %v6701
        %v6737 = vunpack.c.l.b16 %v6702
        %v6738 = vunpack.c.l.b16 %v6703
        %v6739 = vunpack.c.l.b16 %v6704
        %v6740 = vunpack.c.l.b16 %v6705
        %v6741 = vunpack.c.l.b16 %v6706
        %v6742 = vunpack.c.l.b16 %v6707
        %v6743 = vpack.c.b16 %v6728, %v6727
        %v6744 = vpack.c.b16 %v6730, %v6729
        %v6745 = vpack.c.b16 %v6732, %v6731
        %v6746 = vpack.c.b16 %v6734, %v6733
        %v6747 = vpack.c.b16 %v6736, %v6735
        %v6748 = vpack.c.b16 %v6738, %v6737
        %v6749 = vpack.c.b16 %v6740, %v6739
        %v6750 = vpack.c.b16 %v6742, %v6741
        %6759 = vmatpush.bf16.msra.mxu0 %v6750
        %6760 = vmatpush.bf16.msra.mxu0 %v6749
        %6761 = vmatpush.bf16.msra.mxu0 %v6748
        %6762 = vmatpush.bf16.msra.mxu0 %v6747
        %6763 = vmatpush.bf16.msra.mxu0 %v6746
        %6764 = vmatpush.bf16.msra.mxu0 %v6745
        %6765 = vmatpush.bf16.msra.mxu0 %v6744
        %6766 = vmatpush.bf16.msra.mxu0 %v6743
        %6767 = vmatmul.bf16.gmra.mxu0 %v6708
        %v6768 = vpop.f32.mrf.mxu0
        %v6769 = vadd.f32 %v6710, %v6768
        %v6770 = vpop.f32.mrf.mxu0
        %v6771 = vadd.f32 %v6710, %v6770
        %6772 = vmatmul.bf16.gmra.mxu0 %v6709
        %v6773 = vpop.f32.mrf.mxu0
        %v6774 = vadd.f32 %v6710, %v6773
        %v6775 = vpop.f32.mrf.mxu0
        %v6776 = vadd.f32 %v6710, %v6775
        %6777 = vdwg.mxu0
        %v6778 = vld [vmem:[%s6 + $0x37] ss:$0 sm:$0xff]
        %v6779 = vld [vmem:[%s6 + $0x40] ss:$0 sm:$0xff]
        %6780 = vadd.xlane.f32.xlu0 %v6769
        %v6781 = vpop.xlane.xlu0 %6780
        %6782 = vadd.xlane.f32.xlu0 %v6771
        %v6783 = vpop.xlane.xlu0 %6782
        %6784 = vadd.xlane.f32.xlu0 %v6774
        %v6785 = vpop.xlane.xlu0 %6784
        %6786 = vadd.xlane.f32.xlu0 %v6776
        %v6787 = vpop.xlane.xlu0 %6786
        %v6788 = vmul.f32 %v6781, %v5447
        %v6789 = vmul.f32 %v6783, %v5447
        %v6790 = vmul.f32 %v6785, %v5447
        %v6791 = vmul.f32 %v6787, %v5447
        %v6792 = vsub.f32 %v6769, %v6788
        %v6793 = vsub.f32 %v6771, %v6789
        %v6794 = vsub.f32 %v6774, %v6790
        %v6795 = vsub.f32 %v6776, %v6791
        %v6796 = vmul.f32 %v6792, %v6792
        %v6797 = vmul.f32 %v6793, %v6793
        %v6798 = vmul.f32 %v6794, %v6794
        %v6799 = vmul.f32 %v6795, %v6795
        %6800 = vadd.xlane.f32.xlu0 %v6796
        %v6801 = vpop.xlane.xlu0 %6800
        %6802 = vadd.xlane.f32.xlu0 %v6797
        %v6803 = vpop.xlane.xlu0 %6802
        %6804 = vadd.xlane.f32.xlu0 %v6798
        %v6805 = vpop.xlane.xlu0 %6804
        %6806 = vadd.xlane.f32.xlu0 %v6799
        %v6807 = vpop.xlane.xlu0 %6806
        %v6808 = vmul.f32 %v6801, %v5447
        %v6809 = vmul.f32 %v6803, %v5447
        %v6810 = vmul.f32 %v6805, %v5447
        %v6811 = vmul.f32 %v6807, %v5447
        %v6812 = vadd.f32 %v6808, 1e-05
        %v6813 = vadd.f32 %v6809, 1e-05
        %v6814 = vadd.f32 %v6810, 1e-05
        %v6815 = vadd.f32 %v6811, 1e-05
        %v6816 = vrsqrt.pop %v6812
        %v6817 = vmul.f32 %v6816, %v6812
        %v6818 = vmul.f32 %v6817, %v6816
        %v6819 = vmul.f32 0.5, %v6818
        %v6820 = vsub.f32 1.5, %v6819
        %v6821 = vmul.f32 %v6816, %v6820
        %vm6822 = vweird.f32 %v6812
        %vm6823 = vweird.f32 %v6816
        %vm6824 = vmor %vm6822, %vm6823
        %v6825 = vsel %vm6824, %v6816, %v6821
        %v6826 = vrsqrt.pop %v6813
        %v6827 = vmul.f32 %v6826, %v6813
        %v6828 = vmul.f32 %v6827, %v6826
        %v6829 = vmul.f32 0.5, %v6828
        %v6830 = vsub.f32 1.5, %v6829
        %v6831 = vmul.f32 %v6826, %v6830
        %vm6832 = vweird.f32 %v6813
        %vm6833 = vweird.f32 %v6826
        %vm6834 = vmor %vm6832, %vm6833
        %v6835 = vsel %vm6834, %v6826, %v6831
        %v6836 = vrsqrt.pop %v6814
        %v6837 = vmul.f32 %v6836, %v6814
        %v6838 = vmul.f32 %v6837, %v6836
        %v6839 = vmul.f32 0.5, %v6838
        %v6840 = vsub.f32 1.5, %v6839
        %v6841 = vmul.f32 %v6836, %v6840
        %vm6842 = vweird.f32 %v6814
        %vm6843 = vweird.f32 %v6836
        %vm6844 = vmor %vm6842, %vm6843
        %v6845 = vsel %vm6844, %v6836, %v6841
        %v6846 = vrsqrt.pop %v6815
        %v6847 = vmul.f32 %v6846, %v6815
        %v6848 = vmul.f32 %v6847, %v6846
        %v6849 = vmul.f32 0.5, %v6848
        %v6850 = vsub.f32 1.5, %v6849
        %v6851 = vmul.f32 %v6846, %v6850
        %vm6852 = vweird.f32 %v6815
        %vm6853 = vweird.f32 %v6846
        %vm6854 = vmor %vm6852, %vm6853
        %v6855 = vsel %vm6854, %v6846, %v6851
        %v6856 = vmul.f32 %v6792, %v6825
        %v6857 = vmul.f32 %v6793, %v6835
        %v6858 = vmul.f32 %v6794, %v6845
        %v6859 = vmul.f32 %v6795, %v6855
        %v6860 = vmul.f32 %v6856, %v6778
        %v6861 = vmul.f32 %v6857, %v6778
        %v6862 = vmul.f32 %v6858, %v6778
        %v6863 = vmul.f32 %v6859, %v6778
        %v6864 = vadd.f32 %v6860, %v6779
        %v6865 = vadd.f32 %v6861, %v6779
        %v6866 = vadd.f32 %v6862, %v6779
        %v6867 = vadd.f32 %v6863, %v6779
        %vm6868 = vcmp.gt.f32.partialorder %v6864, 0.0
        %vm6869 = vcmp.gt.f32.partialorder %v6865, 0.0
        %vm6870 = vcmp.gt.f32.partialorder %v6866, 0.0
        %vm6871 = vcmp.gt.f32.partialorder %v6867, 0.0
        %v6872 = vmul.f32 %v6864, 0.01
        %v6873 = vmul.f32 %v6865, 0.01
        %v6874 = vmul.f32 %v6866, 0.01
        %v6875 = vmul.f32 %v6867, 0.01
        %v6876 = vsel %vm6868, %v6864, %v6872
        %v6877 = vsel %vm6869, %v6865, %v6873
        %v6878 = vsel %vm6870, %v6866, %v6874
        %v6879 = vsel %vm6871, %v6867, %v6875
        %v6880 = vld [vmem:[#allocation4 + $0x140] sm:$0xf]
        %v6881 = vld [vmem:[#allocation4 + $0x144] sm:$0xf]
        %v6882 = vld [vmem:[#allocation4 + $0x148] sm:$0xf]
        %v6883 = vld [vmem:[#allocation4 + $0x14c] sm:$0xf]
        %v6884 = vld [vmem:[#allocation4 + $0x150] sm:$0xf]
        %v6885 = vld [vmem:[#allocation4 + $0x154] sm:$0xf]
        %v6886 = vld [vmem:[#allocation4 + $0x158] sm:$0xf]
        %v6887 = vld [vmem:[#allocation4 + $0x15c] sm:$0xf]
        %v6888 = vld [vmem:[#allocation4 + $0x160] sm:$0xf]
        %v6889 = vld [vmem:[#allocation4 + $0x164] sm:$0xf]
        %v6890 = vld [vmem:[#allocation4 + $0x168] sm:$0xf]
        %v6891 = vld [vmem:[#allocation4 + $0x16c] sm:$0xf]
        %v6892 = vld [vmem:[#allocation4 + $0x170] sm:$0xf]
        %v6893 = vld [vmem:[#allocation4 + $0x174] sm:$0xf]
        %v6894 = vld [vmem:[#allocation4 + $0x178] sm:$0xf]
        %v6895 = vld [vmem:[#allocation4 + $0x17c] sm:$0xf]
        %v6896 = vpack.c.bf16 %v6877, %v6876
        %v6897 = vpack.c.bf16 %v6879, %v6878
        %v6898 = vld [vmem:[%s6 + $0x41] ss:$0 sm:$0xff]
        %v6915 = vunpack.c.l.b16 %v6880
        %v6916 = vunpack.c.l.b16 %v6881
        %v6917 = vunpack.c.l.b16 %v6882
        %v6918 = vunpack.c.l.b16 %v6883
        %v6919 = vunpack.c.l.b16 %v6884
        %v6920 = vunpack.c.l.b16 %v6885
        %v6921 = vunpack.c.l.b16 %v6886
        %v6922 = vunpack.c.l.b16 %v6887
        %v6923 = vunpack.c.l.b16 %v6888
        %v6924 = vunpack.c.l.b16 %v6889
        %v6925 = vunpack.c.l.b16 %v6890
        %v6926 = vunpack.c.l.b16 %v6891
        %v6927 = vunpack.c.l.b16 %v6892
        %v6928 = vunpack.c.l.b16 %v6893
        %v6929 = vunpack.c.l.b16 %v6894
        %v6930 = vunpack.c.l.b16 %v6895
        %v6931 = vpack.c.b16 %v6916, %v6915
        %v6932 = vpack.c.b16 %v6918, %v6917
        %v6933 = vpack.c.b16 %v6920, %v6919
        %v6934 = vpack.c.b16 %v6922, %v6921
        %v6935 = vpack.c.b16 %v6924, %v6923
        %v6936 = vpack.c.b16 %v6926, %v6925
        %v6937 = vpack.c.b16 %v6928, %v6927
        %v6938 = vpack.c.b16 %v6930, %v6929
        %6947 = vmatpush.bf16.msra.mxu0 %v6938
        %6948 = vmatpush.bf16.msra.mxu0 %v6937
        %6949 = vmatpush.bf16.msra.mxu0 %v6936
        %6950 = vmatpush.bf16.msra.mxu0 %v6935
        %6951 = vmatpush.bf16.msra.mxu0 %v6934
        %6952 = vmatpush.bf16.msra.mxu0 %v6933
        %6953 = vmatpush.bf16.msra.mxu0 %v6932
        %6954 = vmatpush.bf16.msra.mxu0 %v6931
        %6955 = vmatmul.bf16.gmra.mxu0 %v6896
        %v6956 = vpop.f32.mrf.mxu0
        %v6957 = vadd.f32 %v6898, %v6956
        %v6958 = vpop.f32.mrf.mxu0
        %v6959 = vadd.f32 %v6898, %v6958
        %6960 = vmatmul.bf16.gmra.mxu0 %v6897
        %v6961 = vpop.f32.mrf.mxu0
        %v6962 = vadd.f32 %v6898, %v6961
        %v6963 = vpop.f32.mrf.mxu0
        %v6964 = vadd.f32 %v6898, %v6963
        %6965 = vdwg.mxu0
        %v6966 = vld [vmem:[%s6 + $0x42] ss:$0 sm:$0xff]
        %v6967 = vld [vmem:[%s6 + $0x43] ss:$0 sm:$0xff]
        %6968 = vadd.xlane.f32.xlu0 %v6957
        %v6969 = vpop.xlane.xlu0 %6968
        %6970 = vadd.xlane.f32.xlu0 %v6959
        %v6971 = vpop.xlane.xlu0 %6970
        %6972 = vadd.xlane.f32.xlu0 %v6962
        %v6973 = vpop.xlane.xlu0 %6972
        %6974 = vadd.xlane.f32.xlu0 %v6964
        %v6975 = vpop.xlane.xlu0 %6974
        %v6976 = vmul.f32 %v6969, %v5447
        %v6977 = vmul.f32 %v6971, %v5447
        %v6978 = vmul.f32 %v6973, %v5447
        %v6979 = vmul.f32 %v6975, %v5447
        %v6980 = vsub.f32 %v6957, %v6976
        %v6981 = vsub.f32 %v6959, %v6977
        %v6982 = vsub.f32 %v6962, %v6978
        %v6983 = vsub.f32 %v6964, %v6979
        %v6984 = vmul.f32 %v6980, %v6980
        %v6985 = vmul.f32 %v6981, %v6981
        %v6986 = vmul.f32 %v6982, %v6982
        %v6987 = vmul.f32 %v6983, %v6983
        %6988 = vadd.xlane.f32.xlu0 %v6984
        %v6989 = vpop.xlane.xlu0 %6988
        %6990 = vadd.xlane.f32.xlu0 %v6985
        %v6991 = vpop.xlane.xlu0 %6990
        %6992 = vadd.xlane.f32.xlu0 %v6986
        %v6993 = vpop.xlane.xlu0 %6992
        %6994 = vadd.xlane.f32.xlu0 %v6987
        %v6995 = vpop.xlane.xlu0 %6994
        %v6996 = vmul.f32 %v6989, %v5447
        %v6997 = vmul.f32 %v6991, %v5447
        %v6998 = vmul.f32 %v6993, %v5447
        %v6999 = vmul.f32 %v6995, %v5447
        %v7000 = vadd.f32 %v6996, 1e-05
        %v7001 = vadd.f32 %v6997, 1e-05
        %v7002 = vadd.f32 %v6998, 1e-05
        %v7003 = vadd.f32 %v6999, 1e-05
        %v7004 = vrsqrt.pop %v7000
        %v7005 = vmul.f32 %v7004, %v7000
        %v7006 = vmul.f32 %v7005, %v7004
        %v7007 = vmul.f32 0.5, %v7006
        %v7008 = vsub.f32 1.5, %v7007
        %v7009 = vmul.f32 %v7004, %v7008
        %vm7010 = vweird.f32 %v7000
        %vm7011 = vweird.f32 %v7004
        %vm7012 = vmor %vm7010, %vm7011
        %v7013 = vsel %vm7012, %v7004, %v7009
        %v7014 = vrsqrt.pop %v7001
        %v7015 = vmul.f32 %v7014, %v7001
        %v7016 = vmul.f32 %v7015, %v7014
        %v7017 = vmul.f32 0.5, %v7016
        %v7018 = vsub.f32 1.5, %v7017
        %v7019 = vmul.f32 %v7014, %v7018
        %vm7020 = vweird.f32 %v7001
        %vm7021 = vweird.f32 %v7014
        %vm7022 = vmor %vm7020, %vm7021
        %v7023 = vsel %vm7022, %v7014, %v7019
        %v7024 = vrsqrt.pop %v7002
        %v7025 = vmul.f32 %v7024, %v7002
        %v7026 = vmul.f32 %v7025, %v7024
        %v7027 = vmul.f32 0.5, %v7026
        %v7028 = vsub.f32 1.5, %v7027
        %v7029 = vmul.f32 %v7024, %v7028
        %vm7030 = vweird.f32 %v7002
        %vm7031 = vweird.f32 %v7024
        %vm7032 = vmor %vm7030, %vm7031
        %v7033 = vsel %vm7032, %v7024, %v7029
        %v7034 = vrsqrt.pop %v7003
        %v7035 = vmul.f32 %v7034, %v7003
        %v7036 = vmul.f32 %v7035, %v7034
        %v7037 = vmul.f32 0.5, %v7036
        %v7038 = vsub.f32 1.5, %v7037
        %v7039 = vmul.f32 %v7034, %v7038
        %vm7040 = vweird.f32 %v7003
        %vm7041 = vweird.f32 %v7034
        %vm7042 = vmor %vm7040, %vm7041
        %v7043 = vsel %vm7042, %v7034, %v7039
        %v7044 = vmul.f32 %v6980, %v7013
        %v7045 = vmul.f32 %v6981, %v7023
        %v7046 = vmul.f32 %v6982, %v7033
        %v7047 = vmul.f32 %v6983, %v7043
        %v7048 = vmul.f32 %v7044, %v6966
        %v7049 = vmul.f32 %v7045, %v6966
        %v7050 = vmul.f32 %v7046, %v6966
        %v7051 = vmul.f32 %v7047, %v6966
        %v7052 = vadd.f32 %v7048, %v6967
        %v7053 = vadd.f32 %v7049, %v6967
        %v7054 = vadd.f32 %v7050, %v6967
        %v7055 = vadd.f32 %v7051, %v6967
        %vm7056 = vcmp.gt.f32.partialorder %v7052, 0.0
        %vm7057 = vcmp.gt.f32.partialorder %v7053, 0.0
        %vm7058 = vcmp.gt.f32.partialorder %v7054, 0.0
        %vm7059 = vcmp.gt.f32.partialorder %v7055, 0.0
        %v7060 = vmul.f32 %v7052, 0.01
        %v7061 = vmul.f32 %v7053, 0.01
        %v7062 = vmul.f32 %v7054, 0.01
        %v7063 = vmul.f32 %v7055, 0.01
        %v7064 = vsel %vm7056, %v7052, %v7060
        %v7065 = vsel %vm7057, %v7053, %v7061
        %v7066 = vsel %vm7058, %v7054, %v7062
        %v7067 = vsel %vm7059, %v7055, %v7063
        %v7068 = vld [vmem:[#allocation4 + $0x180] sm:$0xf]
        %v7069 = vld [vmem:[#allocation4 + $0x184] sm:$0xf]
        %v7070 = vld [vmem:[#allocation4 + $0x188] sm:$0xf]
        %v7071 = vld [vmem:[#allocation4 + $0x18c] sm:$0xf]
        %v7072 = vld [vmem:[#allocation4 + $0x190] sm:$0xf]
        %v7073 = vld [vmem:[#allocation4 + $0x194] sm:$0xf]
        %v7074 = vld [vmem:[#allocation4 + $0x198] sm:$0xf]
        %v7075 = vld [vmem:[#allocation4 + $0x19c] sm:$0xf]
        %v7076 = vld [vmem:[#allocation4 + $0x1a0] sm:$0xf]
        %v7077 = vld [vmem:[#allocation4 + $0x1a4] sm:$0xf]
        %v7078 = vld [vmem:[#allocation4 + $0x1a8] sm:$0xf]
        %v7079 = vld [vmem:[#allocation4 + $0x1ac] sm:$0xf]
        %v7080 = vld [vmem:[#allocation4 + $0x1b0] sm:$0xf]
        %v7081 = vld [vmem:[#allocation4 + $0x1b4] sm:$0xf]
        %v7082 = vld [vmem:[#allocation4 + $0x1b8] sm:$0xf]
        %v7083 = vld [vmem:[#allocation4 + $0x1bc] sm:$0xf]
        %v7084 = vpack.c.bf16 %v7065, %v7064
        %v7085 = vpack.c.bf16 %v7067, %v7066
        %v7086 = vld [vmem:[%s6 + $0x44] ss:$0 sm:$0xff]
        %v7103 = vunpack.c.l.b16 %v7068
        %v7104 = vunpack.c.l.b16 %v7069
        %v7105 = vunpack.c.l.b16 %v7070
        %v7106 = vunpack.c.l.b16 %v7071
        %v7107 = vunpack.c.l.b16 %v7072
        %v7108 = vunpack.c.l.b16 %v7073
        %v7109 = vunpack.c.l.b16 %v7074
        %v7110 = vunpack.c.l.b16 %v7075
        %v7111 = vunpack.c.l.b16 %v7076
        %v7112 = vunpack.c.l.b16 %v7077
        %v7113 = vunpack.c.l.b16 %v7078
        %v7114 = vunpack.c.l.b16 %v7079
        %v7115 = vunpack.c.l.b16 %v7080
        %v7116 = vunpack.c.l.b16 %v7081
        %v7117 = vunpack.c.l.b16 %v7082
        %v7118 = vunpack.c.l.b16 %v7083
        %v7119 = vpack.c.b16 %v7104, %v7103
        %v7120 = vpack.c.b16 %v7106, %v7105
        %v7121 = vpack.c.b16 %v7108, %v7107
        %v7122 = vpack.c.b16 %v7110, %v7109
        %v7123 = vpack.c.b16 %v7112, %v7111
        %v7124 = vpack.c.b16 %v7114, %v7113
        %v7125 = vpack.c.b16 %v7116, %v7115
        %v7126 = vpack.c.b16 %v7118, %v7117
        %7135 = vmatpush.bf16.msra.mxu0 %v7126
        %7136 = vmatpush.bf16.msra.mxu0 %v7125
        %7137 = vmatpush.bf16.msra.mxu0 %v7124
        %7138 = vmatpush.bf16.msra.mxu0 %v7123
        %7139 = vmatpush.bf16.msra.mxu0 %v7122
        %7140 = vmatpush.bf16.msra.mxu0 %v7121
        %7141 = vmatpush.bf16.msra.mxu0 %v7120
        %7142 = vmatpush.bf16.msra.mxu0 %v7119
        %7143 = vmatmul.bf16.gmra.mxu0 %v7084
        %v7144 = vpop.f32.mrf.mxu0
        %v7145 = vadd.f32 %v7086, %v7144
        %v7146 = vpop.f32.mrf.mxu0
        %v7147 = vadd.f32 %v7086, %v7146
        %7148 = vmatmul.bf16.gmra.mxu0 %v7085
        %v7149 = vpop.f32.mrf.mxu0
        %v7150 = vadd.f32 %v7086, %v7149
        %v7151 = vpop.f32.mrf.mxu0
        %v7152 = vadd.f32 %v7086, %v7151
        %7153 = vdwg.mxu0
        %v7154 = vld [vmem:[%s6 + $0x45] ss:$0 sm:$0xff]
        %v7155 = vld [vmem:[%s6 + $0x46] ss:$0 sm:$0xff]
        %v7156 = vmul.f32 %v7145, %v7154
        %v7157 = vmul.f32 %v7147, %v7154
        %v7158 = vmul.f32 %v7150, %v7154
        %v7159 = vmul.f32 %v7152, %v7154
        %7160 = vadd.xlane.f32.xlu0 %v7156
        %v7161 = vpop.xlane.xlu0 %7160
        %7162 = vadd.xlane.f32.xlu0 %v7157
        %v7163 = vpop.xlane.xlu0 %7162
        %7164 = vadd.xlane.f32.xlu0 %v7158
        %v7165 = vpop.xlane.xlu0 %7164
        %7166 = vadd.xlane.f32.xlu0 %v7159
        %v7167 = vpop.xlane.xlu0 %7166
        %v7168 = vadd.f32 %v7161, %v7155
        %v7169 = vadd.f32 %v7163, %v7155
        %v7170 = vadd.f32 %v7165, %v7155
        %v7171 = vadd.f32 %v7167, %v7155
        %vm7172 = vcmask 7168
        %7173 = vst.msk [vmem:[%s361] sm:$0xff] %vm7172, %v7168
        %7174 = vst.msk [vmem:[%s361 + $0x8] sm:$0xff] %vm7172, %v7169
        %7175 = vst.msk [vmem:[%s361 + $0x10] sm:$0xff] %vm7172, %v7170
        %7176 = vst.msk [vmem:[%s361 + $0x18] sm:$0xff] %vm7172, %v7171
        %s7177 = smul.u32 4, %s22
        %p7178 = scmp.lt.s32.totalorder %s7177, 7
        %s7179 = scalar_select %p7178, %s7177, 7
        %s7180 = smul.addr %s7179, 8
        %s7181 = scalar_lea.vmem %s7, %s7180
        // Predicated region
        $region57: #{dqn_gnn_forward.1} parent=47 // pred_check
          %p7182 = pneg %p202
        $region58: #{dqn_gnn_forward.1} parent=47 // pred_check_branch
          %7184 = sbr.rel (%p7182) target = $region60
        $region59: #{dqn_gnn_forward.1} parent=47 // pred_region
          %s7185 = smul.u32 4, %s22
        $region60: #{dqn_gnn_forward.1} parent=47 // pred_fallthru
          _
      $region48: #{dqn_gnn_forward.1} parent=5 // pred_fallthru
        _
      %p7186 = scmp.le.s32.totalorder 2, %s17
      // Predicated region
      $region61: #{dqn_gnn_forward.1} parent=5 // pred_check
        %p7187 = pneg %p7186
      $region62: #{dqn_gnn_forward.1} parent=5 // pred_check_branch
        %7189 = sbr.rel (%p7187) target = $region64
      $region63: #{dqn_gnn_forward.1} parent=5 // pred_region
        %s7190 = ssub.s32 %s17, 2
        // Predicated region
        $region65: #{dqn_gnn_forward.1} parent=63 // pred_check
          %p7191 = pneg %p208
        $region66: #{dqn_gnn_forward.1} parent=63 // pred_check_branch
          %7193 = sbr.rel (%p7191) target = $region68
        $region67: #{dqn_gnn_forward.1} parent=63 // pred_region
          %s7194 = smul.u32 4, %s23
          %p7195 = scmp.lt.s32.totalorder %s7194, 7
          %s7196 = scalar_select %p7195, %s7194, 7
          %s7197 = smul.addr %s7196, 8
          %s7198 = scalar_lea.vmem %s7, %s7197
        $region68: #{dqn_gnn_forward.1} parent=63 // pred_fallthru
          _
      $region64: #{dqn_gnn_forward.1} parent=5 // pred_fallthru
        _
    $region6: #{dqn_gnn_forward.1} parent=1 // loop_footer
      %s21 = sadd.s32 1, %s17
    $region7: #{dqn_gnn_forward.1} parent=1 // loop_footer_branch
      %16 = sbr.rel target = $region3
    $region8: #{dqn_gnn_forward.1} parent=1 // loop_exit
      _
    %7199 = vsyncpa [#allocation3], 1
    %s7200 = scalar_lea.sflag [#allocation3], 1
    %7201 = vsyncpa %s7200, 1
    %7202 = vsyncpa [#allocation5], 1

</llo_original>
